<compile_context>
chip_gen: v6e
topology: v6e:2x2x1
jax: 0.10.0
libtpu: 0.0.40
codegen_flags: <defaults>
</compile_context>

<pallas_src>
import jax
import jax.numpy as jnp
from jax import lax
from jax.experimental import pallas as pl
from jax.experimental.pallas import tpu as pltpu


def _make_kernel(dims):
    (W0, L0, L1, L2, Lrm, Lcm, L3, Lr2, Lc2,
     DM, DN, DU, DV, DP, DR, H5, W5) = dims

    def kernel(x_ref, w1_ref, b1_ref, w2_ref, b2_ref, w3_ref, b3_ref, o_ref,
               x25_ref, x200_ref, x72_ref):
        f32 = jnp.float32

        # ---- Conv2d 1->8, 5x5 (BN pre-folded): one MXU matmul, K=25 ----------------
        x0 = x_ref[0]                                        # (1, L0), flat image
        for dy in range(5):
            for dx in range(5):
                t = 5 * dy + dx
                s = dy * W0 + dx                             # static lane shift
                x25_ref[t:t + 1, :] = x0[:, s:s + L1]
        a1 = jnp.dot(w1_ref[...], x25_ref[...], preferred_element_type=f32)
        a1 = jnp.maximum(a1 + b1_ref[...], 0.0)              # (8, L1)

        # ---- Conv2d 8->8, 5x5: one MXU matmul, K=200 -------------------------------
        for dy in range(5):
            for dx in range(5):
                t = 5 * dy + dx
                s = dy * W0 + dx
                x200_ref[8 * t:8 * t + 8, :] = a1[:, s:s + L2]
        a2 = jnp.dot(w2_ref[...], x200_ref[...], preferred_element_type=f32)
        a2 = jnp.maximum(a2 + b2_ref[...], 0.0)              # (8, L2)

        # ---- MaxPool2d 3x3, stride (3,2): exact shifted element-wise maxima --------
        rm = jnp.maximum(jnp.maximum(a2[:, 0:Lrm], a2[:, W0:W0 + Lrm]),
                         a2[:, 2 * W0:2 * W0 + Lrm])          # max over 3 rows
        cm = jnp.maximum(jnp.maximum(rm[:, 0:Lcm], rm[:, 1:1 + Lcm]),
                         rm[:, 2:2 + Lcm])                    # max over 3 cols, (8, Lcm)

        # ---- Conv2d 8->16, 3x3, stride (3,2): one MXU matmul, K=72 ------------------
        # pooled-grid strides in flat coords: DM = 3*W0 (rows), DN = 2 (cols)
        for ky in range(3):
            for kx in range(3):
                t = 3 * ky + kx
                s = DM * ky + DN * kx
                x72_ref[8 * t:8 * t + 8, :] = cm[:, s:s + L3]
        a3 = jnp.dot(w3_ref[...], x72_ref[...], preferred_element_type=f32)
        a3 = jnp.maximum(a3 + b3_ref[...], 0.0)               # (16, L3)

        # ---- MaxPool2d 3x3, stride (5,2) --------------------------------------------
        # conv3-output strides in flat coords: DU = 3*DM, DV = 2*DN
        rm2 = jnp.maximum(jnp.maximum(a3[:, 0:Lr2], a3[:, DU:DU + Lr2]),
                          a3[:, 2 * DU:2 * DU + Lr2])
        cm2 = jnp.maximum(jnp.maximum(rm2[:, 0:Lc2], rm2[:, DV:DV + Lc2]),
                          rm2[:, 2 * DV:2 * DV + Lc2])         # (16, Lc2)

        # ---- gather the H5*W5 valid anchors into the output block ------------------
        for p in range(H5):
            for r in range(W5):
                q = DP * p + DR * r
                j = p * W5 + r
                o_ref[:, :, j:j + 1] = cm2[:, q:q + 1][None]

    return kernel


@jax.jit
def emotion_encoder_forward(x, params):
    """x: (N, 1, H, W) float32 -> (N, 16, H5, W5) float32 (NCHW)."""
    N, Cin, H, W = x.shape
    assert Cin == 1

    # PyTorch output-size formulas (floor division)
    H1, W1 = H - 4, W - 4
    H2, W2 = H1 - 4, W1 - 4
    H3, W3 = (H2 - 3) // 3 + 1, (W2 - 3) // 2 + 1
    H4, W4 = (H3 - 3) // 3 + 1, (W3 - 3) // 2 + 1
    H5, W5 = (H4 - 3) // 5 + 1, (W4 - 3) // 2 + 1

    # Flat "wide" layout geometry (flat coord q = row*W + col over the input grid)
    W0 = W
    L0 = H * W0
    L1 = L0 - (4 * W0 + 4)          # conv1 wide width
    L2 = L1 - (4 * W0 + 4)          # conv2 wide width
    Lrm = L2 - 2 * W0               # pool1 row-max width
    Lcm = Lrm - 2                   # pool1 col-max width
    DM, DN = 3 * W0, 2              # pooled-grid strides in q
    L3 = Lcm - (2 * DM + 2 * DN)    # conv3 wide width
    DU, DV = 3 * DM, 2 * DN         # conv3-output strides in q
    Lr2 = L3 - 2 * DU               # pool2 row-max width
    Lc2 = Lr2 - 2 * DV              # pool2 col-max width
    DP, DR = 5 * DU, 2 * DV         # final output strides in q
    assert min(L1, L2, Lrm, Lcm, L3, Lr2, Lc2) > 0
    assert (H2 - 1) * W0 + (W2 - 1) < L2
    assert DU * (H4 - 1) + DV * (W4 - 1) < L3
    assert DP * (H5 - 1) + DR * (W5 - 1) < Lc2

    # BatchNorm2d (training mode: batch statistics, biased variance — matches reference),
    # folded into conv1:  conv1(scale*x + shift) = (scale*w1) * x + (b1 + shift*sum(w1)).
    eps = 1e-5
    mu = jnp.mean(x, axis=(0, 2, 3))
    var = jnp.var(x, axis=(0, 2, 3))
    inv = params['bn_gamma'] / jnp.sqrt(var + eps)
    scale = inv[0]
    shift = (params['bn_beta'] - mu * inv)[0]

    w1m = (params['w1'][:, 0] * scale).reshape(8, 25).astype(jnp.float32)         # [o, 5dy+dx]
    b1v = (params['b1'] + shift * params['w1'].sum(axis=(1, 2, 3))
           ).reshape(8, 1).astype(jnp.float32)
    w2m = params['w2'].transpose(0, 2, 3, 1).reshape(8, 200).astype(jnp.float32)  # [o, tap*8+c]
    b2v = params['b2'].reshape(8, 1).astype(jnp.float32)
    w3m = params['w3'].transpose(0, 2, 3, 1).reshape(16, 72).astype(jnp.float32)  # [o, tap*8+c]
    b3v = params['b3'].reshape(16, 1).astype(jnp.float32)

    x_flat = x.reshape(N, 1, L0).astype(jnp.float32)

    dims = (W0, L0, L1, L2, Lrm, Lcm, L3, Lr2, Lc2,
            DM, DN, DU, DV, DP, DR, H5, W5)
    kernel = _make_kernel(dims)

    out_flat = pl.pallas_call(
        kernel,
        grid=(N,),
        in_specs=[
            pl.BlockSpec((1, 1, L0), lambda b: (b, 0, 0)),   # flat image
            pl.BlockSpec((8, 25), lambda b: (0, 0)),         # w1 (BN folded)
            pl.BlockSpec((8, 1), lambda b: (0, 0)),          # b1 (BN folded)
            pl.BlockSpec((8, 200), lambda b: (0, 0)),        # w2 im2col matrix
            pl.BlockSpec((8, 1), lambda b: (0, 0)),          # b2
            pl.BlockSpec((16, 72), lambda b: (0, 0)),        # w3 im2col matrix
            pl.BlockSpec((16, 1), lambda b: (0, 0)),         # b3
        ],
        out_specs=pl.BlockSpec((1, 16, H5 * W5), lambda b: (b, 0, 0)),
        out_shape=jax.ShapeDtypeStruct((N, 16, H5 * W5), jnp.float32),
        scratch_shapes=[
            pltpu.VMEM((25, L1), jnp.float32),    # conv1 im2col patches
            pltpu.VMEM((200, L2), jnp.float32),   # conv2 im2col patches
            pltpu.VMEM((72, L3), jnp.float32),    # conv3 im2col patches
        ],
        compiler_params=pltpu.CompilerParams(
            dimension_semantics=("parallel",),          # batch is independent (v7x megacore)
            vmem_limit_bytes=32 * 1024 * 1024),
    )(x_flat, w1m, b1v, w2m, b2v, w3m, b3v)

    return out_flat.reshape(N, 16, H5, W5)


def emotion_encoder_reference(x, params):
    """Pure-JAX reference matching the PyTorch module (training-mode BN)."""
    eps = 1e-5
    gamma = params['bn_gamma'].reshape(1, -1, 1, 1)
    beta = params['bn_beta'].reshape(1, -1, 1, 1)
    mu = jnp.mean(x, axis=(0, 2, 3), keepdims=True)
    var = jnp.var(x, axis=(0, 2, 3), keepdims=True)
    y = (x - mu) / jnp.sqrt(var + eps) * gamma + beta
    dn = ('NCHW', 'OIHW', 'NCHW')
    y = lax.conv_general_dilated(y, params['w1'], (1, 1), 'VALID', dimension_numbers=dn)
    y = jnp.maximum(y + params['b1'].reshape(1, -1, 1, 1), 0.0)
    y = lax.conv_general_dilated(y, params['w2'], (1, 1), 'VALID', dimension_numbers=dn)
    y = jnp.maximum(y + params['b2'].reshape(1, -1, 1, 1), 0.0)
    y = lax.reduce_window(y, -jnp.inf, lax.max, (1, 1, 3, 3), (1, 1, 3, 2), 'VALID')
    y = lax.conv_general_dilated(y, params['w3'], (3, 2), 'VALID', dimension_numbers=dn)
    y = jnp.maximum(y + params['b3'].reshape(1, -1, 1, 1), 0.0)
    y = lax.reduce_window(y, -jnp.inf, lax.max, (1, 1, 3, 3), (1, 1, 5, 2), 'VALID')
    return y


if __name__ == "__main__":
    key = jax.random.PRNGKey(0)
    ks = jax.random.split(key, 7)
    # melspec: batch=2, 1 channel, 80 mel bins (H), 64 frames (W)
    x = jax.random.normal(ks[0], (2, 1, 80, 64), jnp.float32)
    params = {
        'bn_gamma': jnp.array([1.2], jnp.float32),
        'bn_beta': jnp.array([0.1], jnp.float32),
        'w1': 0.2 * jax.random.normal(ks[1], (8, 1, 5, 5), jnp.float32),
        'b1': 0.1 * jax.random.normal(ks[2], (8,), jnp.float32),
        'w2': 0.1 * jax.random.normal(ks[3], (8, 8, 5, 5), jnp.float32),
        'b2': 0.1 * jax.random.normal(ks[4], (8,), jnp.float32),
        'w3': 0.1 * jax.random.normal(ks[5], (16, 8, 3, 3), jnp.float32),
        'b3': 0.1 * jax.random.normal(ks[6], (16,), jnp.float32),
    }

    out = jax.block_until_ready(emotion_encoder_forward(x, params))
    ref = jax.block_until_ready(emotion_encoder_reference(x, params))

    assert out.shape == ref.shape == (2, 16, 2, 6), (out.shape, ref.shape)
    if not jnp.allclose(out, ref, rtol=1e-2, atol=1e-2):
        raise AssertionError(f"mismatch, max abs diff = {jnp.max(jnp.abs(out - ref))}")
    print("KERNEL_OK")
</pallas_src>

<mosaic_0001>
module attributes {stable_mosaic.version = 11 : i64} {
  func.func @kernel(%arg0: i32, %arg1: memref<1x1x5120xf32, #tpu.memory_space<vmem>>, %arg2: memref<8x25xf32, #tpu.memory_space<vmem>>, %arg3: memref<8x1xf32, #tpu.memory_space<vmem>>, %arg4: memref<8x200xf32, #tpu.memory_space<vmem>>, %arg5: memref<8x1xf32, #tpu.memory_space<vmem>>, %arg6: memref<16x72xf32, #tpu.memory_space<vmem>>, %arg7: memref<16x1xf32, #tpu.memory_space<vmem>>, %arg8: memref<1x16x12xf32, #tpu.memory_space<vmem>>, %arg9: memref<25x4860xf32, #tpu.memory_space<vmem>>, %arg10: memref<200x4600xf32, #tpu.memory_space<vmem>>, %arg11: memref<72x4082xf32, #tpu.memory_space<vmem>>) attributes {dimension_semantics = [#tpu.dimension_semantics<parallel>], iteration_bounds = array<i64: 2>, scalar_prefetch = 0 : i64, scratch_operands = 3 : i64, tpu.core_type = #tpu.core_type<tc>, window_params = [{transform_indices = @transform_0, window_bounds = array<i64: 1, 1, 5120>}, {pipeline_mode = #tpu.pipeline_mode<synchronous>, transform_indices = @transform_1, window_bounds = array<i64: 8, 25>}, {pipeline_mode = #tpu.pipeline_mode<synchronous>, transform_indices = @transform_2, window_bounds = array<i64: 8, 1>}, {pipeline_mode = #tpu.pipeline_mode<synchronous>, transform_indices = @transform_3, window_bounds = array<i64: 8, 200>}, {pipeline_mode = #tpu.pipeline_mode<synchronous>, transform_indices = @transform_4, window_bounds = array<i64: 8, 1>}, {pipeline_mode = #tpu.pipeline_mode<synchronous>, transform_indices = @transform_5, window_bounds = array<i64: 16, 72>}, {pipeline_mode = #tpu.pipeline_mode<synchronous>, transform_indices = @transform_6, window_bounds = array<i64: 16, 1>}, {transform_indices = @transform_7, window_bounds = array<i64: 1, 16, 12>}]} {
    %c0 = arith.constant 0 : index
    %c0_0 = arith.constant 0 : index
    %c0_1 = arith.constant 0 : index
    %0 = vector.load %arg1[%c0, %c0_0, %c0_1] : memref<1x1x5120xf32, #tpu.memory_space<vmem>>, vector<1x1x5120xf32>
    %1 = vector.shape_cast %0 : vector<1x1x5120xf32> to vector<1x5120xf32>
    %2 = vector.extract_strided_slice %1 {offsets = [0, 0], sizes = [1, 4860], strides = [1, 1]} : vector<1x5120xf32> to vector<1x4860xf32>
    %c0_2 = arith.constant 0 : index
    %c0_3 = arith.constant 0 : index
    %3 = vector.load %arg9[%c0_2, %c0_3] : memref<25x4860xf32, #tpu.memory_space<vmem>>, vector<1x4860xf32>
    tpu.vector_store %arg9[%c0_2, %c0_3], %2 {strides = array<i32>} : memref<25x4860xf32, #tpu.memory_space<vmem>>, vector<1x4860xf32>,
    %4 = vector.extract_strided_slice %1 {offsets = [0, 1], sizes = [1, 4860], strides = [1, 1]} : vector<1x5120xf32> to vector<1x4860xf32>
    %c1 = arith.constant 1 : index
    %c0_4 = arith.constant 0 : index
    %5 = vector.load %arg9[%c1, %c0_4] : memref<25x4860xf32, #tpu.memory_space<vmem>>, vector<1x4860xf32>
    tpu.vector_store %arg9[%c1, %c0_4], %4 {strides = array<i32>} : memref<25x4860xf32, #tpu.memory_space<vmem>>, vector<1x4860xf32>,
    %6 = vector.extract_strided_slice %1 {offsets = [0, 2], sizes = [1, 4860], strides = [1, 1]} : vector<1x5120xf32> to vector<1x4860xf32>
    %c2 = arith.constant 2 : index
    %c0_5 = arith.constant 0 : index
    %7 = vector.load %arg9[%c2, %c0_5] : memref<25x4860xf32, #tpu.memory_space<vmem>>, vector<1x4860xf32>
    tpu.vector_store %arg9[%c2, %c0_5], %6 {strides = array<i32>} : memref<25x4860xf32, #tpu.memory_space<vmem>>, vector<1x4860xf32>,
    %8 = vector.extract_strided_slice %1 {offsets = [0, 3], sizes = [1, 4860], strides = [1, 1]} : vector<1x5120xf32> to vector<1x4860xf32>
    %c3 = arith.constant 3 : index
    %c0_6 = arith.constant 0 : index
    %9 = vector.load %arg9[%c3, %c0_6] : memref<25x4860xf32, #tpu.memory_space<vmem>>, vector<1x4860xf32>
    tpu.vector_store %arg9[%c3, %c0_6], %8 {strides = array<i32>} : memref<25x4860xf32, #tpu.memory_space<vmem>>, vector<1x4860xf32>,
    %10 = vector.extract_strided_slice %1 {offsets = [0, 4], sizes = [1, 4860], strides = [1, 1]} : vector<1x5120xf32> to vector<1x4860xf32>
    %c4 = arith.constant 4 : index
    %c0_7 = arith.constant 0 : index
    %11 = vector.load %arg9[%c4, %c0_7] : memref<25x4860xf32, #tpu.memory_space<vmem>>, vector<1x4860xf32>
    tpu.vector_store %arg9[%c4, %c0_7], %10 {strides = array<i32>} : memref<25x4860xf32, #tpu.memory_space<vmem>>, vector<1x4860xf32>,
    %12 = vector.extract_strided_slice %1 {offsets = [0, 64], sizes = [1, 4860], strides = [1, 1]} : vector<1x5120xf32> to vector<1x4860xf32>
    %c5 = arith.constant 5 : index
    %c0_8 = arith.constant 0 : index
    %13 = vector.load %arg9[%c5, %c0_8] : memref<25x4860xf32, #tpu.memory_space<vmem>>, vector<1x4860xf32>
    tpu.vector_store %arg9[%c5, %c0_8], %12 {strides = array<i32>} : memref<25x4860xf32, #tpu.memory_space<vmem>>, vector<1x4860xf32>,
    %14 = vector.extract_strided_slice %1 {offsets = [0, 65], sizes = [1, 4860], strides = [1, 1]} : vector<1x5120xf32> to vector<1x4860xf32>
    %c6 = arith.constant 6 : index
    %c0_9 = arith.constant 0 : index
    %15 = vector.load %arg9[%c6, %c0_9] : memref<25x4860xf32, #tpu.memory_space<vmem>>, vector<1x4860xf32>
    tpu.vector_store %arg9[%c6, %c0_9], %14 {strides = array<i32>} : memref<25x4860xf32, #tpu.memory_space<vmem>>, vector<1x4860xf32>,
    %16 = vector.extract_strided_slice %1 {offsets = [0, 66], sizes = [1, 4860], strides = [1, 1]} : vector<1x5120xf32> to vector<1x4860xf32>
    %c7 = arith.constant 7 : index
    %c0_10 = arith.constant 0 : index
    %17 = vector.load %arg9[%c7, %c0_10] : memref<25x4860xf32, #tpu.memory_space<vmem>>, vector<1x4860xf32>
    tpu.vector_store %arg9[%c7, %c0_10], %16 {strides = array<i32>} : memref<25x4860xf32, #tpu.memory_space<vmem>>, vector<1x4860xf32>,
    %18 = vector.extract_strided_slice %1 {offsets = [0, 67], sizes = [1, 4860], strides = [1, 1]} : vector<1x5120xf32> to vector<1x4860xf32>
    %c8 = arith.constant 8 : index
    %c0_11 = arith.constant 0 : index
    %19 = vector.load %arg9[%c8, %c0_11] : memref<25x4860xf32, #tpu.memory_space<vmem>>, vector<1x4860xf32>
    tpu.vector_store %arg9[%c8, %c0_11], %18 {strides = array<i32>} : memref<25x4860xf32, #tpu.memory_space<vmem>>, vector<1x4860xf32>,
    %20 = vector.extract_strided_slice %1 {offsets = [0, 68], sizes = [1, 4860], strides = [1, 1]} : vector<1x5120xf32> to vector<1x4860xf32>
    %c9 = arith.constant 9 : index
    %c0_12 = arith.constant 0 : index
    %21 = vector.load %arg9[%c9, %c0_12] : memref<25x4860xf32, #tpu.memory_space<vmem>>, vector<1x4860xf32>
    tpu.vector_store %arg9[%c9, %c0_12], %20 {strides = array<i32>} : memref<25x4860xf32, #tpu.memory_space<vmem>>, vector<1x4860xf32>,
    %22 = vector.extract_strided_slice %1 {offsets = [0, 128], sizes = [1, 4860], strides = [1, 1]} : vector<1x5120xf32> to vector<1x4860xf32>
    %c10 = arith.constant 10 : index
    %c0_13 = arith.constant 0 : index
    %23 = vector.load %arg9[%c10, %c0_13] : memref<25x4860xf32, #tpu.memory_space<vmem>>, vector<1x4860xf32>
    tpu.vector_store %arg9[%c10, %c0_13], %22 {strides = array<i32>} : memref<25x4860xf32, #tpu.memory_space<vmem>>, vector<1x4860xf32>,
    %24 = vector.extract_strided_slice %1 {offsets = [0, 129], sizes = [1, 4860], strides = [1, 1]} : vector<1x5120xf32> to vector<1x4860xf32>
    %c11 = arith.constant 11 : index
    %c0_14 = arith.constant 0 : index
    %25 = vector.load %arg9[%c11, %c0_14] : memref<25x4860xf32, #tpu.memory_space<vmem>>, vector<1x4860xf32>
    tpu.vector_store %arg9[%c11, %c0_14], %24 {strides = array<i32>} : memref<25x4860xf32, #tpu.memory_space<vmem>>, vector<1x4860xf32>,
    %26 = vector.extract_strided_slice %1 {offsets = [0, 130], sizes = [1, 4860], strides = [1, 1]} : vector<1x5120xf32> to vector<1x4860xf32>
    %c12 = arith.constant 12 : index
    %c0_15 = arith.constant 0 : index
    %27 = vector.load %arg9[%c12, %c0_15] : memref<25x4860xf32, #tpu.memory_space<vmem>>, vector<1x4860xf32>
    tpu.vector_store %arg9[%c12, %c0_15], %26 {strides = array<i32>} : memref<25x4860xf32, #tpu.memory_space<vmem>>, vector<1x4860xf32>,
    %28 = vector.extract_strided_slice %1 {offsets = [0, 131], sizes = [1, 4860], strides = [1, 1]} : vector<1x5120xf32> to vector<1x4860xf32>
    %c13 = arith.constant 13 : index
    %c0_16 = arith.constant 0 : index
    %29 = vector.load %arg9[%c13, %c0_16] : memref<25x4860xf32, #tpu.memory_space<vmem>>, vector<1x4860xf32>
    tpu.vector_store %arg9[%c13, %c0_16], %28 {strides = array<i32>} : memref<25x4860xf32, #tpu.memory_space<vmem>>, vector<1x4860xf32>,
    %30 = vector.extract_strided_slice %1 {offsets = [0, 132], sizes = [1, 4860], strides = [1, 1]} : vector<1x5120xf32> to vector<1x4860xf32>
    %c14 = arith.constant 14 : index
    %c0_17 = arith.constant 0 : index
    %31 = vector.load %arg9[%c14, %c0_17] : memref<25x4860xf32, #tpu.memory_space<vmem>>, vector<1x4860xf32>
    tpu.vector_store %arg9[%c14, %c0_17], %30 {strides = array<i32>} : memref<25x4860xf32, #tpu.memory_space<vmem>>, vector<1x4860xf32>,
    %32 = vector.extract_strided_slice %1 {offsets = [0, 192], sizes = [1, 4860], strides = [1, 1]} : vector<1x5120xf32> to vector<1x4860xf32>
    %c15 = arith.constant 15 : index
    %c0_18 = arith.constant 0 : index
    %33 = vector.load %arg9[%c15, %c0_18] : memref<25x4860xf32, #tpu.memory_space<vmem>>, vector<1x4860xf32>
    tpu.vector_store %arg9[%c15, %c0_18], %32 {strides = array<i32>} : memref<25x4860xf32, #tpu.memory_space<vmem>>, vector<1x4860xf32>,
    %34 = vector.extract_strided_slice %1 {offsets = [0, 193], sizes = [1, 4860], strides = [1, 1]} : vector<1x5120xf32> to vector<1x4860xf32>
    %c16 = arith.constant 16 : index
    %c0_19 = arith.constant 0 : index
    %35 = vector.load %arg9[%c16, %c0_19] : memref<25x4860xf32, #tpu.memory_space<vmem>>, vector<1x4860xf32>
    tpu.vector_store %arg9[%c16, %c0_19], %34 {strides = array<i32>} : memref<25x4860xf32, #tpu.memory_space<vmem>>, vector<1x4860xf32>,
    %36 = vector.extract_strided_slice %1 {offsets = [0, 194], sizes = [1, 4860], strides = [1, 1]} : vector<1x5120xf32> to vector<1x4860xf32>
    %c17 = arith.constant 17 : index
    %c0_20 = arith.constant 0 : index
    %37 = vector.load %arg9[%c17, %c0_20] : memref<25x4860xf32, #tpu.memory_space<vmem>>, vector<1x4860xf32>
    tpu.vector_store %arg9[%c17, %c0_20], %36 {strides = array<i32>} : memref<25x4860xf32, #tpu.memory_space<vmem>>, vector<1x4860xf32>,
    %38 = vector.extract_strided_slice %1 {offsets = [0, 195], sizes = [1, 4860], strides = [1, 1]} : vector<1x5120xf32> to vector<1x4860xf32>
    %c18 = arith.constant 18 : index
    %c0_21 = arith.constant 0 : index
    %39 = vector.load %arg9[%c18, %c0_21] : memref<25x4860xf32, #tpu.memory_space<vmem>>, vector<1x4860xf32>
    tpu.vector_store %arg9[%c18, %c0_21], %38 {strides = array<i32>} : memref<25x4860xf32, #tpu.memory_space<vmem>>, vector<1x4860xf32>,
    %40 = vector.extract_strided_slice %1 {offsets = [0, 196], sizes = [1, 4860], strides = [1, 1]} : vector<1x5120xf32> to vector<1x4860xf32>
    %c19 = arith.constant 19 : index
    %c0_22 = arith.constant 0 : index
    %41 = vector.load %arg9[%c19, %c0_22] : memref<25x4860xf32, #tpu.memory_space<vmem>>, vector<1x4860xf32>
    tpu.vector_store %arg9[%c19, %c0_22], %40 {strides = array<i32>} : memref<25x4860xf32, #tpu.memory_space<vmem>>, vector<1x4860xf32>,
    %42 = vector.extract_strided_slice %1 {offsets = [0, 256], sizes = [1, 4860], strides = [1, 1]} : vector<1x5120xf32> to vector<1x4860xf32>
    %c20 = arith.constant 20 : index
    %c0_23 = arith.constant 0 : index
    %43 = vector.load %arg9[%c20, %c0_23] : memref<25x4860xf32, #tpu.memory_space<vmem>>, vector<1x4860xf32>
    tpu.vector_store %arg9[%c20, %c0_23], %42 {strides = array<i32>} : memref<25x4860xf32, #tpu.memory_space<vmem>>, vector<1x4860xf32>,
    %44 = vector.extract_strided_slice %1 {offsets = [0, 257], sizes = [1, 4860], strides = [1, 1]} : vector<1x5120xf32> to vector<1x4860xf32>
    %c21 = arith.constant 21 : index
    %c0_24 = arith.constant 0 : index
    %45 = vector.load %arg9[%c21, %c0_24] : memref<25x4860xf32, #tpu.memory_space<vmem>>, vector<1x4860xf32>
    tpu.vector_store %arg9[%c21, %c0_24], %44 {strides = array<i32>} : memref<25x4860xf32, #tpu.memory_space<vmem>>, vector<1x4860xf32>,
    %46 = vector.extract_strided_slice %1 {offsets = [0, 258], sizes = [1, 4860], strides = [1, 1]} : vector<1x5120xf32> to vector<1x4860xf32>
    %c22 = arith.constant 22 : index
    %c0_25 = arith.constant 0 : index
    %47 = vector.load %arg9[%c22, %c0_25] : memref<25x4860xf32, #tpu.memory_space<vmem>>, vector<1x4860xf32>
    tpu.vector_store %arg9[%c22, %c0_25], %46 {strides = array<i32>} : memref<25x4860xf32, #tpu.memory_space<vmem>>, vector<1x4860xf32>,
    %48 = vector.extract_strided_slice %1 {offsets = [0, 259], sizes = [1, 4860], strides = [1, 1]} : vector<1x5120xf32> to vector<1x4860xf32>
    %c23 = arith.constant 23 : index
    %c0_26 = arith.constant 0 : index
    %49 = vector.load %arg9[%c23, %c0_26] : memref<25x4860xf32, #tpu.memory_space<vmem>>, vector<1x4860xf32>
    tpu.vector_store %arg9[%c23, %c0_26], %48 {strides = array<i32>} : memref<25x4860xf32, #tpu.memory_space<vmem>>, vector<1x4860xf32>,
    %50 = vector.extract_strided_slice %1 {offsets = [0, 260], sizes = [1, 4860], strides = [1, 1]} : vector<1x5120xf32> to vector<1x4860xf32>
    %c24 = arith.constant 24 : index
    %c0_27 = arith.constant 0 : index
    %51 = vector.load %arg9[%c24, %c0_27] : memref<25x4860xf32, #tpu.memory_space<vmem>>, vector<1x4860xf32>
    tpu.vector_store %arg9[%c24, %c0_27], %50 {strides = array<i32>} : memref<25x4860xf32, #tpu.memory_space<vmem>>, vector<1x4860xf32>,
    %c0_28 = arith.constant 0 : index
    %c0_29 = arith.constant 0 : index
    %52 = vector.load %arg2[%c0_28, %c0_29] : memref<8x25xf32, #tpu.memory_space<vmem>>, vector<8x25xf32>
    %c0_30 = arith.constant 0 : index
    %c0_31 = arith.constant 0 : index
    %53 = vector.load %arg9[%c0_30, %c0_31] : memref<25x4860xf32, #tpu.memory_space<vmem>>, vector<25x4860xf32>
    %cst = arith.constant dense<0.000000e+00> : vector<8x4860xf32>
    %54 = tpu.matmul %52, %53, %cst {dimension_numbers = #tpu.dot_dimension_numbers<[1], [0], [0], [1], [0, 0, 1, 1], [], []>} : vector<8x25xf32>, vector<25x4860xf32>, vector<8x4860xf32> -> vector<8x4860xf32>
    %c0_32 = arith.constant 0 : index
    %c0_33 = arith.constant 0 : index
    %55 = vector.load %arg3[%c0_32, %c0_33] : memref<8x1xf32, #tpu.memory_space<vmem>>, vector<8x1xf32>
    %56 = vector.broadcast %55 : vector<8x1xf32> to vector<8x4860xf32>
    %57 = arith.addf %54, %56 : vector<8x4860xf32>
    %cst_34 = arith.constant 0.000000e+00 : f32
    %58 = vector.broadcast %cst_34 : f32 to vector<8x4860xf32>
    %59 = arith.maximumf %57, %58 : vector<8x4860xf32>
    %60 = vector.extract_strided_slice %59 {offsets = [0, 0], sizes = [8, 4600], strides = [1, 1]} : vector<8x4860xf32> to vector<8x4600xf32>
    %c0_35 = arith.constant 0 : index
    %c0_36 = arith.constant 0 : index
    %61 = vector.load %arg10[%c0_35, %c0_36] : memref<200x4600xf32, #tpu.memory_space<vmem>>, vector<8x4600xf32>
    tpu.vector_store %arg10[%c0_35, %c0_36], %60 {strides = array<i32>} : memref<200x4600xf32, #tpu.memory_space<vmem>>, vector<8x4600xf32>,
    %62 = vector.extract_strided_slice %59 {offsets = [0, 1], sizes = [8, 4600], strides = [1, 1]} : vector<8x4860xf32> to vector<8x4600xf32>
    %c8_37 = arith.constant 8 : index
    %c0_38 = arith.constant 0 : index
    %63 = vector.load %arg10[%c8_37, %c0_38] : memref<200x4600xf32, #tpu.memory_space<vmem>>, vector<8x4600xf32>
    tpu.vector_store %arg10[%c8_37, %c0_38], %62 {strides = array<i32>} : memref<200x4600xf32, #tpu.memory_space<vmem>>, vector<8x4600xf32>,
    %64 = vector.extract_strided_slice %59 {offsets = [0, 2], sizes = [8, 4600], strides = [1, 1]} : vector<8x4860xf32> to vector<8x4600xf32>
    %c16_39 = arith.constant 16 : index
    %c0_40 = arith.constant 0 : index
    %65 = vector.load %arg10[%c16_39, %c0_40] : memref<200x4600xf32, #tpu.memory_space<vmem>>, vector<8x4600xf32>
    tpu.vector_store %arg10[%c16_39, %c0_40], %64 {strides = array<i32>} : memref<200x4600xf32, #tpu.memory_space<vmem>>, vector<8x4600xf32>,
    %66 = vector.extract_strided_slice %59 {offsets = [0, 3], sizes = [8, 4600], strides = [1, 1]} : vector<8x4860xf32> to vector<8x4600xf32>
    %c24_41 = arith.constant 24 : index
    %c0_42 = arith.constant 0 : index
    %67 = vector.load %arg10[%c24_41, %c0_42] : memref<200x4600xf32, #tpu.memory_space<vmem>>, vector<8x4600xf32>
    tpu.vector_store %arg10[%c24_41, %c0_42], %66 {strides = array<i32>} : memref<200x4600xf32, #tpu.memory_space<vmem>>, vector<8x4600xf32>,
    %68 = vector.extract_strided_slice %59 {offsets = [0, 4], sizes = [8, 4600], strides = [1, 1]} : vector<8x4860xf32> to vector<8x4600xf32>
    %c32 = arith.constant 32 : index
    %c0_43 = arith.constant 0 : index
    %69 = vector.load %arg10[%c32, %c0_43] : memref<200x4600xf32, #tpu.memory_space<vmem>>, vector<8x4600xf32>
    tpu.vector_store %arg10[%c32, %c0_43], %68 {strides = array<i32>} : memref<200x4600xf32, #tpu.memory_space<vmem>>, vector<8x4600xf32>,
    %70 = vector.extract_strided_slice %59 {offsets = [0, 64], sizes = [8, 4600], strides = [1, 1]} : vector<8x4860xf32> to vector<8x4600xf32>
    %c40 = arith.constant 40 : index
    %c0_44 = arith.constant 0 : index
    %71 = vector.load %arg10[%c40, %c0_44] : memref<200x4600xf32, #tpu.memory_space<vmem>>, vector<8x4600xf32>
    tpu.vector_store %arg10[%c40, %c0_44], %70 {strides = array<i32>} : memref<200x4600xf32, #tpu.memory_space<vmem>>, vector<8x4600xf32>,
    %72 = vector.extract_strided_slice %59 {offsets = [0, 65], sizes = [8, 4600], strides = [1, 1]} : vector<8x4860xf32> to vector<8x4600xf32>
    %c48 = arith.constant 48 : index
    %c0_45 = arith.constant 0 : index
    %73 = vector.load %arg10[%c48, %c0_45] : memref<200x4600xf32, #tpu.memory_space<vmem>>, vector<8x4600xf32>
    tpu.vector_store %arg10[%c48, %c0_45], %72 {strides = array<i32>} : memref<200x4600xf32, #tpu.memory_space<vmem>>, vector<8x4600xf32>,
    %74 = vector.extract_strided_slice %59 {offsets = [0, 66], sizes = [8, 4600], strides = [1, 1]} : vector<8x4860xf32> to vector<8x4600xf32>
    %c56 = arith.constant 56 : index
    %c0_46 = arith.constant 0 : index
    %75 = vector.load %arg10[%c56, %c0_46] : memref<200x4600xf32, #tpu.memory_space<vmem>>, vector<8x4600xf32>
    tpu.vector_store %arg10[%c56, %c0_46], %74 {strides = array<i32>} : memref<200x4600xf32, #tpu.memory_space<vmem>>, vector<8x4600xf32>,
    %76 = vector.extract_strided_slice %59 {offsets = [0, 67], sizes = [8, 4600], strides = [1, 1]} : vector<8x4860xf32> to vector<8x4600xf32>
    %c64 = arith.constant 64 : index
    %c0_47 = arith.constant 0 : index
    %77 = vector.load %arg10[%c64, %c0_47] : memref<200x4600xf32, #tpu.memory_space<vmem>>, vector<8x4600xf32>
    tpu.vector_store %arg10[%c64, %c0_47], %76 {strides = array<i32>} : memref<200x4600xf32, #tpu.memory_space<vmem>>, vector<8x4600xf32>,
    %78 = vector.extract_strided_slice %59 {offsets = [0, 68], sizes = [8, 4600], strides = [1, 1]} : vector<8x4860xf32> to vector<8x4600xf32>
    %c72 = arith.constant 72 : index
    %c0_48 = arith.constant 0 : index
    %79 = vector.load %arg10[%c72, %c0_48] : memref<200x4600xf32, #tpu.memory_space<vmem>>, vector<8x4600xf32>
    tpu.vector_store %arg10[%c72, %c0_48], %78 {strides = array<i32>} : memref<200x4600xf32, #tpu.memory_space<vmem>>, vector<8x4600xf32>,
    %80 = vector.extract_strided_slice %59 {offsets = [0, 128], sizes = [8, 4600], strides = [1, 1]} : vector<8x4860xf32> to vector<8x4600xf32>
    %c80 = arith.constant 80 : index
    %c0_49 = arith.constant 0 : index
    %81 = vector.load %arg10[%c80, %c0_49] : memref<200x4600xf32, #tpu.memory_space<vmem>>, vector<8x4600xf32>
    tpu.vector_store %arg10[%c80, %c0_49], %80 {strides = array<i32>} : memref<200x4600xf32, #tpu.memory_space<vmem>>, vector<8x4600xf32>,
    %82 = vector.extract_strided_slice %59 {offsets = [0, 129], sizes = [8, 4600], strides = [1, 1]} : vector<8x4860xf32> to vector<8x4600xf32>
    %c88 = arith.constant 88 : index
    %c0_50 = arith.constant 0 : index
    %83 = vector.load %arg10[%c88, %c0_50] : memref<200x4600xf32, #tpu.memory_space<vmem>>, vector<8x4600xf32>
    tpu.vector_store %arg10[%c88, %c0_50], %82 {strides = array<i32>} : memref<200x4600xf32, #tpu.memory_space<vmem>>, vector<8x4600xf32>,
    %84 = vector.extract_strided_slice %59 {offsets = [0, 130], sizes = [8, 4600], strides = [1, 1]} : vector<8x4860xf32> to vector<8x4600xf32>
    %c96 = arith.constant 96 : index
    %c0_51 = arith.constant 0 : index
    %85 = vector.load %arg10[%c96, %c0_51] : memref<200x4600xf32, #tpu.memory_space<vmem>>, vector<8x4600xf32>
    tpu.vector_store %arg10[%c96, %c0_51], %84 {strides = array<i32>} : memref<200x4600xf32, #tpu.memory_space<vmem>>, vector<8x4600xf32>,
    %86 = vector.extract_strided_slice %59 {offsets = [0, 131], sizes = [8, 4600], strides = [1, 1]} : vector<8x4860xf32> to vector<8x4600xf32>
    %c104 = arith.constant 104 : index
    %c0_52 = arith.constant 0 : index
    %87 = vector.load %arg10[%c104, %c0_52] : memref<200x4600xf32, #tpu.memory_space<vmem>>, vector<8x4600xf32>
    tpu.vector_store %arg10[%c104, %c0_52], %86 {strides = array<i32>} : memref<200x4600xf32, #tpu.memory_space<vmem>>, vector<8x4600xf32>,
    %88 = vector.extract_strided_slice %59 {offsets = [0, 132], sizes = [8, 4600], strides = [1, 1]} : vector<8x4860xf32> to vector<8x4600xf32>
    %c112 = arith.constant 112 : index
    %c0_53 = arith.constant 0 : index
    %89 = vector.load %arg10[%c112, %c0_53] : memref<200x4600xf32, #tpu.memory_space<vmem>>, vector<8x4600xf32>
    tpu.vector_store %arg10[%c112, %c0_53], %88 {strides = array<i32>} : memref<200x4600xf32, #tpu.memory_space<vmem>>, vector<8x4600xf32>,
    %90 = vector.extract_strided_slice %59 {offsets = [0, 192], sizes = [8, 4600], strides = [1, 1]} : vector<8x4860xf32> to vector<8x4600xf32>
    %c120 = arith.constant 120 : index
    %c0_54 = arith.constant 0 : index
    %91 = vector.load %arg10[%c120, %c0_54] : memref<200x4600xf32, #tpu.memory_space<vmem>>, vector<8x4600xf32>
    tpu.vector_store %arg10[%c120, %c0_54], %90 {strides = array<i32>} : memref<200x4600xf32, #tpu.memory_space<vmem>>, vector<8x4600xf32>,
    %92 = vector.extract_strided_slice %59 {offsets = [0, 193], sizes = [8, 4600], strides = [1, 1]} : vector<8x4860xf32> to vector<8x4600xf32>
    %c128 = arith.constant 128 : index
    %c0_55 = arith.constant 0 : index
    %93 = vector.load %arg10[%c128, %c0_55] : memref<200x4600xf32, #tpu.memory_space<vmem>>, vector<8x4600xf32>
    tpu.vector_store %arg10[%c128, %c0_55], %92 {strides = array<i32>} : memref<200x4600xf32, #tpu.memory_space<vmem>>, vector<8x4600xf32>,
    %94 = vector.extract_strided_slice %59 {offsets = [0, 194], sizes = [8, 4600], strides = [1, 1]} : vector<8x4860xf32> to vector<8x4600xf32>
    %c136 = arith.constant 136 : index
    %c0_56 = arith.constant 0 : index
    %95 = vector.load %arg10[%c136, %c0_56] : memref<200x4600xf32, #tpu.memory_space<vmem>>, vector<8x4600xf32>
    tpu.vector_store %arg10[%c136, %c0_56], %94 {strides = array<i32>} : memref<200x4600xf32, #tpu.memory_space<vmem>>, vector<8x4600xf32>,
    %96 = vector.extract_strided_slice %59 {offsets = [0, 195], sizes = [8, 4600], strides = [1, 1]} : vector<8x4860xf32> to vector<8x4600xf32>
    %c144 = arith.constant 144 : index
    %c0_57 = arith.constant 0 : index
    %97 = vector.load %arg10[%c144, %c0_57] : memref<200x4600xf32, #tpu.memory_space<vmem>>, vector<8x4600xf32>
    tpu.vector_store %arg10[%c144, %c0_57], %96 {strides = array<i32>} : memref<200x4600xf32, #tpu.memory_space<vmem>>, vector<8x4600xf32>,
    %98 = vector.extract_strided_slice %59 {offsets = [0, 196], sizes = [8, 4600], strides = [1, 1]} : vector<8x4860xf32> to vector<8x4600xf32>
    %c152 = arith.constant 152 : index
    %c0_58 = arith.constant 0 : index
    %99 = vector.load %arg10[%c152, %c0_58] : memref<200x4600xf32, #tpu.memory_space<vmem>>, vector<8x4600xf32>
    tpu.vector_store %arg10[%c152, %c0_58], %98 {strides = array<i32>} : memref<200x4600xf32, #tpu.memory_space<vmem>>, vector<8x4600xf32>,
    %100 = vector.extract_strided_slice %59 {offsets = [0, 256], sizes = [8, 4600], strides = [1, 1]} : vector<8x4860xf32> to vector<8x4600xf32>
    %c160 = arith.constant 160 : index
    %c0_59 = arith.constant 0 : index
    %101 = vector.load %arg10[%c160, %c0_59] : memref<200x4600xf32, #tpu.memory_space<vmem>>, vector<8x4600xf32>
    tpu.vector_store %arg10[%c160, %c0_59], %100 {strides = array<i32>} : memref<200x4600xf32, #tpu.memory_space<vmem>>, vector<8x4600xf32>,
    %102 = vector.extract_strided_slice %59 {offsets = [0, 257], sizes = [8, 4600], strides = [1, 1]} : vector<8x4860xf32> to vector<8x4600xf32>
    %c168 = arith.constant 168 : index
    %c0_60 = arith.constant 0 : index
    %103 = vector.load %arg10[%c168, %c0_60] : memref<200x4600xf32, #tpu.memory_space<vmem>>, vector<8x4600xf32>
    tpu.vector_store %arg10[%c168, %c0_60], %102 {strides = array<i32>} : memref<200x4600xf32, #tpu.memory_space<vmem>>, vector<8x4600xf32>,
    %104 = vector.extract_strided_slice %59 {offsets = [0, 258], sizes = [8, 4600], strides = [1, 1]} : vector<8x4860xf32> to vector<8x4600xf32>
    %c176 = arith.constant 176 : index
    %c0_61 = arith.constant 0 : index
    %105 = vector.load %arg10[%c176, %c0_61] : memref<200x4600xf32, #tpu.memory_space<vmem>>, vector<8x4600xf32>
    tpu.vector_store %arg10[%c176, %c0_61], %104 {strides = array<i32>} : memref<200x4600xf32, #tpu.memory_space<vmem>>, vector<8x4600xf32>,
    %106 = vector.extract_strided_slice %59 {offsets = [0, 259], sizes = [8, 4600], strides = [1, 1]} : vector<8x4860xf32> to vector<8x4600xf32>
    %c184 = arith.constant 184 : index
    %c0_62 = arith.constant 0 : index
    %107 = vector.load %arg10[%c184, %c0_62] : memref<200x4600xf32, #tpu.memory_space<vmem>>, vector<8x4600xf32>
    tpu.vector_store %arg10[%c184, %c0_62], %106 {strides = array<i32>} : memref<200x4600xf32, #tpu.memory_space<vmem>>, vector<8x4600xf32>,
    %108 = vector.extract_strided_slice %59 {offsets = [0, 260], sizes = [8, 4600], strides = [1, 1]} : vector<8x4860xf32> to vector<8x4600xf32>
    %c192 = arith.constant 192 : index
    %c0_63 = arith.constant 0 : index
    %109 = vector.load %arg10[%c192, %c0_63] : memref<200x4600xf32, #tpu.memory_space<vmem>>, vector<8x4600xf32>
    tpu.vector_store %arg10[%c192, %c0_63], %108 {strides = array<i32>} : memref<200x4600xf32, #tpu.memory_space<vmem>>, vector<8x4600xf32>,
    %c0_64 = arith.constant 0 : index
    %c0_65 = arith.constant 0 : index
    %110 = vector.load %arg4[%c0_64, %c0_65] : memref<8x200xf32, #tpu.memory_space<vmem>>, vector<8x200xf32>
    %c0_66 = arith.constant 0 : index
    %c0_67 = arith.constant 0 : index
    %111 = vector.load %arg10[%c0_66, %c0_67] : memref<200x4600xf32, #tpu.memory_space<vmem>>, vector<200x4600xf32>
    %cst_68 = arith.constant dense<0.000000e+00> : vector<8x4600xf32>
    %112 = tpu.matmul %110, %111, %cst_68 {dimension_numbers = #tpu.dot_dimension_numbers<[1], [0], [0], [1], [0, 0, 1, 1], [], []>} : vector<8x200xf32>, vector<200x4600xf32>, vector<8x4600xf32> -> vector<8x4600xf32>
    %c0_69 = arith.constant 0 : index
    %c0_70 = arith.constant 0 : index
    %113 = vector.load %arg5[%c0_69, %c0_70] : memref<8x1xf32, #tpu.memory_space<vmem>>, vector<8x1xf32>
    %114 = vector.broadcast %113 : vector<8x1xf32> to vector<8x4600xf32>
    %115 = arith.addf %112, %114 : vector<8x4600xf32>
    %cst_71 = arith.constant 0.000000e+00 : f32
    %116 = vector.broadcast %cst_71 : f32 to vector<8x4600xf32>
    %117 = arith.maximumf %115, %116 : vector<8x4600xf32>
    %118 = vector.extract_strided_slice %117 {offsets = [0, 0], sizes = [8, 4472], strides = [1, 1]} : vector<8x4600xf32> to vector<8x4472xf32>
    %119 = vector.extract_strided_slice %117 {offsets = [0, 64], sizes = [8, 4472], strides = [1, 1]} : vector<8x4600xf32> to vector<8x4472xf32>
    %120 = arith.maximumf %118, %119 : vector<8x4472xf32>
    %121 = vector.extract_strided_slice %117 {offsets = [0, 128], sizes = [8, 4472], strides = [1, 1]} : vector<8x4600xf32> to vector<8x4472xf32>
    %122 = arith.maximumf %120, %121 : vector<8x4472xf32>
    %123 = vector.extract_strided_slice %122 {offsets = [0, 0], sizes = [8, 4470], strides = [1, 1]} : vector<8x4472xf32> to vector<8x4470xf32>
    %124 = vector.extract_strided_slice %122 {offsets = [0, 1], sizes = [8, 4470], strides = [1, 1]} : vector<8x4472xf32> to vector<8x4470xf32>
    %125 = arith.maximumf %123, %124 : vector<8x4470xf32>
    %126 = vector.extract_strided_slice %122 {offsets = [0, 2], sizes = [8, 4470], strides = [1, 1]} : vector<8x4472xf32> to vector<8x4470xf32>
    %127 = arith.maximumf %125, %126 : vector<8x4470xf32>
    %128 = vector.extract_strided_slice %127 {offsets = [0, 0], sizes = [8, 4082], strides = [1, 1]} : vector<8x4470xf32> to vector<8x4082xf32>
    %c0_72 = arith.constant 0 : index
    %c0_73 = arith.constant 0 : index
    %129 = vector.load %arg11[%c0_72, %c0_73] : memref<72x4082xf32, #tpu.memory_space<vmem>>, vector<8x4082xf32>
    tpu.vector_store %arg11[%c0_72, %c0_73], %128 {strides = array<i32>} : memref<72x4082xf32, #tpu.memory_space<vmem>>, vector<8x4082xf32>,
    %130 = vector.extract_strided_slice %127 {offsets = [0, 2], sizes = [8, 4082], strides = [1, 1]} : vector<8x4470xf32> to vector<8x4082xf32>
    %c8_74 = arith.constant 8 : index
    %c0_75 = arith.constant 0 : index
    %131 = vector.load %arg11[%c8_74, %c0_75] : memref<72x4082xf32, #tpu.memory_space<vmem>>, vector<8x4082xf32>
    tpu.vector_store %arg11[%c8_74, %c0_75], %130 {strides = array<i32>} : memref<72x4082xf32, #tpu.memory_space<vmem>>, vector<8x4082xf32>,
    %132 = vector.extract_strided_slice %127 {offsets = [0, 4], sizes = [8, 4082], strides = [1, 1]} : vector<8x4470xf32> to vector<8x4082xf32>
    %c16_76 = arith.constant 16 : index
    %c0_77 = arith.constant 0 : index
    %133 = vector.load %arg11[%c16_76, %c0_77] : memref<72x4082xf32, #tpu.memory_space<vmem>>, vector<8x4082xf32>
    tpu.vector_store %arg11[%c16_76, %c0_77], %132 {strides = array<i32>} : memref<72x4082xf32, #tpu.memory_space<vmem>>, vector<8x4082xf32>,
    %134 = vector.extract_strided_slice %127 {offsets = [0, 192], sizes = [8, 4082], strides = [1, 1]} : vector<8x4470xf32> to vector<8x4082xf32>
    %c24_78 = arith.constant 24 : index
    %c0_79 = arith.constant 0 : index
    %135 = vector.load %arg11[%c24_78, %c0_79] : memref<72x4082xf32, #tpu.memory_space<vmem>>, vector<8x4082xf32>
    tpu.vector_store %arg11[%c24_78, %c0_79], %134 {strides = array<i32>} : memref<72x4082xf32, #tpu.memory_space<vmem>>, vector<8x4082xf32>,
    %136 = vector.extract_strided_slice %127 {offsets = [0, 194], sizes = [8, 4082], strides = [1, 1]} : vector<8x4470xf32> to vector<8x4082xf32>
    %c32_80 = arith.constant 32 : index
    %c0_81 = arith.constant 0 : index
    %137 = vector.load %arg11[%c32_80, %c0_81] : memref<72x4082xf32, #tpu.memory_space<vmem>>, vector<8x4082xf32>
    tpu.vector_store %arg11[%c32_80, %c0_81], %136 {strides = array<i32>} : memref<72x4082xf32, #tpu.memory_space<vmem>>, vector<8x4082xf32>,
    %138 = vector.extract_strided_slice %127 {offsets = [0, 196], sizes = [8, 4082], strides = [1, 1]} : vector<8x4470xf32> to vector<8x4082xf32>
    %c40_82 = arith.constant 40 : index
    %c0_83 = arith.constant 0 : index
    %139 = vector.load %arg11[%c40_82, %c0_83] : memref<72x4082xf32, #tpu.memory_space<vmem>>, vector<8x4082xf32>
    tpu.vector_store %arg11[%c40_82, %c0_83], %138 {strides = array<i32>} : memref<72x4082xf32, #tpu.memory_space<vmem>>, vector<8x4082xf32>,
    %140 = vector.extract_strided_slice %127 {offsets = [0, 384], sizes = [8, 4082], strides = [1, 1]} : vector<8x4470xf32> to vector<8x4082xf32>
    %c48_84 = arith.constant 48 : index
    %c0_85 = arith.constant 0 : index
    %141 = vector.load %arg11[%c48_84, %c0_85] : memref<72x4082xf32, #tpu.memory_space<vmem>>, vector<8x4082xf32>
    tpu.vector_store %arg11[%c48_84, %c0_85], %140 {strides = array<i32>} : memref<72x4082xf32, #tpu.memory_space<vmem>>, vector<8x4082xf32>,
    %142 = vector.extract_strided_slice %127 {offsets = [0, 386], sizes = [8, 4082], strides = [1, 1]} : vector<8x4470xf32> to vector<8x4082xf32>
    %c56_86 = arith.constant 56 : index
    %c0_87 = arith.constant 0 : index
    %143 = vector.load %arg11[%c56_86, %c0_87] : memref<72x4082xf32, #tpu.memory_space<vmem>>, vector<8x4082xf32>
    tpu.vector_store %arg11[%c56_86, %c0_87], %142 {strides = array<i32>} : memref<72x4082xf32, #tpu.memory_space<vmem>>, vector<8x4082xf32>,
    %144 = vector.extract_strided_slice %127 {offsets = [0, 388], sizes = [8, 4082], strides = [1, 1]} : vector<8x4470xf32> to vector<8x4082xf32>
    %c64_88 = arith.constant 64 : index
    %c0_89 = arith.constant 0 : index
    %145 = vector.load %arg11[%c64_88, %c0_89] : memref<72x4082xf32, #tpu.memory_space<vmem>>, vector<8x4082xf32>
    tpu.vector_store %arg11[%c64_88, %c0_89], %144 {strides = array<i32>} : memref<72x4082xf32, #tpu.memory_space<vmem>>, vector<8x4082xf32>,
    %c0_90 = arith.constant 0 : index
    %c0_91 = arith.constant 0 : index
    %146 = vector.load %arg6[%c0_90, %c0_91] : memref<16x72xf32, #tpu.memory_space<vmem>>, vector<16x72xf32>
    %c0_92 = arith.constant 0 : index
    %c0_93 = arith.constant 0 : index
    %147 = vector.load %arg11[%c0_92, %c0_93] : memref<72x4082xf32, #tpu.memory_space<vmem>>, vector<72x4082xf32>
    %cst_94 = arith.constant dense<0.000000e+00> : vector<16x4082xf32>
    %148 = tpu.matmul %146, %147, %cst_94 {dimension_numbers = #tpu.dot_dimension_numbers<[1], [0], [0], [1], [0, 0, 1, 1], [], []>} : vector<16x72xf32>, vector<72x4082xf32>, vector<16x4082xf32> -> vector<16x4082xf32>
    %c0_95 = arith.constant 0 : index
    %c0_96 = arith.constant 0 : index
    %149 = vector.load %arg7[%c0_95, %c0_96] : memref<16x1xf32, #tpu.memory_space<vmem>>, vector<16x1xf32>
    %150 = vector.broadcast %149 : vector<16x1xf32> to vector<16x4082xf32>
    %151 = arith.addf %148, %150 : vector<16x4082xf32>
    %cst_97 = arith.constant 0.000000e+00 : f32
    %152 = vector.broadcast %cst_97 : f32 to vector<16x4082xf32>
    %153 = arith.maximumf %151, %152 : vector<16x4082xf32>
    %154 = vector.extract_strided_slice %153 {offsets = [0, 0], sizes = [16, 2930], strides = [1, 1]} : vector<16x4082xf32> to vector<16x2930xf32>
    %155 = vector.extract_strided_slice %153 {offsets = [0, 576], sizes = [16, 2930], strides = [1, 1]} : vector<16x4082xf32> to vector<16x2930xf32>
    %156 = arith.maximumf %154, %155 : vector<16x2930xf32>
    %157 = vector.extract_strided_slice %153 {offsets = [0, 1152], sizes = [16, 2930], strides = [1, 1]} : vector<16x4082xf32> to vector<16x2930xf32>
    %158 = arith.maximumf %156, %157 : vector<16x2930xf32>
    %159 = vector.extract_strided_slice %158 {offsets = [0, 0], sizes = [16, 2922], strides = [1, 1]} : vector<16x2930xf32> to vector<16x2922xf32>
    %160 = vector.extract_strided_slice %158 {offsets = [0, 4], sizes = [16, 2922], strides = [1, 1]} : vector<16x2930xf32> to vector<16x2922xf32>
    %161 = arith.maximumf %159, %160 : vector<16x2922xf32>
    %162 = vector.extract_strided_slice %158 {offsets = [0, 8], sizes = [16, 2922], strides = [1, 1]} : vector<16x2930xf32> to vector<16x2922xf32>
    %163 = arith.maximumf %161, %162 : vector<16x2922xf32>
    %164 = vector.extract_strided_slice %163 {offsets = [0, 0], sizes = [16, 1], strides = [1, 1]} : vector<16x2922xf32> to vector<16x1xf32>
    %165 = vector.shape_cast %164 : vector<16x1xf32> to vector<1x16x1xf32>
    %c0_98 = arith.constant 0 : index
    %c0_99 = arith.constant 0 : index
    %c0_100 = arith.constant 0 : index
    %166 = vector.load %arg8[%c0_98, %c0_99, %c0_100] : memref<1x16x12xf32, #tpu.memory_space<vmem>>, vector<1x16x1xf32>
    tpu.vector_store %arg8[%c0_98, %c0_99, %c0_100], %165 {strides = array<i32>} : memref<1x16x12xf32, #tpu.memory_space<vmem>>, vector<1x16x1xf32>,
    %167 = vector.extract_strided_slice %163 {offsets = [0, 8], sizes = [16, 1], strides = [1, 1]} : vector<16x2922xf32> to vector<16x1xf32>
    %168 = vector.shape_cast %167 : vector<16x1xf32> to vector<1x16x1xf32>
    %c0_101 = arith.constant 0 : index
    %c0_102 = arith.constant 0 : index
    %c1_103 = arith.constant 1 : index
    %169 = vector.load %arg8[%c0_101, %c0_102, %c1_103] : memref<1x16x12xf32, #tpu.memory_space<vmem>>, vector<1x16x1xf32>
    tpu.vector_store %arg8[%c0_101, %c0_102, %c1_103], %168 {strides = array<i32>} : memref<1x16x12xf32, #tpu.memory_space<vmem>>, vector<1x16x1xf32>,
    %170 = vector.extract_strided_slice %163 {offsets = [0, 16], sizes = [16, 1], strides = [1, 1]} : vector<16x2922xf32> to vector<16x1xf32>
    %171 = vector.shape_cast %170 : vector<16x1xf32> to vector<1x16x1xf32>
    %c0_104 = arith.constant 0 : index
    %c0_105 = arith.constant 0 : index
    %c2_106 = arith.constant 2 : index
    %172 = vector.load %arg8[%c0_104, %c0_105, %c2_106] : memref<1x16x12xf32, #tpu.memory_space<vmem>>, vector<1x16x1xf32>
    tpu.vector_store %arg8[%c0_104, %c0_105, %c2_106], %171 {strides = array<i32>} : memref<1x16x12xf32, #tpu.memory_space<vmem>>, vector<1x16x1xf32>,
    %173 = vector.extract_strided_slice %163 {offsets = [0, 24], sizes = [16, 1], strides = [1, 1]} : vector<16x2922xf32> to vector<16x1xf32>
    %174 = vector.shape_cast %173 : vector<16x1xf32> to vector<1x16x1xf32>
    %c0_107 = arith.constant 0 : index
    %c0_108 = arith.constant 0 : index
    %c3_109 = arith.constant 3 : index
    %175 = vector.load %arg8[%c0_107, %c0_108, %c3_109] : memref<1x16x12xf32, #tpu.memory_space<vmem>>, vector<1x16x1xf32>
    tpu.vector_store %arg8[%c0_107, %c0_108, %c3_109], %174 {strides = array<i32>} : memref<1x16x12xf32, #tpu.memory_space<vmem>>, vector<1x16x1xf32>,
    %176 = vector.extract_strided_slice %163 {offsets = [0, 32], sizes = [16, 1], strides = [1, 1]} : vector<16x2922xf32> to vector<16x1xf32>
    %177 = vector.shape_cast %176 : vector<16x1xf32> to vector<1x16x1xf32>
    %c0_110 = arith.constant 0 : index
    %c0_111 = arith.constant 0 : index
    %c4_112 = arith.constant 4 : index
    %178 = vector.load %arg8[%c0_110, %c0_111, %c4_112] : memref<1x16x12xf32, #tpu.memory_space<vmem>>, vector<1x16x1xf32>
    tpu.vector_store %arg8[%c0_110, %c0_111, %c4_112], %177 {strides = array<i32>} : memref<1x16x12xf32, #tpu.memory_space<vmem>>, vector<1x16x1xf32>,
    %179 = vector.extract_strided_slice %163 {offsets = [0, 40], sizes = [16, 1], strides = [1, 1]} : vector<16x2922xf32> to vector<16x1xf32>
    %180 = vector.shape_cast %179 : vector<16x1xf32> to vector<1x16x1xf32>
    %c0_113 = arith.constant 0 : index
    %c0_114 = arith.constant 0 : index
    %c5_115 = arith.constant 5 : index
    %181 = vector.load %arg8[%c0_113, %c0_114, %c5_115] : memref<1x16x12xf32, #tpu.memory_space<vmem>>, vector<1x16x1xf32>
    tpu.vector_store %arg8[%c0_113, %c0_114, %c5_115], %180 {strides = array<i32>} : memref<1x16x12xf32, #tpu.memory_space<vmem>>, vector<1x16x1xf32>,
    %182 = vector.extract_strided_slice %163 {offsets = [0, 2880], sizes = [16, 1], strides = [1, 1]} : vector<16x2922xf32> to vector<16x1xf32>
    %183 = vector.shape_cast %182 : vector<16x1xf32> to vector<1x16x1xf32>
    %c0_116 = arith.constant 0 : index
    %c0_117 = arith.constant 0 : index
    %c6_118 = arith.constant 6 : index
    %184 = vector.load %arg8[%c0_116, %c0_117, %c6_118] : memref<1x16x12xf32, #tpu.memory_space<vmem>>, vector<1x16x1xf32>
    tpu.vector_store %arg8[%c0_116, %c0_117, %c6_118], %183 {strides = array<i32>} : memref<1x16x12xf32, #tpu.memory_space<vmem>>, vector<1x16x1xf32>,
    %185 = vector.extract_strided_slice %163 {offsets = [0, 2888], sizes = [16, 1], strides = [1, 1]} : vector<16x2922xf32> to vector<16x1xf32>
    %186 = vector.shape_cast %185 : vector<16x1xf32> to vector<1x16x1xf32>
    %c0_119 = arith.constant 0 : index
    %c0_120 = arith.constant 0 : index
    %c7_121 = arith.constant 7 : index
    %187 = vector.load %arg8[%c0_119, %c0_120, %c7_121] : memref<1x16x12xf32, #tpu.memory_space<vmem>>, vector<1x16x1xf32>
    tpu.vector_store %arg8[%c0_119, %c0_120, %c7_121], %186 {strides = array<i32>} : memref<1x16x12xf32, #tpu.memory_space<vmem>>, vector<1x16x1xf32>,
    %188 = vector.extract_strided_slice %163 {offsets = [0, 2896], sizes = [16, 1], strides = [1, 1]} : vector<16x2922xf32> to vector<16x1xf32>
    %189 = vector.shape_cast %188 : vector<16x1xf32> to vector<1x16x1xf32>
    %c0_122 = arith.constant 0 : index
    %c0_123 = arith.constant 0 : index
    %c8_124 = arith.constant 8 : index
    %190 = vector.load %arg8[%c0_122, %c0_123, %c8_124] : memref<1x16x12xf32, #tpu.memory_space<vmem>>, vector<1x16x1xf32>
    tpu.vector_store %arg8[%c0_122, %c0_123, %c8_124], %189 {strides = array<i32>} : memref<1x16x12xf32, #tpu.memory_space<vmem>>, vector<1x16x1xf32>,
    %191 = vector.extract_strided_slice %163 {offsets = [0, 2904], sizes = [16, 1], strides = [1, 1]} : vector<16x2922xf32> to vector<16x1xf32>
    %192 = vector.shape_cast %191 : vector<16x1xf32> to vector<1x16x1xf32>
    %c0_125 = arith.constant 0 : index
    %c0_126 = arith.constant 0 : index
    %c9_127 = arith.constant 9 : index
    %193 = vector.load %arg8[%c0_125, %c0_126, %c9_127] : memref<1x16x12xf32, #tpu.memory_space<vmem>>, vector<1x16x1xf32>
    tpu.vector_store %arg8[%c0_125, %c0_126, %c9_127], %192 {strides = array<i32>} : memref<1x16x12xf32, #tpu.memory_space<vmem>>, vector<1x16x1xf32>,
    %194 = vector.extract_strided_slice %163 {offsets = [0, 2912], sizes = [16, 1], strides = [1, 1]} : vector<16x2922xf32> to vector<16x1xf32>
    %195 = vector.shape_cast %194 : vector<16x1xf32> to vector<1x16x1xf32>
    %c0_128 = arith.constant 0 : index
    %c0_129 = arith.constant 0 : index
    %c10_130 = arith.constant 10 : index
    %196 = vector.load %arg8[%c0_128, %c0_129, %c10_130] : memref<1x16x12xf32, #tpu.memory_space<vmem>>, vector<1x16x1xf32>
    tpu.vector_store %arg8[%c0_128, %c0_129, %c10_130], %195 {strides = array<i32>} : memref<1x16x12xf32, #tpu.memory_space<vmem>>, vector<1x16x1xf32>,
    %197 = vector.extract_strided_slice %163 {offsets = [0, 2920], sizes = [16, 1], strides = [1, 1]} : vector<16x2922xf32> to vector<16x1xf32>
    %198 = vector.shape_cast %197 : vector<16x1xf32> to vector<1x16x1xf32>
    %c0_131 = arith.constant 0 : index
    %c0_132 = arith.constant 0 : index
    %c11_133 = arith.constant 11 : index
    %199 = vector.load %arg8[%c0_131, %c0_132, %c11_133] : memref<1x16x12xf32, #tpu.memory_space<vmem>>, vector<1x16x1xf32>
    tpu.vector_store %arg8[%c0_131, %c0_132, %c11_133], %198 {strides = array<i32>} : memref<1x16x12xf32, #tpu.memory_space<vmem>>, vector<1x16x1xf32>,
    return
  }
  func.func @transform_0(%arg0: i32) -> (i32, i32, i32) {
    %c0_i32 = arith.constant 0 : i32
    %c0_i32_0 = arith.constant 0 : i32
    %c0_i32_1 = arith.constant 0 : i32
    return %arg0, %c0_i32, %c0_i32_0 : i32, i32, i32
  }
  func.func @transform_1(%arg0: i32) -> (i32, i32) {
    %c0_i32 = arith.constant 0 : i32
    %c0_i32_0 = arith.constant 0 : i32
    %c0_i32_1 = arith.constant 0 : i32
    return %c0_i32, %c0_i32_0 : i32, i32
  }
  func.func @transform_2(%arg0: i32) -> (i32, i32) {
    %c0_i32 = arith.constant 0 : i32
    %c0_i32_0 = arith.constant 0 : i32
    %c0_i32_1 = arith.constant 0 : i32
    return %c0_i32, %c0_i32_0 : i32, i32
  }
  func.func @transform_3(%arg0: i32) -> (i32, i32) {
    %c0_i32 = arith.constant 0 : i32
    %c0_i32_0 = arith.constant 0 : i32
    %c0_i32_1 = arith.constant 0 : i32
    return %c0_i32, %c0_i32_0 : i32, i32
  }
  func.func @transform_4(%arg0: i32) -> (i32, i32) {
    %c0_i32 = arith.constant 0 : i32
    %c0_i32_0 = arith.constant 0 : i32
    %c0_i32_1 = arith.constant 0 : i32
    return %c0_i32, %c0_i32_0 : i32, i32
  }
  func.func @transform_5(%arg0: i32) -> (i32, i32) {
    %c0_i32 = arith.constant 0 : i32
    %c0_i32_0 = arith.constant 0 : i32
    %c0_i32_1 = arith.constant 0 : i32
    return %c0_i32, %c0_i32_0 : i32, i32
  }
  func.func @transform_6(%arg0: i32) -> (i32, i32) {
    %c0_i32 = arith.constant 0 : i32
    %c0_i32_0 = arith.constant 0 : i32
    %c0_i32_1 = arith.constant 0 : i32
    return %c0_i32, %c0_i32_0 : i32, i32
  }
  func.func @transform_7(%arg0: i32) -> (i32, i32, i32) {
    %c0_i32 = arith.constant 0 : i32
    %c0_i32_0 = arith.constant 0 : i32
    %c0_i32_1 = arith.constant 0 : i32
    return %arg0, %c0_i32, %c0_i32_0 : i32, i32, i32
  }
}

</mosaic_0001>

<llo_original>
// kernel: emotion_encoder_forward.1
$region0: #{emotion_encoder_forward.1}
  #allocation0 [shape = 'u32[]', space=smem, size = 0x4, offset = 0x4, fixed_abs, tag = 'smem constant byte address 0x4 - core index']
  #allocation1 [shape = 'u32[144,128]{1,0:T(1,128)}', space=vmem, size = 0x12000, scoped, tag = 'internal scratch']
  #allocation2 [shape = 'f32[25,4860]{1,0:T(8,128)}', space=vmem, size = 0x98000, scoped, tag = 'scratch operand']
  #allocation3 [shape = 'f32[200,4600]{1,0:T(8,128)}', space=vmem, size = 0x384000, scoped, tag = 'scratch operand']
  #allocation4 [shape = 'f32[72,4082]{1,0:T(8,128)}', space=vmem, size = 0x120000, scoped, tag = 'scratch operand']
  %s0 = inlined_call_operand.vmem [shape: f32[2,1,5120], index: 0, kind: input, shape index: {}]
  %s1 = inlined_call_operand.vmem [shape: f32[8,25], index: 1, kind: input, shape index: {}]
  %s2 = inlined_call_operand.vmem [shape: f32[8,1], index: 2, kind: input, shape index: {}]
  %s3 = inlined_call_operand.vmem [shape: f32[8,200], index: 3, kind: input, shape index: {}]
  %s4 = inlined_call_operand.vmem [shape: f32[8,1], index: 4, kind: input, shape index: {}]
  %s5 = inlined_call_operand.vmem [shape: f32[16,72], index: 5, kind: input, shape index: {}]
  %s6 = inlined_call_operand.vmem [shape: f32[16,1], index: 6, kind: input, shape index: {}]
  %s7 = inlined_call_operand.vmem [shape: f32[2,16,12], index: 7, kind: output, shape index: {}]
  %s8 = sld [smem:[#allocation0]]
  $region61: #{emotion_encoder_forward.1} parent=0
    _
  %s10 = ssub.s32 1, %s8
  %s11 = scalar_select 0, %s10, %s8
  loop: start=0, step=1, limit=4
  $region2: #{emotion_encoder_forward.1} parent=0 // loop_pre_header
    _
  $region3: #{emotion_encoder_forward.1} parent=0 // loop_header
    %s13 = sphi 0, %s17
    %p14 = scmp.ge.s32.totalorder %s13, 4
    %s23 = sphi 0, %s25
    %s26 = sphi 0, %s23
    %s27 = sphi 0, %s26
    %s43 = sphi 0, %s27
    %s47 = sphi 0, %s47
    %s49 = sphi 0, %s47
    %s50 = sphi 0, %s49
    %s64 = sphi 0, %s50
    %s68 = sphi 0, %s68
    %s70 = sphi 0, %s68
    %s71 = sphi 0, %s70
    %s85 = sphi 0, %s71
    %s89 = sphi 0, %s89
    %s91 = sphi 0, %s89
    %s92 = sphi 0, %s91
    %s106 = sphi 0, %s92
    %s110 = sphi 0, %s110
    %s112 = sphi 0, %s110
    %s113 = sphi 0, %s112
    %s127 = sphi 0, %s113
    %s131 = sphi 0, %s131
    %s133 = sphi 0, %s131
    %s134 = sphi 0, %s133
    %s148 = sphi 0, %s134
    %s152 = sphi 0, %s152
    %s154 = sphi 0, %s152
    %s155 = sphi 0, %s154
    %s169 = sphi 0, %s155
    %s175 = sphi 0, %s177
    %s178 = sphi 0, %s175
    %s179 = sphi 0, %s178
    %s195 = sphi 0, %s179
  $region4: #{emotion_encoder_forward.1} parent=0 // loop_header_branch
    %16 = sbr.rel (%p14) target = $region8
  $region5: #{emotion_encoder_forward.1} parent=0 // loop_body
    %s18 = ssub.s32 %s13, 1
    %s19 = ssub.s32 %s13, 2
    %s20 = sadd.s32 %s13, 1
    %s21 = ssub.s32 %s13, %s20
    %p22 = scmp.eq.s32.totalorder %s21, 0
    %s24 = sadd.s32 %s23, 1
    %s25 = scalar_select %p22, %s23, %s24
    %p28 = pneg %p22
    %p29 = scmp.eq.s32.totalorder %s13, 1
    %p30 = por %p28, %p29
    %p31 = scmp.ne.s32.totalorder %s23, %s26
    %p32 = scmp.eq.s32.totalorder %s13, 0
    %p33 = por %p31, %p32
    %p34 = scmp.ne.s32.totalorder %s23, %s26
    %p35 = scmp.eq.s32.totalorder %s18, 1
    %p36 = por %p34, %p35
    %p37 = scmp.ne.s32.totalorder %s26, %s27
    %p38 = scmp.eq.s32.totalorder %s18, 0
    %p39 = por %p37, %p38
    %p40 = scmp.ne.s32.totalorder %s26, %s27
    %p41 = scmp.eq.s32.totalorder %s19, 1
    %p42 = por %p40, %p41
    %p44 = scmp.ne.s32.totalorder %s27, %s43
    %p45 = scmp.eq.s32.totalorder %s19, 0
    %p46 = por %p44, %p45
    %s48 = sadd.s32 %s47, 1
    %p51 = scmp.eq.s32.totalorder %s13, 1
    %p52 = scmp.ne.s32.totalorder %s47, %s49
    %p53 = scmp.eq.s32.totalorder %s13, 0
    %p54 = por %p52, %p53
    %p55 = scmp.ne.s32.totalorder %s47, %s49
    %p56 = scmp.eq.s32.totalorder %s18, 1
    %p57 = por %p55, %p56
    %p58 = scmp.ne.s32.totalorder %s49, %s50
    %p59 = scmp.eq.s32.totalorder %s18, 0
    %p60 = por %p58, %p59
    %p61 = scmp.ne.s32.totalorder %s49, %s50
    %p62 = scmp.eq.s32.totalorder %s19, 1
    %p63 = por %p61, %p62
    %p65 = scmp.ne.s32.totalorder %s50, %s64
    %p66 = scmp.eq.s32.totalorder %s19, 0
    %p67 = por %p65, %p66
    %s69 = sadd.s32 %s68, 1
    %p72 = scmp.eq.s32.totalorder %s13, 1
    %p73 = scmp.ne.s32.totalorder %s68, %s70
    %p74 = scmp.eq.s32.totalorder %s13, 0
    %p75 = por %p73, %p74
    %p76 = scmp.ne.s32.totalorder %s68, %s70
    %p77 = scmp.eq.s32.totalorder %s18, 1
    %p78 = por %p76, %p77
    %p79 = scmp.ne.s32.totalorder %s70, %s71
    %p80 = scmp.eq.s32.totalorder %s18, 0
    %p81 = por %p79, %p80
    %p82 = scmp.ne.s32.totalorder %s70, %s71
    %p83 = scmp.eq.s32.totalorder %s19, 1
    %p84 = por %p82, %p83
    %p86 = scmp.ne.s32.totalorder %s71, %s85
    %p87 = scmp.eq.s32.totalorder %s19, 0
    %p88 = por %p86, %p87
    %s90 = sadd.s32 %s89, 1
    %p93 = scmp.eq.s32.totalorder %s13, 1
    %p94 = scmp.ne.s32.totalorder %s89, %s91
    %p95 = scmp.eq.s32.totalorder %s13, 0
    %p96 = por %p94, %p95
    %p97 = scmp.ne.s32.totalorder %s89, %s91
    %p98 = scmp.eq.s32.totalorder %s18, 1
    %p99 = por %p97, %p98
    %p100 = scmp.ne.s32.totalorder %s91, %s92
    %p101 = scmp.eq.s32.totalorder %s18, 0
    %p102 = por %p100, %p101
    %p103 = scmp.ne.s32.totalorder %s91, %s92
    %p104 = scmp.eq.s32.totalorder %s19, 1
    %p105 = por %p103, %p104
    %p107 = scmp.ne.s32.totalorder %s92, %s106
    %p108 = scmp.eq.s32.totalorder %s19, 0
    %p109 = por %p107, %p108
    %s111 = sadd.s32 %s110, 1
    %p114 = scmp.eq.s32.totalorder %s13, 1
    %p115 = scmp.ne.s32.totalorder %s110, %s112
    %p116 = scmp.eq.s32.totalorder %s13, 0
    %p117 = por %p115, %p116
    %p118 = scmp.ne.s32.totalorder %s110, %s112
    %p119 = scmp.eq.s32.totalorder %s18, 1
    %p120 = por %p118, %p119
    %p121 = scmp.ne.s32.totalorder %s112, %s113
    %p122 = scmp.eq.s32.totalorder %s18, 0
    %p123 = por %p121, %p122
    %p124 = scmp.ne.s32.totalorder %s112, %s113
    %p125 = scmp.eq.s32.totalorder %s19, 1
    %p126 = por %p124, %p125
    %p128 = scmp.ne.s32.totalorder %s113, %s127
    %p129 = scmp.eq.s32.totalorder %s19, 0
    %p130 = por %p128, %p129
    %s132 = sadd.s32 %s131, 1
    %p135 = scmp.eq.s32.totalorder %s13, 1
    %p136 = scmp.ne.s32.totalorder %s131, %s133
    %p137 = scmp.eq.s32.totalorder %s13, 0
    %p138 = por %p136, %p137
    %p139 = scmp.ne.s32.totalorder %s131, %s133
    %p140 = scmp.eq.s32.totalorder %s18, 1
    %p141 = por %p139, %p140
    %p142 = scmp.ne.s32.totalorder %s133, %s134
    %p143 = scmp.eq.s32.totalorder %s18, 0
    %p144 = por %p142, %p143
    %p145 = scmp.ne.s32.totalorder %s133, %s134
    %p146 = scmp.eq.s32.totalorder %s19, 1
    %p147 = por %p145, %p146
    %p149 = scmp.ne.s32.totalorder %s134, %s148
    %p150 = scmp.eq.s32.totalorder %s19, 0
    %p151 = por %p149, %p150
    %s153 = sadd.s32 %s152, 1
    %p156 = scmp.eq.s32.totalorder %s13, 1
    %p157 = scmp.ne.s32.totalorder %s152, %s154
    %p158 = scmp.eq.s32.totalorder %s13, 0
    %p159 = por %p157, %p158
    %p160 = scmp.ne.s32.totalorder %s152, %s154
    %p161 = scmp.eq.s32.totalorder %s18, 1
    %p162 = por %p160, %p161
    %p163 = scmp.ne.s32.totalorder %s154, %s155
    %p164 = scmp.eq.s32.totalorder %s18, 0
    %p165 = por %p163, %p164
    %p166 = scmp.ne.s32.totalorder %s154, %s155
    %p167 = scmp.eq.s32.totalorder %s19, 1
    %p168 = por %p166, %p167
    %p170 = scmp.ne.s32.totalorder %s155, %s169
    %p171 = scmp.eq.s32.totalorder %s19, 0
    %p172 = por %p170, %p171
    %s173 = ssub.s32 %s13, %s20
    %p174 = scmp.eq.s32.totalorder %s173, 0
    %s176 = sadd.s32 %s175, 1
    %s177 = scalar_select %p174, %s175, %s176
    %p180 = pneg %p174
    %p181 = scmp.eq.s32.totalorder %s13, 1
    %p182 = por %p180, %p181
    %p183 = scmp.ne.s32.totalorder %s175, %s178
    %p184 = scmp.eq.s32.totalorder %s13, 0
    %p185 = por %p183, %p184
    %p186 = scmp.ne.s32.totalorder %s175, %s178
    %p187 = scmp.eq.s32.totalorder %s18, 1
    %p188 = por %p186, %p187
    %p189 = scmp.ne.s32.totalorder %s178, %s179
    %p190 = scmp.eq.s32.totalorder %s18, 0
    %p191 = por %p189, %p190
    %p192 = scmp.ne.s32.totalorder %s178, %s179
    %p193 = scmp.eq.s32.totalorder %s19, 1
    %p194 = por %p192, %p193
    %p196 = scmp.ne.s32.totalorder %s179, %s195
    %p197 = scmp.eq.s32.totalorder %s19, 0
    %p198 = por %p196, %p197
    %p199 = scmp.le.s32.totalorder 1, %s13
    %p200 = scmp.lt.s32.totalorder %s13, 3
    %p201 = pnand %p199, %p200
    %p202 = pneg %p201
    // Predicated region
    $region9: #{emotion_encoder_forward.1} parent=5 // pred_check
      _
    $region10: #{emotion_encoder_forward.1} parent=5 // pred_check_branch
      %204 = sbr.rel (%p201) target = $region12
    $region11: #{emotion_encoder_forward.1} parent=5 // pred_region
      %s205 = ssub.s32 %s13, 1
      // Predicated region
      $region13: #{emotion_encoder_forward.1} parent=11 // pred_check
        %p206 = pneg %p60
      $region14: #{emotion_encoder_forward.1} parent=11 // pred_check_branch
        %208 = sbr.rel (%p206) target = $region16
      $region15: #{emotion_encoder_forward.1} parent=11 // pred_region
        _
      $region16: #{emotion_encoder_forward.1} parent=11 // pred_fallthru
        _
      // Predicated region
      $region17: #{emotion_encoder_forward.1} parent=11 // pred_check
        %p209 = pneg %p81
      $region18: #{emotion_encoder_forward.1} parent=11 // pred_check_branch
        %211 = sbr.rel (%p209) target = $region20
      $region19: #{emotion_encoder_forward.1} parent=11 // pred_region
        _
      $region20: #{emotion_encoder_forward.1} parent=11 // pred_fallthru
        _
      // Predicated region
      $region21: #{emotion_encoder_forward.1} parent=11 // pred_check
        %p212 = pneg %p102
      $region22: #{emotion_encoder_forward.1} parent=11 // pred_check_branch
        %214 = sbr.rel (%p212) target = $region24
      $region23: #{emotion_encoder_forward.1} parent=11 // pred_region
        _
      $region24: #{emotion_encoder_forward.1} parent=11 // pred_fallthru
        _
      // Predicated region
      $region25: #{emotion_encoder_forward.1} parent=11 // pred_check
        %p215 = pneg %p123
      $region26: #{emotion_encoder_forward.1} parent=11 // pred_check_branch
        %217 = sbr.rel (%p215) target = $region28
      $region27: #{emotion_encoder_forward.1} parent=11 // pred_region
        _
      $region28: #{emotion_encoder_forward.1} parent=11 // pred_fallthru
        _
      // Predicated region
      $region29: #{emotion_encoder_forward.1} parent=11 // pred_check
        %p218 = pneg %p144
      $region30: #{emotion_encoder_forward.1} parent=11 // pred_check_branch
        %220 = sbr.rel (%p218) target = $region32
      $region31: #{emotion_encoder_forward.1} parent=11 // pred_region
        _
      $region32: #{emotion_encoder_forward.1} parent=11 // pred_fallthru
        _
      // Predicated region
      $region33: #{emotion_encoder_forward.1} parent=11 // pred_check
        %p221 = pneg %p165
      $region34: #{emotion_encoder_forward.1} parent=11 // pred_check_branch
        %223 = sbr.rel (%p221) target = $region36
      $region35: #{emotion_encoder_forward.1} parent=11 // pred_region
        _
      $region36: #{emotion_encoder_forward.1} parent=11 // pred_fallthru
        _
    $region12: #{emotion_encoder_forward.1} parent=5 // pred_fallthru
      _
    %p224 = scmp.lt.s32.totalorder %s13, 2
    // Predicated region
    $region37: #{emotion_encoder_forward.1} parent=5 // pred_check
      %p225 = pneg %p224
    $region38: #{emotion_encoder_forward.1} parent=5 // pred_check_branch
      %227 = sbr.rel (%p225) target = $region40
    $region39: #{emotion_encoder_forward.1} parent=5 // pred_region
      // Predicated region
      $region41: #{emotion_encoder_forward.1} parent=39 // pred_check
        %p228 = pneg %p33
      $region42: #{emotion_encoder_forward.1} parent=39 // pred_check_branch
        %230 = sbr.rel (%p228) target = $region44
      $region43: #{emotion_encoder_forward.1} parent=39 // pred_region
        %p231 = scmp.lt.s32.totalorder %s13, 1
        %s232 = scalar_select %p231, %s13, 1
        %s233 = smul.addr %s232, 40
        %s234 = scalar_lea.vmem %s0, %s233
      $region44: #{emotion_encoder_forward.1} parent=39 // pred_fallthru
        _
    $region40: #{emotion_encoder_forward.1} parent=5 // pred_fallthru
      _
    %p235 = scmp.le.s32.totalorder 1, %s13
    %p236 = scmp.lt.s32.totalorder %s13, 3
    %p237 = pnand %p235, %p236
    %p238 = pneg %p237
    // Predicated region
    $region45: #{emotion_encoder_forward.1} parent=5 // pred_check
      _
    $region46: #{emotion_encoder_forward.1} parent=5 // pred_check_branch
      %240 = sbr.rel (%p237) target = $region48
    $region47: #{emotion_encoder_forward.1} parent=5 // pred_region
      %s241 = ssub.s32 %s13, 1
      %p242 = scmp.lt.s32.totalorder %s18, 1
      %s243 = scalar_select %p242, %s18, 1
      %s244 = smul.addr %s243, 40
      %s245 = scalar_lea.vmem %s0, %s244
      %p246 = pneg %p39
      %p247 = pneg %p36
      %p248 = pneg %p60
      %p249 = pneg %p57
      %p250 = pneg %p81
      %p251 = pneg %p78
      %p252 = pneg %p102
      %p253 = pneg %p99
      %p254 = pneg %p123
      %p255 = pneg %p120
      %p256 = pneg %p144
      %p257 = pneg %p141
      %p258 = pneg %p165
      %p259 = pneg %p162
      %p260 = pneg %p191
      %p261 = pneg %p188
      %p262 = scmp.lt.s32.totalorder %s18, 1
      %s263 = scalar_select %p262, %s18, 1
      %s264 = smul.addr %s263, 2
      %s265 = smul.addr %s264, 8
      %s266 = scalar_lea.vmem %s7, %s265
      %p267 = scmp.lt.s32.totalorder %s18, 1
      %s268 = scalar_select %p267, %s18, 1
      %s269 = smul.addr %s268, 40
      %s270 = scalar_lea.vmem %s0, %s269
      %p271 = scmp.lt.s32.totalorder %s18, 1
      %s272 = scalar_select %p271, %s18, 1
      %s273 = smul.addr %s272, 2
      %s274 = smul.addr %s273, 8
      %s275 = scalar_lea.vmem %s7, %s274
      %v276 = vld [vmem:[%s270] sm:$0xff]
      %v277 = vld [vmem:[%s270 + $0x8] sm:$0xff]
      %v278 = vld [vmem:[%s270 + $0x10] sm:$0xff]
      %v279 = vld [vmem:[%s270 + $0x18] sm:$0xff]
      %v280 = vld [vmem:[%s270 + $0x20] sm:$0xff]
      %281 = vst [vmem:[#allocation2] ss:$8 sm:$0xf] %v276
      %282 = vst [vmem:[#allocation2] ss:$8 sm:$0xf0] %v276
      %s283 = scalar_lea.vmem [#allocation2], 64
      %284 = vst [vmem:[%s283] ss:$8 sm:$0xf] %v277
      %285 = vst [vmem:[%s283] ss:$8 sm:$0xf0] %v277
      %s286 = scalar_lea.vmem [#allocation2], 128
      %287 = vst [vmem:[%s286] ss:$8 sm:$0xf] %v278
      %288 = vst [vmem:[%s286] ss:$8 sm:$0xf0] %v278
      %s289 = scalar_lea.vmem [#allocation2], 192
      %290 = vst [vmem:[%s289] ss:$8 sm:$0xf] %v279
      %291 = vst [vmem:[%s289] ss:$8 sm:$0xf0] %v279
      %v292 = vlaneseq
      %vm293 = vcmp.ge.s32.totalorder %v292, 0
      %vm294 = vcmp.lt.s32.totalorder %v292, 764
      %vm295 = vmand %vm293, %vm294
      %s296 = scalar_lea.vmem [#allocation2], 256
      %297 = vst.msk [vmem:[%s296] ss:$8 sm:$0xf] %vm295, %v280
      %298 = vst.msk [vmem:[%s296] ss:$8 sm:$0x30] %vm295, %v280
      %304 = vrot.lane.b32.xlu0 %v276, 127
      %v305 = vpop.permute.xlu0 %304
      %306 = vrot.lane.b32.xlu0 %v277, 127
      %v307 = vpop.permute.xlu0 %306
      %308 = vrot.lane.b32.xlu0 %v278, 127
      %v309 = vpop.permute.xlu0 %308
      %310 = vrot.lane.b32.xlu0 %v279, 127
      %v311 = vpop.permute.xlu0 %310
      %312 = vrot.lane.b32.xlu0 %v280, 127
      %v313 = vpop.permute.xlu0 %312
      %v314 = vrot.slane %v305, 1
      %v315 = vrot.slane %v307, 1
      %v316 = vrot.slane %v309, 1
      %v317 = vrot.slane %v311, 1
      %v318 = vrot.slane %v313, 1
      %vm319 = vcmask 1046528
      %v320 = vsel %vm319, %v314, %v315
      %vm321 = vcmask 1039360
      %v322 = vsel %vm321, %v305, %v320
      %v323 = vsel %vm319, %v315, %v316
      %v324 = vsel %vm321, %v307, %v323
      %v325 = vsel %vm319, %v316, %v317
      %v326 = vsel %vm321, %v309, %v325
      %v327 = vsel %vm319, %v317, %v318
      %v328 = vsel %vm321, %v311, %v327
      %v329 = vsel %vm321, %v313, %v318
      %s335 = scalar_lea.vmem [#allocation2], 1
      %336 = vst [vmem:[%s335] ss:$8 sm:$0xf] %v322
      %337 = vst [vmem:[%s335] ss:$8 sm:$0xf0] %v322
      %s338 = scalar_lea.vmem [#allocation2], 65
      %339 = vst [vmem:[%s338] ss:$8 sm:$0xf] %v324
      %340 = vst [vmem:[%s338] ss:$8 sm:$0xf0] %v324
      %s341 = scalar_lea.vmem [#allocation2], 129
      %342 = vst [vmem:[%s341] ss:$8 sm:$0xf] %v326
      %343 = vst [vmem:[%s341] ss:$8 sm:$0xf0] %v326
      %s344 = scalar_lea.vmem [#allocation2], 193
      %345 = vst [vmem:[%s344] ss:$8 sm:$0xf] %v328
      %346 = vst [vmem:[%s344] ss:$8 sm:$0xf0] %v328
      %s347 = scalar_lea.vmem [#allocation2], 257
      %348 = vst.msk [vmem:[%s347] ss:$8 sm:$0xf] %vm295, %v329
      %349 = vst.msk [vmem:[%s347] ss:$8 sm:$0x30] %vm295, %v329
      %350 = vrot.lane.b32.xlu0 %v276, 126
      %v351 = vpop.permute.xlu0 %350
      %352 = vrot.lane.b32.xlu0 %v277, 126
      %v353 = vpop.permute.xlu0 %352
      %354 = vrot.lane.b32.xlu0 %v278, 126
      %v355 = vpop.permute.xlu0 %354
      %356 = vrot.lane.b32.xlu0 %v279, 126
      %v357 = vpop.permute.xlu0 %356
      %358 = vrot.lane.b32.xlu0 %v280, 126
      %v359 = vpop.permute.xlu0 %358
      %v360 = vrot.slane %v351, 1
      %v361 = vrot.slane %v353, 1
      %v362 = vrot.slane %v355, 1
      %v363 = vrot.slane %v357, 1
      %v364 = vrot.slane %v359, 1
      %v365 = vsel %vm319, %v360, %v361
      %vm366 = vcmask 1031168
      %v367 = vsel %vm366, %v351, %v365
      %v368 = vsel %vm319, %v361, %v362
      %v369 = vsel %vm366, %v353, %v368
      %v370 = vsel %vm319, %v362, %v363
      %v371 = vsel %vm366, %v355, %v370
      %v372 = vsel %vm319, %v363, %v364
      %v373 = vsel %vm366, %v357, %v372
      %v374 = vsel %vm366, %v359, %v364
      %s380 = scalar_lea.vmem [#allocation2], 2
      %381 = vst [vmem:[%s380] ss:$8 sm:$0xf] %v367
      %382 = vst [vmem:[%s380] ss:$8 sm:$0xf0] %v367
      %s383 = scalar_lea.vmem [#allocation2], 66
      %384 = vst [vmem:[%s383] ss:$8 sm:$0xf] %v369
      %385 = vst [vmem:[%s383] ss:$8 sm:$0xf0] %v369
      %s386 = scalar_lea.vmem [#allocation2], 130
      %387 = vst [vmem:[%s386] ss:$8 sm:$0xf] %v371
      %388 = vst [vmem:[%s386] ss:$8 sm:$0xf0] %v371
      %s389 = scalar_lea.vmem [#allocation2], 194
      %390 = vst [vmem:[%s389] ss:$8 sm:$0xf] %v373
      %391 = vst [vmem:[%s389] ss:$8 sm:$0xf0] %v373
      %s392 = scalar_lea.vmem [#allocation2], 258
      %393 = vst.msk [vmem:[%s392] ss:$8 sm:$0xf] %vm295, %v374
      %394 = vst.msk [vmem:[%s392] ss:$8 sm:$0x30] %vm295, %v374
      %395 = vrot.lane.b32.xlu0 %v276, 125
      %v396 = vpop.permute.xlu0 %395
      %397 = vrot.lane.b32.xlu0 %v277, 125
      %v398 = vpop.permute.xlu0 %397
      %399 = vrot.lane.b32.xlu0 %v278, 125
      %v400 = vpop.permute.xlu0 %399
      %401 = vrot.lane.b32.xlu0 %v279, 125
      %v402 = vpop.permute.xlu0 %401
      %403 = vrot.lane.b32.xlu0 %v280, 125
      %v404 = vpop.permute.xlu0 %403
      %v405 = vrot.slane %v396, 1
      %v406 = vrot.slane %v398, 1
      %v407 = vrot.slane %v400, 1
      %v408 = vrot.slane %v402, 1
      %v409 = vrot.slane %v404, 1
      %v410 = vsel %vm319, %v405, %v406
      %vm411 = vcmask 1022976
      %v412 = vsel %vm411, %v396, %v410
      %v413 = vsel %vm319, %v406, %v407
      %v414 = vsel %vm411, %v398, %v413
      %v415 = vsel %vm319, %v407, %v408
      %v416 = vsel %vm411, %v400, %v415
      %v417 = vsel %vm319, %v408, %v409
      %v418 = vsel %vm411, %v402, %v417
      %v419 = vsel %vm411, %v404, %v409
      %s425 = scalar_lea.vmem [#allocation2], 3
      %426 = vst [vmem:[%s425] ss:$8 sm:$0xf] %v412
      %427 = vst [vmem:[%s425] ss:$8 sm:$0xf0] %v412
      %s428 = scalar_lea.vmem [#allocation2], 67
      %429 = vst [vmem:[%s428] ss:$8 sm:$0xf] %v414
      %430 = vst [vmem:[%s428] ss:$8 sm:$0xf0] %v414
      %s431 = scalar_lea.vmem [#allocation2], 131
      %432 = vst [vmem:[%s431] ss:$8 sm:$0xf] %v416
      %433 = vst [vmem:[%s431] ss:$8 sm:$0xf0] %v416
      %s434 = scalar_lea.vmem [#allocation2], 195
      %435 = vst [vmem:[%s434] ss:$8 sm:$0xf] %v418
      %436 = vst [vmem:[%s434] ss:$8 sm:$0xf0] %v418
      %s437 = scalar_lea.vmem [#allocation2], 259
      %438 = vst.msk [vmem:[%s437] ss:$8 sm:$0xf] %vm295, %v419
      %439 = vst.msk [vmem:[%s437] ss:$8 sm:$0x30] %vm295, %v419
      %440 = vrot.lane.b32.xlu0 %v276, 124
      %v441 = vpop.permute.xlu0 %440
      %442 = vrot.lane.b32.xlu0 %v277, 124
      %v443 = vpop.permute.xlu0 %442
      %444 = vrot.lane.b32.xlu0 %v278, 124
      %v445 = vpop.permute.xlu0 %444
      %446 = vrot.lane.b32.xlu0 %v279, 124
      %v447 = vpop.permute.xlu0 %446
      %448 = vrot.lane.b32.xlu0 %v280, 124
      %v449 = vpop.permute.xlu0 %448
      %v450 = vrot.slane %v441, 1
      %v451 = vrot.slane %v443, 1
      %v452 = vrot.slane %v445, 1
      %v453 = vrot.slane %v447, 1
      %v454 = vrot.slane %v449, 1
      %v455 = vsel %vm319, %v450, %v451
      %vm456 = vcmask 1014784
      %v457 = vsel %vm456, %v441, %v455
      %v458 = vsel %vm319, %v451, %v452
      %v459 = vsel %vm456, %v443, %v458
      %v460 = vsel %vm319, %v452, %v453
      %v461 = vsel %vm456, %v445, %v460
      %v462 = vsel %vm319, %v453, %v454
      %v463 = vsel %vm456, %v447, %v462
      %v464 = vsel %vm456, %v449, %v454
      %s470 = scalar_lea.vmem [#allocation2], 4
      %471 = vst [vmem:[%s470] ss:$8 sm:$0xf] %v457
      %472 = vst [vmem:[%s470] ss:$8 sm:$0xf0] %v457
      %s473 = scalar_lea.vmem [#allocation2], 68
      %474 = vst [vmem:[%s473] ss:$8 sm:$0xf] %v459
      %475 = vst [vmem:[%s473] ss:$8 sm:$0xf0] %v459
      %s476 = scalar_lea.vmem [#allocation2], 132
      %477 = vst [vmem:[%s476] ss:$8 sm:$0xf] %v461
      %478 = vst [vmem:[%s476] ss:$8 sm:$0xf0] %v461
      %s479 = scalar_lea.vmem [#allocation2], 196
      %480 = vst [vmem:[%s479] ss:$8 sm:$0xf] %v463
      %481 = vst [vmem:[%s479] ss:$8 sm:$0xf0] %v463
      %s482 = scalar_lea.vmem [#allocation2], 260
      %483 = vst.msk [vmem:[%s482] ss:$8 sm:$0xf] %vm295, %v464
      %484 = vst.msk [vmem:[%s482] ss:$8 sm:$0x30] %vm295, %v464
      %485 = vrot.lane.b32.xlu0 %v276, 64
      %v486 = vpop.permute.xlu0 %485
      %487 = vrot.lane.b32.xlu0 %v277, 64
      %v488 = vpop.permute.xlu0 %487
      %489 = vrot.lane.b32.xlu0 %v278, 64
      %v490 = vpop.permute.xlu0 %489
      %491 = vrot.lane.b32.xlu0 %v279, 64
      %v492 = vpop.permute.xlu0 %491
      %493 = vrot.lane.b32.xlu0 %v280, 64
      %v494 = vpop.permute.xlu0 %493
      %v495 = vrot.slane %v486, 1
      %v496 = vrot.slane %v488, 1
      %v497 = vrot.slane %v490, 1
      %v498 = vrot.slane %v492, 1
      %v499 = vrot.slane %v494, 1
      %v500 = vsel %vm319, %v495, %v496
      %vm501 = vcmask 523264
      %v502 = vsel %vm501, %v486, %v500
      %v503 = vsel %vm319, %v496, %v497
      %v504 = vsel %vm501, %v488, %v503
      %v505 = vsel %vm319, %v497, %v498
      %v506 = vsel %vm501, %v490, %v505
      %v507 = vsel %vm319, %v498, %v499
      %v508 = vsel %vm501, %v492, %v507
      %v509 = vsel %vm501, %v494, %v499
      %s515 = scalar_lea.vmem [#allocation2], 5
      %516 = vst [vmem:[%s515] ss:$8 sm:$0xf] %v502
      %517 = vst [vmem:[%s515] ss:$8 sm:$0xf0] %v502
      %s518 = scalar_lea.vmem [#allocation2], 69
      %519 = vst [vmem:[%s518] ss:$8 sm:$0xf] %v504
      %520 = vst [vmem:[%s518] ss:$8 sm:$0xf0] %v504
      %s521 = scalar_lea.vmem [#allocation2], 133
      %522 = vst [vmem:[%s521] ss:$8 sm:$0xf] %v506
      %523 = vst [vmem:[%s521] ss:$8 sm:$0xf0] %v506
      %s524 = scalar_lea.vmem [#allocation2], 197
      %525 = vst [vmem:[%s524] ss:$8 sm:$0xf] %v508
      %526 = vst [vmem:[%s524] ss:$8 sm:$0xf0] %v508
      %s527 = scalar_lea.vmem [#allocation2], 261
      %528 = vst.msk [vmem:[%s527] ss:$8 sm:$0xf] %vm295, %v509
      %529 = vst.msk [vmem:[%s527] ss:$8 sm:$0x30] %vm295, %v509
      %530 = vrot.lane.b32.xlu0 %v276, 63
      %v531 = vpop.permute.xlu0 %530
      %532 = vrot.lane.b32.xlu0 %v277, 63
      %v533 = vpop.permute.xlu0 %532
      %534 = vrot.lane.b32.xlu0 %v278, 63
      %v535 = vpop.permute.xlu0 %534
      %536 = vrot.lane.b32.xlu0 %v279, 63
      %v537 = vpop.permute.xlu0 %536
      %538 = vrot.lane.b32.xlu0 %v280, 63
      %v539 = vpop.permute.xlu0 %538
      %v540 = vrot.slane %v531, 1
      %v541 = vrot.slane %v533, 1
      %v542 = vrot.slane %v535, 1
      %v543 = vrot.slane %v537, 1
      %v544 = vrot.slane %v539, 1
      %v545 = vsel %vm319, %v540, %v541
      %vm546 = vcmask 515072
      %v547 = vsel %vm546, %v531, %v545
      %v548 = vsel %vm319, %v541, %v542
      %v549 = vsel %vm546, %v533, %v548
      %v550 = vsel %vm319, %v542, %v543
      %v551 = vsel %vm546, %v535, %v550
      %v552 = vsel %vm319, %v543, %v544
      %v553 = vsel %vm546, %v537, %v552
      %v554 = vsel %vm546, %v539, %v544
      %s560 = scalar_lea.vmem [#allocation2], 6
      %561 = vst [vmem:[%s560] ss:$8 sm:$0xf] %v547
      %562 = vst [vmem:[%s560] ss:$8 sm:$0xf0] %v547
      %s563 = scalar_lea.vmem [#allocation2], 70
      %564 = vst [vmem:[%s563] ss:$8 sm:$0xf] %v549
      %565 = vst [vmem:[%s563] ss:$8 sm:$0xf0] %v549
      %s566 = scalar_lea.vmem [#allocation2], 134
      %567 = vst [vmem:[%s566] ss:$8 sm:$0xf] %v551
      %568 = vst [vmem:[%s566] ss:$8 sm:$0xf0] %v551
      %s569 = scalar_lea.vmem [#allocation2], 198
      %570 = vst [vmem:[%s569] ss:$8 sm:$0xf] %v553
      %571 = vst [vmem:[%s569] ss:$8 sm:$0xf0] %v553
      %s572 = scalar_lea.vmem [#allocation2], 262
      %573 = vst.msk [vmem:[%s572] ss:$8 sm:$0xf] %vm295, %v554
      %574 = vst.msk [vmem:[%s572] ss:$8 sm:$0x30] %vm295, %v554
      %575 = vrot.lane.b32.xlu0 %v276, 62
      %v576 = vpop.permute.xlu0 %575
      %577 = vrot.lane.b32.xlu0 %v277, 62
      %v578 = vpop.permute.xlu0 %577
      %579 = vrot.lane.b32.xlu0 %v278, 62
      %v580 = vpop.permute.xlu0 %579
      %581 = vrot.lane.b32.xlu0 %v279, 62
      %v582 = vpop.permute.xlu0 %581
      %583 = vrot.lane.b32.xlu0 %v280, 62
      %v584 = vpop.permute.xlu0 %583
      %v585 = vrot.slane %v576, 1
      %v586 = vrot.slane %v578, 1
      %v587 = vrot.slane %v580, 1
      %v588 = vrot.slane %v582, 1
      %v589 = vrot.slane %v584, 1
      %v590 = vsel %vm319, %v585, %v586
      %vm591 = vcmask 506880
      %v592 = vsel %vm591, %v576, %v590
      %v593 = vsel %vm319, %v586, %v587
      %v594 = vsel %vm591, %v578, %v593
      %v595 = vsel %vm319, %v587, %v588
      %v596 = vsel %vm591, %v580, %v595
      %v597 = vsel %vm319, %v588, %v589
      %v598 = vsel %vm591, %v582, %v597
      %v599 = vsel %vm591, %v584, %v589
      %s605 = scalar_lea.vmem [#allocation2], 7
      %606 = vst [vmem:[%s605] ss:$8 sm:$0xf] %v592
      %607 = vst [vmem:[%s605] ss:$8 sm:$0xf0] %v592
      %s608 = scalar_lea.vmem [#allocation2], 71
      %609 = vst [vmem:[%s608] ss:$8 sm:$0xf] %v594
      %610 = vst [vmem:[%s608] ss:$8 sm:$0xf0] %v594
      %s611 = scalar_lea.vmem [#allocation2], 135
      %612 = vst [vmem:[%s611] ss:$8 sm:$0xf] %v596
      %613 = vst [vmem:[%s611] ss:$8 sm:$0xf0] %v596
      %s614 = scalar_lea.vmem [#allocation2], 199
      %615 = vst [vmem:[%s614] ss:$8 sm:$0xf] %v598
      %616 = vst [vmem:[%s614] ss:$8 sm:$0xf0] %v598
      %s617 = scalar_lea.vmem [#allocation2], 263
      %618 = vst.msk [vmem:[%s617] ss:$8 sm:$0xf] %vm295, %v599
      %619 = vst.msk [vmem:[%s617] ss:$8 sm:$0x30] %vm295, %v599
      %620 = vrot.lane.b32.xlu0 %v276, 61
      %v621 = vpop.permute.xlu0 %620
      %622 = vrot.lane.b32.xlu0 %v277, 61
      %v623 = vpop.permute.xlu0 %622
      %624 = vrot.lane.b32.xlu0 %v278, 61
      %v625 = vpop.permute.xlu0 %624
      %626 = vrot.lane.b32.xlu0 %v279, 61
      %v627 = vpop.permute.xlu0 %626
      %628 = vrot.lane.b32.xlu0 %v280, 61
      %v629 = vpop.permute.xlu0 %628
      %v630 = vrot.slane %v621, 1
      %v631 = vrot.slane %v623, 1
      %v632 = vrot.slane %v625, 1
      %v633 = vrot.slane %v627, 1
      %v634 = vrot.slane %v629, 1
      %v635 = vsel %vm319, %v630, %v631
      %vm636 = vcmask 498688
      %v637 = vsel %vm636, %v621, %v635
      %v638 = vsel %vm319, %v631, %v632
      %v639 = vsel %vm636, %v623, %v638
      %v640 = vsel %vm319, %v632, %v633
      %v641 = vsel %vm636, %v625, %v640
      %v642 = vsel %vm319, %v633, %v634
      %v643 = vsel %vm636, %v627, %v642
      %v644 = vsel %vm636, %v629, %v634
      %s650 = scalar_lea.vmem [#allocation2], 304
      %651 = vst [vmem:[%s650] ss:$8 sm:$0xf] %v637
      %652 = vst [vmem:[%s650] ss:$8 sm:$0xf0] %v637
      %s653 = scalar_lea.vmem [#allocation2], 368
      %654 = vst [vmem:[%s653] ss:$8 sm:$0xf] %v639
      %655 = vst [vmem:[%s653] ss:$8 sm:$0xf0] %v639
      %s656 = scalar_lea.vmem [#allocation2], 432
      %657 = vst [vmem:[%s656] ss:$8 sm:$0xf] %v641
      %658 = vst [vmem:[%s656] ss:$8 sm:$0xf0] %v641
      %s659 = scalar_lea.vmem [#allocation2], 496
      %660 = vst [vmem:[%s659] ss:$8 sm:$0xf] %v643
      %661 = vst [vmem:[%s659] ss:$8 sm:$0xf0] %v643
      %s662 = scalar_lea.vmem [#allocation2], 560
      %663 = vst.msk [vmem:[%s662] ss:$8 sm:$0xf] %vm295, %v644
      %664 = vst.msk [vmem:[%s662] ss:$8 sm:$0x30] %vm295, %v644
      %665 = vrot.lane.b32.xlu0 %v276, 60
      %v666 = vpop.permute.xlu0 %665
      %667 = vrot.lane.b32.xlu0 %v277, 60
      %v668 = vpop.permute.xlu0 %667
      %669 = vrot.lane.b32.xlu0 %v278, 60
      %v670 = vpop.permute.xlu0 %669
      %671 = vrot.lane.b32.xlu0 %v279, 60
      %v672 = vpop.permute.xlu0 %671
      %673 = vrot.lane.b32.xlu0 %v280, 60
      %v674 = vpop.permute.xlu0 %673
      %v675 = vrot.slane %v666, 1
      %v676 = vrot.slane %v668, 1
      %v677 = vrot.slane %v670, 1
      %v678 = vrot.slane %v672, 1
      %v679 = vrot.slane %v674, 1
      %v680 = vsel %vm319, %v675, %v676
      %vm681 = vcmask 490496
      %v682 = vsel %vm681, %v666, %v680
      %v683 = vsel %vm319, %v676, %v677
      %v684 = vsel %vm681, %v668, %v683
      %v685 = vsel %vm319, %v677, %v678
      %v686 = vsel %vm681, %v670, %v685
      %v687 = vsel %vm319, %v678, %v679
      %v688 = vsel %vm681, %v672, %v687
      %v689 = vsel %vm681, %v674, %v679
      %s695 = scalar_lea.vmem [#allocation2], 305
      %696 = vst [vmem:[%s695] ss:$8 sm:$0xf] %v682
      %697 = vst [vmem:[%s695] ss:$8 sm:$0xf0] %v682
      %s698 = scalar_lea.vmem [#allocation2], 369
      %699 = vst [vmem:[%s698] ss:$8 sm:$0xf] %v684
      %700 = vst [vmem:[%s698] ss:$8 sm:$0xf0] %v684
      %s701 = scalar_lea.vmem [#allocation2], 433
      %702 = vst [vmem:[%s701] ss:$8 sm:$0xf] %v686
      %703 = vst [vmem:[%s701] ss:$8 sm:$0xf0] %v686
      %s704 = scalar_lea.vmem [#allocation2], 497
      %705 = vst [vmem:[%s704] ss:$8 sm:$0xf] %v688
      %706 = vst [vmem:[%s704] ss:$8 sm:$0xf0] %v688
      %s707 = scalar_lea.vmem [#allocation2], 561
      %708 = vst.msk [vmem:[%s707] ss:$8 sm:$0xf] %vm295, %v689
      %709 = vst.msk [vmem:[%s707] ss:$8 sm:$0x30] %vm295, %v689
      %v710 = vrot.slane %v276, 1
      %v711 = vrot.slane %v277, 1
      %v712 = vrot.slane %v278, 1
      %v713 = vrot.slane %v279, 1
      %v714 = vrot.slane %v280, 1
      %v715 = vsel %vm319, %v710, %v711
      %v716 = vsel %vm319, %v711, %v712
      %v717 = vsel %vm319, %v712, %v713
      %v718 = vsel %vm319, %v713, %v714
      %s724 = scalar_lea.vmem [#allocation2], 306
      %725 = vst [vmem:[%s724] ss:$8 sm:$0xf] %v715
      %726 = vst [vmem:[%s724] ss:$8 sm:$0xf0] %v715
      %s727 = scalar_lea.vmem [#allocation2], 370
      %728 = vst [vmem:[%s727] ss:$8 sm:$0xf] %v716
      %729 = vst [vmem:[%s727] ss:$8 sm:$0xf0] %v716
      %s730 = scalar_lea.vmem [#allocation2], 434
      %731 = vst [vmem:[%s730] ss:$8 sm:$0xf] %v717
      %732 = vst [vmem:[%s730] ss:$8 sm:$0xf0] %v717
      %s733 = scalar_lea.vmem [#allocation2], 498
      %734 = vst [vmem:[%s733] ss:$8 sm:$0xf] %v718
      %735 = vst [vmem:[%s733] ss:$8 sm:$0xf0] %v718
      %s736 = scalar_lea.vmem [#allocation2], 562
      %737 = vst.msk [vmem:[%s736] ss:$8 sm:$0xf] %vm295, %v714
      %738 = vst.msk [vmem:[%s736] ss:$8 sm:$0x30] %vm295, %v714
      %v739 = vrot.slane %v305, 2
      %v740 = vrot.slane %v307, 2
      %v741 = vrot.slane %v309, 2
      %v742 = vrot.slane %v311, 2
      %v743 = vrot.slane %v313, 2
      %vm744 = vcmask 1045504
      %v745 = vsel %vm744, %v739, %v740
      %v746 = vsel %vm321, %v320, %v745
      %v747 = vsel %vm744, %v740, %v741
      %v748 = vsel %vm321, %v323, %v747
      %v749 = vsel %vm744, %v741, %v742
      %v750 = vsel %vm321, %v325, %v749
      %v751 = vsel %vm744, %v742, %v743
      %v752 = vsel %vm321, %v327, %v751
      %v753 = vsel %vm321, %v318, %v743
      %s759 = scalar_lea.vmem [#allocation2], 307
      %760 = vst [vmem:[%s759] ss:$8 sm:$0xf] %v746
      %761 = vst [vmem:[%s759] ss:$8 sm:$0xf0] %v746
      %s762 = scalar_lea.vmem [#allocation2], 371
      %763 = vst [vmem:[%s762] ss:$8 sm:$0xf] %v748
      %764 = vst [vmem:[%s762] ss:$8 sm:$0xf0] %v748
      %s765 = scalar_lea.vmem [#allocation2], 435
      %766 = vst [vmem:[%s765] ss:$8 sm:$0xf] %v750
      %767 = vst [vmem:[%s765] ss:$8 sm:$0xf0] %v750
      %s768 = scalar_lea.vmem [#allocation2], 499
      %769 = vst [vmem:[%s768] ss:$8 sm:$0xf] %v752
      %770 = vst [vmem:[%s768] ss:$8 sm:$0xf0] %v752
      %s771 = scalar_lea.vmem [#allocation2], 563
      %772 = vst.msk [vmem:[%s771] ss:$8 sm:$0xf] %vm295, %v753
      %773 = vst.msk [vmem:[%s771] ss:$8 sm:$0x30] %vm295, %v753
      %v774 = vrot.slane %v351, 2
      %v775 = vrot.slane %v353, 2
      %v776 = vrot.slane %v355, 2
      %v777 = vrot.slane %v357, 2
      %v778 = vrot.slane %v359, 2
      %v779 = vsel %vm744, %v774, %v775
      %v780 = vsel %vm366, %v365, %v779
      %v781 = vsel %vm744, %v775, %v776
      %v782 = vsel %vm366, %v368, %v781
      %v783 = vsel %vm744, %v776, %v777
      %v784 = vsel %vm366, %v370, %v783
      %v785 = vsel %vm744, %v777, %v778
      %v786 = vsel %vm366, %v372, %v785
      %v787 = vsel %vm366, %v364, %v778
      %s793 = scalar_lea.vmem [#allocation2], 308
      %794 = vst [vmem:[%s793] ss:$8 sm:$0xf] %v780
      %795 = vst [vmem:[%s793] ss:$8 sm:$0xf0] %v780
      %s796 = scalar_lea.vmem [#allocation2], 372
      %797 = vst [vmem:[%s796] ss:$8 sm:$0xf] %v782
      %798 = vst [vmem:[%s796] ss:$8 sm:$0xf0] %v782
      %s799 = scalar_lea.vmem [#allocation2], 436
      %800 = vst [vmem:[%s799] ss:$8 sm:$0xf] %v784
      %801 = vst [vmem:[%s799] ss:$8 sm:$0xf0] %v784
      %s802 = scalar_lea.vmem [#allocation2], 500
      %803 = vst [vmem:[%s802] ss:$8 sm:$0xf] %v786
      %804 = vst [vmem:[%s802] ss:$8 sm:$0xf0] %v786
      %s805 = scalar_lea.vmem [#allocation2], 564
      %806 = vst.msk [vmem:[%s805] ss:$8 sm:$0xf] %vm295, %v787
      %807 = vst.msk [vmem:[%s805] ss:$8 sm:$0x30] %vm295, %v787
      %v808 = vrot.slane %v396, 2
      %v809 = vrot.slane %v398, 2
      %v810 = vrot.slane %v400, 2
      %v811 = vrot.slane %v402, 2
      %v812 = vrot.slane %v404, 2
      %v813 = vsel %vm744, %v808, %v809
      %v814 = vsel %vm411, %v410, %v813
      %v815 = vsel %vm744, %v809, %v810
      %v816 = vsel %vm411, %v413, %v815
      %v817 = vsel %vm744, %v810, %v811
      %v818 = vsel %vm411, %v415, %v817
      %v819 = vsel %vm744, %v811, %v812
      %v820 = vsel %vm411, %v417, %v819
      %v821 = vsel %vm411, %v409, %v812
      %s827 = scalar_lea.vmem [#allocation2], 309
      %828 = vst [vmem:[%s827] ss:$8 sm:$0xf] %v814
      %829 = vst [vmem:[%s827] ss:$8 sm:$0xf0] %v814
      %s830 = scalar_lea.vmem [#allocation2], 373
      %831 = vst [vmem:[%s830] ss:$8 sm:$0xf] %v816
      %832 = vst [vmem:[%s830] ss:$8 sm:$0xf0] %v816
      %s833 = scalar_lea.vmem [#allocation2], 437
      %834 = vst [vmem:[%s833] ss:$8 sm:$0xf] %v818
      %835 = vst [vmem:[%s833] ss:$8 sm:$0xf0] %v818
      %s836 = scalar_lea.vmem [#allocation2], 501
      %837 = vst [vmem:[%s836] ss:$8 sm:$0xf] %v820
      %838 = vst [vmem:[%s836] ss:$8 sm:$0xf0] %v820
      %s839 = scalar_lea.vmem [#allocation2], 565
      %840 = vst.msk [vmem:[%s839] ss:$8 sm:$0xf] %vm295, %v821
      %841 = vst.msk [vmem:[%s839] ss:$8 sm:$0x30] %vm295, %v821
      %v842 = vrot.slane %v441, 2
      %v843 = vrot.slane %v443, 2
      %v844 = vrot.slane %v445, 2
      %v845 = vrot.slane %v447, 2
      %v846 = vrot.slane %v449, 2
      %v847 = vsel %vm744, %v842, %v843
      %v848 = vsel %vm456, %v455, %v847
      %v849 = vsel %vm744, %v843, %v844
      %v850 = vsel %vm456, %v458, %v849
      %v851 = vsel %vm744, %v844, %v845
      %v852 = vsel %vm456, %v460, %v851
      %v853 = vsel %vm744, %v845, %v846
      %v854 = vsel %vm456, %v462, %v853
      %v855 = vsel %vm456, %v454, %v846
      %s861 = scalar_lea.vmem [#allocation2], 310
      %862 = vst [vmem:[%s861] ss:$8 sm:$0xf] %v848
      %863 = vst [vmem:[%s861] ss:$8 sm:$0xf0] %v848
      %s864 = scalar_lea.vmem [#allocation2], 374
      %865 = vst [vmem:[%s864] ss:$8 sm:$0xf] %v850
      %866 = vst [vmem:[%s864] ss:$8 sm:$0xf0] %v850
      %s867 = scalar_lea.vmem [#allocation2], 438
      %868 = vst [vmem:[%s867] ss:$8 sm:$0xf] %v852
      %869 = vst [vmem:[%s867] ss:$8 sm:$0xf0] %v852
      %s870 = scalar_lea.vmem [#allocation2], 502
      %871 = vst [vmem:[%s870] ss:$8 sm:$0xf] %v854
      %872 = vst [vmem:[%s870] ss:$8 sm:$0xf0] %v854
      %s873 = scalar_lea.vmem [#allocation2], 566
      %874 = vst.msk [vmem:[%s873] ss:$8 sm:$0xf] %vm295, %v855
      %875 = vst.msk [vmem:[%s873] ss:$8 sm:$0x30] %vm295, %v855
      %v876 = vrot.slane %v486, 2
      %v877 = vrot.slane %v488, 2
      %v878 = vrot.slane %v490, 2
      %v879 = vrot.slane %v492, 2
      %v880 = vrot.slane %v494, 2
      %v881 = vsel %vm744, %v876, %v877
      %v882 = vsel %vm501, %v500, %v881
      %v883 = vsel %vm744, %v877, %v878
      %v884 = vsel %vm501, %v503, %v883
      %v885 = vsel %vm744, %v878, %v879
      %v886 = vsel %vm501, %v505, %v885
      %v887 = vsel %vm744, %v879, %v880
      %v888 = vsel %vm501, %v507, %v887
      %v889 = vsel %vm501, %v499, %v880
      %s895 = scalar_lea.vmem [#allocation2], 311
      %896 = vst [vmem:[%s895] ss:$8 sm:$0xf] %v882
      %897 = vst [vmem:[%s895] ss:$8 sm:$0xf0] %v882
      %s898 = scalar_lea.vmem [#allocation2], 375
      %899 = vst [vmem:[%s898] ss:$8 sm:$0xf] %v884
      %900 = vst [vmem:[%s898] ss:$8 sm:$0xf0] %v884
      %s901 = scalar_lea.vmem [#allocation2], 439
      %902 = vst [vmem:[%s901] ss:$8 sm:$0xf] %v886
      %903 = vst [vmem:[%s901] ss:$8 sm:$0xf0] %v886
      %s904 = scalar_lea.vmem [#allocation2], 503
      %905 = vst [vmem:[%s904] ss:$8 sm:$0xf] %v888
      %906 = vst [vmem:[%s904] ss:$8 sm:$0xf0] %v888
      %s907 = scalar_lea.vmem [#allocation2], 567
      %908 = vst.msk [vmem:[%s907] ss:$8 sm:$0xf] %vm295, %v889
      %909 = vst.msk [vmem:[%s907] ss:$8 sm:$0x30] %vm295, %v889
      %v910 = vrot.slane %v531, 2
      %v911 = vrot.slane %v533, 2
      %v912 = vrot.slane %v535, 2
      %v913 = vrot.slane %v537, 2
      %v914 = vrot.slane %v539, 2
      %v915 = vsel %vm744, %v910, %v911
      %v916 = vsel %vm546, %v545, %v915
      %v917 = vsel %vm744, %v911, %v912
      %v918 = vsel %vm546, %v548, %v917
      %v919 = vsel %vm744, %v912, %v913
      %v920 = vsel %vm546, %v550, %v919
      %v921 = vsel %vm744, %v913, %v914
      %v922 = vsel %vm546, %v552, %v921
      %v923 = vsel %vm546, %v544, %v914
      %s929 = scalar_lea.vmem [#allocation2], 608
      %930 = vst [vmem:[%s929] ss:$8 sm:$0xf] %v916
      %931 = vst [vmem:[%s929] ss:$8 sm:$0xf0] %v916
      %s932 = scalar_lea.vmem [#allocation2], 672
      %933 = vst [vmem:[%s932] ss:$8 sm:$0xf] %v918
      %934 = vst [vmem:[%s932] ss:$8 sm:$0xf0] %v918
      %s935 = scalar_lea.vmem [#allocation2], 736
      %936 = vst [vmem:[%s935] ss:$8 sm:$0xf] %v920
      %937 = vst [vmem:[%s935] ss:$8 sm:$0xf0] %v920
      %s938 = scalar_lea.vmem [#allocation2], 800
      %939 = vst [vmem:[%s938] ss:$8 sm:$0xf] %v922
      %940 = vst [vmem:[%s938] ss:$8 sm:$0xf0] %v922
      %s941 = scalar_lea.vmem [#allocation2], 864
      %942 = vst.msk [vmem:[%s941] ss:$8 sm:$0xf] %vm295, %v923
      %943 = vst.msk [vmem:[%s941] ss:$8 sm:$0x30] %vm295, %v923
      %v944 = vrot.slane %v576, 2
      %v945 = vrot.slane %v578, 2
      %v946 = vrot.slane %v580, 2
      %v947 = vrot.slane %v582, 2
      %v948 = vrot.slane %v584, 2
      %v949 = vsel %vm744, %v944, %v945
      %v950 = vsel %vm591, %v590, %v949
      %v951 = vsel %vm744, %v945, %v946
      %v952 = vsel %vm591, %v593, %v951
      %v953 = vsel %vm744, %v946, %v947
      %v954 = vsel %vm591, %v595, %v953
      %v955 = vsel %vm744, %v947, %v948
      %v956 = vsel %vm591, %v597, %v955
      %v957 = vsel %vm591, %v589, %v948
      %s963 = scalar_lea.vmem [#allocation2], 609
      %964 = vst [vmem:[%s963] ss:$8 sm:$0xf] %v950
      %965 = vst [vmem:[%s963] ss:$8 sm:$0xf0] %v950
      %s966 = scalar_lea.vmem [#allocation2], 673
      %967 = vst [vmem:[%s966] ss:$8 sm:$0xf] %v952
      %968 = vst [vmem:[%s966] ss:$8 sm:$0xf0] %v952
      %s969 = scalar_lea.vmem [#allocation2], 737
      %970 = vst [vmem:[%s969] ss:$8 sm:$0xf] %v954
      %971 = vst [vmem:[%s969] ss:$8 sm:$0xf0] %v954
      %s972 = scalar_lea.vmem [#allocation2], 801
      %973 = vst [vmem:[%s972] ss:$8 sm:$0xf] %v956
      %974 = vst [vmem:[%s972] ss:$8 sm:$0xf0] %v956
      %s975 = scalar_lea.vmem [#allocation2], 865
      %976 = vst.msk [vmem:[%s975] ss:$8 sm:$0xf] %vm295, %v957
      %977 = vst.msk [vmem:[%s975] ss:$8 sm:$0x30] %vm295, %v957
      %v978 = vrot.slane %v621, 2
      %v979 = vrot.slane %v623, 2
      %v980 = vrot.slane %v625, 2
      %v981 = vrot.slane %v627, 2
      %v982 = vrot.slane %v629, 2
      %v983 = vsel %vm744, %v978, %v979
      %v984 = vsel %vm636, %v635, %v983
      %v985 = vsel %vm744, %v979, %v980
      %v986 = vsel %vm636, %v638, %v985
      %v987 = vsel %vm744, %v980, %v981
      %v988 = vsel %vm636, %v640, %v987
      %v989 = vsel %vm744, %v981, %v982
      %v990 = vsel %vm636, %v642, %v989
      %v991 = vsel %vm636, %v634, %v982
      %s997 = scalar_lea.vmem [#allocation2], 610
      %998 = vst [vmem:[%s997] ss:$8 sm:$0xf] %v984
      %999 = vst [vmem:[%s997] ss:$8 sm:$0xf0] %v984
      %s1000 = scalar_lea.vmem [#allocation2], 674
      %1001 = vst [vmem:[%s1000] ss:$8 sm:$0xf] %v986
      %1002 = vst [vmem:[%s1000] ss:$8 sm:$0xf0] %v986
      %s1003 = scalar_lea.vmem [#allocation2], 738
      %1004 = vst [vmem:[%s1003] ss:$8 sm:$0xf] %v988
      %1005 = vst [vmem:[%s1003] ss:$8 sm:$0xf0] %v988
      %s1006 = scalar_lea.vmem [#allocation2], 802
      %1007 = vst [vmem:[%s1006] ss:$8 sm:$0xf] %v990
      %1008 = vst [vmem:[%s1006] ss:$8 sm:$0xf0] %v990
      %s1009 = scalar_lea.vmem [#allocation2], 866
      %1010 = vst.msk [vmem:[%s1009] ss:$8 sm:$0xf] %vm295, %v991
      %1011 = vst.msk [vmem:[%s1009] ss:$8 sm:$0x30] %vm295, %v991
      %v1012 = vrot.slane %v666, 2
      %v1013 = vrot.slane %v668, 2
      %v1014 = vrot.slane %v670, 2
      %v1015 = vrot.slane %v672, 2
      %v1016 = vrot.slane %v674, 2
      %v1017 = vsel %vm744, %v1012, %v1013
      %v1018 = vsel %vm681, %v680, %v1017
      %v1019 = vsel %vm744, %v1013, %v1014
      %v1020 = vsel %vm681, %v683, %v1019
      %v1021 = vsel %vm744, %v1014, %v1015
      %v1022 = vsel %vm681, %v685, %v1021
      %v1023 = vsel %vm744, %v1015, %v1016
      %v1024 = vsel %vm681, %v687, %v1023
      %v1025 = vsel %vm681, %v679, %v1016
      %s1031 = scalar_lea.vmem [#allocation2], 611
      %1032 = vst [vmem:[%s1031] ss:$8 sm:$0xf] %v1018
      %1033 = vst [vmem:[%s1031] ss:$8 sm:$0xf0] %v1018
      %s1034 = scalar_lea.vmem [#allocation2], 675
      %1035 = vst [vmem:[%s1034] ss:$8 sm:$0xf] %v1020
      %1036 = vst [vmem:[%s1034] ss:$8 sm:$0xf0] %v1020
      %s1037 = scalar_lea.vmem [#allocation2], 739
      %1038 = vst [vmem:[%s1037] ss:$8 sm:$0xf] %v1022
      %1039 = vst [vmem:[%s1037] ss:$8 sm:$0xf0] %v1022
      %s1040 = scalar_lea.vmem [#allocation2], 803
      %1041 = vst [vmem:[%s1040] ss:$8 sm:$0xf] %v1024
      %1042 = vst [vmem:[%s1040] ss:$8 sm:$0xf0] %v1024
      %s1043 = scalar_lea.vmem [#allocation2], 867
      %1044 = vst.msk [vmem:[%s1043] ss:$8 sm:$0xf] %vm295, %v1025
      %1045 = vst.msk [vmem:[%s1043] ss:$8 sm:$0x30] %vm295, %v1025
      %v1046 = vrot.slane %v276, 2
      %v1047 = vrot.slane %v277, 2
      %v1048 = vrot.slane %v278, 2
      %v1049 = vrot.slane %v279, 2
      %v1050 = vrot.slane %v280, 2
      %v1051 = vsel %vm744, %v1046, %v1047
      %v1052 = vsel %vm744, %v1047, %v1048
      %v1053 = vsel %vm744, %v1048, %v1049
      %v1054 = vsel %vm744, %v1049, %v1050
      %s1060 = scalar_lea.vmem [#allocation2], 612
      %1061 = vst [vmem:[%s1060] ss:$8 sm:$0xf] %v1051
      %1062 = vst [vmem:[%s1060] ss:$8 sm:$0xf0] %v1051
      %s1063 = scalar_lea.vmem [#allocation2], 676
      %1064 = vst [vmem:[%s1063] ss:$8 sm:$0xf] %v1052
      %1065 = vst [vmem:[%s1063] ss:$8 sm:$0xf0] %v1052
      %s1066 = scalar_lea.vmem [#allocation2], 740
      %1067 = vst [vmem:[%s1066] ss:$8 sm:$0xf] %v1053
      %1068 = vst [vmem:[%s1066] ss:$8 sm:$0xf0] %v1053
      %s1069 = scalar_lea.vmem [#allocation2], 804
      %1070 = vst [vmem:[%s1069] ss:$8 sm:$0xf] %v1054
      %1071 = vst [vmem:[%s1069] ss:$8 sm:$0xf0] %v1054
      %s1072 = scalar_lea.vmem [#allocation2], 868
      %1073 = vst.msk [vmem:[%s1072] ss:$8 sm:$0xf] %vm295, %v1050
      %1074 = vst.msk [vmem:[%s1072] ss:$8 sm:$0x30] %vm295, %v1050
      %v1075 = vrot.slane %v305, 3
      %v1076 = vrot.slane %v307, 3
      %v1077 = vrot.slane %v309, 3
      %v1078 = vrot.slane %v311, 3
      %v1079 = vrot.slane %v313, 3
      %vm1080 = vcmask 1044480
      %v1081 = vsel %vm1080, %v1075, %v1076
      %v1082 = vsel %vm321, %v745, %v1081
      %v1083 = vsel %vm1080, %v1076, %v1077
      %v1084 = vsel %vm321, %v747, %v1083
      %v1085 = vsel %vm1080, %v1077, %v1078
      %v1086 = vsel %vm321, %v749, %v1085
      %v1087 = vsel %vm1080, %v1078, %v1079
      %v1088 = vsel %vm321, %v751, %v1087
      %v1089 = vsel %vm321, %v743, %v1079
      %s1095 = scalar_lea.vmem [#allocation2], 613
      %1096 = vst [vmem:[%s1095] ss:$8 sm:$0xf] %v1082
      %1097 = vst [vmem:[%s1095] ss:$8 sm:$0xf0] %v1082
      %s1098 = scalar_lea.vmem [#allocation2], 677
      %1099 = vst [vmem:[%s1098] ss:$8 sm:$0xf] %v1084
      %1100 = vst [vmem:[%s1098] ss:$8 sm:$0xf0] %v1084
      %s1101 = scalar_lea.vmem [#allocation2], 741
      %1102 = vst [vmem:[%s1101] ss:$8 sm:$0xf] %v1086
      %1103 = vst [vmem:[%s1101] ss:$8 sm:$0xf0] %v1086
      %s1104 = scalar_lea.vmem [#allocation2], 805
      %1105 = vst [vmem:[%s1104] ss:$8 sm:$0xf] %v1088
      %1106 = vst [vmem:[%s1104] ss:$8 sm:$0xf0] %v1088
      %s1107 = scalar_lea.vmem [#allocation2], 869
      %1108 = vst.msk [vmem:[%s1107] ss:$8 sm:$0xf] %vm295, %v1089
      %1109 = vst.msk [vmem:[%s1107] ss:$8 sm:$0x30] %vm295, %v1089
      %v1110 = vrot.slane %v351, 3
      %v1111 = vrot.slane %v353, 3
      %v1112 = vrot.slane %v355, 3
      %v1113 = vrot.slane %v357, 3
      %v1114 = vrot.slane %v359, 3
      %v1115 = vsel %vm1080, %v1110, %v1111
      %v1116 = vsel %vm366, %v779, %v1115
      %v1117 = vsel %vm1080, %v1111, %v1112
      %v1118 = vsel %vm366, %v781, %v1117
      %v1119 = vsel %vm1080, %v1112, %v1113
      %v1120 = vsel %vm366, %v783, %v1119
      %v1121 = vsel %vm1080, %v1113, %v1114
      %v1122 = vsel %vm366, %v785, %v1121
      %v1123 = vsel %vm366, %v778, %v1114
      %s1129 = scalar_lea.vmem [#allocation2], 614
      %1130 = vst [vmem:[%s1129] ss:$8 sm:$0xf] %v1116
      %1131 = vst [vmem:[%s1129] ss:$8 sm:$0xf0] %v1116
      %s1132 = scalar_lea.vmem [#allocation2], 678
      %1133 = vst [vmem:[%s1132] ss:$8 sm:$0xf] %v1118
      %1134 = vst [vmem:[%s1132] ss:$8 sm:$0xf0] %v1118
      %s1135 = scalar_lea.vmem [#allocation2], 742
      %1136 = vst [vmem:[%s1135] ss:$8 sm:$0xf] %v1120
      %1137 = vst [vmem:[%s1135] ss:$8 sm:$0xf0] %v1120
      %s1138 = scalar_lea.vmem [#allocation2], 806
      %1139 = vst [vmem:[%s1138] ss:$8 sm:$0xf] %v1122
      %1140 = vst [vmem:[%s1138] ss:$8 sm:$0xf0] %v1122
      %s1141 = scalar_lea.vmem [#allocation2], 870
      %1142 = vst.msk [vmem:[%s1141] ss:$8 sm:$0xf] %vm295, %v1123
      %1143 = vst.msk [vmem:[%s1141] ss:$8 sm:$0x30] %vm295, %v1123
      %v1144 = vrot.slane %v396, 3
      %v1145 = vrot.slane %v398, 3
      %v1146 = vrot.slane %v400, 3
      %v1147 = vrot.slane %v402, 3
      %v1148 = vrot.slane %v404, 3
      %v1149 = vsel %vm1080, %v1144, %v1145
      %v1150 = vsel %vm411, %v813, %v1149
      %v1151 = vsel %vm1080, %v1145, %v1146
      %v1152 = vsel %vm411, %v815, %v1151
      %v1153 = vsel %vm1080, %v1146, %v1147
      %v1154 = vsel %vm411, %v817, %v1153
      %v1155 = vsel %vm1080, %v1147, %v1148
      %v1156 = vsel %vm411, %v819, %v1155
      %v1157 = vsel %vm411, %v812, %v1148
      %s1163 = scalar_lea.vmem [#allocation2], 615
      %1164 = vst [vmem:[%s1163] ss:$8 sm:$0xf] %v1150
      %1165 = vst [vmem:[%s1163] ss:$8 sm:$0xf0] %v1150
      %s1166 = scalar_lea.vmem [#allocation2], 679
      %1167 = vst [vmem:[%s1166] ss:$8 sm:$0xf] %v1152
      %1168 = vst [vmem:[%s1166] ss:$8 sm:$0xf0] %v1152
      %s1169 = scalar_lea.vmem [#allocation2], 743
      %1170 = vst [vmem:[%s1169] ss:$8 sm:$0xf] %v1154
      %1171 = vst [vmem:[%s1169] ss:$8 sm:$0xf0] %v1154
      %s1172 = scalar_lea.vmem [#allocation2], 807
      %1173 = vst [vmem:[%s1172] ss:$8 sm:$0xf] %v1156
      %1174 = vst [vmem:[%s1172] ss:$8 sm:$0xf0] %v1156
      %s1175 = scalar_lea.vmem [#allocation2], 871
      %1176 = vst.msk [vmem:[%s1175] ss:$8 sm:$0xf] %vm295, %v1157
      %1177 = vst.msk [vmem:[%s1175] ss:$8 sm:$0x30] %vm295, %v1157
      %v1178 = vrot.slane %v441, 3
      %v1179 = vrot.slane %v443, 3
      %v1180 = vrot.slane %v445, 3
      %v1181 = vrot.slane %v447, 3
      %v1182 = vrot.slane %v449, 3
      %v1183 = vsel %vm1080, %v1178, %v1179
      %v1184 = vsel %vm456, %v847, %v1183
      %v1185 = vsel %vm1080, %v1179, %v1180
      %v1186 = vsel %vm456, %v849, %v1185
      %v1187 = vsel %vm1080, %v1180, %v1181
      %v1188 = vsel %vm456, %v851, %v1187
      %v1189 = vsel %vm1080, %v1181, %v1182
      %v1190 = vsel %vm456, %v853, %v1189
      %v1191 = vsel %vm456, %v846, %v1182
      %s1197 = scalar_lea.vmem [#allocation2], 912
      %1198 = vst [vmem:[%s1197] ss:$8 sm:$0xf] %v1184
      %1199 = vst [vmem:[%s1197] ss:$8 sm:$0xf0] %v1184
      %s1200 = scalar_lea.vmem [#allocation2], 976
      %1201 = vst [vmem:[%s1200] ss:$8 sm:$0xf] %v1186
      %1202 = vst [vmem:[%s1200] ss:$8 sm:$0xf0] %v1186
      %s1203 = scalar_lea.vmem [#allocation2], 1040
      %1204 = vst [vmem:[%s1203] ss:$8 sm:$0xf] %v1188
      %1205 = vst [vmem:[%s1203] ss:$8 sm:$0xf0] %v1188
      %s1206 = scalar_lea.vmem [#allocation2], 1104
      %1207 = vst [vmem:[%s1206] ss:$8 sm:$0xf] %v1190
      %1208 = vst [vmem:[%s1206] ss:$8 sm:$0xf0] %v1190
      %s1209 = scalar_lea.vmem [#allocation2], 1168
      %1210 = vst.msk [vmem:[%s1209] ss:$8 sm:$0xf] %vm295, %v1191
      %1211 = vst.msk [vmem:[%s1209] ss:$8 sm:$0x30] %vm295, %v1191
      %v1212 = vld [vmem:[%s1] sm:$0xff]
      %v1213 = vld [vmem:[#allocation2] sm:$0xff]
      %v1214 = vld [vmem:[#allocation2 + $0x8] sm:$0xff]
      %v1215 = vld [vmem:[#allocation2 + $0x10] sm:$0xff]
      %v1216 = vld [vmem:[#allocation2 + $0x18] sm:$0xff]
      %v1217 = vld [vmem:[#allocation2 + $0x20] sm:$0xff]
      %v1218 = vld [vmem:[#allocation2 + $0x28] sm:$0xff]
      %v1219 = vld [vmem:[#allocation2 + $0x30] sm:$0xff]
      %v1220 = vld [vmem:[#allocation2 + $0x38] sm:$0xff]
      %v1221 = vld [vmem:[#allocation2 + $0x40] sm:$0xff]
      %v1222 = vld [vmem:[#allocation2 + $0x48] sm:$0xff]
      %v1223 = vld [vmem:[#allocation2 + $0x50] sm:$0xff]
      %v1224 = vld [vmem:[#allocation2 + $0x58] sm:$0xff]
      %v1225 = vld [vmem:[#allocation2 + $0x60] sm:$0xff]
      %v1226 = vld [vmem:[#allocation2 + $0x68] sm:$0xff]
      %v1227 = vld [vmem:[#allocation2 + $0x70] sm:$0xff]
      %v1228 = vld [vmem:[#allocation2 + $0x78] sm:$0xff]
      %v1229 = vld [vmem:[#allocation2 + $0x80] sm:$0xff]
      %v1230 = vld [vmem:[#allocation2 + $0x88] sm:$0xff]
      %v1231 = vld [vmem:[#allocation2 + $0x90] sm:$0xff]
      %v1232 = vld [vmem:[#allocation2 + $0x98] sm:$0xff]
      %v1233 = vld [vmem:[#allocation2 + $0xa0] sm:$0xff]
      %v1234 = vld [vmem:[#allocation2 + $0xa8] sm:$0xff]
      %v1235 = vld [vmem:[#allocation2 + $0xb0] sm:$0xff]
      %v1236 = vld [vmem:[#allocation2 + $0xb8] sm:$0xff]
      %v1237 = vld [vmem:[#allocation2 + $0xc0] sm:$0xff]
      %v1238 = vld [vmem:[#allocation2 + $0xc8] sm:$0xff]
      %v1239 = vld [vmem:[#allocation2 + $0xd0] sm:$0xff]
      %v1240 = vld [vmem:[#allocation2 + $0xd8] sm:$0xff]
      %v1241 = vld [vmem:[#allocation2 + $0xe0] sm:$0xff]
      %v1242 = vld [vmem:[#allocation2 + $0xe8] sm:$0xff]
      %v1243 = vld [vmem:[#allocation2 + $0xf0] sm:$0xff]
      %v1244 = vld [vmem:[#allocation2 + $0xf8] sm:$0xff]
      %v1245 = vld [vmem:[#allocation2 + $0x100] sm:$0xff]
      %v1246 = vld [vmem:[#allocation2 + $0x108] sm:$0xff]
      %v1247 = vld [vmem:[#allocation2 + $0x110] sm:$0xff]
      %v1248 = vld [vmem:[#allocation2 + $0x118] sm:$0xff]
      %v1249 = vld [vmem:[#allocation2 + $0x120] sm:$0xff]
      %v1250 = vld [vmem:[#allocation2 + $0x128] sm:$0xff]
      %v1251 = vld [vmem:[#allocation2 + $0x130] sm:$0xff]
      %v1252 = vld [vmem:[#allocation2 + $0x138] sm:$0xff]
      %v1253 = vld [vmem:[#allocation2 + $0x140] sm:$0xff]
      %v1254 = vld [vmem:[#allocation2 + $0x148] sm:$0xff]
      %v1255 = vld [vmem:[#allocation2 + $0x150] sm:$0xff]
      %v1256 = vld [vmem:[#allocation2 + $0x158] sm:$0xff]
      %v1257 = vld [vmem:[#allocation2 + $0x160] sm:$0xff]
      %v1258 = vld [vmem:[#allocation2 + $0x168] sm:$0xff]
      %v1259 = vld [vmem:[#allocation2 + $0x170] sm:$0xff]
      %v1260 = vld [vmem:[#allocation2 + $0x178] sm:$0xff]
      %v1261 = vld [vmem:[#allocation2 + $0x180] sm:$0xff]
      %v1262 = vld [vmem:[#allocation2 + $0x188] sm:$0xff]
      %v1263 = vld [vmem:[#allocation2 + $0x190] sm:$0xff]
      %v1264 = vld [vmem:[#allocation2 + $0x198] sm:$0xff]
      %v1265 = vld [vmem:[#allocation2 + $0x1a0] sm:$0xff]
      %v1266 = vld [vmem:[#allocation2 + $0x1a8] sm:$0xff]
      %v1267 = vld [vmem:[#allocation2 + $0x1b0] sm:$0xff]
      %v1268 = vld [vmem:[#allocation2 + $0x1b8] sm:$0xff]
      %v1269 = vld [vmem:[#allocation2 + $0x1c0] sm:$0xff]
      %v1270 = vld [vmem:[#allocation2 + $0x1c8] sm:$0xff]
      %v1271 = vld [vmem:[#allocation2 + $0x1d0] sm:$0xff]
      %v1272 = vld [vmem:[#allocation2 + $0x1d8] sm:$0xff]
      %v1273 = vld [vmem:[#allocation2 + $0x1e0] sm:$0xff]
      %v1274 = vld [vmem:[#allocation2 + $0x1e8] sm:$0xff]
      %v1275 = vld [vmem:[#allocation2 + $0x1f0] sm:$0xff]
      %v1276 = vld [vmem:[#allocation2 + $0x1f8] sm:$0xff]
      %v1277 = vld [vmem:[#allocation2 + $0x200] sm:$0xff]
      %v1278 = vld [vmem:[#allocation2 + $0x208] sm:$0xff]
      %v1279 = vld [vmem:[#allocation2 + $0x210] sm:$0xff]
      %v1280 = vld [vmem:[#allocation2 + $0x218] sm:$0xff]
      %v1281 = vld [vmem:[#allocation2 + $0x220] sm:$0xff]
      %v1282 = vld [vmem:[#allocation2 + $0x228] sm:$0xff]
      %v1283 = vld [vmem:[#allocation2 + $0x230] sm:$0xff]
      %v1284 = vld [vmem:[#allocation2 + $0x238] sm:$0xff]
      %v1285 = vld [vmem:[#allocation2 + $0x240] sm:$0xff]
      %v1286 = vld [vmem:[#allocation2 + $0x248] sm:$0xff]
      %v1287 = vld [vmem:[#allocation2 + $0x250] sm:$0xff]
      %v1288 = vld [vmem:[#allocation2 + $0x258] sm:$0xff]
      %v1289 = vld [vmem:[#allocation2 + $0x260] sm:$0xff]
      %v1290 = vld [vmem:[#allocation2 + $0x268] sm:$0xff]
      %v1291 = vld [vmem:[#allocation2 + $0x270] sm:$0xff]
      %v1292 = vld [vmem:[#allocation2 + $0x278] sm:$0xff]
      %v1293 = vld [vmem:[#allocation2 + $0x280] sm:$0xff]
      %v1294 = vld [vmem:[#allocation2 + $0x288] sm:$0xff]
      %v1295 = vld [vmem:[#allocation2 + $0x290] sm:$0xff]
      %v1296 = vld [vmem:[#allocation2 + $0x298] sm:$0xff]
      %v1297 = vld [vmem:[#allocation2 + $0x2a0] sm:$0xff]
      %v1298 = vld [vmem:[#allocation2 + $0x2a8] sm:$0xff]
      %v1299 = vld [vmem:[#allocation2 + $0x2b0] sm:$0xff]
      %v1300 = vld [vmem:[#allocation2 + $0x2b8] sm:$0xff]
      %v1301 = vld [vmem:[#allocation2 + $0x2c0] sm:$0xff]
      %v1302 = vld [vmem:[#allocation2 + $0x2c8] sm:$0xff]
      %v1303 = vld [vmem:[#allocation2 + $0x2d0] sm:$0xff]
      %v1304 = vld [vmem:[#allocation2 + $0x2d8] sm:$0xff]
      %v1305 = vld [vmem:[#allocation2 + $0x2e0] sm:$0xff]
      %v1306 = vld [vmem:[#allocation2 + $0x2e8] sm:$0xff]
      %v1307 = vld [vmem:[#allocation2 + $0x2f0] sm:$0xff]
      %v1308 = vld [vmem:[#allocation2 + $0x2f8] sm:$0xff]
      %v1309 = vld [vmem:[#allocation2 + $0x300] sm:$0xff]
      %v1310 = vld [vmem:[#allocation2 + $0x308] sm:$0xff]
      %v1311 = vld [vmem:[#allocation2 + $0x310] sm:$0xff]
      %v1312 = vld [vmem:[#allocation2 + $0x318] sm:$0xff]
      %v1313 = vld [vmem:[#allocation2 + $0x320] sm:$0xff]
      %v1314 = vld [vmem:[#allocation2 + $0x328] sm:$0xff]
      %v1315 = vld [vmem:[#allocation2 + $0x330] sm:$0xff]
      %v1316 = vld [vmem:[#allocation2 + $0x338] sm:$0xff]
      %v1317 = vld [vmem:[#allocation2 + $0x340] sm:$0xff]
      %v1318 = vld [vmem:[#allocation2 + $0x348] sm:$0xff]
      %v1319 = vld [vmem:[#allocation2 + $0x350] sm:$0xff]
      %v1320 = vld [vmem:[#allocation2 + $0x358] sm:$0xff]
      %v1321 = vld [vmem:[#allocation2 + $0x360] sm:$0xff]
      %v1322 = vld [vmem:[#allocation2 + $0x368] sm:$0xff]
      %v1323 = vld [vmem:[#allocation2 + $0x370] sm:$0xff]
      %v1324 = vld [vmem:[#allocation2 + $0x378] sm:$0xff]
      %v1325 = vld [vmem:[#allocation2 + $0x380] sm:$0xff]
      %v1326 = vld [vmem:[#allocation2 + $0x388] sm:$0xff]
      %v1327 = vld [vmem:[#allocation2 + $0x390] sm:$0x1]
      %v1328 = vld [vmem:[#allocation2 + $0x398] sm:$0x1]
      %v1329 = vld [vmem:[#allocation2 + $0x3a0] sm:$0x1]
      %v1330 = vld [vmem:[#allocation2 + $0x3a8] sm:$0x1]
      %v1331 = vld [vmem:[#allocation2 + $0x3b0] sm:$0x1]
      %v1332 = vld [vmem:[#allocation2 + $0x3b8] sm:$0x1]
      %v1333 = vld [vmem:[#allocation2 + $0x3c0] sm:$0x1]
      %v1334 = vld [vmem:[#allocation2 + $0x3c8] sm:$0x1]
      %v1335 = vld [vmem:[#allocation2 + $0x3d0] sm:$0x1]
      %v1336 = vld [vmem:[#allocation2 + $0x3d8] sm:$0x1]
      %v1337 = vld [vmem:[#allocation2 + $0x3e0] sm:$0x1]
      %v1338 = vld [vmem:[#allocation2 + $0x3e8] sm:$0x1]
      %v1339 = vld [vmem:[#allocation2 + $0x3f0] sm:$0x1]
      %v1340 = vld [vmem:[#allocation2 + $0x3f8] sm:$0x1]
      %v1341 = vld [vmem:[#allocation2 + $0x400] sm:$0x1]
      %v1342 = vld [vmem:[#allocation2 + $0x408] sm:$0x1]
      %v1343 = vld [vmem:[#allocation2 + $0x410] sm:$0x1]
      %v1344 = vld [vmem:[#allocation2 + $0x418] sm:$0x1]
      %v1345 = vld [vmem:[#allocation2 + $0x420] sm:$0x1]
      %v1346 = vld [vmem:[#allocation2 + $0x428] sm:$0x1]
      %v1347 = vld [vmem:[#allocation2 + $0x430] sm:$0x1]
      %v1348 = vld [vmem:[#allocation2 + $0x438] sm:$0x1]
      %v1349 = vld [vmem:[#allocation2 + $0x440] sm:$0x1]
      %v1350 = vld [vmem:[#allocation2 + $0x448] sm:$0x1]
      %v1351 = vld [vmem:[#allocation2 + $0x450] sm:$0x1]
      %v1352 = vld [vmem:[#allocation2 + $0x458] sm:$0x1]
      %v1353 = vld [vmem:[#allocation2 + $0x460] sm:$0x1]
      %v1354 = vld [vmem:[#allocation2 + $0x468] sm:$0x1]
      %v1355 = vld [vmem:[#allocation2 + $0x470] sm:$0x1]
      %v1356 = vld [vmem:[#allocation2 + $0x478] sm:$0x1]
      %v1357 = vld [vmem:[#allocation2 + $0x480] sm:$0x1]
      %v1358 = vld [vmem:[#allocation2 + $0x488] sm:$0x1]
      %v1359 = vld [vmem:[#allocation2 + $0x490] sm:$0x1]
      %v1360 = vld [vmem:[#allocation2 + $0x498] sm:$0x1]
      %v1361 = vld [vmem:[#allocation2 + $0x4a0] sm:$0x1]
      %v1362 = vld [vmem:[#allocation2 + $0x4a8] sm:$0x1]
      %v1363 = vld [vmem:[#allocation2 + $0x4b0] sm:$0x1]
      %v1364 = vld [vmem:[#allocation2 + $0x4b8] sm:$0x1]
      %v1365 = vld [vmem:[%s2] sm:$0xff]
      %1367 = vset.pattern.permute.xlu0 0
      %1368 = vperm.xlu0 %1367, %v1365
      %v1369 = vpop.permute.xlu0 %1368
      %vm1371 = vcmask 203776
      %v1373 = vsel %vm1371, %v1212, 0
      %vm1375 = vcmask 1040384
      %v1377 = vsel %vm1375, %v1327, 0
      %v1380 = vsel %vm1375, %v1328, 0
      %v1383 = vsel %vm1375, %v1329, 0
      %v1386 = vsel %vm1375, %v1330, 0
      %v1389 = vsel %vm1375, %v1331, 0
      %v1392 = vsel %vm1375, %v1332, 0
      %v1395 = vsel %vm1375, %v1333, 0
      %v1398 = vsel %vm1375, %v1334, 0
      %v1401 = vsel %vm1375, %v1335, 0
      %v1404 = vsel %vm1375, %v1336, 0
      %v1407 = vsel %vm1375, %v1337, 0
      %v1410 = vsel %vm1375, %v1338, 0
      %v1413 = vsel %vm1375, %v1339, 0
      %v1416 = vsel %vm1375, %v1340, 0
      %v1419 = vsel %vm1375, %v1341, 0
      %v1422 = vsel %vm1375, %v1342, 0
      %v1425 = vsel %vm1375, %v1343, 0
      %v1428 = vsel %vm1375, %v1344, 0
      %v1431 = vsel %vm1375, %v1345, 0
      %v1434 = vsel %vm1375, %v1346, 0
      %v1437 = vsel %vm1375, %v1347, 0
      %v1440 = vsel %vm1375, %v1348, 0
      %v1443 = vsel %vm1375, %v1349, 0
      %v1446 = vsel %vm1375, %v1350, 0
      %v1449 = vsel %vm1375, %v1351, 0
      %v1452 = vsel %vm1375, %v1352, 0
      %v1455 = vsel %vm1375, %v1353, 0
      %v1458 = vsel %vm1375, %v1354, 0
      %v1461 = vsel %vm1375, %v1355, 0
      %v1464 = vsel %vm1375, %v1356, 0
      %v1467 = vsel %vm1375, %v1357, 0
      %v1470 = vsel %vm1375, %v1358, 0
      %v1473 = vsel %vm1375, %v1359, 0
      %v1476 = vsel %vm1375, %v1360, 0
      %v1479 = vsel %vm1375, %v1361, 0
      %v1482 = vsel %vm1375, %v1362, 0
      %v1485 = vsel %vm1375, %v1363, 0
      %v1488 = vsel %vm1375, %v1364, 0
      %1490 = vmatprep.subr.mxu0 0.0
      %1491 = vmatpush1.msra.mxu0 0.0
      %1492 = vmatprep.subr.mxu0 0.0
      %1493 = vmatpush1.msra.mxu0 0.0
      %1494 = vmatprep.subr.mxu0 0.0
      %1495 = vmatpush1.msra.mxu0 0.0
      %1496 = vmatprep.subr.mxu0 0.0
      %1497 = vmatpush1.msra.mxu0 0.0
      %1498 = vmatprep.subr.mxu0 0.0
      %1499 = vmatpush1.msra.mxu0 0.0
      %1500 = vmatprep.subr.mxu0 0.0
      %1501 = vmatpush1.msra.mxu0 0.0
      %1502 = vmatprep.subr.mxu0 0.0
      %1503 = vmatpush1.msra.mxu0 0.0
      %1504 = vmatprep.subr.mxu0 0.0
      %1505 = vmatpush1.msra.mxu0 0.0
      %1506 = vmatprep.subr.mxu0 0.0
      %1507 = vmatpush1.msra.mxu0 0.0
      %1508 = vmatprep.subr.mxu0 0.0
      %1509 = vmatpush1.msra.mxu0 0.0
      %1510 = vmatprep.subr.mxu0 0.0
      %1511 = vmatpush1.msra.mxu0 0.0
      %1512 = vmatprep.subr.mxu0 0.0
      %1513 = vmatpush1.msra.mxu0 0.0
      %1514 = vmatprep.subr.mxu0 %v1380
      %1515 = vmatpush1.msra.mxu0 %v1377
      %1516 = vmatprep.subr.mxu0 %v1290
      %1517 = vmatpush1.msra.mxu0 %v1289
      %1518 = vmatprep.subr.mxu0 %v1252
      %1519 = vmatpush1.msra.mxu0 %v1251
      %1520 = vmatprep.subr.mxu0 %v1214
      %1521 = vmatpush1.msra.mxu0 %v1213
      %1522 = vmatprep.subr.mxu0 0.0
      %1523 = vmatpush2.msra.mxu0 0.0
      %1524 = vmatprep.subr.mxu0 0.0
      %1525 = vmatpush2.msra.mxu0 0.0
      %1526 = vmatprep.subr.mxu0 0.0
      %1527 = vmatpush2.msra.mxu0 0.0
      %1528 = vmatprep.subr.mxu0 0.0
      %1529 = vmatpush2.msra.mxu0 0.0
      %1530 = vmatprep.subr.mxu0 0.0
      %1531 = vmatpush2.msra.mxu0 0.0
      %1532 = vmatprep.subr.mxu0 0.0
      %1533 = vmatpush2.msra.mxu0 0.0
      %1534 = vmatprep.subr.mxu0 0.0
      %1535 = vmatpush2.msra.mxu0 0.0
      %1536 = vmatprep.subr.mxu0 0.0
      %1537 = vmatpush2.msra.mxu0 0.0
      %1538 = vmatprep.subr.mxu0 0.0
      %1539 = vmatpush2.msra.mxu0 0.0
      %1540 = vmatprep.subr.mxu0 0.0
      %1541 = vmatpush2.msra.mxu0 0.0
      %1542 = vmatprep.subr.mxu0 0.0
      %1543 = vmatpush2.msra.mxu0 0.0
      %1544 = vmatprep.subr.mxu0 0.0
      %1545 = vmatpush2.msra.mxu0 0.0
      %1546 = vmatprep.subr.mxu0 0.0
      %1547 = vmatpush2.msra.mxu0 0.0
      %1548 = vmatprep.subr.mxu0 0.0
      %1549 = vmatpush2.msra.mxu0 0.0
      %1550 = vmatprep.subr.mxu0 0.0
      %1551 = vmatpush2.msra.mxu0 0.0
      %1552 = vmatprep.subr.mxu0 0.0
      %1553 = vmatpush2.msra.mxu0 0.0
      %1554 = vmatprep.mubr.f32.mxu0 0.0
      %1555 = vmatmul.mubr.f32.gmra.mxu0 %v1373
      %v1556 = vpop.f32.mrf.mxu0
      %v1557 = vadd.f32 %v1369, %v1556
      %v1558 = vpop.f32.mrf.mxu0
      %v1559 = vadd.f32 %v1369, %v1558
      %1560 = vdwg.mxu0
      %1561 = vmatprep.subr.mxu0 0.0
      %1562 = vmatpush1.msra.mxu0 0.0
      %1563 = vmatprep.subr.mxu0 0.0
      %1564 = vmatpush1.msra.mxu0 0.0
      %1565 = vmatprep.subr.mxu0 0.0
      %1566 = vmatpush1.msra.mxu0 0.0
      %1567 = vmatprep.subr.mxu0 0.0
      %1568 = vmatpush1.msra.mxu0 0.0
      %1569 = vmatprep.subr.mxu0 0.0
      %1570 = vmatpush1.msra.mxu0 0.0
      %1571 = vmatprep.subr.mxu0 0.0
      %1572 = vmatpush1.msra.mxu0 0.0
      %1573 = vmatprep.subr.mxu0 0.0
      %1574 = vmatpush1.msra.mxu0 0.0
      %1575 = vmatprep.subr.mxu0 0.0
      %1576 = vmatpush1.msra.mxu0 0.0
      %1577 = vmatprep.subr.mxu0 0.0
      %1578 = vmatpush1.msra.mxu0 0.0
      %1579 = vmatprep.subr.mxu0 0.0
      %1580 = vmatpush1.msra.mxu0 0.0
      %1581 = vmatprep.subr.mxu0 0.0
      %1582 = vmatpush1.msra.mxu0 0.0
      %1583 = vmatprep.subr.mxu0 0.0
      %1584 = vmatpush1.msra.mxu0 0.0
      %1585 = vmatprep.subr.mxu0 %v1386
      %1586 = vmatpush1.msra.mxu0 %v1383
      %1587 = vmatprep.subr.mxu0 %v1292
      %1588 = vmatpush1.msra.mxu0 %v1291
      %1589 = vmatprep.subr.mxu0 %v1254
      %1590 = vmatpush1.msra.mxu0 %v1253
      %1591 = vmatprep.subr.mxu0 %v1216
      %1592 = vmatpush1.msra.mxu0 %v1215
      %1593 = vmatprep.subr.mxu0 0.0
      %1594 = vmatpush2.msra.mxu0 0.0
      %1595 = vmatprep.subr.mxu0 0.0
      %1596 = vmatpush2.msra.mxu0 0.0
      %1597 = vmatprep.subr.mxu0 0.0
      %1598 = vmatpush2.msra.mxu0 0.0
      %1599 = vmatprep.subr.mxu0 0.0
      %1600 = vmatpush2.msra.mxu0 0.0
      %1601 = vmatprep.subr.mxu0 0.0
      %1602 = vmatpush2.msra.mxu0 0.0
      %1603 = vmatprep.subr.mxu0 0.0
      %1604 = vmatpush2.msra.mxu0 0.0
      %1605 = vmatprep.subr.mxu0 0.0
      %1606 = vmatpush2.msra.mxu0 0.0
      %1607 = vmatprep.subr.mxu0 0.0
      %1608 = vmatpush2.msra.mxu0 0.0
      %1609 = vmatprep.subr.mxu0 0.0
      %1610 = vmatpush2.msra.mxu0 0.0
      %1611 = vmatprep.subr.mxu0 0.0
      %1612 = vmatpush2.msra.mxu0 0.0
      %1613 = vmatprep.subr.mxu0 0.0
      %1614 = vmatpush2.msra.mxu0 0.0
      %1615 = vmatprep.subr.mxu0 0.0
      %1616 = vmatpush2.msra.mxu0 0.0
      %1617 = vmatprep.subr.mxu0 0.0
      %1618 = vmatpush2.msra.mxu0 0.0
      %1619 = vmatprep.subr.mxu0 0.0
      %1620 = vmatpush2.msra.mxu0 0.0
      %1621 = vmatprep.subr.mxu0 0.0
      %1622 = vmatpush2.msra.mxu0 0.0
      %1623 = vmatprep.subr.mxu0 0.0
      %1624 = vmatpush2.msra.mxu0 0.0
      %1625 = vmatprep.mubr.f32.mxu0 0.0
      %1626 = vmatmul.mubr.f32.gmra.mxu0 %v1373
      %v1627 = vpop.f32.mrf.mxu0
      %v1628 = vadd.f32 %v1369, %v1627
      %v1629 = vpop.f32.mrf.mxu0
      %v1630 = vadd.f32 %v1369, %v1629
      %1631 = vdwg.mxu0
      %1632 = vmatprep.subr.mxu0 0.0
      %1633 = vmatpush1.msra.mxu0 0.0
      %1634 = vmatprep.subr.mxu0 0.0
      %1635 = vmatpush1.msra.mxu0 0.0
      %1636 = vmatprep.subr.mxu0 0.0
      %1637 = vmatpush1.msra.mxu0 0.0
      %1638 = vmatprep.subr.mxu0 0.0
      %1639 = vmatpush1.msra.mxu0 0.0
      %1640 = vmatprep.subr.mxu0 0.0
      %1641 = vmatpush1.msra.mxu0 0.0
      %1642 = vmatprep.subr.mxu0 0.0
      %1643 = vmatpush1.msra.mxu0 0.0
      %1644 = vmatprep.subr.mxu0 0.0
      %1645 = vmatpush1.msra.mxu0 0.0
      %1646 = vmatprep.subr.mxu0 0.0
      %1647 = vmatpush1.msra.mxu0 0.0
      %1648 = vmatprep.subr.mxu0 0.0
      %1649 = vmatpush1.msra.mxu0 0.0
      %1650 = vmatprep.subr.mxu0 0.0
      %1651 = vmatpush1.msra.mxu0 0.0
      %1652 = vmatprep.subr.mxu0 0.0
      %1653 = vmatpush1.msra.mxu0 0.0
      %1654 = vmatprep.subr.mxu0 0.0
      %1655 = vmatpush1.msra.mxu0 0.0
      %1656 = vmatprep.subr.mxu0 %v1392
      %1657 = vmatpush1.msra.mxu0 %v1389
      %1658 = vmatprep.subr.mxu0 %v1294
      %1659 = vmatpush1.msra.mxu0 %v1293
      %1660 = vmatprep.subr.mxu0 %v1256
      %1661 = vmatpush1.msra.mxu0 %v1255
      %1662 = vmatprep.subr.mxu0 %v1218
      %1663 = vmatpush1.msra.mxu0 %v1217
      %1664 = vmatprep.subr.mxu0 0.0
      %1665 = vmatpush2.msra.mxu0 0.0
      %1666 = vmatprep.subr.mxu0 0.0
      %1667 = vmatpush2.msra.mxu0 0.0
      %1668 = vmatprep.subr.mxu0 0.0
      %1669 = vmatpush2.msra.mxu0 0.0
      %1670 = vmatprep.subr.mxu0 0.0
      %1671 = vmatpush2.msra.mxu0 0.0
      %1672 = vmatprep.subr.mxu0 0.0
      %1673 = vmatpush2.msra.mxu0 0.0
      %1674 = vmatprep.subr.mxu0 0.0
      %1675 = vmatpush2.msra.mxu0 0.0
      %1676 = vmatprep.subr.mxu0 0.0
      %1677 = vmatpush2.msra.mxu0 0.0
      %1678 = vmatprep.subr.mxu0 0.0
      %1679 = vmatpush2.msra.mxu0 0.0
      %1680 = vmatprep.subr.mxu0 0.0
      %1681 = vmatpush2.msra.mxu0 0.0
      %1682 = vmatprep.subr.mxu0 0.0
      %1683 = vmatpush2.msra.mxu0 0.0
      %1684 = vmatprep.subr.mxu0 0.0
      %1685 = vmatpush2.msra.mxu0 0.0
      %1686 = vmatprep.subr.mxu0 0.0
      %1687 = vmatpush2.msra.mxu0 0.0
      %1688 = vmatprep.subr.mxu0 0.0
      %1689 = vmatpush2.msra.mxu0 0.0
      %1690 = vmatprep.subr.mxu0 0.0
      %1691 = vmatpush2.msra.mxu0 0.0
      %1692 = vmatprep.subr.mxu0 0.0
      %1693 = vmatpush2.msra.mxu0 0.0
      %1694 = vmatprep.subr.mxu0 0.0
      %1695 = vmatpush2.msra.mxu0 0.0
      %1696 = vmatprep.mubr.f32.mxu0 0.0
      %1697 = vmatmul.mubr.f32.gmra.mxu0 %v1373
      %v1698 = vpop.f32.mrf.mxu0
      %v1699 = vadd.f32 %v1369, %v1698
      %v1700 = vpop.f32.mrf.mxu0
      %v1701 = vadd.f32 %v1369, %v1700
      %1702 = vdwg.mxu0
      %1703 = vmatprep.subr.mxu0 0.0
      %1704 = vmatpush1.msra.mxu0 0.0
      %1705 = vmatprep.subr.mxu0 0.0
      %1706 = vmatpush1.msra.mxu0 0.0
      %1707 = vmatprep.subr.mxu0 0.0
      %1708 = vmatpush1.msra.mxu0 0.0
      %1709 = vmatprep.subr.mxu0 0.0
      %1710 = vmatpush1.msra.mxu0 0.0
      %1711 = vmatprep.subr.mxu0 0.0
      %1712 = vmatpush1.msra.mxu0 0.0
      %1713 = vmatprep.subr.mxu0 0.0
      %1714 = vmatpush1.msra.mxu0 0.0
      %1715 = vmatprep.subr.mxu0 0.0
      %1716 = vmatpush1.msra.mxu0 0.0
      %1717 = vmatprep.subr.mxu0 0.0
      %1718 = vmatpush1.msra.mxu0 0.0
      %1719 = vmatprep.subr.mxu0 0.0
      %1720 = vmatpush1.msra.mxu0 0.0
      %1721 = vmatprep.subr.mxu0 0.0
      %1722 = vmatpush1.msra.mxu0 0.0
      %1723 = vmatprep.subr.mxu0 0.0
      %1724 = vmatpush1.msra.mxu0 0.0
      %1725 = vmatprep.subr.mxu0 0.0
      %1726 = vmatpush1.msra.mxu0 0.0
      %1727 = vmatprep.subr.mxu0 %v1398
      %1728 = vmatpush1.msra.mxu0 %v1395
      %1729 = vmatprep.subr.mxu0 %v1296
      %1730 = vmatpush1.msra.mxu0 %v1295
      %1731 = vmatprep.subr.mxu0 %v1258
      %1732 = vmatpush1.msra.mxu0 %v1257
      %1733 = vmatprep.subr.mxu0 %v1220
      %1734 = vmatpush1.msra.mxu0 %v1219
      %1735 = vmatprep.subr.mxu0 0.0
      %1736 = vmatpush2.msra.mxu0 0.0
      %1737 = vmatprep.subr.mxu0 0.0
      %1738 = vmatpush2.msra.mxu0 0.0
      %1739 = vmatprep.subr.mxu0 0.0
      %1740 = vmatpush2.msra.mxu0 0.0
      %1741 = vmatprep.subr.mxu0 0.0
      %1742 = vmatpush2.msra.mxu0 0.0
      %1743 = vmatprep.subr.mxu0 0.0
      %1744 = vmatpush2.msra.mxu0 0.0
      %1745 = vmatprep.subr.mxu0 0.0
      %1746 = vmatpush2.msra.mxu0 0.0
      %1747 = vmatprep.subr.mxu0 0.0
      %1748 = vmatpush2.msra.mxu0 0.0
      %1749 = vmatprep.subr.mxu0 0.0
      %1750 = vmatpush2.msra.mxu0 0.0
      %1751 = vmatprep.subr.mxu0 0.0
      %1752 = vmatpush2.msra.mxu0 0.0
      %1753 = vmatprep.subr.mxu0 0.0
      %1754 = vmatpush2.msra.mxu0 0.0
      %1755 = vmatprep.subr.mxu0 0.0
      %1756 = vmatpush2.msra.mxu0 0.0
      %1757 = vmatprep.subr.mxu0 0.0
      %1758 = vmatpush2.msra.mxu0 0.0
      %1759 = vmatprep.subr.mxu0 0.0
      %1760 = vmatpush2.msra.mxu0 0.0
      %1761 = vmatprep.subr.mxu0 0.0
      %1762 = vmatpush2.msra.mxu0 0.0
      %1763 = vmatprep.subr.mxu0 0.0
      %1764 = vmatpush2.msra.mxu0 0.0
      %1765 = vmatprep.subr.mxu0 0.0
      %1766 = vmatpush2.msra.mxu0 0.0
      %1767 = vmatprep.mubr.f32.mxu0 0.0
      %1768 = vmatmul.mubr.f32.gmra.mxu0 %v1373
      %v1769 = vpop.f32.mrf.mxu0
      %v1770 = vadd.f32 %v1369, %v1769
      %v1771 = vpop.f32.mrf.mxu0
      %v1772 = vadd.f32 %v1369, %v1771
      %1773 = vdwg.mxu0
      %1774 = vmatprep.subr.mxu0 0.0
      %1775 = vmatpush1.msra.mxu0 0.0
      %1776 = vmatprep.subr.mxu0 0.0
      %1777 = vmatpush1.msra.mxu0 0.0
      %1778 = vmatprep.subr.mxu0 0.0
      %1779 = vmatpush1.msra.mxu0 0.0
      %1780 = vmatprep.subr.mxu0 0.0
      %1781 = vmatpush1.msra.mxu0 0.0
      %1782 = vmatprep.subr.mxu0 0.0
      %1783 = vmatpush1.msra.mxu0 0.0
      %1784 = vmatprep.subr.mxu0 0.0
      %1785 = vmatpush1.msra.mxu0 0.0
      %1786 = vmatprep.subr.mxu0 0.0
      %1787 = vmatpush1.msra.mxu0 0.0
      %1788 = vmatprep.subr.mxu0 0.0
      %1789 = vmatpush1.msra.mxu0 0.0
      %1790 = vmatprep.subr.mxu0 0.0
      %1791 = vmatpush1.msra.mxu0 0.0
      %1792 = vmatprep.subr.mxu0 0.0
      %1793 = vmatpush1.msra.mxu0 0.0
      %1794 = vmatprep.subr.mxu0 0.0
      %1795 = vmatpush1.msra.mxu0 0.0
      %1796 = vmatprep.subr.mxu0 0.0
      %1797 = vmatpush1.msra.mxu0 0.0
      %1798 = vmatprep.subr.mxu0 %v1404
      %1799 = vmatpush1.msra.mxu0 %v1401
      %1800 = vmatprep.subr.mxu0 %v1298
      %1801 = vmatpush1.msra.mxu0 %v1297
      %1802 = vmatprep.subr.mxu0 %v1260
      %1803 = vmatpush1.msra.mxu0 %v1259
      %1804 = vmatprep.subr.mxu0 %v1222
      %1805 = vmatpush1.msra.mxu0 %v1221
      %1806 = vmatprep.subr.mxu0 0.0
      %1807 = vmatpush2.msra.mxu0 0.0
      %1808 = vmatprep.subr.mxu0 0.0
      %1809 = vmatpush2.msra.mxu0 0.0
      %1810 = vmatprep.subr.mxu0 0.0
      %1811 = vmatpush2.msra.mxu0 0.0
      %1812 = vmatprep.subr.mxu0 0.0
      %1813 = vmatpush2.msra.mxu0 0.0
      %1814 = vmatprep.subr.mxu0 0.0
      %1815 = vmatpush2.msra.mxu0 0.0
      %1816 = vmatprep.subr.mxu0 0.0
      %1817 = vmatpush2.msra.mxu0 0.0
      %1818 = vmatprep.subr.mxu0 0.0
      %1819 = vmatpush2.msra.mxu0 0.0
      %1820 = vmatprep.subr.mxu0 0.0
      %1821 = vmatpush2.msra.mxu0 0.0
      %1822 = vmatprep.subr.mxu0 0.0
      %1823 = vmatpush2.msra.mxu0 0.0
      %1824 = vmatprep.subr.mxu0 0.0
      %1825 = vmatpush2.msra.mxu0 0.0
      %1826 = vmatprep.subr.mxu0 0.0
      %1827 = vmatpush2.msra.mxu0 0.0
      %1828 = vmatprep.subr.mxu0 0.0
      %1829 = vmatpush2.msra.mxu0 0.0
      %1830 = vmatprep.subr.mxu0 0.0
      %1831 = vmatpush2.msra.mxu0 0.0
      %1832 = vmatprep.subr.mxu0 0.0
      %1833 = vmatpush2.msra.mxu0 0.0
      %1834 = vmatprep.subr.mxu0 0.0
      %1835 = vmatpush2.msra.mxu0 0.0
      %1836 = vmatprep.subr.mxu0 0.0
      %1837 = vmatpush2.msra.mxu0 0.0
      %1838 = vmatprep.mubr.f32.mxu0 0.0
      %1839 = vmatmul.mubr.f32.gmra.mxu0 %v1373
      %v1840 = vpop.f32.mrf.mxu0
      %v1841 = vadd.f32 %v1369, %v1840
      %v1842 = vpop.f32.mrf.mxu0
      %v1843 = vadd.f32 %v1369, %v1842
      %1844 = vdwg.mxu0
      %1845 = vmatprep.subr.mxu0 0.0
      %1846 = vmatpush1.msra.mxu0 0.0
      %1847 = vmatprep.subr.mxu0 0.0
      %1848 = vmatpush1.msra.mxu0 0.0
      %1849 = vmatprep.subr.mxu0 0.0
      %1850 = vmatpush1.msra.mxu0 0.0
      %1851 = vmatprep.subr.mxu0 0.0
      %1852 = vmatpush1.msra.mxu0 0.0
      %1853 = vmatprep.subr.mxu0 0.0
      %1854 = vmatpush1.msra.mxu0 0.0
      %1855 = vmatprep.subr.mxu0 0.0
      %1856 = vmatpush1.msra.mxu0 0.0
      %1857 = vmatprep.subr.mxu0 0.0
      %1858 = vmatpush1.msra.mxu0 0.0
      %1859 = vmatprep.subr.mxu0 0.0
      %1860 = vmatpush1.msra.mxu0 0.0
      %1861 = vmatprep.subr.mxu0 0.0
      %1862 = vmatpush1.msra.mxu0 0.0
      %1863 = vmatprep.subr.mxu0 0.0
      %1864 = vmatpush1.msra.mxu0 0.0
      %1865 = vmatprep.subr.mxu0 0.0
      %1866 = vmatpush1.msra.mxu0 0.0
      %1867 = vmatprep.subr.mxu0 0.0
      %1868 = vmatpush1.msra.mxu0 0.0
      %1869 = vmatprep.subr.mxu0 %v1410
      %1870 = vmatpush1.msra.mxu0 %v1407
      %1871 = vmatprep.subr.mxu0 %v1300
      %1872 = vmatpush1.msra.mxu0 %v1299
      %1873 = vmatprep.subr.mxu0 %v1262
      %1874 = vmatpush1.msra.mxu0 %v1261
      %1875 = vmatprep.subr.mxu0 %v1224
      %1876 = vmatpush1.msra.mxu0 %v1223
      %1877 = vmatprep.subr.mxu0 0.0
      %1878 = vmatpush2.msra.mxu0 0.0
      %1879 = vmatprep.subr.mxu0 0.0
      %1880 = vmatpush2.msra.mxu0 0.0
      %1881 = vmatprep.subr.mxu0 0.0
      %1882 = vmatpush2.msra.mxu0 0.0
      %1883 = vmatprep.subr.mxu0 0.0
      %1884 = vmatpush2.msra.mxu0 0.0
      %1885 = vmatprep.subr.mxu0 0.0
      %1886 = vmatpush2.msra.mxu0 0.0
      %1887 = vmatprep.subr.mxu0 0.0
      %1888 = vmatpush2.msra.mxu0 0.0
      %1889 = vmatprep.subr.mxu0 0.0
      %1890 = vmatpush2.msra.mxu0 0.0
      %1891 = vmatprep.subr.mxu0 0.0
      %1892 = vmatpush2.msra.mxu0 0.0
      %1893 = vmatprep.subr.mxu0 0.0
      %1894 = vmatpush2.msra.mxu0 0.0
      %1895 = vmatprep.subr.mxu0 0.0
      %1896 = vmatpush2.msra.mxu0 0.0
      %1897 = vmatprep.subr.mxu0 0.0
      %1898 = vmatpush2.msra.mxu0 0.0
      %1899 = vmatprep.subr.mxu0 0.0
      %1900 = vmatpush2.msra.mxu0 0.0
      %1901 = vmatprep.subr.mxu0 0.0
      %1902 = vmatpush2.msra.mxu0 0.0
      %1903 = vmatprep.subr.mxu0 0.0
      %1904 = vmatpush2.msra.mxu0 0.0
      %1905 = vmatprep.subr.mxu0 0.0
      %1906 = vmatpush2.msra.mxu0 0.0
      %1907 = vmatprep.subr.mxu0 0.0
      %1908 = vmatpush2.msra.mxu0 0.0
      %1909 = vmatprep.mubr.f32.mxu0 0.0
      %1910 = vmatmul.mubr.f32.gmra.mxu0 %v1373
      %v1911 = vpop.f32.mrf.mxu0
      %v1912 = vadd.f32 %v1369, %v1911
      %v1913 = vpop.f32.mrf.mxu0
      %v1914 = vadd.f32 %v1369, %v1913
      %1915 = vdwg.mxu0
      %1916 = vmatprep.subr.mxu0 0.0
      %1917 = vmatpush1.msra.mxu0 0.0
      %1918 = vmatprep.subr.mxu0 0.0
      %1919 = vmatpush1.msra.mxu0 0.0
      %1920 = vmatprep.subr.mxu0 0.0
      %1921 = vmatpush1.msra.mxu0 0.0
      %1922 = vmatprep.subr.mxu0 0.0
      %1923 = vmatpush1.msra.mxu0 0.0
      %1924 = vmatprep.subr.mxu0 0.0
      %1925 = vmatpush1.msra.mxu0 0.0
      %1926 = vmatprep.subr.mxu0 0.0
      %1927 = vmatpush1.msra.mxu0 0.0
      %1928 = vmatprep.subr.mxu0 0.0
      %1929 = vmatpush1.msra.mxu0 0.0
      %1930 = vmatprep.subr.mxu0 0.0
      %1931 = vmatpush1.msra.mxu0 0.0
      %1932 = vmatprep.subr.mxu0 0.0
      %1933 = vmatpush1.msra.mxu0 0.0
      %1934 = vmatprep.subr.mxu0 0.0
      %1935 = vmatpush1.msra.mxu0 0.0
      %1936 = vmatprep.subr.mxu0 0.0
      %1937 = vmatpush1.msra.mxu0 0.0
      %1938 = vmatprep.subr.mxu0 0.0
      %1939 = vmatpush1.msra.mxu0 0.0
      %1940 = vmatprep.subr.mxu0 %v1416
      %1941 = vmatpush1.msra.mxu0 %v1413
      %1942 = vmatprep.subr.mxu0 %v1302
      %1943 = vmatpush1.msra.mxu0 %v1301
      %1944 = vmatprep.subr.mxu0 %v1264
      %1945 = vmatpush1.msra.mxu0 %v1263
      %1946 = vmatprep.subr.mxu0 %v1226
      %1947 = vmatpush1.msra.mxu0 %v1225
      %1948 = vmatprep.subr.mxu0 0.0
      %1949 = vmatpush2.msra.mxu0 0.0
      %1950 = vmatprep.subr.mxu0 0.0
      %1951 = vmatpush2.msra.mxu0 0.0
      %1952 = vmatprep.subr.mxu0 0.0
      %1953 = vmatpush2.msra.mxu0 0.0
      %1954 = vmatprep.subr.mxu0 0.0
      %1955 = vmatpush2.msra.mxu0 0.0
      %1956 = vmatprep.subr.mxu0 0.0
      %1957 = vmatpush2.msra.mxu0 0.0
      %1958 = vmatprep.subr.mxu0 0.0
      %1959 = vmatpush2.msra.mxu0 0.0
      %1960 = vmatprep.subr.mxu0 0.0
      %1961 = vmatpush2.msra.mxu0 0.0
      %1962 = vmatprep.subr.mxu0 0.0
      %1963 = vmatpush2.msra.mxu0 0.0
      %1964 = vmatprep.subr.mxu0 0.0
      %1965 = vmatpush2.msra.mxu0 0.0
      %1966 = vmatprep.subr.mxu0 0.0
      %1967 = vmatpush2.msra.mxu0 0.0
      %1968 = vmatprep.subr.mxu0 0.0
      %1969 = vmatpush2.msra.mxu0 0.0
      %1970 = vmatprep.subr.mxu0 0.0
      %1971 = vmatpush2.msra.mxu0 0.0
      %1972 = vmatprep.subr.mxu0 0.0
      %1973 = vmatpush2.msra.mxu0 0.0
      %1974 = vmatprep.subr.mxu0 0.0
      %1975 = vmatpush2.msra.mxu0 0.0
      %1976 = vmatprep.subr.mxu0 0.0
      %1977 = vmatpush2.msra.mxu0 0.0
      %1978 = vmatprep.subr.mxu0 0.0
      %1979 = vmatpush2.msra.mxu0 0.0
      %1980 = vmatprep.mubr.f32.mxu0 0.0
      %1981 = vmatmul.mubr.f32.gmra.mxu0 %v1373
      %v1982 = vpop.f32.mrf.mxu0
      %v1983 = vadd.f32 %v1369, %v1982
      %v1984 = vpop.f32.mrf.mxu0
      %v1985 = vadd.f32 %v1369, %v1984
      %1986 = vdwg.mxu0
      %1987 = vmatprep.subr.mxu0 0.0
      %1988 = vmatpush1.msra.mxu0 0.0
      %1989 = vmatprep.subr.mxu0 0.0
      %1990 = vmatpush1.msra.mxu0 0.0
      %1991 = vmatprep.subr.mxu0 0.0
      %1992 = vmatpush1.msra.mxu0 0.0
      %1993 = vmatprep.subr.mxu0 0.0
      %1994 = vmatpush1.msra.mxu0 0.0
      %1995 = vmatprep.subr.mxu0 0.0
      %1996 = vmatpush1.msra.mxu0 0.0
      %1997 = vmatprep.subr.mxu0 0.0
      %1998 = vmatpush1.msra.mxu0 0.0
      %1999 = vmatprep.subr.mxu0 0.0
      %2000 = vmatpush1.msra.mxu0 0.0
      %2001 = vmatprep.subr.mxu0 0.0
      %2002 = vmatpush1.msra.mxu0 0.0
      %2003 = vmatprep.subr.mxu0 0.0
      %2004 = vmatpush1.msra.mxu0 0.0
      %2005 = vmatprep.subr.mxu0 0.0
      %2006 = vmatpush1.msra.mxu0 0.0
      %2007 = vmatprep.subr.mxu0 0.0
      %2008 = vmatpush1.msra.mxu0 0.0
      %2009 = vmatprep.subr.mxu0 0.0
      %2010 = vmatpush1.msra.mxu0 0.0
      %2011 = vmatprep.subr.mxu0 %v1422
      %2012 = vmatpush1.msra.mxu0 %v1419
      %2013 = vmatprep.subr.mxu0 %v1304
      %2014 = vmatpush1.msra.mxu0 %v1303
      %2015 = vmatprep.subr.mxu0 %v1266
      %2016 = vmatpush1.msra.mxu0 %v1265
      %2017 = vmatprep.subr.mxu0 %v1228
      %2018 = vmatpush1.msra.mxu0 %v1227
      %2019 = vmatprep.subr.mxu0 0.0
      %2020 = vmatpush2.msra.mxu0 0.0
      %2021 = vmatprep.subr.mxu0 0.0
      %2022 = vmatpush2.msra.mxu0 0.0
      %2023 = vmatprep.subr.mxu0 0.0
      %2024 = vmatpush2.msra.mxu0 0.0
      %2025 = vmatprep.subr.mxu0 0.0
      %2026 = vmatpush2.msra.mxu0 0.0
      %2027 = vmatprep.subr.mxu0 0.0
      %2028 = vmatpush2.msra.mxu0 0.0
      %2029 = vmatprep.subr.mxu0 0.0
      %2030 = vmatpush2.msra.mxu0 0.0
      %2031 = vmatprep.subr.mxu0 0.0
      %2032 = vmatpush2.msra.mxu0 0.0
      %2033 = vmatprep.subr.mxu0 0.0
      %2034 = vmatpush2.msra.mxu0 0.0
      %2035 = vmatprep.subr.mxu0 0.0
      %2036 = vmatpush2.msra.mxu0 0.0
      %2037 = vmatprep.subr.mxu0 0.0
      %2038 = vmatpush2.msra.mxu0 0.0
      %2039 = vmatprep.subr.mxu0 0.0
      %2040 = vmatpush2.msra.mxu0 0.0
      %2041 = vmatprep.subr.mxu0 0.0
      %2042 = vmatpush2.msra.mxu0 0.0
      %2043 = vmatprep.subr.mxu0 0.0
      %2044 = vmatpush2.msra.mxu0 0.0
      %2045 = vmatprep.subr.mxu0 0.0
      %2046 = vmatpush2.msra.mxu0 0.0
      %2047 = vmatprep.subr.mxu0 0.0
      %2048 = vmatpush2.msra.mxu0 0.0
      %2049 = vmatprep.subr.mxu0 0.0
      %2050 = vmatpush2.msra.mxu0 0.0
      %2051 = vmatprep.mubr.f32.mxu0 0.0
      %2052 = vmatmul.mubr.f32.gmra.mxu0 %v1373
      %v2053 = vpop.f32.mrf.mxu0
      %v2054 = vadd.f32 %v1369, %v2053
      %v2055 = vpop.f32.mrf.mxu0
      %v2056 = vadd.f32 %v1369, %v2055
      %2057 = vdwg.mxu0
      %2058 = vmatprep.subr.mxu0 0.0
      %2059 = vmatpush1.msra.mxu0 0.0
      %2060 = vmatprep.subr.mxu0 0.0
      %2061 = vmatpush1.msra.mxu0 0.0
      %2062 = vmatprep.subr.mxu0 0.0
      %2063 = vmatpush1.msra.mxu0 0.0
      %2064 = vmatprep.subr.mxu0 0.0
      %2065 = vmatpush1.msra.mxu0 0.0
      %2066 = vmatprep.subr.mxu0 0.0
      %2067 = vmatpush1.msra.mxu0 0.0
      %2068 = vmatprep.subr.mxu0 0.0
      %2069 = vmatpush1.msra.mxu0 0.0
      %2070 = vmatprep.subr.mxu0 0.0
      %2071 = vmatpush1.msra.mxu0 0.0
      %2072 = vmatprep.subr.mxu0 0.0
      %2073 = vmatpush1.msra.mxu0 0.0
      %2074 = vmatprep.subr.mxu0 0.0
      %2075 = vmatpush1.msra.mxu0 0.0
      %2076 = vmatprep.subr.mxu0 0.0
      %2077 = vmatpush1.msra.mxu0 0.0
      %2078 = vmatprep.subr.mxu0 0.0
      %2079 = vmatpush1.msra.mxu0 0.0
      %2080 = vmatprep.subr.mxu0 0.0
      %2081 = vmatpush1.msra.mxu0 0.0
      %2082 = vmatprep.subr.mxu0 %v1428
      %2083 = vmatpush1.msra.mxu0 %v1425
      %2084 = vmatprep.subr.mxu0 %v1306
      %2085 = vmatpush1.msra.mxu0 %v1305
      %2086 = vmatprep.subr.mxu0 %v1268
      %2087 = vmatpush1.msra.mxu0 %v1267
      %2088 = vmatprep.subr.mxu0 %v1230
      %2089 = vmatpush1.msra.mxu0 %v1229
      %2090 = vmatprep.subr.mxu0 0.0
      %2091 = vmatpush2.msra.mxu0 0.0
      %2092 = vmatprep.subr.mxu0 0.0
      %2093 = vmatpush2.msra.mxu0 0.0
      %2094 = vmatprep.subr.mxu0 0.0
      %2095 = vmatpush2.msra.mxu0 0.0
      %2096 = vmatprep.subr.mxu0 0.0
      %2097 = vmatpush2.msra.mxu0 0.0
      %2098 = vmatprep.subr.mxu0 0.0
      %2099 = vmatpush2.msra.mxu0 0.0
      %2100 = vmatprep.subr.mxu0 0.0
      %2101 = vmatpush2.msra.mxu0 0.0
      %2102 = vmatprep.subr.mxu0 0.0
      %2103 = vmatpush2.msra.mxu0 0.0
      %2104 = vmatprep.subr.mxu0 0.0
      %2105 = vmatpush2.msra.mxu0 0.0
      %2106 = vmatprep.subr.mxu0 0.0
      %2107 = vmatpush2.msra.mxu0 0.0
      %2108 = vmatprep.subr.mxu0 0.0
      %2109 = vmatpush2.msra.mxu0 0.0
      %2110 = vmatprep.subr.mxu0 0.0
      %2111 = vmatpush2.msra.mxu0 0.0
      %2112 = vmatprep.subr.mxu0 0.0
      %2113 = vmatpush2.msra.mxu0 0.0
      %2114 = vmatprep.subr.mxu0 0.0
      %2115 = vmatpush2.msra.mxu0 0.0
      %2116 = vmatprep.subr.mxu0 0.0
      %2117 = vmatpush2.msra.mxu0 0.0
      %2118 = vmatprep.subr.mxu0 0.0
      %2119 = vmatpush2.msra.mxu0 0.0
      %2120 = vmatprep.subr.mxu0 0.0
      %2121 = vmatpush2.msra.mxu0 0.0
      %2122 = vmatprep.mubr.f32.mxu0 0.0
      %2123 = vmatmul.mubr.f32.gmra.mxu0 %v1373
      %v2124 = vpop.f32.mrf.mxu0
      %v2125 = vadd.f32 %v1369, %v2124
      %v2126 = vpop.f32.mrf.mxu0
      %v2127 = vadd.f32 %v1369, %v2126
      %2128 = vdwg.mxu0
      %2129 = vmatprep.subr.mxu0 0.0
      %2130 = vmatpush1.msra.mxu0 0.0
      %2131 = vmatprep.subr.mxu0 0.0
      %2132 = vmatpush1.msra.mxu0 0.0
      %2133 = vmatprep.subr.mxu0 0.0
      %2134 = vmatpush1.msra.mxu0 0.0
      %2135 = vmatprep.subr.mxu0 0.0
      %2136 = vmatpush1.msra.mxu0 0.0
      %2137 = vmatprep.subr.mxu0 0.0
      %2138 = vmatpush1.msra.mxu0 0.0
      %2139 = vmatprep.subr.mxu0 0.0
      %2140 = vmatpush1.msra.mxu0 0.0
      %2141 = vmatprep.subr.mxu0 0.0
      %2142 = vmatpush1.msra.mxu0 0.0
      %2143 = vmatprep.subr.mxu0 0.0
      %2144 = vmatpush1.msra.mxu0 0.0
      %2145 = vmatprep.subr.mxu0 0.0
      %2146 = vmatpush1.msra.mxu0 0.0
      %2147 = vmatprep.subr.mxu0 0.0
      %2148 = vmatpush1.msra.mxu0 0.0
      %2149 = vmatprep.subr.mxu0 0.0
      %2150 = vmatpush1.msra.mxu0 0.0
      %2151 = vmatprep.subr.mxu0 0.0
      %2152 = vmatpush1.msra.mxu0 0.0
      %2153 = vmatprep.subr.mxu0 %v1434
      %2154 = vmatpush1.msra.mxu0 %v1431
      %2155 = vmatprep.subr.mxu0 %v1308
      %2156 = vmatpush1.msra.mxu0 %v1307
      %2157 = vmatprep.subr.mxu0 %v1270
      %2158 = vmatpush1.msra.mxu0 %v1269
      %2159 = vmatprep.subr.mxu0 %v1232
      %2160 = vmatpush1.msra.mxu0 %v1231
      %2161 = vmatprep.subr.mxu0 0.0
      %2162 = vmatpush2.msra.mxu0 0.0
      %2163 = vmatprep.subr.mxu0 0.0
      %2164 = vmatpush2.msra.mxu0 0.0
      %2165 = vmatprep.subr.mxu0 0.0
      %2166 = vmatpush2.msra.mxu0 0.0
      %2167 = vmatprep.subr.mxu0 0.0
      %2168 = vmatpush2.msra.mxu0 0.0
      %2169 = vmatprep.subr.mxu0 0.0
      %2170 = vmatpush2.msra.mxu0 0.0
      %2171 = vmatprep.subr.mxu0 0.0
      %2172 = vmatpush2.msra.mxu0 0.0
      %2173 = vmatprep.subr.mxu0 0.0
      %2174 = vmatpush2.msra.mxu0 0.0
      %2175 = vmatprep.subr.mxu0 0.0
      %2176 = vmatpush2.msra.mxu0 0.0
      %2177 = vmatprep.subr.mxu0 0.0
      %2178 = vmatpush2.msra.mxu0 0.0
      %2179 = vmatprep.subr.mxu0 0.0
      %2180 = vmatpush2.msra.mxu0 0.0
      %2181 = vmatprep.subr.mxu0 0.0
      %2182 = vmatpush2.msra.mxu0 0.0
      %2183 = vmatprep.subr.mxu0 0.0
      %2184 = vmatpush2.msra.mxu0 0.0
      %2185 = vmatprep.subr.mxu0 0.0
      %2186 = vmatpush2.msra.mxu0 0.0
      %2187 = vmatprep.subr.mxu0 0.0
      %2188 = vmatpush2.msra.mxu0 0.0
      %2189 = vmatprep.subr.mxu0 0.0
      %2190 = vmatpush2.msra.mxu0 0.0
      %2191 = vmatprep.subr.mxu0 0.0
      %2192 = vmatpush2.msra.mxu0 0.0
      %2193 = vmatprep.mubr.f32.mxu0 0.0
      %2194 = vmatmul.mubr.f32.gmra.mxu0 %v1373
      %v2195 = vpop.f32.mrf.mxu0
      %v2196 = vadd.f32 %v1369, %v2195
      %v2197 = vpop.f32.mrf.mxu0
      %v2198 = vadd.f32 %v1369, %v2197
      %2199 = vdwg.mxu0
      %2200 = vmatprep.subr.mxu0 0.0
      %2201 = vmatpush1.msra.mxu0 0.0
      %2202 = vmatprep.subr.mxu0 0.0
      %2203 = vmatpush1.msra.mxu0 0.0
      %2204 = vmatprep.subr.mxu0 0.0
      %2205 = vmatpush1.msra.mxu0 0.0
      %2206 = vmatprep.subr.mxu0 0.0
      %2207 = vmatpush1.msra.mxu0 0.0
      %2208 = vmatprep.subr.mxu0 0.0
      %2209 = vmatpush1.msra.mxu0 0.0
      %2210 = vmatprep.subr.mxu0 0.0
      %2211 = vmatpush1.msra.mxu0 0.0
      %2212 = vmatprep.subr.mxu0 0.0
      %2213 = vmatpush1.msra.mxu0 0.0
      %2214 = vmatprep.subr.mxu0 0.0
      %2215 = vmatpush1.msra.mxu0 0.0
      %2216 = vmatprep.subr.mxu0 0.0
      %2217 = vmatpush1.msra.mxu0 0.0
      %2218 = vmatprep.subr.mxu0 0.0
      %2219 = vmatpush1.msra.mxu0 0.0
      %2220 = vmatprep.subr.mxu0 0.0
      %2221 = vmatpush1.msra.mxu0 0.0
      %2222 = vmatprep.subr.mxu0 0.0
      %2223 = vmatpush1.msra.mxu0 0.0
      %2224 = vmatprep.subr.mxu0 %v1440
      %2225 = vmatpush1.msra.mxu0 %v1437
      %2226 = vmatprep.subr.mxu0 %v1310
      %2227 = vmatpush1.msra.mxu0 %v1309
      %2228 = vmatprep.subr.mxu0 %v1272
      %2229 = vmatpush1.msra.mxu0 %v1271
      %2230 = vmatprep.subr.mxu0 %v1234
      %2231 = vmatpush1.msra.mxu0 %v1233
      %2232 = vmatprep.subr.mxu0 0.0
      %2233 = vmatpush2.msra.mxu0 0.0
      %2234 = vmatprep.subr.mxu0 0.0
      %2235 = vmatpush2.msra.mxu0 0.0
      %2236 = vmatprep.subr.mxu0 0.0
      %2237 = vmatpush2.msra.mxu0 0.0
      %2238 = vmatprep.subr.mxu0 0.0
      %2239 = vmatpush2.msra.mxu0 0.0
      %2240 = vmatprep.subr.mxu0 0.0
      %2241 = vmatpush2.msra.mxu0 0.0
      %2242 = vmatprep.subr.mxu0 0.0
      %2243 = vmatpush2.msra.mxu0 0.0
      %2244 = vmatprep.subr.mxu0 0.0
      %2245 = vmatpush2.msra.mxu0 0.0
      %2246 = vmatprep.subr.mxu0 0.0
      %2247 = vmatpush2.msra.mxu0 0.0
      %2248 = vmatprep.subr.mxu0 0.0
      %2249 = vmatpush2.msra.mxu0 0.0
      %2250 = vmatprep.subr.mxu0 0.0
      %2251 = vmatpush2.msra.mxu0 0.0
      %2252 = vmatprep.subr.mxu0 0.0
      %2253 = vmatpush2.msra.mxu0 0.0
      %2254 = vmatprep.subr.mxu0 0.0
      %2255 = vmatpush2.msra.mxu0 0.0
      %2256 = vmatprep.subr.mxu0 0.0
      %2257 = vmatpush2.msra.mxu0 0.0
      %2258 = vmatprep.subr.mxu0 0.0
      %2259 = vmatpush2.msra.mxu0 0.0
      %2260 = vmatprep.subr.mxu0 0.0
      %2261 = vmatpush2.msra.mxu0 0.0
      %2262 = vmatprep.subr.mxu0 0.0
      %2263 = vmatpush2.msra.mxu0 0.0
      %2264 = vmatprep.mubr.f32.mxu0 0.0
      %2265 = vmatmul.mubr.f32.gmra.mxu0 %v1373
      %v2266 = vpop.f32.mrf.mxu0
      %v2267 = vadd.f32 %v1369, %v2266
      %v2268 = vpop.f32.mrf.mxu0
      %v2269 = vadd.f32 %v1369, %v2268
      %2270 = vdwg.mxu0
      %2271 = vmatprep.subr.mxu0 0.0
      %2272 = vmatpush1.msra.mxu0 0.0
      %2273 = vmatprep.subr.mxu0 0.0
      %2274 = vmatpush1.msra.mxu0 0.0
      %2275 = vmatprep.subr.mxu0 0.0
      %2276 = vmatpush1.msra.mxu0 0.0
      %2277 = vmatprep.subr.mxu0 0.0
      %2278 = vmatpush1.msra.mxu0 0.0
      %2279 = vmatprep.subr.mxu0 0.0
      %2280 = vmatpush1.msra.mxu0 0.0
      %2281 = vmatprep.subr.mxu0 0.0
      %2282 = vmatpush1.msra.mxu0 0.0
      %2283 = vmatprep.subr.mxu0 0.0
      %2284 = vmatpush1.msra.mxu0 0.0
      %2285 = vmatprep.subr.mxu0 0.0
      %2286 = vmatpush1.msra.mxu0 0.0
      %2287 = vmatprep.subr.mxu0 0.0
      %2288 = vmatpush1.msra.mxu0 0.0
      %2289 = vmatprep.subr.mxu0 0.0
      %2290 = vmatpush1.msra.mxu0 0.0
      %2291 = vmatprep.subr.mxu0 0.0
      %2292 = vmatpush1.msra.mxu0 0.0
      %2293 = vmatprep.subr.mxu0 0.0
      %2294 = vmatpush1.msra.mxu0 0.0
      %2295 = vmatprep.subr.mxu0 %v1446
      %2296 = vmatpush1.msra.mxu0 %v1443
      %2297 = vmatprep.subr.mxu0 %v1312
      %2298 = vmatpush1.msra.mxu0 %v1311
      %2299 = vmatprep.subr.mxu0 %v1274
      %2300 = vmatpush1.msra.mxu0 %v1273
      %2301 = vmatprep.subr.mxu0 %v1236
      %2302 = vmatpush1.msra.mxu0 %v1235
      %2303 = vmatprep.subr.mxu0 0.0
      %2304 = vmatpush2.msra.mxu0 0.0
      %2305 = vmatprep.subr.mxu0 0.0
      %2306 = vmatpush2.msra.mxu0 0.0
      %2307 = vmatprep.subr.mxu0 0.0
      %2308 = vmatpush2.msra.mxu0 0.0
      %2309 = vmatprep.subr.mxu0 0.0
      %2310 = vmatpush2.msra.mxu0 0.0
      %2311 = vmatprep.subr.mxu0 0.0
      %2312 = vmatpush2.msra.mxu0 0.0
      %2313 = vmatprep.subr.mxu0 0.0
      %2314 = vmatpush2.msra.mxu0 0.0
      %2315 = vmatprep.subr.mxu0 0.0
      %2316 = vmatpush2.msra.mxu0 0.0
      %2317 = vmatprep.subr.mxu0 0.0
      %2318 = vmatpush2.msra.mxu0 0.0
      %2319 = vmatprep.subr.mxu0 0.0
      %2320 = vmatpush2.msra.mxu0 0.0
      %2321 = vmatprep.subr.mxu0 0.0
      %2322 = vmatpush2.msra.mxu0 0.0
      %2323 = vmatprep.subr.mxu0 0.0
      %2324 = vmatpush2.msra.mxu0 0.0
      %2325 = vmatprep.subr.mxu0 0.0
      %2326 = vmatpush2.msra.mxu0 0.0
      %2327 = vmatprep.subr.mxu0 0.0
      %2328 = vmatpush2.msra.mxu0 0.0
      %2329 = vmatprep.subr.mxu0 0.0
      %2330 = vmatpush2.msra.mxu0 0.0
      %2331 = vmatprep.subr.mxu0 0.0
      %2332 = vmatpush2.msra.mxu0 0.0
      %2333 = vmatprep.subr.mxu0 0.0
      %2334 = vmatpush2.msra.mxu0 0.0
      %2335 = vmatprep.mubr.f32.mxu0 0.0
      %2336 = vmatmul.mubr.f32.gmra.mxu0 %v1373
      %v2337 = vpop.f32.mrf.mxu0
      %v2338 = vadd.f32 %v1369, %v2337
      %v2339 = vpop.f32.mrf.mxu0
      %v2340 = vadd.f32 %v1369, %v2339
      %2341 = vdwg.mxu0
      %2342 = vmatprep.subr.mxu0 0.0
      %2343 = vmatpush1.msra.mxu0 0.0
      %2344 = vmatprep.subr.mxu0 0.0
      %2345 = vmatpush1.msra.mxu0 0.0
      %2346 = vmatprep.subr.mxu0 0.0
      %2347 = vmatpush1.msra.mxu0 0.0
      %2348 = vmatprep.subr.mxu0 0.0
      %2349 = vmatpush1.msra.mxu0 0.0
      %2350 = vmatprep.subr.mxu0 0.0
      %2351 = vmatpush1.msra.mxu0 0.0
      %2352 = vmatprep.subr.mxu0 0.0
      %2353 = vmatpush1.msra.mxu0 0.0
      %2354 = vmatprep.subr.mxu0 0.0
      %2355 = vmatpush1.msra.mxu0 0.0
      %2356 = vmatprep.subr.mxu0 0.0
      %2357 = vmatpush1.msra.mxu0 0.0
      %2358 = vmatprep.subr.mxu0 0.0
      %2359 = vmatpush1.msra.mxu0 0.0
      %2360 = vmatprep.subr.mxu0 0.0
      %2361 = vmatpush1.msra.mxu0 0.0
      %2362 = vmatprep.subr.mxu0 0.0
      %2363 = vmatpush1.msra.mxu0 0.0
      %2364 = vmatprep.subr.mxu0 0.0
      %2365 = vmatpush1.msra.mxu0 0.0
      %2366 = vmatprep.subr.mxu0 %v1452
      %2367 = vmatpush1.msra.mxu0 %v1449
      %2368 = vmatprep.subr.mxu0 %v1314
      %2369 = vmatpush1.msra.mxu0 %v1313
      %2370 = vmatprep.subr.mxu0 %v1276
      %2371 = vmatpush1.msra.mxu0 %v1275
      %2372 = vmatprep.subr.mxu0 %v1238
      %2373 = vmatpush1.msra.mxu0 %v1237
      %2374 = vmatprep.subr.mxu0 0.0
      %2375 = vmatpush2.msra.mxu0 0.0
      %2376 = vmatprep.subr.mxu0 0.0
      %2377 = vmatpush2.msra.mxu0 0.0
      %2378 = vmatprep.subr.mxu0 0.0
      %2379 = vmatpush2.msra.mxu0 0.0
      %2380 = vmatprep.subr.mxu0 0.0
      %2381 = vmatpush2.msra.mxu0 0.0
      %2382 = vmatprep.subr.mxu0 0.0
      %2383 = vmatpush2.msra.mxu0 0.0
      %2384 = vmatprep.subr.mxu0 0.0
      %2385 = vmatpush2.msra.mxu0 0.0
      %2386 = vmatprep.subr.mxu0 0.0
      %2387 = vmatpush2.msra.mxu0 0.0
      %2388 = vmatprep.subr.mxu0 0.0
      %2389 = vmatpush2.msra.mxu0 0.0
      %2390 = vmatprep.subr.mxu0 0.0
      %2391 = vmatpush2.msra.mxu0 0.0
      %2392 = vmatprep.subr.mxu0 0.0
      %2393 = vmatpush2.msra.mxu0 0.0
      %2394 = vmatprep.subr.mxu0 0.0
      %2395 = vmatpush2.msra.mxu0 0.0
      %2396 = vmatprep.subr.mxu0 0.0
      %2397 = vmatpush2.msra.mxu0 0.0
      %2398 = vmatprep.subr.mxu0 0.0
      %2399 = vmatpush2.msra.mxu0 0.0
      %2400 = vmatprep.subr.mxu0 0.0
      %2401 = vmatpush2.msra.mxu0 0.0
      %2402 = vmatprep.subr.mxu0 0.0
      %2403 = vmatpush2.msra.mxu0 0.0
      %2404 = vmatprep.subr.mxu0 0.0
      %2405 = vmatpush2.msra.mxu0 0.0
      %2406 = vmatprep.mubr.f32.mxu0 0.0
      %2407 = vmatmul.mubr.f32.gmra.mxu0 %v1373
      %v2408 = vpop.f32.mrf.mxu0
      %v2409 = vadd.f32 %v1369, %v2408
      %v2410 = vpop.f32.mrf.mxu0
      %v2411 = vadd.f32 %v1369, %v2410
      %2412 = vdwg.mxu0
      %2413 = vmatprep.subr.mxu0 0.0
      %2414 = vmatpush1.msra.mxu0 0.0
      %2415 = vmatprep.subr.mxu0 0.0
      %2416 = vmatpush1.msra.mxu0 0.0
      %2417 = vmatprep.subr.mxu0 0.0
      %2418 = vmatpush1.msra.mxu0 0.0
      %2419 = vmatprep.subr.mxu0 0.0
      %2420 = vmatpush1.msra.mxu0 0.0
      %2421 = vmatprep.subr.mxu0 0.0
      %2422 = vmatpush1.msra.mxu0 0.0
      %2423 = vmatprep.subr.mxu0 0.0
      %2424 = vmatpush1.msra.mxu0 0.0
      %2425 = vmatprep.subr.mxu0 0.0
      %2426 = vmatpush1.msra.mxu0 0.0
      %2427 = vmatprep.subr.mxu0 0.0
      %2428 = vmatpush1.msra.mxu0 0.0
      %2429 = vmatprep.subr.mxu0 0.0
      %2430 = vmatpush1.msra.mxu0 0.0
      %2431 = vmatprep.subr.mxu0 0.0
      %2432 = vmatpush1.msra.mxu0 0.0
      %2433 = vmatprep.subr.mxu0 0.0
      %2434 = vmatpush1.msra.mxu0 0.0
      %2435 = vmatprep.subr.mxu0 0.0
      %2436 = vmatpush1.msra.mxu0 0.0
      %2437 = vmatprep.subr.mxu0 %v1458
      %2438 = vmatpush1.msra.mxu0 %v1455
      %2439 = vmatprep.subr.mxu0 %v1316
      %2440 = vmatpush1.msra.mxu0 %v1315
      %2441 = vmatprep.subr.mxu0 %v1278
      %2442 = vmatpush1.msra.mxu0 %v1277
      %2443 = vmatprep.subr.mxu0 %v1240
      %2444 = vmatpush1.msra.mxu0 %v1239
      %2445 = vmatprep.subr.mxu0 0.0
      %2446 = vmatpush2.msra.mxu0 0.0
      %2447 = vmatprep.subr.mxu0 0.0
      %2448 = vmatpush2.msra.mxu0 0.0
      %2449 = vmatprep.subr.mxu0 0.0
      %2450 = vmatpush2.msra.mxu0 0.0
      %2451 = vmatprep.subr.mxu0 0.0
      %2452 = vmatpush2.msra.mxu0 0.0
      %2453 = vmatprep.subr.mxu0 0.0
      %2454 = vmatpush2.msra.mxu0 0.0
      %2455 = vmatprep.subr.mxu0 0.0
      %2456 = vmatpush2.msra.mxu0 0.0
      %2457 = vmatprep.subr.mxu0 0.0
      %2458 = vmatpush2.msra.mxu0 0.0
      %2459 = vmatprep.subr.mxu0 0.0
      %2460 = vmatpush2.msra.mxu0 0.0
      %2461 = vmatprep.subr.mxu0 0.0
      %2462 = vmatpush2.msra.mxu0 0.0
      %2463 = vmatprep.subr.mxu0 0.0
      %2464 = vmatpush2.msra.mxu0 0.0
      %2465 = vmatprep.subr.mxu0 0.0
      %2466 = vmatpush2.msra.mxu0 0.0
      %2467 = vmatprep.subr.mxu0 0.0
      %2468 = vmatpush2.msra.mxu0 0.0
      %2469 = vmatprep.subr.mxu0 0.0
      %2470 = vmatpush2.msra.mxu0 0.0
      %2471 = vmatprep.subr.mxu0 0.0
      %2472 = vmatpush2.msra.mxu0 0.0
      %2473 = vmatprep.subr.mxu0 0.0
      %2474 = vmatpush2.msra.mxu0 0.0
      %2475 = vmatprep.subr.mxu0 0.0
      %2476 = vmatpush2.msra.mxu0 0.0
      %2477 = vmatprep.mubr.f32.mxu0 0.0
      %2478 = vmatmul.mubr.f32.gmra.mxu0 %v1373
      %v2479 = vpop.f32.mrf.mxu0
      %v2480 = vadd.f32 %v1369, %v2479
      %v2481 = vpop.f32.mrf.mxu0
      %v2482 = vadd.f32 %v1369, %v2481
      %2483 = vdwg.mxu0
      %2484 = vmatprep.subr.mxu0 0.0
      %2485 = vmatpush1.msra.mxu0 0.0
      %2486 = vmatprep.subr.mxu0 0.0
      %2487 = vmatpush1.msra.mxu0 0.0
      %2488 = vmatprep.subr.mxu0 0.0
      %2489 = vmatpush1.msra.mxu0 0.0
      %2490 = vmatprep.subr.mxu0 0.0
      %2491 = vmatpush1.msra.mxu0 0.0
      %2492 = vmatprep.subr.mxu0 0.0
      %2493 = vmatpush1.msra.mxu0 0.0
      %2494 = vmatprep.subr.mxu0 0.0
      %2495 = vmatpush1.msra.mxu0 0.0
      %2496 = vmatprep.subr.mxu0 0.0
      %2497 = vmatpush1.msra.mxu0 0.0
      %2498 = vmatprep.subr.mxu0 0.0
      %2499 = vmatpush1.msra.mxu0 0.0
      %2500 = vmatprep.subr.mxu0 0.0
      %2501 = vmatpush1.msra.mxu0 0.0
      %2502 = vmatprep.subr.mxu0 0.0
      %2503 = vmatpush1.msra.mxu0 0.0
      %2504 = vmatprep.subr.mxu0 0.0
      %2505 = vmatpush1.msra.mxu0 0.0
      %2506 = vmatprep.subr.mxu0 0.0
      %2507 = vmatpush1.msra.mxu0 0.0
      %2508 = vmatprep.subr.mxu0 %v1464
      %2509 = vmatpush1.msra.mxu0 %v1461
      %2510 = vmatprep.subr.mxu0 %v1318
      %2511 = vmatpush1.msra.mxu0 %v1317
      %2512 = vmatprep.subr.mxu0 %v1280
      %2513 = vmatpush1.msra.mxu0 %v1279
      %2514 = vmatprep.subr.mxu0 %v1242
      %2515 = vmatpush1.msra.mxu0 %v1241
      %2516 = vmatprep.subr.mxu0 0.0
      %2517 = vmatpush2.msra.mxu0 0.0
      %2518 = vmatprep.subr.mxu0 0.0
      %2519 = vmatpush2.msra.mxu0 0.0
      %2520 = vmatprep.subr.mxu0 0.0
      %2521 = vmatpush2.msra.mxu0 0.0
      %2522 = vmatprep.subr.mxu0 0.0
      %2523 = vmatpush2.msra.mxu0 0.0
      %2524 = vmatprep.subr.mxu0 0.0
      %2525 = vmatpush2.msra.mxu0 0.0
      %2526 = vmatprep.subr.mxu0 0.0
      %2527 = vmatpush2.msra.mxu0 0.0
      %2528 = vmatprep.subr.mxu0 0.0
      %2529 = vmatpush2.msra.mxu0 0.0
      %2530 = vmatprep.subr.mxu0 0.0
      %2531 = vmatpush2.msra.mxu0 0.0
      %2532 = vmatprep.subr.mxu0 0.0
      %2533 = vmatpush2.msra.mxu0 0.0
      %2534 = vmatprep.subr.mxu0 0.0
      %2535 = vmatpush2.msra.mxu0 0.0
      %2536 = vmatprep.subr.mxu0 0.0
      %2537 = vmatpush2.msra.mxu0 0.0
      %2538 = vmatprep.subr.mxu0 0.0
      %2539 = vmatpush2.msra.mxu0 0.0
      %2540 = vmatprep.subr.mxu0 0.0
      %2541 = vmatpush2.msra.mxu0 0.0
      %2542 = vmatprep.subr.mxu0 0.0
      %2543 = vmatpush2.msra.mxu0 0.0
      %2544 = vmatprep.subr.mxu0 0.0
      %2545 = vmatpush2.msra.mxu0 0.0
      %2546 = vmatprep.subr.mxu0 0.0
      %2547 = vmatpush2.msra.mxu0 0.0
      %2548 = vmatprep.mubr.f32.mxu0 0.0
      %2549 = vmatmul.mubr.f32.gmra.mxu0 %v1373
      %v2550 = vpop.f32.mrf.mxu0
      %v2551 = vadd.f32 %v1369, %v2550
      %v2552 = vpop.f32.mrf.mxu0
      %v2553 = vadd.f32 %v1369, %v2552
      %2554 = vdwg.mxu0
      %2555 = vmatprep.subr.mxu0 0.0
      %2556 = vmatpush1.msra.mxu0 0.0
      %2557 = vmatprep.subr.mxu0 0.0
      %2558 = vmatpush1.msra.mxu0 0.0
      %2559 = vmatprep.subr.mxu0 0.0
      %2560 = vmatpush1.msra.mxu0 0.0
      %2561 = vmatprep.subr.mxu0 0.0
      %2562 = vmatpush1.msra.mxu0 0.0
      %2563 = vmatprep.subr.mxu0 0.0
      %2564 = vmatpush1.msra.mxu0 0.0
      %2565 = vmatprep.subr.mxu0 0.0
      %2566 = vmatpush1.msra.mxu0 0.0
      %2567 = vmatprep.subr.mxu0 0.0
      %2568 = vmatpush1.msra.mxu0 0.0
      %2569 = vmatprep.subr.mxu0 0.0
      %2570 = vmatpush1.msra.mxu0 0.0
      %2571 = vmatprep.subr.mxu0 0.0
      %2572 = vmatpush1.msra.mxu0 0.0
      %2573 = vmatprep.subr.mxu0 0.0
      %2574 = vmatpush1.msra.mxu0 0.0
      %2575 = vmatprep.subr.mxu0 0.0
      %2576 = vmatpush1.msra.mxu0 0.0
      %2577 = vmatprep.subr.mxu0 0.0
      %2578 = vmatpush1.msra.mxu0 0.0
      %2579 = vmatprep.subr.mxu0 %v1470
      %2580 = vmatpush1.msra.mxu0 %v1467
      %2581 = vmatprep.subr.mxu0 %v1320
      %2582 = vmatpush1.msra.mxu0 %v1319
      %2583 = vmatprep.subr.mxu0 %v1282
      %2584 = vmatpush1.msra.mxu0 %v1281
      %2585 = vmatprep.subr.mxu0 %v1244
      %2586 = vmatpush1.msra.mxu0 %v1243
      %2587 = vmatprep.subr.mxu0 0.0
      %2588 = vmatpush2.msra.mxu0 0.0
      %2589 = vmatprep.subr.mxu0 0.0
      %2590 = vmatpush2.msra.mxu0 0.0
      %2591 = vmatprep.subr.mxu0 0.0
      %2592 = vmatpush2.msra.mxu0 0.0
      %2593 = vmatprep.subr.mxu0 0.0
      %2594 = vmatpush2.msra.mxu0 0.0
      %2595 = vmatprep.subr.mxu0 0.0
      %2596 = vmatpush2.msra.mxu0 0.0
      %2597 = vmatprep.subr.mxu0 0.0
      %2598 = vmatpush2.msra.mxu0 0.0
      %2599 = vmatprep.subr.mxu0 0.0
      %2600 = vmatpush2.msra.mxu0 0.0
      %2601 = vmatprep.subr.mxu0 0.0
      %2602 = vmatpush2.msra.mxu0 0.0
      %2603 = vmatprep.subr.mxu0 0.0
      %2604 = vmatpush2.msra.mxu0 0.0
      %2605 = vmatprep.subr.mxu0 0.0
      %2606 = vmatpush2.msra.mxu0 0.0
      %2607 = vmatprep.subr.mxu0 0.0
      %2608 = vmatpush2.msra.mxu0 0.0
      %2609 = vmatprep.subr.mxu0 0.0
      %2610 = vmatpush2.msra.mxu0 0.0
      %2611 = vmatprep.subr.mxu0 0.0
      %2612 = vmatpush2.msra.mxu0 0.0
      %2613 = vmatprep.subr.mxu0 0.0
      %2614 = vmatpush2.msra.mxu0 0.0
      %2615 = vmatprep.subr.mxu0 0.0
      %2616 = vmatpush2.msra.mxu0 0.0
      %2617 = vmatprep.subr.mxu0 0.0
      %2618 = vmatpush2.msra.mxu0 0.0
      %2619 = vmatprep.mubr.f32.mxu0 0.0
      %2620 = vmatmul.mubr.f32.gmra.mxu0 %v1373
      %v2621 = vpop.f32.mrf.mxu0
      %v2622 = vadd.f32 %v1369, %v2621
      %v2623 = vpop.f32.mrf.mxu0
      %v2624 = vadd.f32 %v1369, %v2623
      %2625 = vdwg.mxu0
      %2626 = vmatprep.subr.mxu0 0.0
      %2627 = vmatpush1.msra.mxu0 0.0
      %2628 = vmatprep.subr.mxu0 0.0
      %2629 = vmatpush1.msra.mxu0 0.0
      %2630 = vmatprep.subr.mxu0 0.0
      %2631 = vmatpush1.msra.mxu0 0.0
      %2632 = vmatprep.subr.mxu0 0.0
      %2633 = vmatpush1.msra.mxu0 0.0
      %2634 = vmatprep.subr.mxu0 0.0
      %2635 = vmatpush1.msra.mxu0 0.0
      %2636 = vmatprep.subr.mxu0 0.0
      %2637 = vmatpush1.msra.mxu0 0.0
      %2638 = vmatprep.subr.mxu0 0.0
      %2639 = vmatpush1.msra.mxu0 0.0
      %2640 = vmatprep.subr.mxu0 0.0
      %2641 = vmatpush1.msra.mxu0 0.0
      %2642 = vmatprep.subr.mxu0 0.0
      %2643 = vmatpush1.msra.mxu0 0.0
      %2644 = vmatprep.subr.mxu0 0.0
      %2645 = vmatpush1.msra.mxu0 0.0
      %2646 = vmatprep.subr.mxu0 0.0
      %2647 = vmatpush1.msra.mxu0 0.0
      %2648 = vmatprep.subr.mxu0 0.0
      %2649 = vmatpush1.msra.mxu0 0.0
      %2650 = vmatprep.subr.mxu0 %v1476
      %2651 = vmatpush1.msra.mxu0 %v1473
      %2652 = vmatprep.subr.mxu0 %v1322
      %2653 = vmatpush1.msra.mxu0 %v1321
      %2654 = vmatprep.subr.mxu0 %v1284
      %2655 = vmatpush1.msra.mxu0 %v1283
      %2656 = vmatprep.subr.mxu0 %v1246
      %2657 = vmatpush1.msra.mxu0 %v1245
      %2658 = vmatprep.subr.mxu0 0.0
      %2659 = vmatpush2.msra.mxu0 0.0
      %2660 = vmatprep.subr.mxu0 0.0
      %2661 = vmatpush2.msra.mxu0 0.0
      %2662 = vmatprep.subr.mxu0 0.0
      %2663 = vmatpush2.msra.mxu0 0.0
      %2664 = vmatprep.subr.mxu0 0.0
      %2665 = vmatpush2.msra.mxu0 0.0
      %2666 = vmatprep.subr.mxu0 0.0
      %2667 = vmatpush2.msra.mxu0 0.0
      %2668 = vmatprep.subr.mxu0 0.0
      %2669 = vmatpush2.msra.mxu0 0.0
      %2670 = vmatprep.subr.mxu0 0.0
      %2671 = vmatpush2.msra.mxu0 0.0
      %2672 = vmatprep.subr.mxu0 0.0
      %2673 = vmatpush2.msra.mxu0 0.0
      %2674 = vmatprep.subr.mxu0 0.0
      %2675 = vmatpush2.msra.mxu0 0.0
      %2676 = vmatprep.subr.mxu0 0.0
      %2677 = vmatpush2.msra.mxu0 0.0
      %2678 = vmatprep.subr.mxu0 0.0
      %2679 = vmatpush2.msra.mxu0 0.0
      %2680 = vmatprep.subr.mxu0 0.0
      %2681 = vmatpush2.msra.mxu0 0.0
      %2682 = vmatprep.subr.mxu0 0.0
      %2683 = vmatpush2.msra.mxu0 0.0
      %2684 = vmatprep.subr.mxu0 0.0
      %2685 = vmatpush2.msra.mxu0 0.0
      %2686 = vmatprep.subr.mxu0 0.0
      %2687 = vmatpush2.msra.mxu0 0.0
      %2688 = vmatprep.subr.mxu0 0.0
      %2689 = vmatpush2.msra.mxu0 0.0
      %2690 = vmatprep.mubr.f32.mxu0 0.0
      %2691 = vmatmul.mubr.f32.gmra.mxu0 %v1373
      %v2692 = vpop.f32.mrf.mxu0
      %v2693 = vadd.f32 %v1369, %v2692
      %v2694 = vpop.f32.mrf.mxu0
      %v2695 = vadd.f32 %v1369, %v2694
      %2696 = vdwg.mxu0
      %2697 = vmatprep.subr.mxu0 0.0
      %2698 = vmatpush1.msra.mxu0 0.0
      %2699 = vmatprep.subr.mxu0 0.0
      %2700 = vmatpush1.msra.mxu0 0.0
      %2701 = vmatprep.subr.mxu0 0.0
      %2702 = vmatpush1.msra.mxu0 0.0
      %2703 = vmatprep.subr.mxu0 0.0
      %2704 = vmatpush1.msra.mxu0 0.0
      %2705 = vmatprep.subr.mxu0 0.0
      %2706 = vmatpush1.msra.mxu0 0.0
      %2707 = vmatprep.subr.mxu0 0.0
      %2708 = vmatpush1.msra.mxu0 0.0
      %2709 = vmatprep.subr.mxu0 0.0
      %2710 = vmatpush1.msra.mxu0 0.0
      %2711 = vmatprep.subr.mxu0 0.0
      %2712 = vmatpush1.msra.mxu0 0.0
      %2713 = vmatprep.subr.mxu0 0.0
      %2714 = vmatpush1.msra.mxu0 0.0
      %2715 = vmatprep.subr.mxu0 0.0
      %2716 = vmatpush1.msra.mxu0 0.0
      %2717 = vmatprep.subr.mxu0 0.0
      %2718 = vmatpush1.msra.mxu0 0.0
      %2719 = vmatprep.subr.mxu0 0.0
      %2720 = vmatpush1.msra.mxu0 0.0
      %2721 = vmatprep.subr.mxu0 %v1482
      %2722 = vmatpush1.msra.mxu0 %v1479
      %2723 = vmatprep.subr.mxu0 %v1324
      %2724 = vmatpush1.msra.mxu0 %v1323
      %2725 = vmatprep.subr.mxu0 %v1286
      %2726 = vmatpush1.msra.mxu0 %v1285
      %2727 = vmatprep.subr.mxu0 %v1248
      %2728 = vmatpush1.msra.mxu0 %v1247
      %2729 = vmatprep.subr.mxu0 0.0
      %2730 = vmatpush2.msra.mxu0 0.0
      %2731 = vmatprep.subr.mxu0 0.0
      %2732 = vmatpush2.msra.mxu0 0.0
      %2733 = vmatprep.subr.mxu0 0.0
      %2734 = vmatpush2.msra.mxu0 0.0
      %2735 = vmatprep.subr.mxu0 0.0
      %2736 = vmatpush2.msra.mxu0 0.0
      %2737 = vmatprep.subr.mxu0 0.0
      %2738 = vmatpush2.msra.mxu0 0.0
      %2739 = vmatprep.subr.mxu0 0.0
      %2740 = vmatpush2.msra.mxu0 0.0
      %2741 = vmatprep.subr.mxu0 0.0
      %2742 = vmatpush2.msra.mxu0 0.0
      %2743 = vmatprep.subr.mxu0 0.0
      %2744 = vmatpush2.msra.mxu0 0.0
      %2745 = vmatprep.subr.mxu0 0.0
      %2746 = vmatpush2.msra.mxu0 0.0
      %2747 = vmatprep.subr.mxu0 0.0
      %2748 = vmatpush2.msra.mxu0 0.0
      %2749 = vmatprep.subr.mxu0 0.0
      %2750 = vmatpush2.msra.mxu0 0.0
      %2751 = vmatprep.subr.mxu0 0.0
      %2752 = vmatpush2.msra.mxu0 0.0
      %2753 = vmatprep.subr.mxu0 0.0
      %2754 = vmatpush2.msra.mxu0 0.0
      %2755 = vmatprep.subr.mxu0 0.0
      %2756 = vmatpush2.msra.mxu0 0.0
      %2757 = vmatprep.subr.mxu0 0.0
      %2758 = vmatpush2.msra.mxu0 0.0
      %2759 = vmatprep.subr.mxu0 0.0
      %2760 = vmatpush2.msra.mxu0 0.0
      %2761 = vmatprep.mubr.f32.mxu0 0.0
      %2762 = vmatmul.mubr.f32.gmra.mxu0 %v1373
      %v2763 = vpop.f32.mrf.mxu0
      %v2764 = vadd.f32 %v1369, %v2763
      %v2765 = vpop.f32.mrf.mxu0
      %v2766 = vadd.f32 %v1369, %v2765
      %2767 = vdwg.mxu0
      %2768 = vmatprep.subr.mxu0 0.0
      %2769 = vmatpush1.msra.mxu0 0.0
      %2770 = vmatprep.subr.mxu0 0.0
      %2771 = vmatpush1.msra.mxu0 0.0
      %2772 = vmatprep.subr.mxu0 0.0
      %2773 = vmatpush1.msra.mxu0 0.0
      %2774 = vmatprep.subr.mxu0 0.0
      %2775 = vmatpush1.msra.mxu0 0.0
      %2776 = vmatprep.subr.mxu0 0.0
      %2777 = vmatpush1.msra.mxu0 0.0
      %2778 = vmatprep.subr.mxu0 0.0
      %2779 = vmatpush1.msra.mxu0 0.0
      %2780 = vmatprep.subr.mxu0 0.0
      %2781 = vmatpush1.msra.mxu0 0.0
      %2782 = vmatprep.subr.mxu0 0.0
      %2783 = vmatpush1.msra.mxu0 0.0
      %2784 = vmatprep.subr.mxu0 0.0
      %2785 = vmatpush1.msra.mxu0 0.0
      %2786 = vmatprep.subr.mxu0 0.0
      %2787 = vmatpush1.msra.mxu0 0.0
      %2788 = vmatprep.subr.mxu0 0.0
      %2789 = vmatpush1.msra.mxu0 0.0
      %2790 = vmatprep.subr.mxu0 0.0
      %2791 = vmatpush1.msra.mxu0 0.0
      %2792 = vmatprep.subr.mxu0 %v1488
      %2793 = vmatpush1.msra.mxu0 %v1485
      %2794 = vmatprep.subr.mxu0 %v1326
      %2795 = vmatpush1.msra.mxu0 %v1325
      %2796 = vmatprep.subr.mxu0 %v1288
      %2797 = vmatpush1.msra.mxu0 %v1287
      %2798 = vmatprep.subr.mxu0 %v1250
      %2799 = vmatpush1.msra.mxu0 %v1249
      %2800 = vmatprep.subr.mxu0 0.0
      %2801 = vmatpush2.msra.mxu0 0.0
      %2802 = vmatprep.subr.mxu0 0.0
      %2803 = vmatpush2.msra.mxu0 0.0
      %2804 = vmatprep.subr.mxu0 0.0
      %2805 = vmatpush2.msra.mxu0 0.0
      %2806 = vmatprep.subr.mxu0 0.0
      %2807 = vmatpush2.msra.mxu0 0.0
      %2808 = vmatprep.subr.mxu0 0.0
      %2809 = vmatpush2.msra.mxu0 0.0
      %2810 = vmatprep.subr.mxu0 0.0
      %2811 = vmatpush2.msra.mxu0 0.0
      %2812 = vmatprep.subr.mxu0 0.0
      %2813 = vmatpush2.msra.mxu0 0.0
      %2814 = vmatprep.subr.mxu0 0.0
      %2815 = vmatpush2.msra.mxu0 0.0
      %2816 = vmatprep.subr.mxu0 0.0
      %2817 = vmatpush2.msra.mxu0 0.0
      %2818 = vmatprep.subr.mxu0 0.0
      %2819 = vmatpush2.msra.mxu0 0.0
      %2820 = vmatprep.subr.mxu0 0.0
      %2821 = vmatpush2.msra.mxu0 0.0
      %2822 = vmatprep.subr.mxu0 0.0
      %2823 = vmatpush2.msra.mxu0 0.0
      %2824 = vmatprep.subr.mxu0 0.0
      %2825 = vmatpush2.msra.mxu0 0.0
      %2826 = vmatprep.subr.mxu0 0.0
      %2827 = vmatpush2.msra.mxu0 0.0
      %2828 = vmatprep.subr.mxu0 0.0
      %2829 = vmatpush2.msra.mxu0 0.0
      %2830 = vmatprep.subr.mxu0 0.0
      %2831 = vmatpush2.msra.mxu0 0.0
      %2832 = vmatprep.mubr.f32.mxu0 0.0
      %2833 = vmatmul.mubr.f32.gmra.mxu0 %v1373
      %v2834 = vpop.f32.mrf.mxu0
      %v2835 = vadd.f32 %v1369, %v2834
      %v2836 = vpop.f32.mrf.mxu0
      %v2837 = vadd.f32 %v1369, %v2836
      %2838 = vdwg.mxu0
      %v2839 = vmax.f32 %v1557, 0.0
      %v2840 = vmax.f32 %v1559, 0.0
      %v2841 = vmax.f32 %v1628, 0.0
      %v2842 = vmax.f32 %v1630, 0.0
      %v2843 = vmax.f32 %v1699, 0.0
      %v2844 = vmax.f32 %v1701, 0.0
      %v2845 = vmax.f32 %v1770, 0.0
      %v2846 = vmax.f32 %v1772, 0.0
      %v2847 = vmax.f32 %v1841, 0.0
      %v2848 = vmax.f32 %v1843, 0.0
      %v2849 = vmax.f32 %v1912, 0.0
      %v2850 = vmax.f32 %v1914, 0.0
      %v2851 = vmax.f32 %v1983, 0.0
      %v2852 = vmax.f32 %v1985, 0.0
      %v2853 = vmax.f32 %v2054, 0.0
      %v2854 = vmax.f32 %v2056, 0.0
      %v2855 = vmax.f32 %v2125, 0.0
      %v2856 = vmax.f32 %v2127, 0.0
      %v2857 = vmax.f32 %v2196, 0.0
      %v2858 = vmax.f32 %v2198, 0.0
      %v2859 = vmax.f32 %v2267, 0.0
      %v2860 = vmax.f32 %v2269, 0.0
      %v2861 = vmax.f32 %v2338, 0.0
      %v2862 = vmax.f32 %v2340, 0.0
      %v2863 = vmax.f32 %v2409, 0.0
      %v2864 = vmax.f32 %v2411, 0.0
      %v2865 = vmax.f32 %v2480, 0.0
      %v2866 = vmax.f32 %v2482, 0.0
      %v2867 = vmax.f32 %v2551, 0.0
      %v2868 = vmax.f32 %v2553, 0.0
      %v2869 = vmax.f32 %v2622, 0.0
      %v2870 = vmax.f32 %v2624, 0.0
      %v2871 = vmax.f32 %v2693, 0.0
      %v2872 = vmax.f32 %v2695, 0.0
      %v2873 = vmax.f32 %v2764, 0.0
      %v2874 = vmax.f32 %v2766, 0.0
      %v2875 = vmax.f32 %v2835, 0.0
      %v2876 = vmax.f32 %v2837, 0.0
      %2877 = vst [vmem:[#allocation3] sm:$0xff] %v2839
      %2878 = vst [vmem:[#allocation3 + $0x8] sm:$0xff] %v2840
      %2879 = vst [vmem:[#allocation3 + $0x10] sm:$0xff] %v2841
      %2880 = vst [vmem:[#allocation3 + $0x18] sm:$0xff] %v2842
      %2881 = vst [vmem:[#allocation3 + $0x20] sm:$0xff] %v2843
      %2882 = vst [vmem:[#allocation3 + $0x28] sm:$0xff] %v2844
      %2883 = vst [vmem:[#allocation3 + $0x30] sm:$0xff] %v2845
      %2884 = vst [vmem:[#allocation3 + $0x38] sm:$0xff] %v2846
      %2885 = vst [vmem:[#allocation3 + $0x40] sm:$0xff] %v2847
      %2886 = vst [vmem:[#allocation3 + $0x48] sm:$0xff] %v2848
      %2887 = vst [vmem:[#allocation3 + $0x50] sm:$0xff] %v2849
      %2888 = vst [vmem:[#allocation3 + $0x58] sm:$0xff] %v2850
      %2889 = vst [vmem:[#allocation3 + $0x60] sm:$0xff] %v2851
      %2890 = vst [vmem:[#allocation3 + $0x68] sm:$0xff] %v2852
      %2891 = vst [vmem:[#allocation3 + $0x70] sm:$0xff] %v2853
      %2892 = vst [vmem:[#allocation3 + $0x78] sm:$0xff] %v2854
      %2893 = vst [vmem:[#allocation3 + $0x80] sm:$0xff] %v2855
      %2894 = vst [vmem:[#allocation3 + $0x88] sm:$0xff] %v2856
      %2895 = vst [vmem:[#allocation3 + $0x90] sm:$0xff] %v2857
      %2896 = vst [vmem:[#allocation3 + $0x98] sm:$0xff] %v2858
      %2897 = vst [vmem:[#allocation3 + $0xa0] sm:$0xff] %v2859
      %2898 = vst [vmem:[#allocation3 + $0xa8] sm:$0xff] %v2860
      %2899 = vst [vmem:[#allocation3 + $0xb0] sm:$0xff] %v2861
      %2900 = vst [vmem:[#allocation3 + $0xb8] sm:$0xff] %v2862
      %2901 = vst [vmem:[#allocation3 + $0xc0] sm:$0xff] %v2863
      %2902 = vst [vmem:[#allocation3 + $0xc8] sm:$0xff] %v2864
      %2903 = vst [vmem:[#allocation3 + $0xd0] sm:$0xff] %v2865
      %2904 = vst [vmem:[#allocation3 + $0xd8] sm:$0xff] %v2866
      %2905 = vst [vmem:[#allocation3 + $0xe0] sm:$0xff] %v2867
      %2906 = vst [vmem:[#allocation3 + $0xe8] sm:$0xff] %v2868
      %2907 = vst [vmem:[#allocation3 + $0xf0] sm:$0xff] %v2869
      %2908 = vst [vmem:[#allocation3 + $0xf8] sm:$0xff] %v2870
      %2909 = vst [vmem:[#allocation3 + $0x100] sm:$0xff] %v2871
      %2910 = vst [vmem:[#allocation3 + $0x108] sm:$0xff] %v2872
      %2911 = vst [vmem:[#allocation3 + $0x110] sm:$0xff] %v2873
      %vm2912 = vcmask 982016
      %2913 = vst.msk [vmem:[#allocation3 + $0x118] sm:$0xff] %vm2912, %v2874
      %2950 = vrot.lane.b32.xlu0 %v2839, 127
      %v2951 = vpop.permute.xlu0 %2950
      %2952 = vrot.lane.b32.xlu0 %v2840, 127
      %v2953 = vpop.permute.xlu0 %2952
      %2954 = vrot.lane.b32.xlu0 %v2841, 127
      %v2955 = vpop.permute.xlu0 %2954
      %2956 = vrot.lane.b32.xlu0 %v2842, 127
      %v2957 = vpop.permute.xlu0 %2956
      %2958 = vrot.lane.b32.xlu0 %v2843, 127
      %v2959 = vpop.permute.xlu0 %2958
      %2960 = vrot.lane.b32.xlu0 %v2844, 127
      %v2961 = vpop.permute.xlu0 %2960
      %2962 = vrot.lane.b32.xlu0 %v2845, 127
      %v2963 = vpop.permute.xlu0 %2962
      %2964 = vrot.lane.b32.xlu0 %v2846, 127
      %v2965 = vpop.permute.xlu0 %2964
      %2966 = vrot.lane.b32.xlu0 %v2847, 127
      %v2967 = vpop.permute.xlu0 %2966
      %2968 = vrot.lane.b32.xlu0 %v2848, 127
      %v2969 = vpop.permute.xlu0 %2968
      %2970 = vrot.lane.b32.xlu0 %v2849, 127
      %v2971 = vpop.permute.xlu0 %2970
      %2972 = vrot.lane.b32.xlu0 %v2850, 127
      %v2973 = vpop.permute.xlu0 %2972
      %2974 = vrot.lane.b32.xlu0 %v2851, 127
      %v2975 = vpop.permute.xlu0 %2974
      %2976 = vrot.lane.b32.xlu0 %v2852, 127
      %v2977 = vpop.permute.xlu0 %2976
      %2978 = vrot.lane.b32.xlu0 %v2853, 127
      %v2979 = vpop.permute.xlu0 %2978
      %2980 = vrot.lane.b32.xlu0 %v2854, 127
      %v2981 = vpop.permute.xlu0 %2980
      %2982 = vrot.lane.b32.xlu0 %v2855, 127
      %v2983 = vpop.permute.xlu0 %2982
      %2984 = vrot.lane.b32.xlu0 %v2856, 127
      %v2985 = vpop.permute.xlu0 %2984
      %2986 = vrot.lane.b32.xlu0 %v2857, 127
      %v2987 = vpop.permute.xlu0 %2986
      %2988 = vrot.lane.b32.xlu0 %v2858, 127
      %v2989 = vpop.permute.xlu0 %2988
      %2990 = vrot.lane.b32.xlu0 %v2859, 127
      %v2991 = vpop.permute.xlu0 %2990
      %2992 = vrot.lane.b32.xlu0 %v2860, 127
      %v2993 = vpop.permute.xlu0 %2992
      %2994 = vrot.lane.b32.xlu0 %v2861, 127
      %v2995 = vpop.permute.xlu0 %2994
      %2996 = vrot.lane.b32.xlu0 %v2862, 127
      %v2997 = vpop.permute.xlu0 %2996
      %2998 = vrot.lane.b32.xlu0 %v2863, 127
      %v2999 = vpop.permute.xlu0 %2998
      %3000 = vrot.lane.b32.xlu0 %v2864, 127
      %v3001 = vpop.permute.xlu0 %3000
      %3002 = vrot.lane.b32.xlu0 %v2865, 127
      %v3003 = vpop.permute.xlu0 %3002
      %3004 = vrot.lane.b32.xlu0 %v2866, 127
      %v3005 = vpop.permute.xlu0 %3004
      %3006 = vrot.lane.b32.xlu0 %v2867, 127
      %v3007 = vpop.permute.xlu0 %3006
      %3008 = vrot.lane.b32.xlu0 %v2868, 127
      %v3009 = vpop.permute.xlu0 %3008
      %3010 = vrot.lane.b32.xlu0 %v2869, 127
      %v3011 = vpop.permute.xlu0 %3010
      %3012 = vrot.lane.b32.xlu0 %v2870, 127
      %v3013 = vpop.permute.xlu0 %3012
      %3014 = vrot.lane.b32.xlu0 %v2871, 127
      %v3015 = vpop.permute.xlu0 %3014
      %3016 = vrot.lane.b32.xlu0 %v2872, 127
      %v3017 = vpop.permute.xlu0 %3016
      %3018 = vrot.lane.b32.xlu0 %v2873, 127
      %v3019 = vpop.permute.xlu0 %3018
      %3020 = vrot.lane.b32.xlu0 %v2874, 127
      %v3021 = vpop.permute.xlu0 %3020
      %v3022 = vsel %vm321, %v2951, %v2953
      %v3023 = vsel %vm321, %v2953, %v2955
      %v3024 = vsel %vm321, %v2955, %v2957
      %v3025 = vsel %vm321, %v2957, %v2959
      %v3026 = vsel %vm321, %v2959, %v2961
      %v3027 = vsel %vm321, %v2961, %v2963
      %v3028 = vsel %vm321, %v2963, %v2965
      %v3029 = vsel %vm321, %v2965, %v2967
      %v3030 = vsel %vm321, %v2967, %v2969
      %v3031 = vsel %vm321, %v2969, %v2971
      %v3032 = vsel %vm321, %v2971, %v2973
      %v3033 = vsel %vm321, %v2973, %v2975
      %v3034 = vsel %vm321, %v2975, %v2977
      %v3035 = vsel %vm321, %v2977, %v2979
      %v3036 = vsel %vm321, %v2979, %v2981
      %v3037 = vsel %vm321, %v2981, %v2983
      %v3038 = vsel %vm321, %v2983, %v2985
      %v3039 = vsel %vm321, %v2985, %v2987
      %v3040 = vsel %vm321, %v2987, %v2989
      %v3041 = vsel %vm321, %v2989, %v2991
      %v3042 = vsel %vm321, %v2991, %v2993
      %v3043 = vsel %vm321, %v2993, %v2995
      %v3044 = vsel %vm321, %v2995, %v2997
      %v3045 = vsel %vm321, %v2997, %v2999
      %v3046 = vsel %vm321, %v2999, %v3001
      %v3047 = vsel %vm321, %v3001, %v3003
      %v3048 = vsel %vm321, %v3003, %v3005
      %v3049 = vsel %vm321, %v3005, %v3007
      %v3050 = vsel %vm321, %v3007, %v3009
      %v3051 = vsel %vm321, %v3009, %v3011
      %v3052 = vsel %vm321, %v3011, %v3013
      %v3053 = vsel %vm321, %v3013, %v3015
      %v3054 = vsel %vm321, %v3015, %v3017
      %v3055 = vsel %vm321, %v3017, %v3019
      %v3056 = vsel %vm321, %v3019, %v3021
      %3093 = vst [vmem:[#allocation3 + $0x120] sm:$0xff] %v3022
      %3094 = vst [vmem:[#allocation3 + $0x128] sm:$0xff] %v3023
      %3095 = vst [vmem:[#allocation3 + $0x130] sm:$0xff] %v3024
      %3096 = vst [vmem:[#allocation3 + $0x138] sm:$0xff] %v3025
      %3097 = vst [vmem:[#allocation3 + $0x140] sm:$0xff] %v3026
      %3098 = vst [vmem:[#allocation3 + $0x148] sm:$0xff] %v3027
      %3099 = vst [vmem:[#allocation3 + $0x150] sm:$0xff] %v3028
      %3100 = vst [vmem:[#allocation3 + $0x158] sm:$0xff] %v3029
      %3101 = vst [vmem:[#allocation3 + $0x160] sm:$0xff] %v3030
      %3102 = vst [vmem:[#allocation3 + $0x168] sm:$0xff] %v3031
      %3103 = vst [vmem:[#allocation3 + $0x170] sm:$0xff] %v3032
      %3104 = vst [vmem:[#allocation3 + $0x178] sm:$0xff] %v3033
      %3105 = vst [vmem:[#allocation3 + $0x180] sm:$0xff] %v3034
      %3106 = vst [vmem:[#allocation3 + $0x188] sm:$0xff] %v3035
      %3107 = vst [vmem:[#allocation3 + $0x190] sm:$0xff] %v3036
      %3108 = vst [vmem:[#allocation3 + $0x198] sm:$0xff] %v3037
      %3109 = vst [vmem:[#allocation3 + $0x1a0] sm:$0xff] %v3038
      %3110 = vst [vmem:[#allocation3 + $0x1a8] sm:$0xff] %v3039
      %3111 = vst [vmem:[#allocation3 + $0x1b0] sm:$0xff] %v3040
      %3112 = vst [vmem:[#allocation3 + $0x1b8] sm:$0xff] %v3041
      %3113 = vst [vmem:[#allocation3 + $0x1c0] sm:$0xff] %v3042
      %3114 = vst [vmem:[#allocation3 + $0x1c8] sm:$0xff] %v3043
      %3115 = vst [vmem:[#allocation3 + $0x1d0] sm:$0xff] %v3044
      %3116 = vst [vmem:[#allocation3 + $0x1d8] sm:$0xff] %v3045
      %3117 = vst [vmem:[#allocation3 + $0x1e0] sm:$0xff] %v3046
      %3118 = vst [vmem:[#allocation3 + $0x1e8] sm:$0xff] %v3047
      %3119 = vst [vmem:[#allocation3 + $0x1f0] sm:$0xff] %v3048
      %3120 = vst [vmem:[#allocation3 + $0x1f8] sm:$0xff] %v3049
      %3121 = vst [vmem:[#allocation3 + $0x200] sm:$0xff] %v3050
      %3122 = vst [vmem:[#allocation3 + $0x208] sm:$0xff] %v3051
      %3123 = vst [vmem:[#allocation3 + $0x210] sm:$0xff] %v3052
      %3124 = vst [vmem:[#allocation3 + $0x218] sm:$0xff] %v3053
      %3125 = vst [vmem:[#allocation3 + $0x220] sm:$0xff] %v3054
      %3126 = vst [vmem:[#allocation3 + $0x228] sm:$0xff] %v3055
      %3127 = vst [vmem:[#allocation3 + $0x230] sm:$0xff] %v3056
      %3128 = vst.msk [vmem:[#allocation3 + $0x238] sm:$0xff] %vm2912, %v3021
      %3129 = vrot.lane.b32.xlu0 %v2839, 126
      %v3130 = vpop.permute.xlu0 %3129
      %3131 = vrot.lane.b32.xlu0 %v2840, 126
      %v3132 = vpop.permute.xlu0 %3131
      %3133 = vrot.lane.b32.xlu0 %v2841, 126
      %v3134 = vpop.permute.xlu0 %3133
      %3135 = vrot.lane.b32.xlu0 %v2842, 126
      %v3136 = vpop.permute.xlu0 %3135
      %3137 = vrot.lane.b32.xlu0 %v2843, 126
      %v3138 = vpop.permute.xlu0 %3137
      %3139 = vrot.lane.b32.xlu0 %v2844, 126
      %v3140 = vpop.permute.xlu0 %3139
      %3141 = vrot.lane.b32.xlu0 %v2845, 126
      %v3142 = vpop.permute.xlu0 %3141
      %3143 = vrot.lane.b32.xlu0 %v2846, 126
      %v3144 = vpop.permute.xlu0 %3143
      %3145 = vrot.lane.b32.xlu0 %v2847, 126
      %v3146 = vpop.permute.xlu0 %3145
      %3147 = vrot.lane.b32.xlu0 %v2848, 126
      %v3148 = vpop.permute.xlu0 %3147
      %3149 = vrot.lane.b32.xlu0 %v2849, 126
      %v3150 = vpop.permute.xlu0 %3149
      %3151 = vrot.lane.b32.xlu0 %v2850, 126
      %v3152 = vpop.permute.xlu0 %3151
      %3153 = vrot.lane.b32.xlu0 %v2851, 126
      %v3154 = vpop.permute.xlu0 %3153
      %3155 = vrot.lane.b32.xlu0 %v2852, 126
      %v3156 = vpop.permute.xlu0 %3155
      %3157 = vrot.lane.b32.xlu0 %v2853, 126
      %v3158 = vpop.permute.xlu0 %3157
      %3159 = vrot.lane.b32.xlu0 %v2854, 126
      %v3160 = vpop.permute.xlu0 %3159
      %3161 = vrot.lane.b32.xlu0 %v2855, 126
      %v3162 = vpop.permute.xlu0 %3161
      %3163 = vrot.lane.b32.xlu0 %v2856, 126
      %v3164 = vpop.permute.xlu0 %3163
      %3165 = vrot.lane.b32.xlu0 %v2857, 126
      %v3166 = vpop.permute.xlu0 %3165
      %3167 = vrot.lane.b32.xlu0 %v2858, 126
      %v3168 = vpop.permute.xlu0 %3167
      %3169 = vrot.lane.b32.xlu0 %v2859, 126
      %v3170 = vpop.permute.xlu0 %3169
      %3171 = vrot.lane.b32.xlu0 %v2860, 126
      %v3172 = vpop.permute.xlu0 %3171
      %3173 = vrot.lane.b32.xlu0 %v2861, 126
      %v3174 = vpop.permute.xlu0 %3173
      %3175 = vrot.lane.b32.xlu0 %v2862, 126
      %v3176 = vpop.permute.xlu0 %3175
      %3177 = vrot.lane.b32.xlu0 %v2863, 126
      %v3178 = vpop.permute.xlu0 %3177
      %3179 = vrot.lane.b32.xlu0 %v2864, 126
      %v3180 = vpop.permute.xlu0 %3179
      %3181 = vrot.lane.b32.xlu0 %v2865, 126
      %v3182 = vpop.permute.xlu0 %3181
      %3183 = vrot.lane.b32.xlu0 %v2866, 126
      %v3184 = vpop.permute.xlu0 %3183
      %3185 = vrot.lane.b32.xlu0 %v2867, 126
      %v3186 = vpop.permute.xlu0 %3185
      %3187 = vrot.lane.b32.xlu0 %v2868, 126
      %v3188 = vpop.permute.xlu0 %3187
      %3189 = vrot.lane.b32.xlu0 %v2869, 126
      %v3190 = vpop.permute.xlu0 %3189
      %3191 = vrot.lane.b32.xlu0 %v2870, 126
      %v3192 = vpop.permute.xlu0 %3191
      %3193 = vrot.lane.b32.xlu0 %v2871, 126
      %v3194 = vpop.permute.xlu0 %3193
      %3195 = vrot.lane.b32.xlu0 %v2872, 126
      %v3196 = vpop.permute.xlu0 %3195
      %3197 = vrot.lane.b32.xlu0 %v2873, 126
      %v3198 = vpop.permute.xlu0 %3197
      %3199 = vrot.lane.b32.xlu0 %v2874, 126
      %v3200 = vpop.permute.xlu0 %3199
      %v3201 = vsel %vm366, %v3130, %v3132
      %v3202 = vsel %vm366, %v3132, %v3134
      %v3203 = vsel %vm366, %v3134, %v3136
      %v3204 = vsel %vm366, %v3136, %v3138
      %v3205 = vsel %vm366, %v3138, %v3140
      %v3206 = vsel %vm366, %v3140, %v3142
      %v3207 = vsel %vm366, %v3142, %v3144
      %v3208 = vsel %vm366, %v3144, %v3146
      %v3209 = vsel %vm366, %v3146, %v3148
      %v3210 = vsel %vm366, %v3148, %v3150
      %v3211 = vsel %vm366, %v3150, %v3152
      %v3212 = vsel %vm366, %v3152, %v3154
      %v3213 = vsel %vm366, %v3154, %v3156
      %v3214 = vsel %vm366, %v3156, %v3158
      %v3215 = vsel %vm366, %v3158, %v3160
      %v3216 = vsel %vm366, %v3160, %v3162
      %v3217 = vsel %vm366, %v3162, %v3164
      %v3218 = vsel %vm366, %v3164, %v3166
      %v3219 = vsel %vm366, %v3166, %v3168
      %v3220 = vsel %vm366, %v3168, %v3170
      %v3221 = vsel %vm366, %v3170, %v3172
      %v3222 = vsel %vm366, %v3172, %v3174
      %v3223 = vsel %vm366, %v3174, %v3176
      %v3224 = vsel %vm366, %v3176, %v3178
      %v3225 = vsel %vm366, %v3178, %v3180
      %v3226 = vsel %vm366, %v3180, %v3182
      %v3227 = vsel %vm366, %v3182, %v3184
      %v3228 = vsel %vm366, %v3184, %v3186
      %v3229 = vsel %vm366, %v3186, %v3188
      %v3230 = vsel %vm366, %v3188, %v3190
      %v3231 = vsel %vm366, %v3190, %v3192
      %v3232 = vsel %vm366, %v3192, %v3194
      %v3233 = vsel %vm366, %v3194, %v3196
      %v3234 = vsel %vm366, %v3196, %v3198
      %v3235 = vsel %vm366, %v3198, %v3200
      %3272 = vst [vmem:[#allocation3 + $0x240] sm:$0xff] %v3201
      %3273 = vst [vmem:[#allocation3 + $0x248] sm:$0xff] %v3202
      %3274 = vst [vmem:[#allocation3 + $0x250] sm:$0xff] %v3203
      %3275 = vst [vmem:[#allocation3 + $0x258] sm:$0xff] %v3204
      %3276 = vst [vmem:[#allocation3 + $0x260] sm:$0xff] %v3205
      %3277 = vst [vmem:[#allocation3 + $0x268] sm:$0xff] %v3206
      %3278 = vst [vmem:[#allocation3 + $0x270] sm:$0xff] %v3207
      %3279 = vst [vmem:[#allocation3 + $0x278] sm:$0xff] %v3208
      %3280 = vst [vmem:[#allocation3 + $0x280] sm:$0xff] %v3209
      %3281 = vst [vmem:[#allocation3 + $0x288] sm:$0xff] %v3210
      %3282 = vst [vmem:[#allocation3 + $0x290] sm:$0xff] %v3211
      %3283 = vst [vmem:[#allocation3 + $0x298] sm:$0xff] %v3212
      %3284 = vst [vmem:[#allocation3 + $0x2a0] sm:$0xff] %v3213
      %3285 = vst [vmem:[#allocation3 + $0x2a8] sm:$0xff] %v3214
      %3286 = vst [vmem:[#allocation3 + $0x2b0] sm:$0xff] %v3215
      %3287 = vst [vmem:[#allocation3 + $0x2b8] sm:$0xff] %v3216
      %3288 = vst [vmem:[#allocation3 + $0x2c0] sm:$0xff] %v3217
      %3289 = vst [vmem:[#allocation3 + $0x2c8] sm:$0xff] %v3218
      %3290 = vst [vmem:[#allocation3 + $0x2d0] sm:$0xff] %v3219
      %3291 = vst [vmem:[#allocation3 + $0x2d8] sm:$0xff] %v3220
      %3292 = vst [vmem:[#allocation3 + $0x2e0] sm:$0xff] %v3221
      %3293 = vst [vmem:[#allocation3 + $0x2e8] sm:$0xff] %v3222
      %3294 = vst [vmem:[#allocation3 + $0x2f0] sm:$0xff] %v3223
      %3295 = vst [vmem:[#allocation3 + $0x2f8] sm:$0xff] %v3224
      %3296 = vst [vmem:[#allocation3 + $0x300] sm:$0xff] %v3225
      %3297 = vst [vmem:[#allocation3 + $0x308] sm:$0xff] %v3226
      %3298 = vst [vmem:[#allocation3 + $0x310] sm:$0xff] %v3227
      %3299 = vst [vmem:[#allocation3 + $0x318] sm:$0xff] %v3228
      %3300 = vst [vmem:[#allocation3 + $0x320] sm:$0xff] %v3229
      %3301 = vst [vmem:[#allocation3 + $0x328] sm:$0xff] %v3230
      %3302 = vst [vmem:[#allocation3 + $0x330] sm:$0xff] %v3231
      %3303 = vst [vmem:[#allocation3 + $0x338] sm:$0xff] %v3232
      %3304 = vst [vmem:[#allocation3 + $0x340] sm:$0xff] %v3233
      %3305 = vst [vmem:[#allocation3 + $0x348] sm:$0xff] %v3234
      %3306 = vst [vmem:[#allocation3 + $0x350] sm:$0xff] %v3235
      %3307 = vst.msk [vmem:[#allocation3 + $0x358] sm:$0xff] %vm2912, %v3200
      %3308 = vrot.lane.b32.xlu0 %v2839, 125
      %v3309 = vpop.permute.xlu0 %3308
      %3310 = vrot.lane.b32.xlu0 %v2840, 125
      %v3311 = vpop.permute.xlu0 %3310
      %3312 = vrot.lane.b32.xlu0 %v2841, 125
      %v3313 = vpop.permute.xlu0 %3312
      %3314 = vrot.lane.b32.xlu0 %v2842, 125
      %v3315 = vpop.permute.xlu0 %3314
      %3316 = vrot.lane.b32.xlu0 %v2843, 125
      %v3317 = vpop.permute.xlu0 %3316
      %3318 = vrot.lane.b32.xlu0 %v2844, 125
      %v3319 = vpop.permute.xlu0 %3318
      %3320 = vrot.lane.b32.xlu0 %v2845, 125
      %v3321 = vpop.permute.xlu0 %3320
      %3322 = vrot.lane.b32.xlu0 %v2846, 125
      %v3323 = vpop.permute.xlu0 %3322
      %3324 = vrot.lane.b32.xlu0 %v2847, 125
      %v3325 = vpop.permute.xlu0 %3324
      %3326 = vrot.lane.b32.xlu0 %v2848, 125
      %v3327 = vpop.permute.xlu0 %3326
      %3328 = vrot.lane.b32.xlu0 %v2849, 125
      %v3329 = vpop.permute.xlu0 %3328
      %3330 = vrot.lane.b32.xlu0 %v2850, 125
      %v3331 = vpop.permute.xlu0 %3330
      %3332 = vrot.lane.b32.xlu0 %v2851, 125
      %v3333 = vpop.permute.xlu0 %3332
      %3334 = vrot.lane.b32.xlu0 %v2852, 125
      %v3335 = vpop.permute.xlu0 %3334
      %3336 = vrot.lane.b32.xlu0 %v2853, 125
      %v3337 = vpop.permute.xlu0 %3336
      %3338 = vrot.lane.b32.xlu0 %v2854, 125
      %v3339 = vpop.permute.xlu0 %3338
      %3340 = vrot.lane.b32.xlu0 %v2855, 125
      %v3341 = vpop.permute.xlu0 %3340
      %3342 = vrot.lane.b32.xlu0 %v2856, 125
      %v3343 = vpop.permute.xlu0 %3342
      %3344 = vrot.lane.b32.xlu0 %v2857, 125
      %v3345 = vpop.permute.xlu0 %3344
      %3346 = vrot.lane.b32.xlu0 %v2858, 125
      %v3347 = vpop.permute.xlu0 %3346
      %3348 = vrot.lane.b32.xlu0 %v2859, 125
      %v3349 = vpop.permute.xlu0 %3348
      %3350 = vrot.lane.b32.xlu0 %v2860, 125
      %v3351 = vpop.permute.xlu0 %3350
      %3352 = vrot.lane.b32.xlu0 %v2861, 125
      %v3353 = vpop.permute.xlu0 %3352
      %3354 = vrot.lane.b32.xlu0 %v2862, 125
      %v3355 = vpop.permute.xlu0 %3354
      %3356 = vrot.lane.b32.xlu0 %v2863, 125
      %v3357 = vpop.permute.xlu0 %3356
      %3358 = vrot.lane.b32.xlu0 %v2864, 125
      %v3359 = vpop.permute.xlu0 %3358
      %3360 = vrot.lane.b32.xlu0 %v2865, 125
      %v3361 = vpop.permute.xlu0 %3360
      %3362 = vrot.lane.b32.xlu0 %v2866, 125
      %v3363 = vpop.permute.xlu0 %3362
      %3364 = vrot.lane.b32.xlu0 %v2867, 125
      %v3365 = vpop.permute.xlu0 %3364
      %3366 = vrot.lane.b32.xlu0 %v2868, 125
      %v3367 = vpop.permute.xlu0 %3366
      %3368 = vrot.lane.b32.xlu0 %v2869, 125
      %v3369 = vpop.permute.xlu0 %3368
      %3370 = vrot.lane.b32.xlu0 %v2870, 125
      %v3371 = vpop.permute.xlu0 %3370
      %3372 = vrot.lane.b32.xlu0 %v2871, 125
      %v3373 = vpop.permute.xlu0 %3372
      %3374 = vrot.lane.b32.xlu0 %v2872, 125
      %v3375 = vpop.permute.xlu0 %3374
      %3376 = vrot.lane.b32.xlu0 %v2873, 125
      %v3377 = vpop.permute.xlu0 %3376
      %3378 = vrot.lane.b32.xlu0 %v2874, 125
      %v3379 = vpop.permute.xlu0 %3378
      %v3380 = vsel %vm411, %v3309, %v3311
      %v3381 = vsel %vm411, %v3311, %v3313
      %v3382 = vsel %vm411, %v3313, %v3315
      %v3383 = vsel %vm411, %v3315, %v3317
      %v3384 = vsel %vm411, %v3317, %v3319
      %v3385 = vsel %vm411, %v3319, %v3321
      %v3386 = vsel %vm411, %v3321, %v3323
      %v3387 = vsel %vm411, %v3323, %v3325
      %v3388 = vsel %vm411, %v3325, %v3327
      %v3389 = vsel %vm411, %v3327, %v3329
      %v3390 = vsel %vm411, %v3329, %v3331
      %v3391 = vsel %vm411, %v3331, %v3333
      %v3392 = vsel %vm411, %v3333, %v3335
      %v3393 = vsel %vm411, %v3335, %v3337
      %v3394 = vsel %vm411, %v3337, %v3339
      %v3395 = vsel %vm411, %v3339, %v3341
      %v3396 = vsel %vm411, %v3341, %v3343
      %v3397 = vsel %vm411, %v3343, %v3345
      %v3398 = vsel %vm411, %v3345, %v3347
      %v3399 = vsel %vm411, %v3347, %v3349
      %v3400 = vsel %vm411, %v3349, %v3351
      %v3401 = vsel %vm411, %v3351, %v3353
      %v3402 = vsel %vm411, %v3353, %v3355
      %v3403 = vsel %vm411, %v3355, %v3357
      %v3404 = vsel %vm411, %v3357, %v3359
      %v3405 = vsel %vm411, %v3359, %v3361
      %v3406 = vsel %vm411, %v3361, %v3363
      %v3407 = vsel %vm411, %v3363, %v3365
      %v3408 = vsel %vm411, %v3365, %v3367
      %v3409 = vsel %vm411, %v3367, %v3369
      %v3410 = vsel %vm411, %v3369, %v3371
      %v3411 = vsel %vm411, %v3371, %v3373
      %v3412 = vsel %vm411, %v3373, %v3375
      %v3413 = vsel %vm411, %v3375, %v3377
      %v3414 = vsel %vm411, %v3377, %v3379
      %3451 = vst [vmem:[#allocation3 + $0x360] sm:$0xff] %v3380
      %3452 = vst [vmem:[#allocation3 + $0x368] sm:$0xff] %v3381
      %3453 = vst [vmem:[#allocation3 + $0x370] sm:$0xff] %v3382
      %3454 = vst [vmem:[#allocation3 + $0x378] sm:$0xff] %v3383
      %3455 = vst [vmem:[#allocation3 + $0x380] sm:$0xff] %v3384
      %3456 = vst [vmem:[#allocation3 + $0x388] sm:$0xff] %v3385
      %3457 = vst [vmem:[#allocation3 + $0x390] sm:$0xff] %v3386
      %3458 = vst [vmem:[#allocation3 + $0x398] sm:$0xff] %v3387
      %3459 = vst [vmem:[#allocation3 + $0x3a0] sm:$0xff] %v3388
      %3460 = vst [vmem:[#allocation3 + $0x3a8] sm:$0xff] %v3389
      %3461 = vst [vmem:[#allocation3 + $0x3b0] sm:$0xff] %v3390
      %3462 = vst [vmem:[#allocation3 + $0x3b8] sm:$0xff] %v3391
      %3463 = vst [vmem:[#allocation3 + $0x3c0] sm:$0xff] %v3392
      %3464 = vst [vmem:[#allocation3 + $0x3c8] sm:$0xff] %v3393
      %3465 = vst [vmem:[#allocation3 + $0x3d0] sm:$0xff] %v3394
      %3466 = vst [vmem:[#allocation3 + $0x3d8] sm:$0xff] %v3395
      %3467 = vst [vmem:[#allocation3 + $0x3e0] sm:$0xff] %v3396
      %3468 = vst [vmem:[#allocation3 + $0x3e8] sm:$0xff] %v3397
      %3469 = vst [vmem:[#allocation3 + $0x3f0] sm:$0xff] %v3398
      %3470 = vst [vmem:[#allocation3 + $0x3f8] sm:$0xff] %v3399
      %3471 = vst [vmem:[#allocation3 + $0x400] sm:$0xff] %v3400
      %3472 = vst [vmem:[#allocation3 + $0x408] sm:$0xff] %v3401
      %3473 = vst [vmem:[#allocation3 + $0x410] sm:$0xff] %v3402
      %3474 = vst [vmem:[#allocation3 + $0x418] sm:$0xff] %v3403
      %3475 = vst [vmem:[#allocation3 + $0x420] sm:$0xff] %v3404
      %3476 = vst [vmem:[#allocation3 + $0x428] sm:$0xff] %v3405
      %3477 = vst [vmem:[#allocation3 + $0x430] sm:$0xff] %v3406
      %3478 = vst [vmem:[#allocation3 + $0x438] sm:$0xff] %v3407
      %3479 = vst [vmem:[#allocation3 + $0x440] sm:$0xff] %v3408
      %3480 = vst [vmem:[#allocation3 + $0x448] sm:$0xff] %v3409
      %3481 = vst [vmem:[#allocation3 + $0x450] sm:$0xff] %v3410
      %3482 = vst [vmem:[#allocation3 + $0x458] sm:$0xff] %v3411
      %3483 = vst [vmem:[#allocation3 + $0x460] sm:$0xff] %v3412
      %3484 = vst [vmem:[#allocation3 + $0x468] sm:$0xff] %v3413
      %3485 = vst [vmem:[#allocation3 + $0x470] sm:$0xff] %v3414
      %3486 = vst.msk [vmem:[#allocation3 + $0x478] sm:$0xff] %vm2912, %v3379
      %3487 = vrot.lane.b32.xlu0 %v2839, 124
      %v3488 = vpop.permute.xlu0 %3487
      %3489 = vrot.lane.b32.xlu0 %v2840, 124
      %v3490 = vpop.permute.xlu0 %3489
      %3491 = vrot.lane.b32.xlu0 %v2841, 124
      %v3492 = vpop.permute.xlu0 %3491
      %3493 = vrot.lane.b32.xlu0 %v2842, 124
      %v3494 = vpop.permute.xlu0 %3493
      %3495 = vrot.lane.b32.xlu0 %v2843, 124
      %v3496 = vpop.permute.xlu0 %3495
      %3497 = vrot.lane.b32.xlu0 %v2844, 124
      %v3498 = vpop.permute.xlu0 %3497
      %3499 = vrot.lane.b32.xlu0 %v2845, 124
      %v3500 = vpop.permute.xlu0 %3499
      %3501 = vrot.lane.b32.xlu0 %v2846, 124
      %v3502 = vpop.permute.xlu0 %3501
      %3503 = vrot.lane.b32.xlu0 %v2847, 124
      %v3504 = vpop.permute.xlu0 %3503
      %3505 = vrot.lane.b32.xlu0 %v2848, 124
      %v3506 = vpop.permute.xlu0 %3505
      %3507 = vrot.lane.b32.xlu0 %v2849, 124
      %v3508 = vpop.permute.xlu0 %3507
      %3509 = vrot.lane.b32.xlu0 %v2850, 124
      %v3510 = vpop.permute.xlu0 %3509
      %3511 = vrot.lane.b32.xlu0 %v2851, 124
      %v3512 = vpop.permute.xlu0 %3511
      %3513 = vrot.lane.b32.xlu0 %v2852, 124
      %v3514 = vpop.permute.xlu0 %3513
      %3515 = vrot.lane.b32.xlu0 %v2853, 124
      %v3516 = vpop.permute.xlu0 %3515
      %3517 = vrot.lane.b32.xlu0 %v2854, 124
      %v3518 = vpop.permute.xlu0 %3517
      %3519 = vrot.lane.b32.xlu0 %v2855, 124
      %v3520 = vpop.permute.xlu0 %3519
      %3521 = vrot.lane.b32.xlu0 %v2856, 124
      %v3522 = vpop.permute.xlu0 %3521
      %3523 = vrot.lane.b32.xlu0 %v2857, 124
      %v3524 = vpop.permute.xlu0 %3523
      %3525 = vrot.lane.b32.xlu0 %v2858, 124
      %v3526 = vpop.permute.xlu0 %3525
      %3527 = vrot.lane.b32.xlu0 %v2859, 124
      %v3528 = vpop.permute.xlu0 %3527
      %3529 = vrot.lane.b32.xlu0 %v2860, 124
      %v3530 = vpop.permute.xlu0 %3529
      %3531 = vrot.lane.b32.xlu0 %v2861, 124
      %v3532 = vpop.permute.xlu0 %3531
      %3533 = vrot.lane.b32.xlu0 %v2862, 124
      %v3534 = vpop.permute.xlu0 %3533
      %3535 = vrot.lane.b32.xlu0 %v2863, 124
      %v3536 = vpop.permute.xlu0 %3535
      %3537 = vrot.lane.b32.xlu0 %v2864, 124
      %v3538 = vpop.permute.xlu0 %3537
      %3539 = vrot.lane.b32.xlu0 %v2865, 124
      %v3540 = vpop.permute.xlu0 %3539
      %3541 = vrot.lane.b32.xlu0 %v2866, 124
      %v3542 = vpop.permute.xlu0 %3541
      %3543 = vrot.lane.b32.xlu0 %v2867, 124
      %v3544 = vpop.permute.xlu0 %3543
      %3545 = vrot.lane.b32.xlu0 %v2868, 124
      %v3546 = vpop.permute.xlu0 %3545
      %3547 = vrot.lane.b32.xlu0 %v2869, 124
      %v3548 = vpop.permute.xlu0 %3547
      %3549 = vrot.lane.b32.xlu0 %v2870, 124
      %v3550 = vpop.permute.xlu0 %3549
      %3551 = vrot.lane.b32.xlu0 %v2871, 124
      %v3552 = vpop.permute.xlu0 %3551
      %3553 = vrot.lane.b32.xlu0 %v2872, 124
      %v3554 = vpop.permute.xlu0 %3553
      %3555 = vrot.lane.b32.xlu0 %v2873, 124
      %v3556 = vpop.permute.xlu0 %3555
      %3557 = vrot.lane.b32.xlu0 %v2874, 124
      %v3558 = vpop.permute.xlu0 %3557
      %v3559 = vsel %vm456, %v3488, %v3490
      %v3560 = vsel %vm456, %v3490, %v3492
      %v3561 = vsel %vm456, %v3492, %v3494
      %v3562 = vsel %vm456, %v3494, %v3496
      %v3563 = vsel %vm456, %v3496, %v3498
      %v3564 = vsel %vm456, %v3498, %v3500
      %v3565 = vsel %vm456, %v3500, %v3502
      %v3566 = vsel %vm456, %v3502, %v3504
      %v3567 = vsel %vm456, %v3504, %v3506
      %v3568 = vsel %vm456, %v3506, %v3508
      %v3569 = vsel %vm456, %v3508, %v3510
      %v3570 = vsel %vm456, %v3510, %v3512
      %v3571 = vsel %vm456, %v3512, %v3514
      %v3572 = vsel %vm456, %v3514, %v3516
      %v3573 = vsel %vm456, %v3516, %v3518
      %v3574 = vsel %vm456, %v3518, %v3520
      %v3575 = vsel %vm456, %v3520, %v3522
      %v3576 = vsel %vm456, %v3522, %v3524
      %v3577 = vsel %vm456, %v3524, %v3526
      %v3578 = vsel %vm456, %v3526, %v3528
      %v3579 = vsel %vm456, %v3528, %v3530
      %v3580 = vsel %vm456, %v3530, %v3532
      %v3581 = vsel %vm456, %v3532, %v3534
      %v3582 = vsel %vm456, %v3534, %v3536
      %v3583 = vsel %vm456, %v3536, %v3538
      %v3584 = vsel %vm456, %v3538, %v3540
      %v3585 = vsel %vm456, %v3540, %v3542
      %v3586 = vsel %vm456, %v3542, %v3544
      %v3587 = vsel %vm456, %v3544, %v3546
      %v3588 = vsel %vm456, %v3546, %v3548
      %v3589 = vsel %vm456, %v3548, %v3550
      %v3590 = vsel %vm456, %v3550, %v3552
      %v3591 = vsel %vm456, %v3552, %v3554
      %v3592 = vsel %vm456, %v3554, %v3556
      %v3593 = vsel %vm456, %v3556, %v3558
      %3630 = vst [vmem:[#allocation3 + $0x480] sm:$0xff] %v3559
      %3631 = vst [vmem:[#allocation3 + $0x488] sm:$0xff] %v3560
      %3632 = vst [vmem:[#allocation3 + $0x490] sm:$0xff] %v3561
      %3633 = vst [vmem:[#allocation3 + $0x498] sm:$0xff] %v3562
      %3634 = vst [vmem:[#allocation3 + $0x4a0] sm:$0xff] %v3563
      %3635 = vst [vmem:[#allocation3 + $0x4a8] sm:$0xff] %v3564
      %3636 = vst [vmem:[#allocation3 + $0x4b0] sm:$0xff] %v3565
      %3637 = vst [vmem:[#allocation3 + $0x4b8] sm:$0xff] %v3566
      %3638 = vst [vmem:[#allocation3 + $0x4c0] sm:$0xff] %v3567
      %3639 = vst [vmem:[#allocation3 + $0x4c8] sm:$0xff] %v3568
      %3640 = vst [vmem:[#allocation3 + $0x4d0] sm:$0xff] %v3569
      %3641 = vst [vmem:[#allocation3 + $0x4d8] sm:$0xff] %v3570
      %3642 = vst [vmem:[#allocation3 + $0x4e0] sm:$0xff] %v3571
      %3643 = vst [vmem:[#allocation3 + $0x4e8] sm:$0xff] %v3572
      %3644 = vst [vmem:[#allocation3 + $0x4f0] sm:$0xff] %v3573
      %3645 = vst [vmem:[#allocation3 + $0x4f8] sm:$0xff] %v3574
      %3646 = vst [vmem:[#allocation3 + $0x500] sm:$0xff] %v3575
      %3647 = vst [vmem:[#allocation3 + $0x508] sm:$0xff] %v3576
      %3648 = vst [vmem:[#allocation3 + $0x510] sm:$0xff] %v3577
      %3649 = vst [vmem:[#allocation3 + $0x518] sm:$0xff] %v3578
      %3650 = vst [vmem:[#allocation3 + $0x520] sm:$0xff] %v3579
      %3651 = vst [vmem:[#allocation3 + $0x528] sm:$0xff] %v3580
      %3652 = vst [vmem:[#allocation3 + $0x530] sm:$0xff] %v3581
      %3653 = vst [vmem:[#allocation3 + $0x538] sm:$0xff] %v3582
      %3654 = vst [vmem:[#allocation3 + $0x540] sm:$0xff] %v3583
      %3655 = vst [vmem:[#allocation3 + $0x548] sm:$0xff] %v3584
      %3656 = vst [vmem:[#allocation3 + $0x550] sm:$0xff] %v3585
      %3657 = vst [vmem:[#allocation3 + $0x558] sm:$0xff] %v3586
      %3658 = vst [vmem:[#allocation3 + $0x560] sm:$0xff] %v3587
      %3659 = vst [vmem:[#allocation3 + $0x568] sm:$0xff] %v3588
      %3660 = vst [vmem:[#allocation3 + $0x570] sm:$0xff] %v3589
      %3661 = vst [vmem:[#allocation3 + $0x578] sm:$0xff] %v3590
      %3662 = vst [vmem:[#allocation3 + $0x580] sm:$0xff] %v3591
      %3663 = vst [vmem:[#allocation3 + $0x588] sm:$0xff] %v3592
      %3664 = vst [vmem:[#allocation3 + $0x590] sm:$0xff] %v3593
      %3665 = vst.msk [vmem:[#allocation3 + $0x598] sm:$0xff] %vm2912, %v3558
      %3667 = vrot.lane.b32.xlu0 %v2839, 64
      %v3668 = vpop.permute.xlu0 %3667
      %3669 = vrot.lane.b32.xlu0 %v2840, 64
      %v3670 = vpop.permute.xlu0 %3669
      %3671 = vrot.lane.b32.xlu0 %v2841, 64
      %v3672 = vpop.permute.xlu0 %3671
      %3673 = vrot.lane.b32.xlu0 %v2842, 64
      %v3674 = vpop.permute.xlu0 %3673
      %3675 = vrot.lane.b32.xlu0 %v2843, 64
      %v3676 = vpop.permute.xlu0 %3675
      %3677 = vrot.lane.b32.xlu0 %v2844, 64
      %v3678 = vpop.permute.xlu0 %3677
      %3679 = vrot.lane.b32.xlu0 %v2845, 64
      %v3680 = vpop.permute.xlu0 %3679
      %3681 = vrot.lane.b32.xlu0 %v2846, 64
      %v3682 = vpop.permute.xlu0 %3681
      %3683 = vrot.lane.b32.xlu0 %v2847, 64
      %v3684 = vpop.permute.xlu0 %3683
      %3685 = vrot.lane.b32.xlu0 %v2848, 64
      %v3686 = vpop.permute.xlu0 %3685
      %3687 = vrot.lane.b32.xlu0 %v2849, 64
      %v3688 = vpop.permute.xlu0 %3687
      %3689 = vrot.lane.b32.xlu0 %v2850, 64
      %v3690 = vpop.permute.xlu0 %3689
      %3691 = vrot.lane.b32.xlu0 %v2851, 64
      %v3692 = vpop.permute.xlu0 %3691
      %3693 = vrot.lane.b32.xlu0 %v2852, 64
      %v3694 = vpop.permute.xlu0 %3693
      %3695 = vrot.lane.b32.xlu0 %v2853, 64
      %v3696 = vpop.permute.xlu0 %3695
      %3697 = vrot.lane.b32.xlu0 %v2854, 64
      %v3698 = vpop.permute.xlu0 %3697
      %3699 = vrot.lane.b32.xlu0 %v2855, 64
      %v3700 = vpop.permute.xlu0 %3699
      %3701 = vrot.lane.b32.xlu0 %v2856, 64
      %v3702 = vpop.permute.xlu0 %3701
      %3703 = vrot.lane.b32.xlu0 %v2857, 64
      %v3704 = vpop.permute.xlu0 %3703
      %3705 = vrot.lane.b32.xlu0 %v2858, 64
      %v3706 = vpop.permute.xlu0 %3705
      %3707 = vrot.lane.b32.xlu0 %v2859, 64
      %v3708 = vpop.permute.xlu0 %3707
      %3709 = vrot.lane.b32.xlu0 %v2860, 64
      %v3710 = vpop.permute.xlu0 %3709
      %3711 = vrot.lane.b32.xlu0 %v2861, 64
      %v3712 = vpop.permute.xlu0 %3711
      %3713 = vrot.lane.b32.xlu0 %v2862, 64
      %v3714 = vpop.permute.xlu0 %3713
      %3715 = vrot.lane.b32.xlu0 %v2863, 64
      %v3716 = vpop.permute.xlu0 %3715
      %3717 = vrot.lane.b32.xlu0 %v2864, 64
      %v3718 = vpop.permute.xlu0 %3717
      %3719 = vrot.lane.b32.xlu0 %v2865, 64
      %v3720 = vpop.permute.xlu0 %3719
      %3721 = vrot.lane.b32.xlu0 %v2866, 64
      %v3722 = vpop.permute.xlu0 %3721
      %3723 = vrot.lane.b32.xlu0 %v2867, 64
      %v3724 = vpop.permute.xlu0 %3723
      %3725 = vrot.lane.b32.xlu0 %v2868, 64
      %v3726 = vpop.permute.xlu0 %3725
      %3727 = vrot.lane.b32.xlu0 %v2869, 64
      %v3728 = vpop.permute.xlu0 %3727
      %3729 = vrot.lane.b32.xlu0 %v2870, 64
      %v3730 = vpop.permute.xlu0 %3729
      %3731 = vrot.lane.b32.xlu0 %v2871, 64
      %v3732 = vpop.permute.xlu0 %3731
      %3733 = vrot.lane.b32.xlu0 %v2872, 64
      %v3734 = vpop.permute.xlu0 %3733
      %3735 = vrot.lane.b32.xlu0 %v2873, 64
      %v3736 = vpop.permute.xlu0 %3735
      %3737 = vrot.lane.b32.xlu0 %v2874, 64
      %v3738 = vpop.permute.xlu0 %3737
      %3739 = vrot.lane.b32.xlu0 %v2875, 64
      %v3740 = vpop.permute.xlu0 %3739
      %v3741 = vsel %vm501, %v3668, %v3670
      %v3742 = vsel %vm501, %v3670, %v3672
      %v3743 = vsel %vm501, %v3672, %v3674
      %v3744 = vsel %vm501, %v3674, %v3676
      %v3745 = vsel %vm501, %v3676, %v3678
      %v3746 = vsel %vm501, %v3678, %v3680
      %v3747 = vsel %vm501, %v3680, %v3682
      %v3748 = vsel %vm501, %v3682, %v3684
      %v3749 = vsel %vm501, %v3684, %v3686
      %v3750 = vsel %vm501, %v3686, %v3688
      %v3751 = vsel %vm501, %v3688, %v3690
      %v3752 = vsel %vm501, %v3690, %v3692
      %v3753 = vsel %vm501, %v3692, %v3694
      %v3754 = vsel %vm501, %v3694, %v3696
      %v3755 = vsel %vm501, %v3696, %v3698
      %v3756 = vsel %vm501, %v3698, %v3700
      %v3757 = vsel %vm501, %v3700, %v3702
      %v3758 = vsel %vm501, %v3702, %v3704
      %v3759 = vsel %vm501, %v3704, %v3706
      %v3760 = vsel %vm501, %v3706, %v3708
      %v3761 = vsel %vm501, %v3708, %v3710
      %v3762 = vsel %vm501, %v3710, %v3712
      %v3763 = vsel %vm501, %v3712, %v3714
      %v3764 = vsel %vm501, %v3714, %v3716
      %v3765 = vsel %vm501, %v3716, %v3718
      %v3766 = vsel %vm501, %v3718, %v3720
      %v3767 = vsel %vm501, %v3720, %v3722
      %v3768 = vsel %vm501, %v3722, %v3724
      %v3769 = vsel %vm501, %v3724, %v3726
      %v3770 = vsel %vm501, %v3726, %v3728
      %v3771 = vsel %vm501, %v3728, %v3730
      %v3772 = vsel %vm501, %v3730, %v3732
      %v3773 = vsel %vm501, %v3732, %v3734
      %v3774 = vsel %vm501, %v3734, %v3736
      %v3775 = vsel %vm501, %v3736, %v3738
      %v3776 = vsel %vm501, %v3738, %v3740
      %3813 = vst [vmem:[#allocation3 + $0x5a0] sm:$0xff] %v3741
      %3814 = vst [vmem:[#allocation3 + $0x5a8] sm:$0xff] %v3742
      %3815 = vst [vmem:[#allocation3 + $0x5b0] sm:$0xff] %v3743
      %3816 = vst [vmem:[#allocation3 + $0x5b8] sm:$0xff] %v3744
      %3817 = vst [vmem:[#allocation3 + $0x5c0] sm:$0xff] %v3745
      %3818 = vst [vmem:[#allocation3 + $0x5c8] sm:$0xff] %v3746
      %3819 = vst [vmem:[#allocation3 + $0x5d0] sm:$0xff] %v3747
      %3820 = vst [vmem:[#allocation3 + $0x5d8] sm:$0xff] %v3748
      %3821 = vst [vmem:[#allocation3 + $0x5e0] sm:$0xff] %v3749
      %3822 = vst [vmem:[#allocation3 + $0x5e8] sm:$0xff] %v3750
      %3823 = vst [vmem:[#allocation3 + $0x5f0] sm:$0xff] %v3751
      %3824 = vst [vmem:[#allocation3 + $0x5f8] sm:$0xff] %v3752
      %3825 = vst [vmem:[#allocation3 + $0x600] sm:$0xff] %v3753
      %3826 = vst [vmem:[#allocation3 + $0x608] sm:$0xff] %v3754
      %3827 = vst [vmem:[#allocation3 + $0x610] sm:$0xff] %v3755
      %3828 = vst [vmem:[#allocation3 + $0x618] sm:$0xff] %v3756
      %3829 = vst [vmem:[#allocation3 + $0x620] sm:$0xff] %v3757
      %3830 = vst [vmem:[#allocation3 + $0x628] sm:$0xff] %v3758
      %3831 = vst [vmem:[#allocation3 + $0x630] sm:$0xff] %v3759
      %3832 = vst [vmem:[#allocation3 + $0x638] sm:$0xff] %v3760
      %3833 = vst [vmem:[#allocation3 + $0x640] sm:$0xff] %v3761
      %3834 = vst [vmem:[#allocation3 + $0x648] sm:$0xff] %v3762
      %3835 = vst [vmem:[#allocation3 + $0x650] sm:$0xff] %v3763
      %3836 = vst [vmem:[#allocation3 + $0x658] sm:$0xff] %v3764
      %3837 = vst [vmem:[#allocation3 + $0x660] sm:$0xff] %v3765
      %3838 = vst [vmem:[#allocation3 + $0x668] sm:$0xff] %v3766
      %3839 = vst [vmem:[#allocation3 + $0x670] sm:$0xff] %v3767
      %3840 = vst [vmem:[#allocation3 + $0x678] sm:$0xff] %v3768
      %3841 = vst [vmem:[#allocation3 + $0x680] sm:$0xff] %v3769
      %3842 = vst [vmem:[#allocation3 + $0x688] sm:$0xff] %v3770
      %3843 = vst [vmem:[#allocation3 + $0x690] sm:$0xff] %v3771
      %3844 = vst [vmem:[#allocation3 + $0x698] sm:$0xff] %v3772
      %3845 = vst [vmem:[#allocation3 + $0x6a0] sm:$0xff] %v3773
      %3846 = vst [vmem:[#allocation3 + $0x6a8] sm:$0xff] %v3774
      %3847 = vst [vmem:[#allocation3 + $0x6b0] sm:$0xff] %v3775
      %3848 = vst.msk [vmem:[#allocation3 + $0x6b8] sm:$0xff] %vm2912, %v3776
      %3849 = vrot.lane.b32.xlu0 %v2839, 63
      %v3850 = vpop.permute.xlu0 %3849
      %3851 = vrot.lane.b32.xlu0 %v2840, 63
      %v3852 = vpop.permute.xlu0 %3851
      %3853 = vrot.lane.b32.xlu0 %v2841, 63
      %v3854 = vpop.permute.xlu0 %3853
      %3855 = vrot.lane.b32.xlu0 %v2842, 63
      %v3856 = vpop.permute.xlu0 %3855
      %3857 = vrot.lane.b32.xlu0 %v2843, 63
      %v3858 = vpop.permute.xlu0 %3857
      %3859 = vrot.lane.b32.xlu0 %v2844, 63
      %v3860 = vpop.permute.xlu0 %3859
      %3861 = vrot.lane.b32.xlu0 %v2845, 63
      %v3862 = vpop.permute.xlu0 %3861
      %3863 = vrot.lane.b32.xlu0 %v2846, 63
      %v3864 = vpop.permute.xlu0 %3863
      %3865 = vrot.lane.b32.xlu0 %v2847, 63
      %v3866 = vpop.permute.xlu0 %3865
      %3867 = vrot.lane.b32.xlu0 %v2848, 63
      %v3868 = vpop.permute.xlu0 %3867
      %3869 = vrot.lane.b32.xlu0 %v2849, 63
      %v3870 = vpop.permute.xlu0 %3869
      %3871 = vrot.lane.b32.xlu0 %v2850, 63
      %v3872 = vpop.permute.xlu0 %3871
      %3873 = vrot.lane.b32.xlu0 %v2851, 63
      %v3874 = vpop.permute.xlu0 %3873
      %3875 = vrot.lane.b32.xlu0 %v2852, 63
      %v3876 = vpop.permute.xlu0 %3875
      %3877 = vrot.lane.b32.xlu0 %v2853, 63
      %v3878 = vpop.permute.xlu0 %3877
      %3879 = vrot.lane.b32.xlu0 %v2854, 63
      %v3880 = vpop.permute.xlu0 %3879
      %3881 = vrot.lane.b32.xlu0 %v2855, 63
      %v3882 = vpop.permute.xlu0 %3881
      %3883 = vrot.lane.b32.xlu0 %v2856, 63
      %v3884 = vpop.permute.xlu0 %3883
      %3885 = vrot.lane.b32.xlu0 %v2857, 63
      %v3886 = vpop.permute.xlu0 %3885
      %3887 = vrot.lane.b32.xlu0 %v2858, 63
      %v3888 = vpop.permute.xlu0 %3887
      %3889 = vrot.lane.b32.xlu0 %v2859, 63
      %v3890 = vpop.permute.xlu0 %3889
      %3891 = vrot.lane.b32.xlu0 %v2860, 63
      %v3892 = vpop.permute.xlu0 %3891
      %3893 = vrot.lane.b32.xlu0 %v2861, 63
      %v3894 = vpop.permute.xlu0 %3893
      %3895 = vrot.lane.b32.xlu0 %v2862, 63
      %v3896 = vpop.permute.xlu0 %3895
      %3897 = vrot.lane.b32.xlu0 %v2863, 63
      %v3898 = vpop.permute.xlu0 %3897
      %3899 = vrot.lane.b32.xlu0 %v2864, 63
      %v3900 = vpop.permute.xlu0 %3899
      %3901 = vrot.lane.b32.xlu0 %v2865, 63
      %v3902 = vpop.permute.xlu0 %3901
      %3903 = vrot.lane.b32.xlu0 %v2866, 63
      %v3904 = vpop.permute.xlu0 %3903
      %3905 = vrot.lane.b32.xlu0 %v2867, 63
      %v3906 = vpop.permute.xlu0 %3905
      %3907 = vrot.lane.b32.xlu0 %v2868, 63
      %v3908 = vpop.permute.xlu0 %3907
      %3909 = vrot.lane.b32.xlu0 %v2869, 63
      %v3910 = vpop.permute.xlu0 %3909
      %3911 = vrot.lane.b32.xlu0 %v2870, 63
      %v3912 = vpop.permute.xlu0 %3911
      %3913 = vrot.lane.b32.xlu0 %v2871, 63
      %v3914 = vpop.permute.xlu0 %3913
      %3915 = vrot.lane.b32.xlu0 %v2872, 63
      %v3916 = vpop.permute.xlu0 %3915
      %3917 = vrot.lane.b32.xlu0 %v2873, 63
      %v3918 = vpop.permute.xlu0 %3917
      %3919 = vrot.lane.b32.xlu0 %v2874, 63
      %v3920 = vpop.permute.xlu0 %3919
      %3921 = vrot.lane.b32.xlu0 %v2875, 63
      %v3922 = vpop.permute.xlu0 %3921
      %v3923 = vsel %vm546, %v3850, %v3852
      %v3924 = vsel %vm546, %v3852, %v3854
      %v3925 = vsel %vm546, %v3854, %v3856
      %v3926 = vsel %vm546, %v3856, %v3858
      %v3927 = vsel %vm546, %v3858, %v3860
      %v3928 = vsel %vm546, %v3860, %v3862
      %v3929 = vsel %vm546, %v3862, %v3864
      %v3930 = vsel %vm546, %v3864, %v3866
      %v3931 = vsel %vm546, %v3866, %v3868
      %v3932 = vsel %vm546, %v3868, %v3870
      %v3933 = vsel %vm546, %v3870, %v3872
      %v3934 = vsel %vm546, %v3872, %v3874
      %v3935 = vsel %vm546, %v3874, %v3876
      %v3936 = vsel %vm546, %v3876, %v3878
      %v3937 = vsel %vm546, %v3878, %v3880
      %v3938 = vsel %vm546, %v3880, %v3882
      %v3939 = vsel %vm546, %v3882, %v3884
      %v3940 = vsel %vm546, %v3884, %v3886
      %v3941 = vsel %vm546, %v3886, %v3888
      %v3942 = vsel %vm546, %v3888, %v3890
      %v3943 = vsel %vm546, %v3890, %v3892
      %v3944 = vsel %vm546, %v3892, %v3894
      %v3945 = vsel %vm546, %v3894, %v3896
      %v3946 = vsel %vm546, %v3896, %v3898
      %v3947 = vsel %vm546, %v3898, %v3900
      %v3948 = vsel %vm546, %v3900, %v3902
      %v3949 = vsel %vm546, %v3902, %v3904
      %v3950 = vsel %vm546, %v3904, %v3906
      %v3951 = vsel %vm546, %v3906, %v3908
      %v3952 = vsel %vm546, %v3908, %v3910
      %v3953 = vsel %vm546, %v3910, %v3912
      %v3954 = vsel %vm546, %v3912, %v3914
      %v3955 = vsel %vm546, %v3914, %v3916
      %v3956 = vsel %vm546, %v3916, %v3918
      %v3957 = vsel %vm546, %v3918, %v3920
      %v3958 = vsel %vm546, %v3920, %v3922
      %3995 = vst [vmem:[#allocation3 + $0x6c0] sm:$0xff] %v3923
      %3996 = vst [vmem:[#allocation3 + $0x6c8] sm:$0xff] %v3924
      %3997 = vst [vmem:[#allocation3 + $0x6d0] sm:$0xff] %v3925
      %3998 = vst [vmem:[#allocation3 + $0x6d8] sm:$0xff] %v3926
      %3999 = vst [vmem:[#allocation3 + $0x6e0] sm:$0xff] %v3927
      %4000 = vst [vmem:[#allocation3 + $0x6e8] sm:$0xff] %v3928
      %4001 = vst [vmem:[#allocation3 + $0x6f0] sm:$0xff] %v3929
      %4002 = vst [vmem:[#allocation3 + $0x6f8] sm:$0xff] %v3930
      %4003 = vst [vmem:[#allocation3 + $0x700] sm:$0xff] %v3931
      %4004 = vst [vmem:[#allocation3 + $0x708] sm:$0xff] %v3932
      %4005 = vst [vmem:[#allocation3 + $0x710] sm:$0xff] %v3933
      %4006 = vst [vmem:[#allocation3 + $0x718] sm:$0xff] %v3934
      %4007 = vst [vmem:[#allocation3 + $0x720] sm:$0xff] %v3935
      %4008 = vst [vmem:[#allocation3 + $0x728] sm:$0xff] %v3936
      %4009 = vst [vmem:[#allocation3 + $0x730] sm:$0xff] %v3937
      %4010 = vst [vmem:[#allocation3 + $0x738] sm:$0xff] %v3938
      %4011 = vst [vmem:[#allocation3 + $0x740] sm:$0xff] %v3939
      %4012 = vst [vmem:[#allocation3 + $0x748] sm:$0xff] %v3940
      %4013 = vst [vmem:[#allocation3 + $0x750] sm:$0xff] %v3941
      %4014 = vst [vmem:[#allocation3 + $0x758] sm:$0xff] %v3942
      %4015 = vst [vmem:[#allocation3 + $0x760] sm:$0xff] %v3943
      %4016 = vst [vmem:[#allocation3 + $0x768] sm:$0xff] %v3944
      %4017 = vst [vmem:[#allocation3 + $0x770] sm:$0xff] %v3945
      %4018 = vst [vmem:[#allocation3 + $0x778] sm:$0xff] %v3946
      %4019 = vst [vmem:[#allocation3 + $0x780] sm:$0xff] %v3947
      %4020 = vst [vmem:[#allocation3 + $0x788] sm:$0xff] %v3948
      %4021 = vst [vmem:[#allocation3 + $0x790] sm:$0xff] %v3949
      %4022 = vst [vmem:[#allocation3 + $0x798] sm:$0xff] %v3950
      %4023 = vst [vmem:[#allocation3 + $0x7a0] sm:$0xff] %v3951
      %4024 = vst [vmem:[#allocation3 + $0x7a8] sm:$0xff] %v3952
      %4025 = vst [vmem:[#allocation3 + $0x7b0] sm:$0xff] %v3953
      %4026 = vst [vmem:[#allocation3 + $0x7b8] sm:$0xff] %v3954
      %4027 = vst [vmem:[#allocation3 + $0x7c0] sm:$0xff] %v3955
      %4028 = vst [vmem:[#allocation3 + $0x7c8] sm:$0xff] %v3956
      %4029 = vst [vmem:[#allocation3 + $0x7d0] sm:$0xff] %v3957
      %4030 = vst.msk [vmem:[#allocation3 + $0x7d8] sm:$0xff] %vm2912, %v3958
      %4031 = vrot.lane.b32.xlu0 %v2839, 62
      %v4032 = vpop.permute.xlu0 %4031
      %4033 = vrot.lane.b32.xlu0 %v2840, 62
      %v4034 = vpop.permute.xlu0 %4033
      %4035 = vrot.lane.b32.xlu0 %v2841, 62
      %v4036 = vpop.permute.xlu0 %4035
      %4037 = vrot.lane.b32.xlu0 %v2842, 62
      %v4038 = vpop.permute.xlu0 %4037
      %4039 = vrot.lane.b32.xlu0 %v2843, 62
      %v4040 = vpop.permute.xlu0 %4039
      %4041 = vrot.lane.b32.xlu0 %v2844, 62
      %v4042 = vpop.permute.xlu0 %4041
      %4043 = vrot.lane.b32.xlu0 %v2845, 62
      %v4044 = vpop.permute.xlu0 %4043
      %4045 = vrot.lane.b32.xlu0 %v2846, 62
      %v4046 = vpop.permute.xlu0 %4045
      %4047 = vrot.lane.b32.xlu0 %v2847, 62
      %v4048 = vpop.permute.xlu0 %4047
      %4049 = vrot.lane.b32.xlu0 %v2848, 62
      %v4050 = vpop.permute.xlu0 %4049
      %4051 = vrot.lane.b32.xlu0 %v2849, 62
      %v4052 = vpop.permute.xlu0 %4051
      %4053 = vrot.lane.b32.xlu0 %v2850, 62
      %v4054 = vpop.permute.xlu0 %4053
      %4055 = vrot.lane.b32.xlu0 %v2851, 62
      %v4056 = vpop.permute.xlu0 %4055
      %4057 = vrot.lane.b32.xlu0 %v2852, 62
      %v4058 = vpop.permute.xlu0 %4057
      %4059 = vrot.lane.b32.xlu0 %v2853, 62
      %v4060 = vpop.permute.xlu0 %4059
      %4061 = vrot.lane.b32.xlu0 %v2854, 62
      %v4062 = vpop.permute.xlu0 %4061
      %4063 = vrot.lane.b32.xlu0 %v2855, 62
      %v4064 = vpop.permute.xlu0 %4063
      %4065 = vrot.lane.b32.xlu0 %v2856, 62
      %v4066 = vpop.permute.xlu0 %4065
      %4067 = vrot.lane.b32.xlu0 %v2857, 62
      %v4068 = vpop.permute.xlu0 %4067
      %4069 = vrot.lane.b32.xlu0 %v2858, 62
      %v4070 = vpop.permute.xlu0 %4069
      %4071 = vrot.lane.b32.xlu0 %v2859, 62
      %v4072 = vpop.permute.xlu0 %4071
      %4073 = vrot.lane.b32.xlu0 %v2860, 62
      %v4074 = vpop.permute.xlu0 %4073
      %4075 = vrot.lane.b32.xlu0 %v2861, 62
      %v4076 = vpop.permute.xlu0 %4075
      %4077 = vrot.lane.b32.xlu0 %v2862, 62
      %v4078 = vpop.permute.xlu0 %4077
      %4079 = vrot.lane.b32.xlu0 %v2863, 62
      %v4080 = vpop.permute.xlu0 %4079
      %4081 = vrot.lane.b32.xlu0 %v2864, 62
      %v4082 = vpop.permute.xlu0 %4081
      %4083 = vrot.lane.b32.xlu0 %v2865, 62
      %v4084 = vpop.permute.xlu0 %4083
      %4085 = vrot.lane.b32.xlu0 %v2866, 62
      %v4086 = vpop.permute.xlu0 %4085
      %4087 = vrot.lane.b32.xlu0 %v2867, 62
      %v4088 = vpop.permute.xlu0 %4087
      %4089 = vrot.lane.b32.xlu0 %v2868, 62
      %v4090 = vpop.permute.xlu0 %4089
      %4091 = vrot.lane.b32.xlu0 %v2869, 62
      %v4092 = vpop.permute.xlu0 %4091
      %4093 = vrot.lane.b32.xlu0 %v2870, 62
      %v4094 = vpop.permute.xlu0 %4093
      %4095 = vrot.lane.b32.xlu0 %v2871, 62
      %v4096 = vpop.permute.xlu0 %4095
      %4097 = vrot.lane.b32.xlu0 %v2872, 62
      %v4098 = vpop.permute.xlu0 %4097
      %4099 = vrot.lane.b32.xlu0 %v2873, 62
      %v4100 = vpop.permute.xlu0 %4099
      %4101 = vrot.lane.b32.xlu0 %v2874, 62
      %v4102 = vpop.permute.xlu0 %4101
      %4103 = vrot.lane.b32.xlu0 %v2875, 62
      %v4104 = vpop.permute.xlu0 %4103
      %v4105 = vsel %vm591, %v4032, %v4034
      %v4106 = vsel %vm591, %v4034, %v4036
      %v4107 = vsel %vm591, %v4036, %v4038
      %v4108 = vsel %vm591, %v4038, %v4040
      %v4109 = vsel %vm591, %v4040, %v4042
      %v4110 = vsel %vm591, %v4042, %v4044
      %v4111 = vsel %vm591, %v4044, %v4046
      %v4112 = vsel %vm591, %v4046, %v4048
      %v4113 = vsel %vm591, %v4048, %v4050
      %v4114 = vsel %vm591, %v4050, %v4052
      %v4115 = vsel %vm591, %v4052, %v4054
      %v4116 = vsel %vm591, %v4054, %v4056
      %v4117 = vsel %vm591, %v4056, %v4058
      %v4118 = vsel %vm591, %v4058, %v4060
      %v4119 = vsel %vm591, %v4060, %v4062
      %v4120 = vsel %vm591, %v4062, %v4064
      %v4121 = vsel %vm591, %v4064, %v4066
      %v4122 = vsel %vm591, %v4066, %v4068
      %v4123 = vsel %vm591, %v4068, %v4070
      %v4124 = vsel %vm591, %v4070, %v4072
      %v4125 = vsel %vm591, %v4072, %v4074
      %v4126 = vsel %vm591, %v4074, %v4076
      %v4127 = vsel %vm591, %v4076, %v4078
      %v4128 = vsel %vm591, %v4078, %v4080
      %v4129 = vsel %vm591, %v4080, %v4082
      %v4130 = vsel %vm591, %v4082, %v4084
      %v4131 = vsel %vm591, %v4084, %v4086
      %v4132 = vsel %vm591, %v4086, %v4088
      %v4133 = vsel %vm591, %v4088, %v4090
      %v4134 = vsel %vm591, %v4090, %v4092
      %v4135 = vsel %vm591, %v4092, %v4094
      %v4136 = vsel %vm591, %v4094, %v4096
      %v4137 = vsel %vm591, %v4096, %v4098
      %v4138 = vsel %vm591, %v4098, %v4100
      %v4139 = vsel %vm591, %v4100, %v4102
      %v4140 = vsel %vm591, %v4102, %v4104
      %4177 = vst [vmem:[#allocation3 + $0x7e0] sm:$0xff] %v4105
      %4178 = vst [vmem:[#allocation3 + $0x7e8] sm:$0xff] %v4106
      %4179 = vst [vmem:[#allocation3 + $0x7f0] sm:$0xff] %v4107
      %4180 = vst [vmem:[#allocation3 + $0x7f8] sm:$0xff] %v4108
      %4181 = vst [vmem:[#allocation3 + $0x800] sm:$0xff] %v4109
      %4182 = vst [vmem:[#allocation3 + $0x808] sm:$0xff] %v4110
      %4183 = vst [vmem:[#allocation3 + $0x810] sm:$0xff] %v4111
      %4184 = vst [vmem:[#allocation3 + $0x818] sm:$0xff] %v4112
      %4185 = vst [vmem:[#allocation3 + $0x820] sm:$0xff] %v4113
      %4186 = vst [vmem:[#allocation3 + $0x828] sm:$0xff] %v4114
      %4187 = vst [vmem:[#allocation3 + $0x830] sm:$0xff] %v4115
      %4188 = vst [vmem:[#allocation3 + $0x838] sm:$0xff] %v4116
      %4189 = vst [vmem:[#allocation3 + $0x840] sm:$0xff] %v4117
      %4190 = vst [vmem:[#allocation3 + $0x848] sm:$0xff] %v4118
      %4191 = vst [vmem:[#allocation3 + $0x850] sm:$0xff] %v4119
      %4192 = vst [vmem:[#allocation3 + $0x858] sm:$0xff] %v4120
      %4193 = vst [vmem:[#allocation3 + $0x860] sm:$0xff] %v4121
      %4194 = vst [vmem:[#allocation3 + $0x868] sm:$0xff] %v4122
      %4195 = vst [vmem:[#allocation3 + $0x870] sm:$0xff] %v4123
      %4196 = vst [vmem:[#allocation3 + $0x878] sm:$0xff] %v4124
      %4197 = vst [vmem:[#allocation3 + $0x880] sm:$0xff] %v4125
      %4198 = vst [vmem:[#allocation3 + $0x888] sm:$0xff] %v4126
      %4199 = vst [vmem:[#allocation3 + $0x890] sm:$0xff] %v4127
      %4200 = vst [vmem:[#allocation3 + $0x898] sm:$0xff] %v4128
      %4201 = vst [vmem:[#allocation3 + $0x8a0] sm:$0xff] %v4129
      %4202 = vst [vmem:[#allocation3 + $0x8a8] sm:$0xff] %v4130
      %4203 = vst [vmem:[#allocation3 + $0x8b0] sm:$0xff] %v4131
      %4204 = vst [vmem:[#allocation3 + $0x8b8] sm:$0xff] %v4132
      %4205 = vst [vmem:[#allocation3 + $0x8c0] sm:$0xff] %v4133
      %4206 = vst [vmem:[#allocation3 + $0x8c8] sm:$0xff] %v4134
      %4207 = vst [vmem:[#allocation3 + $0x8d0] sm:$0xff] %v4135
      %4208 = vst [vmem:[#allocation3 + $0x8d8] sm:$0xff] %v4136
      %4209 = vst [vmem:[#allocation3 + $0x8e0] sm:$0xff] %v4137
      %4210 = vst [vmem:[#allocation3 + $0x8e8] sm:$0xff] %v4138
      %4211 = vst [vmem:[#allocation3 + $0x8f0] sm:$0xff] %v4139
      %4212 = vst.msk [vmem:[#allocation3 + $0x8f8] sm:$0xff] %vm2912, %v4140
      %4213 = vrot.lane.b32.xlu0 %v2839, 61
      %v4214 = vpop.permute.xlu0 %4213
      %4215 = vrot.lane.b32.xlu0 %v2840, 61
      %v4216 = vpop.permute.xlu0 %4215
      %4217 = vrot.lane.b32.xlu0 %v2841, 61
      %v4218 = vpop.permute.xlu0 %4217
      %4219 = vrot.lane.b32.xlu0 %v2842, 61
      %v4220 = vpop.permute.xlu0 %4219
      %4221 = vrot.lane.b32.xlu0 %v2843, 61
      %v4222 = vpop.permute.xlu0 %4221
      %4223 = vrot.lane.b32.xlu0 %v2844, 61
      %v4224 = vpop.permute.xlu0 %4223
      %4225 = vrot.lane.b32.xlu0 %v2845, 61
      %v4226 = vpop.permute.xlu0 %4225
      %4227 = vrot.lane.b32.xlu0 %v2846, 61
      %v4228 = vpop.permute.xlu0 %4227
      %4229 = vrot.lane.b32.xlu0 %v2847, 61
      %v4230 = vpop.permute.xlu0 %4229
      %4231 = vrot.lane.b32.xlu0 %v2848, 61
      %v4232 = vpop.permute.xlu0 %4231
      %4233 = vrot.lane.b32.xlu0 %v2849, 61
      %v4234 = vpop.permute.xlu0 %4233
      %4235 = vrot.lane.b32.xlu0 %v2850, 61
      %v4236 = vpop.permute.xlu0 %4235
      %4237 = vrot.lane.b32.xlu0 %v2851, 61
      %v4238 = vpop.permute.xlu0 %4237
      %4239 = vrot.lane.b32.xlu0 %v2852, 61
      %v4240 = vpop.permute.xlu0 %4239
      %4241 = vrot.lane.b32.xlu0 %v2853, 61
      %v4242 = vpop.permute.xlu0 %4241
      %4243 = vrot.lane.b32.xlu0 %v2854, 61
      %v4244 = vpop.permute.xlu0 %4243
      %4245 = vrot.lane.b32.xlu0 %v2855, 61
      %v4246 = vpop.permute.xlu0 %4245
      %4247 = vrot.lane.b32.xlu0 %v2856, 61
      %v4248 = vpop.permute.xlu0 %4247
      %4249 = vrot.lane.b32.xlu0 %v2857, 61
      %v4250 = vpop.permute.xlu0 %4249
      %4251 = vrot.lane.b32.xlu0 %v2858, 61
      %v4252 = vpop.permute.xlu0 %4251
      %4253 = vrot.lane.b32.xlu0 %v2859, 61
      %v4254 = vpop.permute.xlu0 %4253
      %4255 = vrot.lane.b32.xlu0 %v2860, 61
      %v4256 = vpop.permute.xlu0 %4255
      %4257 = vrot.lane.b32.xlu0 %v2861, 61
      %v4258 = vpop.permute.xlu0 %4257
      %4259 = vrot.lane.b32.xlu0 %v2862, 61
      %v4260 = vpop.permute.xlu0 %4259
      %4261 = vrot.lane.b32.xlu0 %v2863, 61
      %v4262 = vpop.permute.xlu0 %4261
      %4263 = vrot.lane.b32.xlu0 %v2864, 61
      %v4264 = vpop.permute.xlu0 %4263
      %4265 = vrot.lane.b32.xlu0 %v2865, 61
      %v4266 = vpop.permute.xlu0 %4265
      %4267 = vrot.lane.b32.xlu0 %v2866, 61
      %v4268 = vpop.permute.xlu0 %4267
      %4269 = vrot.lane.b32.xlu0 %v2867, 61
      %v4270 = vpop.permute.xlu0 %4269
      %4271 = vrot.lane.b32.xlu0 %v2868, 61
      %v4272 = vpop.permute.xlu0 %4271
      %4273 = vrot.lane.b32.xlu0 %v2869, 61
      %v4274 = vpop.permute.xlu0 %4273
      %4275 = vrot.lane.b32.xlu0 %v2870, 61
      %v4276 = vpop.permute.xlu0 %4275
      %4277 = vrot.lane.b32.xlu0 %v2871, 61
      %v4278 = vpop.permute.xlu0 %4277
      %4279 = vrot.lane.b32.xlu0 %v2872, 61
      %v4280 = vpop.permute.xlu0 %4279
      %4281 = vrot.lane.b32.xlu0 %v2873, 61
      %v4282 = vpop.permute.xlu0 %4281
      %4283 = vrot.lane.b32.xlu0 %v2874, 61
      %v4284 = vpop.permute.xlu0 %4283
      %4285 = vrot.lane.b32.xlu0 %v2875, 61
      %v4286 = vpop.permute.xlu0 %4285
      %v4287 = vsel %vm636, %v4214, %v4216
      %v4288 = vsel %vm636, %v4216, %v4218
      %v4289 = vsel %vm636, %v4218, %v4220
      %v4290 = vsel %vm636, %v4220, %v4222
      %v4291 = vsel %vm636, %v4222, %v4224
      %v4292 = vsel %vm636, %v4224, %v4226
      %v4293 = vsel %vm636, %v4226, %v4228
      %v4294 = vsel %vm636, %v4228, %v4230
      %v4295 = vsel %vm636, %v4230, %v4232
      %v4296 = vsel %vm636, %v4232, %v4234
      %v4297 = vsel %vm636, %v4234, %v4236
      %v4298 = vsel %vm636, %v4236, %v4238
      %v4299 = vsel %vm636, %v4238, %v4240
      %v4300 = vsel %vm636, %v4240, %v4242
      %v4301 = vsel %vm636, %v4242, %v4244
      %v4302 = vsel %vm636, %v4244, %v4246
      %v4303 = vsel %vm636, %v4246, %v4248
      %v4304 = vsel %vm636, %v4248, %v4250
      %v4305 = vsel %vm636, %v4250, %v4252
      %v4306 = vsel %vm636, %v4252, %v4254
      %v4307 = vsel %vm636, %v4254, %v4256
      %v4308 = vsel %vm636, %v4256, %v4258
      %v4309 = vsel %vm636, %v4258, %v4260
      %v4310 = vsel %vm636, %v4260, %v4262
      %v4311 = vsel %vm636, %v4262, %v4264
      %v4312 = vsel %vm636, %v4264, %v4266
      %v4313 = vsel %vm636, %v4266, %v4268
      %v4314 = vsel %vm636, %v4268, %v4270
      %v4315 = vsel %vm636, %v4270, %v4272
      %v4316 = vsel %vm636, %v4272, %v4274
      %v4317 = vsel %vm636, %v4274, %v4276
      %v4318 = vsel %vm636, %v4276, %v4278
      %v4319 = vsel %vm636, %v4278, %v4280
      %v4320 = vsel %vm636, %v4280, %v4282
      %v4321 = vsel %vm636, %v4282, %v4284
      %v4322 = vsel %vm636, %v4284, %v4286
      %4359 = vst [vmem:[#allocation3 + $0x900] sm:$0xff] %v4287
      %4360 = vst [vmem:[#allocation3 + $0x908] sm:$0xff] %v4288
      %4361 = vst [vmem:[#allocation3 + $0x910] sm:$0xff] %v4289
      %4362 = vst [vmem:[#allocation3 + $0x918] sm:$0xff] %v4290
      %4363 = vst [vmem:[#allocation3 + $0x920] sm:$0xff] %v4291
      %4364 = vst [vmem:[#allocation3 + $0x928] sm:$0xff] %v4292
      %4365 = vst [vmem:[#allocation3 + $0x930] sm:$0xff] %v4293
      %4366 = vst [vmem:[#allocation3 + $0x938] sm:$0xff] %v4294
      %4367 = vst [vmem:[#allocation3 + $0x940] sm:$0xff] %v4295
      %4368 = vst [vmem:[#allocation3 + $0x948] sm:$0xff] %v4296
      %4369 = vst [vmem:[#allocation3 + $0x950] sm:$0xff] %v4297
      %4370 = vst [vmem:[#allocation3 + $0x958] sm:$0xff] %v4298
      %4371 = vst [vmem:[#allocation3 + $0x960] sm:$0xff] %v4299
      %4372 = vst [vmem:[#allocation3 + $0x968] sm:$0xff] %v4300
      %4373 = vst [vmem:[#allocation3 + $0x970] sm:$0xff] %v4301
      %4374 = vst [vmem:[#allocation3 + $0x978] sm:$0xff] %v4302
      %4375 = vst [vmem:[#allocation3 + $0x980] sm:$0xff] %v4303
      %4376 = vst [vmem:[#allocation3 + $0x988] sm:$0xff] %v4304
      %4377 = vst [vmem:[#allocation3 + $0x990] sm:$0xff] %v4305
      %4378 = vst [vmem:[#allocation3 + $0x998] sm:$0xff] %v4306
      %4379 = vst [vmem:[#allocation3 + $0x9a0] sm:$0xff] %v4307
      %4380 = vst [vmem:[#allocation3 + $0x9a8] sm:$0xff] %v4308
      %4381 = vst [vmem:[#allocation3 + $0x9b0] sm:$0xff] %v4309
      %4382 = vst [vmem:[#allocation3 + $0x9b8] sm:$0xff] %v4310
      %4383 = vst [vmem:[#allocation3 + $0x9c0] sm:$0xff] %v4311
      %4384 = vst [vmem:[#allocation3 + $0x9c8] sm:$0xff] %v4312
      %4385 = vst [vmem:[#allocation3 + $0x9d0] sm:$0xff] %v4313
      %4386 = vst [vmem:[#allocation3 + $0x9d8] sm:$0xff] %v4314
      %4387 = vst [vmem:[#allocation3 + $0x9e0] sm:$0xff] %v4315
      %4388 = vst [vmem:[#allocation3 + $0x9e8] sm:$0xff] %v4316
      %4389 = vst [vmem:[#allocation3 + $0x9f0] sm:$0xff] %v4317
      %4390 = vst [vmem:[#allocation3 + $0x9f8] sm:$0xff] %v4318
      %4391 = vst [vmem:[#allocation3 + $0xa00] sm:$0xff] %v4319
      %4392 = vst [vmem:[#allocation3 + $0xa08] sm:$0xff] %v4320
      %4393 = vst [vmem:[#allocation3 + $0xa10] sm:$0xff] %v4321
      %4394 = vst.msk [vmem:[#allocation3 + $0xa18] sm:$0xff] %vm2912, %v4322
      %4395 = vrot.lane.b32.xlu0 %v2839, 60
      %v4396 = vpop.permute.xlu0 %4395
      %4397 = vrot.lane.b32.xlu0 %v2840, 60
      %v4398 = vpop.permute.xlu0 %4397
      %4399 = vrot.lane.b32.xlu0 %v2841, 60
      %v4400 = vpop.permute.xlu0 %4399
      %4401 = vrot.lane.b32.xlu0 %v2842, 60
      %v4402 = vpop.permute.xlu0 %4401
      %4403 = vrot.lane.b32.xlu0 %v2843, 60
      %v4404 = vpop.permute.xlu0 %4403
      %4405 = vrot.lane.b32.xlu0 %v2844, 60
      %v4406 = vpop.permute.xlu0 %4405
      %4407 = vrot.lane.b32.xlu0 %v2845, 60
      %v4408 = vpop.permute.xlu0 %4407
      %4409 = vrot.lane.b32.xlu0 %v2846, 60
      %v4410 = vpop.permute.xlu0 %4409
      %4411 = vrot.lane.b32.xlu0 %v2847, 60
      %v4412 = vpop.permute.xlu0 %4411
      %4413 = vrot.lane.b32.xlu0 %v2848, 60
      %v4414 = vpop.permute.xlu0 %4413
      %4415 = vrot.lane.b32.xlu0 %v2849, 60
      %v4416 = vpop.permute.xlu0 %4415
      %4417 = vrot.lane.b32.xlu0 %v2850, 60
      %v4418 = vpop.permute.xlu0 %4417
      %4419 = vrot.lane.b32.xlu0 %v2851, 60
      %v4420 = vpop.permute.xlu0 %4419
      %4421 = vrot.lane.b32.xlu0 %v2852, 60
      %v4422 = vpop.permute.xlu0 %4421
      %4423 = vrot.lane.b32.xlu0 %v2853, 60
      %v4424 = vpop.permute.xlu0 %4423
      %4425 = vrot.lane.b32.xlu0 %v2854, 60
      %v4426 = vpop.permute.xlu0 %4425
      %4427 = vrot.lane.b32.xlu0 %v2855, 60
      %v4428 = vpop.permute.xlu0 %4427
      %4429 = vrot.lane.b32.xlu0 %v2856, 60
      %v4430 = vpop.permute.xlu0 %4429
      %4431 = vrot.lane.b32.xlu0 %v2857, 60
      %v4432 = vpop.permute.xlu0 %4431
      %4433 = vrot.lane.b32.xlu0 %v2858, 60
      %v4434 = vpop.permute.xlu0 %4433
      %4435 = vrot.lane.b32.xlu0 %v2859, 60
      %v4436 = vpop.permute.xlu0 %4435
      %4437 = vrot.lane.b32.xlu0 %v2860, 60
      %v4438 = vpop.permute.xlu0 %4437
      %4439 = vrot.lane.b32.xlu0 %v2861, 60
      %v4440 = vpop.permute.xlu0 %4439
      %4441 = vrot.lane.b32.xlu0 %v2862, 60
      %v4442 = vpop.permute.xlu0 %4441
      %4443 = vrot.lane.b32.xlu0 %v2863, 60
      %v4444 = vpop.permute.xlu0 %4443
      %4445 = vrot.lane.b32.xlu0 %v2864, 60
      %v4446 = vpop.permute.xlu0 %4445
      %4447 = vrot.lane.b32.xlu0 %v2865, 60
      %v4448 = vpop.permute.xlu0 %4447
      %4449 = vrot.lane.b32.xlu0 %v2866, 60
      %v4450 = vpop.permute.xlu0 %4449
      %4451 = vrot.lane.b32.xlu0 %v2867, 60
      %v4452 = vpop.permute.xlu0 %4451
      %4453 = vrot.lane.b32.xlu0 %v2868, 60
      %v4454 = vpop.permute.xlu0 %4453
      %4455 = vrot.lane.b32.xlu0 %v2869, 60
      %v4456 = vpop.permute.xlu0 %4455
      %4457 = vrot.lane.b32.xlu0 %v2870, 60
      %v4458 = vpop.permute.xlu0 %4457
      %4459 = vrot.lane.b32.xlu0 %v2871, 60
      %v4460 = vpop.permute.xlu0 %4459
      %4461 = vrot.lane.b32.xlu0 %v2872, 60
      %v4462 = vpop.permute.xlu0 %4461
      %4463 = vrot.lane.b32.xlu0 %v2873, 60
      %v4464 = vpop.permute.xlu0 %4463
      %4465 = vrot.lane.b32.xlu0 %v2874, 60
      %v4466 = vpop.permute.xlu0 %4465
      %4467 = vrot.lane.b32.xlu0 %v2875, 60
      %v4468 = vpop.permute.xlu0 %4467
      %v4469 = vsel %vm681, %v4396, %v4398
      %v4470 = vsel %vm681, %v4398, %v4400
      %v4471 = vsel %vm681, %v4400, %v4402
      %v4472 = vsel %vm681, %v4402, %v4404
      %v4473 = vsel %vm681, %v4404, %v4406
      %v4474 = vsel %vm681, %v4406, %v4408
      %v4475 = vsel %vm681, %v4408, %v4410
      %v4476 = vsel %vm681, %v4410, %v4412
      %v4477 = vsel %vm681, %v4412, %v4414
      %v4478 = vsel %vm681, %v4414, %v4416
      %v4479 = vsel %vm681, %v4416, %v4418
      %v4480 = vsel %vm681, %v4418, %v4420
      %v4481 = vsel %vm681, %v4420, %v4422
      %v4482 = vsel %vm681, %v4422, %v4424
      %v4483 = vsel %vm681, %v4424, %v4426
      %v4484 = vsel %vm681, %v4426, %v4428
      %v4485 = vsel %vm681, %v4428, %v4430
      %v4486 = vsel %vm681, %v4430, %v4432
      %v4487 = vsel %vm681, %v4432, %v4434
      %v4488 = vsel %vm681, %v4434, %v4436
      %v4489 = vsel %vm681, %v4436, %v4438
      %v4490 = vsel %vm681, %v4438, %v4440
      %v4491 = vsel %vm681, %v4440, %v4442
      %v4492 = vsel %vm681, %v4442, %v4444
      %v4493 = vsel %vm681, %v4444, %v4446
      %v4494 = vsel %vm681, %v4446, %v4448
      %v4495 = vsel %vm681, %v4448, %v4450
      %v4496 = vsel %vm681, %v4450, %v4452
      %v4497 = vsel %vm681, %v4452, %v4454
      %v4498 = vsel %vm681, %v4454, %v4456
      %v4499 = vsel %vm681, %v4456, %v4458
      %v4500 = vsel %vm681, %v4458, %v4460
      %v4501 = vsel %vm681, %v4460, %v4462
      %v4502 = vsel %vm681, %v4462, %v4464
      %v4503 = vsel %vm681, %v4464, %v4466
      %v4504 = vsel %vm681, %v4466, %v4468
      %4541 = vst [vmem:[#allocation3 + $0xa20] sm:$0xff] %v4469
      %4542 = vst [vmem:[#allocation3 + $0xa28] sm:$0xff] %v4470
      %4543 = vst [vmem:[#allocation3 + $0xa30] sm:$0xff] %v4471
      %4544 = vst [vmem:[#allocation3 + $0xa38] sm:$0xff] %v4472
      %4545 = vst [vmem:[#allocation3 + $0xa40] sm:$0xff] %v4473
      %4546 = vst [vmem:[#allocation3 + $0xa48] sm:$0xff] %v4474
      %4547 = vst [vmem:[#allocation3 + $0xa50] sm:$0xff] %v4475
      %4548 = vst [vmem:[#allocation3 + $0xa58] sm:$0xff] %v4476
      %4549 = vst [vmem:[#allocation3 + $0xa60] sm:$0xff] %v4477
      %4550 = vst [vmem:[#allocation3 + $0xa68] sm:$0xff] %v4478
      %4551 = vst [vmem:[#allocation3 + $0xa70] sm:$0xff] %v4479
      %4552 = vst [vmem:[#allocation3 + $0xa78] sm:$0xff] %v4480
      %4553 = vst [vmem:[#allocation3 + $0xa80] sm:$0xff] %v4481
      %4554 = vst [vmem:[#allocation3 + $0xa88] sm:$0xff] %v4482
      %4555 = vst [vmem:[#allocation3 + $0xa90] sm:$0xff] %v4483
      %4556 = vst [vmem:[#allocation3 + $0xa98] sm:$0xff] %v4484
      %4557 = vst [vmem:[#allocation3 + $0xaa0] sm:$0xff] %v4485
      %4558 = vst [vmem:[#allocation3 + $0xaa8] sm:$0xff] %v4486
      %4559 = vst [vmem:[#allocation3 + $0xab0] sm:$0xff] %v4487
      %4560 = vst [vmem:[#allocation3 + $0xab8] sm:$0xff] %v4488
      %4561 = vst [vmem:[#allocation3 + $0xac0] sm:$0xff] %v4489
      %4562 = vst [vmem:[#allocation3 + $0xac8] sm:$0xff] %v4490
      %4563 = vst [vmem:[#allocation3 + $0xad0] sm:$0xff] %v4491
      %4564 = vst [vmem:[#allocation3 + $0xad8] sm:$0xff] %v4492
      %4565 = vst [vmem:[#allocation3 + $0xae0] sm:$0xff] %v4493
      %4566 = vst [vmem:[#allocation3 + $0xae8] sm:$0xff] %v4494
      %4567 = vst [vmem:[#allocation3 + $0xaf0] sm:$0xff] %v4495
      %4568 = vst [vmem:[#allocation3 + $0xaf8] sm:$0xff] %v4496
      %4569 = vst [vmem:[#allocation3 + $0xb00] sm:$0xff] %v4497
      %4570 = vst [vmem:[#allocation3 + $0xb08] sm:$0xff] %v4498
      %4571 = vst [vmem:[#allocation3 + $0xb10] sm:$0xff] %v4499
      %4572 = vst [vmem:[#allocation3 + $0xb18] sm:$0xff] %v4500
      %4573 = vst [vmem:[#allocation3 + $0xb20] sm:$0xff] %v4501
      %4574 = vst [vmem:[#allocation3 + $0xb28] sm:$0xff] %v4502
      %4575 = vst [vmem:[#allocation3 + $0xb30] sm:$0xff] %v4503
      %4576 = vst.msk [vmem:[#allocation3 + $0xb38] sm:$0xff] %vm2912, %v4504
      %4577 = vst [vmem:[#allocation3 + $0xb40] sm:$0xff] %v2840
      %4578 = vst [vmem:[#allocation3 + $0xb48] sm:$0xff] %v2841
      %4579 = vst [vmem:[#allocation3 + $0xb50] sm:$0xff] %v2842
      %4580 = vst [vmem:[#allocation3 + $0xb58] sm:$0xff] %v2843
      %4581 = vst [vmem:[#allocation3 + $0xb60] sm:$0xff] %v2844
      %4582 = vst [vmem:[#allocation3 + $0xb68] sm:$0xff] %v2845
      %4583 = vst [vmem:[#allocation3 + $0xb70] sm:$0xff] %v2846
      %4584 = vst [vmem:[#allocation3 + $0xb78] sm:$0xff] %v2847
      %4585 = vst [vmem:[#allocation3 + $0xb80] sm:$0xff] %v2848
      %4586 = vst [vmem:[#allocation3 + $0xb88] sm:$0xff] %v2849
      %4587 = vst [vmem:[#allocation3 + $0xb90] sm:$0xff] %v2850
      %4588 = vst [vmem:[#allocation3 + $0xb98] sm:$0xff] %v2851
      %4589 = vst [vmem:[#allocation3 + $0xba0] sm:$0xff] %v2852
      %4590 = vst [vmem:[#allocation3 + $0xba8] sm:$0xff] %v2853
      %4591 = vst [vmem:[#allocation3 + $0xbb0] sm:$0xff] %v2854
      %4592 = vst [vmem:[#allocation3 + $0xbb8] sm:$0xff] %v2855
      %4593 = vst [vmem:[#allocation3 + $0xbc0] sm:$0xff] %v2856
      %4594 = vst [vmem:[#allocation3 + $0xbc8] sm:$0xff] %v2857
      %4595 = vst [vmem:[#allocation3 + $0xbd0] sm:$0xff] %v2858
      %4596 = vst [vmem:[#allocation3 + $0xbd8] sm:$0xff] %v2859
      %4597 = vst [vmem:[#allocation3 + $0xbe0] sm:$0xff] %v2860
      %4598 = vst [vmem:[#allocation3 + $0xbe8] sm:$0xff] %v2861
      %4599 = vst [vmem:[#allocation3 + $0xbf0] sm:$0xff] %v2862
      %4600 = vst [vmem:[#allocation3 + $0xbf8] sm:$0xff] %v2863
      %4601 = vst [vmem:[#allocation3 + $0xc00] sm:$0xff] %v2864
      %4602 = vst [vmem:[#allocation3 + $0xc08] sm:$0xff] %v2865
      %4603 = vst [vmem:[#allocation3 + $0xc10] sm:$0xff] %v2866
      %4604 = vst [vmem:[#allocation3 + $0xc18] sm:$0xff] %v2867
      %4605 = vst [vmem:[#allocation3 + $0xc20] sm:$0xff] %v2868
      %4606 = vst [vmem:[#allocation3 + $0xc28] sm:$0xff] %v2869
      %4607 = vst [vmem:[#allocation3 + $0xc30] sm:$0xff] %v2870
      %4608 = vst [vmem:[#allocation3 + $0xc38] sm:$0xff] %v2871
      %4609 = vst [vmem:[#allocation3 + $0xc40] sm:$0xff] %v2872
      %4610 = vst [vmem:[#allocation3 + $0xc48] sm:$0xff] %v2873
      %4611 = vst [vmem:[#allocation3 + $0xc50] sm:$0xff] %v2874
      %4612 = vst.msk [vmem:[#allocation3 + $0xc58] sm:$0xff] %vm2912, %v2875
      %4613 = vrot.lane.b32.xlu0 %v2875, 127
      %v4614 = vpop.permute.xlu0 %4613
      %v4615 = vsel %vm321, %v3021, %v4614
      %4618 = vst [vmem:[#allocation3 + $0xc60] sm:$0xff] %v3023
      %4619 = vst [vmem:[#allocation3 + $0xc68] sm:$0xff] %v3024
      %4620 = vst [vmem:[#allocation3 + $0xc70] sm:$0xff] %v3025
      %4621 = vst [vmem:[#allocation3 + $0xc78] sm:$0xff] %v3026
      %4622 = vst [vmem:[#allocation3 + $0xc80] sm:$0xff] %v3027
      %4623 = vst [vmem:[#allocation3 + $0xc88] sm:$0xff] %v3028
      %4624 = vst [vmem:[#allocation3 + $0xc90] sm:$0xff] %v3029
      %4625 = vst [vmem:[#allocation3 + $0xc98] sm:$0xff] %v3030
      %4626 = vst [vmem:[#allocation3 + $0xca0] sm:$0xff] %v3031
      %4627 = vst [vmem:[#allocation3 + $0xca8] sm:$0xff] %v3032
      %4628 = vst [vmem:[#allocation3 + $0xcb0] sm:$0xff] %v3033
      %4629 = vst [vmem:[#allocation3 + $0xcb8] sm:$0xff] %v3034
      %4630 = vst [vmem:[#allocation3 + $0xcc0] sm:$0xff] %v3035
      %4631 = vst [vmem:[#allocation3 + $0xcc8] sm:$0xff] %v3036
      %4632 = vst [vmem:[#allocation3 + $0xcd0] sm:$0xff] %v3037
      %4633 = vst [vmem:[#allocation3 + $0xcd8] sm:$0xff] %v3038
      %4634 = vst [vmem:[#allocation3 + $0xce0] sm:$0xff] %v3039
      %4635 = vst [vmem:[#allocation3 + $0xce8] sm:$0xff] %v3040
      %4636 = vst [vmem:[#allocation3 + $0xcf0] sm:$0xff] %v3041
      %4637 = vst [vmem:[#allocation3 + $0xcf8] sm:$0xff] %v3042
      %4638 = vst [vmem:[#allocation3 + $0xd00] sm:$0xff] %v3043
      %4639 = vst [vmem:[#allocation3 + $0xd08] sm:$0xff] %v3044
      %4640 = vst [vmem:[#allocation3 + $0xd10] sm:$0xff] %v3045
      %4641 = vst [vmem:[#allocation3 + $0xd18] sm:$0xff] %v3046
      %4642 = vst [vmem:[#allocation3 + $0xd20] sm:$0xff] %v3047
      %4643 = vst [vmem:[#allocation3 + $0xd28] sm:$0xff] %v3048
      %4644 = vst [vmem:[#allocation3 + $0xd30] sm:$0xff] %v3049
      %4645 = vst [vmem:[#allocation3 + $0xd38] sm:$0xff] %v3050
      %4646 = vst [vmem:[#allocation3 + $0xd40] sm:$0xff] %v3051
      %4647 = vst [vmem:[#allocation3 + $0xd48] sm:$0xff] %v3052
      %4648 = vst [vmem:[#allocation3 + $0xd50] sm:$0xff] %v3053
      %4649 = vst [vmem:[#allocation3 + $0xd58] sm:$0xff] %v3054
      %4650 = vst [vmem:[#allocation3 + $0xd60] sm:$0xff] %v3055
      %4651 = vst [vmem:[#allocation3 + $0xd68] sm:$0xff] %v3056
      %4652 = vst [vmem:[#allocation3 + $0xd70] sm:$0xff] %v4615
      %4653 = vst.msk [vmem:[#allocation3 + $0xd78] sm:$0xff] %vm2912, %v4614
      %4654 = vrot.lane.b32.xlu0 %v2875, 126
      %v4655 = vpop.permute.xlu0 %4654
      %v4656 = vsel %vm366, %v3200, %v4655
      %4659 = vst [vmem:[#allocation3 + $0xd80] sm:$0xff] %v3202
      %4660 = vst [vmem:[#allocation3 + $0xd88] sm:$0xff] %v3203
      %4661 = vst [vmem:[#allocation3 + $0xd90] sm:$0xff] %v3204
      %4662 = vst [vmem:[#allocation3 + $0xd98] sm:$0xff] %v3205
      %4663 = vst [vmem:[#allocation3 + $0xda0] sm:$0xff] %v3206
      %4664 = vst [vmem:[#allocation3 + $0xda8] sm:$0xff] %v3207
      %4665 = vst [vmem:[#allocation3 + $0xdb0] sm:$0xff] %v3208
      %4666 = vst [vmem:[#allocation3 + $0xdb8] sm:$0xff] %v3209
      %4667 = vst [vmem:[#allocation3 + $0xdc0] sm:$0xff] %v3210
      %4668 = vst [vmem:[#allocation3 + $0xdc8] sm:$0xff] %v3211
      %4669 = vst [vmem:[#allocation3 + $0xdd0] sm:$0xff] %v3212
      %4670 = vst [vmem:[#allocation3 + $0xdd8] sm:$0xff] %v3213
      %4671 = vst [vmem:[#allocation3 + $0xde0] sm:$0xff] %v3214
      %4672 = vst [vmem:[#allocation3 + $0xde8] sm:$0xff] %v3215
      %4673 = vst [vmem:[#allocation3 + $0xdf0] sm:$0xff] %v3216
      %4674 = vst [vmem:[#allocation3 + $0xdf8] sm:$0xff] %v3217
      %4675 = vst [vmem:[#allocation3 + $0xe00] sm:$0xff] %v3218
      %4676 = vst [vmem:[#allocation3 + $0xe08] sm:$0xff] %v3219
      %4677 = vst [vmem:[#allocation3 + $0xe10] sm:$0xff] %v3220
      %4678 = vst [vmem:[#allocation3 + $0xe18] sm:$0xff] %v3221
      %4679 = vst [vmem:[#allocation3 + $0xe20] sm:$0xff] %v3222
      %4680 = vst [vmem:[#allocation3 + $0xe28] sm:$0xff] %v3223
      %4681 = vst [vmem:[#allocation3 + $0xe30] sm:$0xff] %v3224
      %4682 = vst [vmem:[#allocation3 + $0xe38] sm:$0xff] %v3225
      %4683 = vst [vmem:[#allocation3 + $0xe40] sm:$0xff] %v3226
      %4684 = vst [vmem:[#allocation3 + $0xe48] sm:$0xff] %v3227
      %4685 = vst [vmem:[#allocation3 + $0xe50] sm:$0xff] %v3228
      %4686 = vst [vmem:[#allocation3 + $0xe58] sm:$0xff] %v3229
      %4687 = vst [vmem:[#allocation3 + $0xe60] sm:$0xff] %v3230
      %4688 = vst [vmem:[#allocation3 + $0xe68] sm:$0xff] %v3231
      %4689 = vst [vmem:[#allocation3 + $0xe70] sm:$0xff] %v3232
      %4690 = vst [vmem:[#allocation3 + $0xe78] sm:$0xff] %v3233
      %4691 = vst [vmem:[#allocation3 + $0xe80] sm:$0xff] %v3234
      %4692 = vst [vmem:[#allocation3 + $0xe88] sm:$0xff] %v3235
      %4693 = vst [vmem:[#allocation3 + $0xe90] sm:$0xff] %v4656
      %4694 = vst.msk [vmem:[#allocation3 + $0xe98] sm:$0xff] %vm2912, %v4655
      %4695 = vrot.lane.b32.xlu0 %v2875, 125
      %v4696 = vpop.permute.xlu0 %4695
      %v4697 = vsel %vm411, %v3379, %v4696
      %4700 = vst [vmem:[#allocation3 + $0xea0] sm:$0xff] %v3381
      %4701 = vst [vmem:[#allocation3 + $0xea8] sm:$0xff] %v3382
      %4702 = vst [vmem:[#allocation3 + $0xeb0] sm:$0xff] %v3383
      %4703 = vst [vmem:[#allocation3 + $0xeb8] sm:$0xff] %v3384
      %4704 = vst [vmem:[#allocation3 + $0xec0] sm:$0xff] %v3385
      %4705 = vst [vmem:[#allocation3 + $0xec8] sm:$0xff] %v3386
      %4706 = vst [vmem:[#allocation3 + $0xed0] sm:$0xff] %v3387
      %4707 = vst [vmem:[#allocation3 + $0xed8] sm:$0xff] %v3388
      %4708 = vst [vmem:[#allocation3 + $0xee0] sm:$0xff] %v3389
      %4709 = vst [vmem:[#allocation3 + $0xee8] sm:$0xff] %v3390
      %4710 = vst [vmem:[#allocation3 + $0xef0] sm:$0xff] %v3391
      %4711 = vst [vmem:[#allocation3 + $0xef8] sm:$0xff] %v3392
      %4712 = vst [vmem:[#allocation3 + $0xf00] sm:$0xff] %v3393
      %4713 = vst [vmem:[#allocation3 + $0xf08] sm:$0xff] %v3394
      %4714 = vst [vmem:[#allocation3 + $0xf10] sm:$0xff] %v3395
      %4715 = vst [vmem:[#allocation3 + $0xf18] sm:$0xff] %v3396
      %4716 = vst [vmem:[#allocation3 + $0xf20] sm:$0xff] %v3397
      %4717 = vst [vmem:[#allocation3 + $0xf28] sm:$0xff] %v3398
      %4718 = vst [vmem:[#allocation3 + $0xf30] sm:$0xff] %v3399
      %4719 = vst [vmem:[#allocation3 + $0xf38] sm:$0xff] %v3400
      %4720 = vst [vmem:[#allocation3 + $0xf40] sm:$0xff] %v3401
      %4721 = vst [vmem:[#allocation3 + $0xf48] sm:$0xff] %v3402
      %4722 = vst [vmem:[#allocation3 + $0xf50] sm:$0xff] %v3403
      %4723 = vst [vmem:[#allocation3 + $0xf58] sm:$0xff] %v3404
      %4724 = vst [vmem:[#allocation3 + $0xf60] sm:$0xff] %v3405
      %4725 = vst [vmem:[#allocation3 + $0xf68] sm:$0xff] %v3406
      %4726 = vst [vmem:[#allocation3 + $0xf70] sm:$0xff] %v3407
      %4727 = vst [vmem:[#allocation3 + $0xf78] sm:$0xff] %v3408
      %4728 = vst [vmem:[#allocation3 + $0xf80] sm:$0xff] %v3409
      %4729 = vst [vmem:[#allocation3 + $0xf88] sm:$0xff] %v3410
      %4730 = vst [vmem:[#allocation3 + $0xf90] sm:$0xff] %v3411
      %4731 = vst [vmem:[#allocation3 + $0xf98] sm:$0xff] %v3412
      %4732 = vst [vmem:[#allocation3 + $0xfa0] sm:$0xff] %v3413
      %4733 = vst [vmem:[#allocation3 + $0xfa8] sm:$0xff] %v3414
      %4734 = vst [vmem:[#allocation3 + $0xfb0] sm:$0xff] %v4697
      %4735 = vst.msk [vmem:[#allocation3 + $0xfb8] sm:$0xff] %vm2912, %v4696
      %4736 = vrot.lane.b32.xlu0 %v2875, 124
      %v4737 = vpop.permute.xlu0 %4736
      %v4738 = vsel %vm456, %v3558, %v4737
      %4741 = vst [vmem:[#allocation3 + $0xfc0] sm:$0xff] %v3560
      %4742 = vst [vmem:[#allocation3 + $0xfc8] sm:$0xff] %v3561
      %4743 = vst [vmem:[#allocation3 + $0xfd0] sm:$0xff] %v3562
      %4744 = vst [vmem:[#allocation3 + $0xfd8] sm:$0xff] %v3563
      %4745 = vst [vmem:[#allocation3 + $0xfe0] sm:$0xff] %v3564
      %4746 = vst [vmem:[#allocation3 + $0xfe8] sm:$0xff] %v3565
      %4747 = vst [vmem:[#allocation3 + $0xff0] sm:$0xff] %v3566
      %4748 = vst [vmem:[#allocation3 + $0xff8] sm:$0xff] %v3567
      %4749 = vst [vmem:[#allocation3 + $0x1000] sm:$0xff] %v3568
      %4750 = vst [vmem:[#allocation3 + $0x1008] sm:$0xff] %v3569
      %4751 = vst [vmem:[#allocation3 + $0x1010] sm:$0xff] %v3570
      %4752 = vst [vmem:[#allocation3 + $0x1018] sm:$0xff] %v3571
      %4753 = vst [vmem:[#allocation3 + $0x1020] sm:$0xff] %v3572
      %4754 = vst [vmem:[#allocation3 + $0x1028] sm:$0xff] %v3573
      %4755 = vst [vmem:[#allocation3 + $0x1030] sm:$0xff] %v3574
      %4756 = vst [vmem:[#allocation3 + $0x1038] sm:$0xff] %v3575
      %4757 = vst [vmem:[#allocation3 + $0x1040] sm:$0xff] %v3576
      %4758 = vst [vmem:[#allocation3 + $0x1048] sm:$0xff] %v3577
      %4759 = vst [vmem:[#allocation3 + $0x1050] sm:$0xff] %v3578
      %4760 = vst [vmem:[#allocation3 + $0x1058] sm:$0xff] %v3579
      %4761 = vst [vmem:[#allocation3 + $0x1060] sm:$0xff] %v3580
      %4762 = vst [vmem:[#allocation3 + $0x1068] sm:$0xff] %v3581
      %4763 = vst [vmem:[#allocation3 + $0x1070] sm:$0xff] %v3582
      %4764 = vst [vmem:[#allocation3 + $0x1078] sm:$0xff] %v3583
      %4765 = vst [vmem:[#allocation3 + $0x1080] sm:$0xff] %v3584
      %4766 = vst [vmem:[#allocation3 + $0x1088] sm:$0xff] %v3585
      %4767 = vst [vmem:[#allocation3 + $0x1090] sm:$0xff] %v3586
      %4768 = vst [vmem:[#allocation3 + $0x1098] sm:$0xff] %v3587
      %4769 = vst [vmem:[#allocation3 + $0x10a0] sm:$0xff] %v3588
      %4770 = vst [vmem:[#allocation3 + $0x10a8] sm:$0xff] %v3589
      %4771 = vst [vmem:[#allocation3 + $0x10b0] sm:$0xff] %v3590
      %4772 = vst [vmem:[#allocation3 + $0x10b8] sm:$0xff] %v3591
      %4773 = vst [vmem:[#allocation3 + $0x10c0] sm:$0xff] %v3592
      %4774 = vst [vmem:[#allocation3 + $0x10c8] sm:$0xff] %v3593
      %4775 = vst [vmem:[#allocation3 + $0x10d0] sm:$0xff] %v4738
      %4776 = vst.msk [vmem:[#allocation3 + $0x10d8] sm:$0xff] %vm2912, %v4737
      %4778 = vrot.lane.b32.xlu0 %v2876, 64
      %v4779 = vpop.permute.xlu0 %4778
      %v4780 = vsel %vm501, %v3740, %v4779
      %4782 = vst [vmem:[#allocation3 + $0x10e0] sm:$0xff] %v3742
      %4783 = vst [vmem:[#allocation3 + $0x10e8] sm:$0xff] %v3743
      %4784 = vst [vmem:[#allocation3 + $0x10f0] sm:$0xff] %v3744
      %4785 = vst [vmem:[#allocation3 + $0x10f8] sm:$0xff] %v3745
      %4786 = vst [vmem:[#allocation3 + $0x1100] sm:$0xff] %v3746
      %4787 = vst [vmem:[#allocation3 + $0x1108] sm:$0xff] %v3747
      %4788 = vst [vmem:[#allocation3 + $0x1110] sm:$0xff] %v3748
      %4789 = vst [vmem:[#allocation3 + $0x1118] sm:$0xff] %v3749
      %4790 = vst [vmem:[#allocation3 + $0x1120] sm:$0xff] %v3750
      %4791 = vst [vmem:[#allocation3 + $0x1128] sm:$0xff] %v3751
      %4792 = vst [vmem:[#allocation3 + $0x1130] sm:$0xff] %v3752
      %4793 = vst [vmem:[#allocation3 + $0x1138] sm:$0xff] %v3753
      %4794 = vst [vmem:[#allocation3 + $0x1140] sm:$0xff] %v3754
      %4795 = vst [vmem:[#allocation3 + $0x1148] sm:$0xff] %v3755
      %4796 = vst [vmem:[#allocation3 + $0x1150] sm:$0xff] %v3756
      %4797 = vst [vmem:[#allocation3 + $0x1158] sm:$0xff] %v3757
      %4798 = vst [vmem:[#allocation3 + $0x1160] sm:$0xff] %v3758
      %4799 = vst [vmem:[#allocation3 + $0x1168] sm:$0xff] %v3759
      %4800 = vst [vmem:[#allocation3 + $0x1170] sm:$0xff] %v3760
      %4801 = vst [vmem:[#allocation3 + $0x1178] sm:$0xff] %v3761
      %4802 = vst [vmem:[#allocation3 + $0x1180] sm:$0xff] %v3762
      %4803 = vst [vmem:[#allocation3 + $0x1188] sm:$0xff] %v3763
      %4804 = vst [vmem:[#allocation3 + $0x1190] sm:$0xff] %v3764
      %4805 = vst [vmem:[#allocation3 + $0x1198] sm:$0xff] %v3765
      %4806 = vst [vmem:[#allocation3 + $0x11a0] sm:$0xff] %v3766
      %4807 = vst [vmem:[#allocation3 + $0x11a8] sm:$0xff] %v3767
      %4808 = vst [vmem:[#allocation3 + $0x11b0] sm:$0xff] %v3768
      %4809 = vst [vmem:[#allocation3 + $0x11b8] sm:$0xff] %v3769
      %4810 = vst [vmem:[#allocation3 + $0x11c0] sm:$0xff] %v3770
      %4811 = vst [vmem:[#allocation3 + $0x11c8] sm:$0xff] %v3771
      %4812 = vst [vmem:[#allocation3 + $0x11d0] sm:$0xff] %v3772
      %4813 = vst [vmem:[#allocation3 + $0x11d8] sm:$0xff] %v3773
      %4814 = vst [vmem:[#allocation3 + $0x11e0] sm:$0xff] %v3774
      %4815 = vst [vmem:[#allocation3 + $0x11e8] sm:$0xff] %v3775
      %4816 = vst [vmem:[#allocation3 + $0x11f0] sm:$0xff] %v3776
      %4817 = vst.msk [vmem:[#allocation3 + $0x11f8] sm:$0xff] %vm2912, %v4780
      %4818 = vrot.lane.b32.xlu0 %v2876, 63
      %v4819 = vpop.permute.xlu0 %4818
      %v4820 = vsel %vm546, %v3922, %v4819
      %4822 = vst [vmem:[#allocation3 + $0x1200] sm:$0xff] %v3924
      %4823 = vst [vmem:[#allocation3 + $0x1208] sm:$0xff] %v3925
      %4824 = vst [vmem:[#allocation3 + $0x1210] sm:$0xff] %v3926
      %4825 = vst [vmem:[#allocation3 + $0x1218] sm:$0xff] %v3927
      %4826 = vst [vmem:[#allocation3 + $0x1220] sm:$0xff] %v3928
      %4827 = vst [vmem:[#allocation3 + $0x1228] sm:$0xff] %v3929
      %4828 = vst [vmem:[#allocation3 + $0x1230] sm:$0xff] %v3930
      %4829 = vst [vmem:[#allocation3 + $0x1238] sm:$0xff] %v3931
      %4830 = vst [vmem:[#allocation3 + $0x1240] sm:$0xff] %v3932
      %4831 = vst [vmem:[#allocation3 + $0x1248] sm:$0xff] %v3933
      %4832 = vst [vmem:[#allocation3 + $0x1250] sm:$0xff] %v3934
      %4833 = vst [vmem:[#allocation3 + $0x1258] sm:$0xff] %v3935
      %4834 = vst [vmem:[#allocation3 + $0x1260] sm:$0xff] %v3936
      %4835 = vst [vmem:[#allocation3 + $0x1268] sm:$0xff] %v3937
      %4836 = vst [vmem:[#allocation3 + $0x1270] sm:$0xff] %v3938
      %4837 = vst [vmem:[#allocation3 + $0x1278] sm:$0xff] %v3939
      %4838 = vst [vmem:[#allocation3 + $0x1280] sm:$0xff] %v3940
      %4839 = vst [vmem:[#allocation3 + $0x1288] sm:$0xff] %v3941
      %4840 = vst [vmem:[#allocation3 + $0x1290] sm:$0xff] %v3942
      %4841 = vst [vmem:[#allocation3 + $0x1298] sm:$0xff] %v3943
      %4842 = vst [vmem:[#allocation3 + $0x12a0] sm:$0xff] %v3944
      %4843 = vst [vmem:[#allocation3 + $0x12a8] sm:$0xff] %v3945
      %4844 = vst [vmem:[#allocation3 + $0x12b0] sm:$0xff] %v3946
      %4845 = vst [vmem:[#allocation3 + $0x12b8] sm:$0xff] %v3947
      %4846 = vst [vmem:[#allocation3 + $0x12c0] sm:$0xff] %v3948
      %4847 = vst [vmem:[#allocation3 + $0x12c8] sm:$0xff] %v3949
      %4848 = vst [vmem:[#allocation3 + $0x12d0] sm:$0xff] %v3950
      %4849 = vst [vmem:[#allocation3 + $0x12d8] sm:$0xff] %v3951
      %4850 = vst [vmem:[#allocation3 + $0x12e0] sm:$0xff] %v3952
      %4851 = vst [vmem:[#allocation3 + $0x12e8] sm:$0xff] %v3953
      %4852 = vst [vmem:[#allocation3 + $0x12f0] sm:$0xff] %v3954
      %4853 = vst [vmem:[#allocation3 + $0x12f8] sm:$0xff] %v3955
      %4854 = vst [vmem:[#allocation3 + $0x1300] sm:$0xff] %v3956
      %4855 = vst [vmem:[#allocation3 + $0x1308] sm:$0xff] %v3957
      %4856 = vst [vmem:[#allocation3 + $0x1310] sm:$0xff] %v3958
      %4857 = vst.msk [vmem:[#allocation3 + $0x1318] sm:$0xff] %vm2912, %v4820
      %4858 = vrot.lane.b32.xlu0 %v2876, 62
      %v4859 = vpop.permute.xlu0 %4858
      %v4860 = vsel %vm591, %v4104, %v4859
      %4862 = vst [vmem:[#allocation3 + $0x1320] sm:$0xff] %v4106
      %4863 = vst [vmem:[#allocation3 + $0x1328] sm:$0xff] %v4107
      %4864 = vst [vmem:[#allocation3 + $0x1330] sm:$0xff] %v4108
      %4865 = vst [vmem:[#allocation3 + $0x1338] sm:$0xff] %v4109
      %4866 = vst [vmem:[#allocation3 + $0x1340] sm:$0xff] %v4110
      %4867 = vst [vmem:[#allocation3 + $0x1348] sm:$0xff] %v4111
      %4868 = vst [vmem:[#allocation3 + $0x1350] sm:$0xff] %v4112
      %4869 = vst [vmem:[#allocation3 + $0x1358] sm:$0xff] %v4113
      %4870 = vst [vmem:[#allocation3 + $0x1360] sm:$0xff] %v4114
      %4871 = vst [vmem:[#allocation3 + $0x1368] sm:$0xff] %v4115
      %4872 = vst [vmem:[#allocation3 + $0x1370] sm:$0xff] %v4116
      %4873 = vst [vmem:[#allocation3 + $0x1378] sm:$0xff] %v4117
      %4874 = vst [vmem:[#allocation3 + $0x1380] sm:$0xff] %v4118
      %4875 = vst [vmem:[#allocation3 + $0x1388] sm:$0xff] %v4119
      %4876 = vst [vmem:[#allocation3 + $0x1390] sm:$0xff] %v4120
      %4877 = vst [vmem:[#allocation3 + $0x1398] sm:$0xff] %v4121
      %4878 = vst [vmem:[#allocation3 + $0x13a0] sm:$0xff] %v4122
      %4879 = vst [vmem:[#allocation3 + $0x13a8] sm:$0xff] %v4123
      %4880 = vst [vmem:[#allocation3 + $0x13b0] sm:$0xff] %v4124
      %4881 = vst [vmem:[#allocation3 + $0x13b8] sm:$0xff] %v4125
      %4882 = vst [vmem:[#allocation3 + $0x13c0] sm:$0xff] %v4126
      %4883 = vst [vmem:[#allocation3 + $0x13c8] sm:$0xff] %v4127
      %4884 = vst [vmem:[#allocation3 + $0x13d0] sm:$0xff] %v4128
      %4885 = vst [vmem:[#allocation3 + $0x13d8] sm:$0xff] %v4129
      %4886 = vst [vmem:[#allocation3 + $0x13e0] sm:$0xff] %v4130
      %4887 = vst [vmem:[#allocation3 + $0x13e8] sm:$0xff] %v4131
      %4888 = vst [vmem:[#allocation3 + $0x13f0] sm:$0xff] %v4132
      %4889 = vst [vmem:[#allocation3 + $0x13f8] sm:$0xff] %v4133
      %4890 = vst [vmem:[#allocation3 + $0x1400] sm:$0xff] %v4134
      %4891 = vst [vmem:[#allocation3 + $0x1408] sm:$0xff] %v4135
      %4892 = vst [vmem:[#allocation3 + $0x1410] sm:$0xff] %v4136
      %4893 = vst [vmem:[#allocation3 + $0x1418] sm:$0xff] %v4137
      %4894 = vst [vmem:[#allocation3 + $0x1420] sm:$0xff] %v4138
      %4895 = vst [vmem:[#allocation3 + $0x1428] sm:$0xff] %v4139
      %4896 = vst [vmem:[#allocation3 + $0x1430] sm:$0xff] %v4140
      %4897 = vst.msk [vmem:[#allocation3 + $0x1438] sm:$0xff] %vm2912, %v4860
      %4898 = vrot.lane.b32.xlu0 %v2876, 61
      %v4899 = vpop.permute.xlu0 %4898
      %v4900 = vsel %vm636, %v4286, %v4899
      %4902 = vst [vmem:[#allocation3 + $0x1440] sm:$0xff] %v4288
      %4903 = vst [vmem:[#allocation3 + $0x1448] sm:$0xff] %v4289
      %4904 = vst [vmem:[#allocation3 + $0x1450] sm:$0xff] %v4290
      %4905 = vst [vmem:[#allocation3 + $0x1458] sm:$0xff] %v4291
      %4906 = vst [vmem:[#allocation3 + $0x1460] sm:$0xff] %v4292
      %4907 = vst [vmem:[#allocation3 + $0x1468] sm:$0xff] %v4293
      %4908 = vst [vmem:[#allocation3 + $0x1470] sm:$0xff] %v4294
      %4909 = vst [vmem:[#allocation3 + $0x1478] sm:$0xff] %v4295
      %4910 = vst [vmem:[#allocation3 + $0x1480] sm:$0xff] %v4296
      %4911 = vst [vmem:[#allocation3 + $0x1488] sm:$0xff] %v4297
      %4912 = vst [vmem:[#allocation3 + $0x1490] sm:$0xff] %v4298
      %4913 = vst [vmem:[#allocation3 + $0x1498] sm:$0xff] %v4299
      %4914 = vst [vmem:[#allocation3 + $0x14a0] sm:$0xff] %v4300
      %4915 = vst [vmem:[#allocation3 + $0x14a8] sm:$0xff] %v4301
      %4916 = vst [vmem:[#allocation3 + $0x14b0] sm:$0xff] %v4302
      %4917 = vst [vmem:[#allocation3 + $0x14b8] sm:$0xff] %v4303
      %4918 = vst [vmem:[#allocation3 + $0x14c0] sm:$0xff] %v4304
      %4919 = vst [vmem:[#allocation3 + $0x14c8] sm:$0xff] %v4305
      %4920 = vst [vmem:[#allocation3 + $0x14d0] sm:$0xff] %v4306
      %4921 = vst [vmem:[#allocation3 + $0x14d8] sm:$0xff] %v4307
      %4922 = vst [vmem:[#allocation3 + $0x14e0] sm:$0xff] %v4308
      %4923 = vst [vmem:[#allocation3 + $0x14e8] sm:$0xff] %v4309
      %4924 = vst [vmem:[#allocation3 + $0x14f0] sm:$0xff] %v4310
      %4925 = vst [vmem:[#allocation3 + $0x14f8] sm:$0xff] %v4311
      %4926 = vst [vmem:[#allocation3 + $0x1500] sm:$0xff] %v4312
      %4927 = vst [vmem:[#allocation3 + $0x1508] sm:$0xff] %v4313
      %4928 = vst [vmem:[#allocation3 + $0x1510] sm:$0xff] %v4314
      %4929 = vst [vmem:[#allocation3 + $0x1518] sm:$0xff] %v4315
      %4930 = vst [vmem:[#allocation3 + $0x1520] sm:$0xff] %v4316
      %4931 = vst [vmem:[#allocation3 + $0x1528] sm:$0xff] %v4317
      %4932 = vst [vmem:[#allocation3 + $0x1530] sm:$0xff] %v4318
      %4933 = vst [vmem:[#allocation3 + $0x1538] sm:$0xff] %v4319
      %4934 = vst [vmem:[#allocation3 + $0x1540] sm:$0xff] %v4320
      %4935 = vst [vmem:[#allocation3 + $0x1548] sm:$0xff] %v4321
      %4936 = vst [vmem:[#allocation3 + $0x1550] sm:$0xff] %v4322
      %4937 = vst.msk [vmem:[#allocation3 + $0x1558] sm:$0xff] %vm2912, %v4900
      %4938 = vrot.lane.b32.xlu0 %v2876, 60
      %v4939 = vpop.permute.xlu0 %4938
      %v4940 = vsel %vm681, %v4468, %v4939
      %4942 = vst [vmem:[#allocation3 + $0x1560] sm:$0xff] %v4470
      %4943 = vst [vmem:[#allocation3 + $0x1568] sm:$0xff] %v4471
      %4944 = vst [vmem:[#allocation3 + $0x1570] sm:$0xff] %v4472
      %4945 = vst [vmem:[#allocation3 + $0x1578] sm:$0xff] %v4473
      %4946 = vst [vmem:[#allocation3 + $0x1580] sm:$0xff] %v4474
      %4947 = vst [vmem:[#allocation3 + $0x1588] sm:$0xff] %v4475
      %4948 = vst [vmem:[#allocation3 + $0x1590] sm:$0xff] %v4476
      %4949 = vst [vmem:[#allocation3 + $0x1598] sm:$0xff] %v4477
      %4950 = vst [vmem:[#allocation3 + $0x15a0] sm:$0xff] %v4478
      %4951 = vst [vmem:[#allocation3 + $0x15a8] sm:$0xff] %v4479
      %4952 = vst [vmem:[#allocation3 + $0x15b0] sm:$0xff] %v4480
      %4953 = vst [vmem:[#allocation3 + $0x15b8] sm:$0xff] %v4481
      %4954 = vst [vmem:[#allocation3 + $0x15c0] sm:$0xff] %v4482
      %4955 = vst [vmem:[#allocation3 + $0x15c8] sm:$0xff] %v4483
      %4956 = vst [vmem:[#allocation3 + $0x15d0] sm:$0xff] %v4484
      %4957 = vst [vmem:[#allocation3 + $0x15d8] sm:$0xff] %v4485
      %4958 = vst [vmem:[#allocation3 + $0x15e0] sm:$0xff] %v4486
      %4959 = vst [vmem:[#allocation3 + $0x15e8] sm:$0xff] %v4487
      %4960 = vst [vmem:[#allocation3 + $0x15f0] sm:$0xff] %v4488
      %4961 = vst [vmem:[#allocation3 + $0x15f8] sm:$0xff] %v4489
      %4962 = vst [vmem:[#allocation3 + $0x1600] sm:$0xff] %v4490
      %4963 = vst [vmem:[#allocation3 + $0x1608] sm:$0xff] %v4491
      %4964 = vst [vmem:[#allocation3 + $0x1610] sm:$0xff] %v4492
      %4965 = vst [vmem:[#allocation3 + $0x1618] sm:$0xff] %v4493
      %4966 = vst [vmem:[#allocation3 + $0x1620] sm:$0xff] %v4494
      %4967 = vst [vmem:[#allocation3 + $0x1628] sm:$0xff] %v4495
      %4968 = vst [vmem:[#allocation3 + $0x1630] sm:$0xff] %v4496
      %4969 = vst [vmem:[#allocation3 + $0x1638] sm:$0xff] %v4497
      %4970 = vst [vmem:[#allocation3 + $0x1640] sm:$0xff] %v4498
      %4971 = vst [vmem:[#allocation3 + $0x1648] sm:$0xff] %v4499
      %4972 = vst [vmem:[#allocation3 + $0x1650] sm:$0xff] %v4500
      %4973 = vst [vmem:[#allocation3 + $0x1658] sm:$0xff] %v4501
      %4974 = vst [vmem:[#allocation3 + $0x1660] sm:$0xff] %v4502
      %4975 = vst [vmem:[#allocation3 + $0x1668] sm:$0xff] %v4503
      %4976 = vst [vmem:[#allocation3 + $0x1670] sm:$0xff] %v4504
      %4977 = vst.msk [vmem:[#allocation3 + $0x1678] sm:$0xff] %vm2912, %v4940
      %4978 = vst [vmem:[#allocation3 + $0x1680] sm:$0xff] %v2841
      %4979 = vst [vmem:[#allocation3 + $0x1688] sm:$0xff] %v2842
      %4980 = vst [vmem:[#allocation3 + $0x1690] sm:$0xff] %v2843
      %4981 = vst [vmem:[#allocation3 + $0x1698] sm:$0xff] %v2844
      %4982 = vst [vmem:[#allocation3 + $0x16a0] sm:$0xff] %v2845
      %4983 = vst [vmem:[#allocation3 + $0x16a8] sm:$0xff] %v2846
      %4984 = vst [vmem:[#allocation3 + $0x16b0] sm:$0xff] %v2847
      %4985 = vst [vmem:[#allocation3 + $0x16b8] sm:$0xff] %v2848
      %4986 = vst [vmem:[#allocation3 + $0x16c0] sm:$0xff] %v2849
      %4987 = vst [vmem:[#allocation3 + $0x16c8] sm:$0xff] %v2850
      %4988 = vst [vmem:[#allocation3 + $0x16d0] sm:$0xff] %v2851
      %4989 = vst [vmem:[#allocation3 + $0x16d8] sm:$0xff] %v2852
      %4990 = vst [vmem:[#allocation3 + $0x16e0] sm:$0xff] %v2853
      %4991 = vst [vmem:[#allocation3 + $0x16e8] sm:$0xff] %v2854
      %4992 = vst [vmem:[#allocation3 + $0x16f0] sm:$0xff] %v2855
      %4993 = vst [vmem:[#allocation3 + $0x16f8] sm:$0xff] %v2856
      %4994 = vst [vmem:[#allocation3 + $0x1700] sm:$0xff] %v2857
      %4995 = vst [vmem:[#allocation3 + $0x1708] sm:$0xff] %v2858
      %4996 = vst [vmem:[#allocation3 + $0x1710] sm:$0xff] %v2859
      %4997 = vst [vmem:[#allocation3 + $0x1718] sm:$0xff] %v2860
      %4998 = vst [vmem:[#allocation3 + $0x1720] sm:$0xff] %v2861
      %4999 = vst [vmem:[#allocation3 + $0x1728] sm:$0xff] %v2862
      %5000 = vst [vmem:[#allocation3 + $0x1730] sm:$0xff] %v2863
      %5001 = vst [vmem:[#allocation3 + $0x1738] sm:$0xff] %v2864
      %5002 = vst [vmem:[#allocation3 + $0x1740] sm:$0xff] %v2865
      %5003 = vst [vmem:[#allocation3 + $0x1748] sm:$0xff] %v2866
      %5004 = vst [vmem:[#allocation3 + $0x1750] sm:$0xff] %v2867
      %5005 = vst [vmem:[#allocation3 + $0x1758] sm:$0xff] %v2868
      %5006 = vst [vmem:[#allocation3 + $0x1760] sm:$0xff] %v2869
      %5007 = vst [vmem:[#allocation3 + $0x1768] sm:$0xff] %v2870
      %5008 = vst [vmem:[#allocation3 + $0x1770] sm:$0xff] %v2871
      %5009 = vst [vmem:[#allocation3 + $0x1778] sm:$0xff] %v2872
      %5010 = vst [vmem:[#allocation3 + $0x1780] sm:$0xff] %v2873
      %5011 = vst [vmem:[#allocation3 + $0x1788] sm:$0xff] %v2874
      %5012 = vst [vmem:[#allocation3 + $0x1790] sm:$0xff] %v2875
      %5013 = vst.msk [vmem:[#allocation3 + $0x1798] sm:$0xff] %vm2912, %v2876
      %5014 = vrot.lane.b32.xlu0 %v2876, 127
      %v5015 = vpop.permute.xlu0 %5014
      %v5016 = vsel %vm321, %v4614, %v5015
      %5019 = vst [vmem:[#allocation3 + $0x17a0] sm:$0xff] %v3024
      %5020 = vst [vmem:[#allocation3 + $0x17a8] sm:$0xff] %v3025
      %5021 = vst [vmem:[#allocation3 + $0x17b0] sm:$0xff] %v3026
      %5022 = vst [vmem:[#allocation3 + $0x17b8] sm:$0xff] %v3027
      %5023 = vst [vmem:[#allocation3 + $0x17c0] sm:$0xff] %v3028
      %5024 = vst [vmem:[#allocation3 + $0x17c8] sm:$0xff] %v3029
      %5025 = vst [vmem:[#allocation3 + $0x17d0] sm:$0xff] %v3030
      %5026 = vst [vmem:[#allocation3 + $0x17d8] sm:$0xff] %v3031
      %5027 = vst [vmem:[#allocation3 + $0x17e0] sm:$0xff] %v3032
      %5028 = vst [vmem:[#allocation3 + $0x17e8] sm:$0xff] %v3033
      %5029 = vst [vmem:[#allocation3 + $0x17f0] sm:$0xff] %v3034
      %5030 = vst [vmem:[#allocation3 + $0x17f8] sm:$0xff] %v3035
      %5031 = vst [vmem:[#allocation3 + $0x1800] sm:$0xff] %v3036
      %5032 = vst [vmem:[#allocation3 + $0x1808] sm:$0xff] %v3037
      %5033 = vst [vmem:[#allocation3 + $0x1810] sm:$0xff] %v3038
      %5034 = vst [vmem:[#allocation3 + $0x1818] sm:$0xff] %v3039
      %5035 = vst [vmem:[#allocation3 + $0x1820] sm:$0xff] %v3040
      %5036 = vst [vmem:[#allocation3 + $0x1828] sm:$0xff] %v3041
      %5037 = vst [vmem:[#allocation3 + $0x1830] sm:$0xff] %v3042
      %5038 = vst [vmem:[#allocation3 + $0x1838] sm:$0xff] %v3043
      %5039 = vst [vmem:[#allocation3 + $0x1840] sm:$0xff] %v3044
      %5040 = vst [vmem:[#allocation3 + $0x1848] sm:$0xff] %v3045
      %5041 = vst [vmem:[#allocation3 + $0x1850] sm:$0xff] %v3046
      %5042 = vst [vmem:[#allocation3 + $0x1858] sm:$0xff] %v3047
      %5043 = vst [vmem:[#allocation3 + $0x1860] sm:$0xff] %v3048
      %5044 = vst [vmem:[#allocation3 + $0x1868] sm:$0xff] %v3049
      %5045 = vst [vmem:[#allocation3 + $0x1870] sm:$0xff] %v3050
      %5046 = vst [vmem:[#allocation3 + $0x1878] sm:$0xff] %v3051
      %5047 = vst [vmem:[#allocation3 + $0x1880] sm:$0xff] %v3052
      %5048 = vst [vmem:[#allocation3 + $0x1888] sm:$0xff] %v3053
      %5049 = vst [vmem:[#allocation3 + $0x1890] sm:$0xff] %v3054
      %5050 = vst [vmem:[#allocation3 + $0x1898] sm:$0xff] %v3055
      %5051 = vst [vmem:[#allocation3 + $0x18a0] sm:$0xff] %v3056
      %5052 = vst [vmem:[#allocation3 + $0x18a8] sm:$0xff] %v4615
      %5053 = vst [vmem:[#allocation3 + $0x18b0] sm:$0xff] %v5016
      %5054 = vst.msk [vmem:[#allocation3 + $0x18b8] sm:$0xff] %vm2912, %v5015
      %5055 = vrot.lane.b32.xlu0 %v2876, 126
      %v5056 = vpop.permute.xlu0 %5055
      %v5057 = vsel %vm366, %v4655, %v5056
      %5060 = vst [vmem:[#allocation3 + $0x18c0] sm:$0xff] %v3203
      %5061 = vst [vmem:[#allocation3 + $0x18c8] sm:$0xff] %v3204
      %5062 = vst [vmem:[#allocation3 + $0x18d0] sm:$0xff] %v3205
      %5063 = vst [vmem:[#allocation3 + $0x18d8] sm:$0xff] %v3206
      %5064 = vst [vmem:[#allocation3 + $0x18e0] sm:$0xff] %v3207
      %5065 = vst [vmem:[#allocation3 + $0x18e8] sm:$0xff] %v3208
      %5066 = vst [vmem:[#allocation3 + $0x18f0] sm:$0xff] %v3209
      %5067 = vst [vmem:[#allocation3 + $0x18f8] sm:$0xff] %v3210
      %5068 = vst [vmem:[#allocation3 + $0x1900] sm:$0xff] %v3211
      %5069 = vst [vmem:[#allocation3 + $0x1908] sm:$0xff] %v3212
      %5070 = vst [vmem:[#allocation3 + $0x1910] sm:$0xff] %v3213
      %5071 = vst [vmem:[#allocation3 + $0x1918] sm:$0xff] %v3214
      %5072 = vst [vmem:[#allocation3 + $0x1920] sm:$0xff] %v3215
      %5073 = vst [vmem:[#allocation3 + $0x1928] sm:$0xff] %v3216
      %5074 = vst [vmem:[#allocation3 + $0x1930] sm:$0xff] %v3217
      %5075 = vst [vmem:[#allocation3 + $0x1938] sm:$0xff] %v3218
      %5076 = vst [vmem:[#allocation3 + $0x1940] sm:$0xff] %v3219
      %5077 = vst [vmem:[#allocation3 + $0x1948] sm:$0xff] %v3220
      %5078 = vst [vmem:[#allocation3 + $0x1950] sm:$0xff] %v3221
      %5079 = vst [vmem:[#allocation3 + $0x1958] sm:$0xff] %v3222
      %5080 = vst [vmem:[#allocation3 + $0x1960] sm:$0xff] %v3223
      %5081 = vst [vmem:[#allocation3 + $0x1968] sm:$0xff] %v3224
      %5082 = vst [vmem:[#allocation3 + $0x1970] sm:$0xff] %v3225
      %5083 = vst [vmem:[#allocation3 + $0x1978] sm:$0xff] %v3226
      %5084 = vst [vmem:[#allocation3 + $0x1980] sm:$0xff] %v3227
      %5085 = vst [vmem:[#allocation3 + $0x1988] sm:$0xff] %v3228
      %5086 = vst [vmem:[#allocation3 + $0x1990] sm:$0xff] %v3229
      %5087 = vst [vmem:[#allocation3 + $0x1998] sm:$0xff] %v3230
      %5088 = vst [vmem:[#allocation3 + $0x19a0] sm:$0xff] %v3231
      %5089 = vst [vmem:[#allocation3 + $0x19a8] sm:$0xff] %v3232
      %5090 = vst [vmem:[#allocation3 + $0x19b0] sm:$0xff] %v3233
      %5091 = vst [vmem:[#allocation3 + $0x19b8] sm:$0xff] %v3234
      %5092 = vst [vmem:[#allocation3 + $0x19c0] sm:$0xff] %v3235
      %5093 = vst [vmem:[#allocation3 + $0x19c8] sm:$0xff] %v4656
      %5094 = vst [vmem:[#allocation3 + $0x19d0] sm:$0xff] %v5057
      %5095 = vst.msk [vmem:[#allocation3 + $0x19d8] sm:$0xff] %vm2912, %v5056
      %5096 = vrot.lane.b32.xlu0 %v2876, 125
      %v5097 = vpop.permute.xlu0 %5096
      %v5098 = vsel %vm411, %v4696, %v5097
      %5101 = vst [vmem:[#allocation3 + $0x19e0] sm:$0xff] %v3382
      %5102 = vst [vmem:[#allocation3 + $0x19e8] sm:$0xff] %v3383
      %5103 = vst [vmem:[#allocation3 + $0x19f0] sm:$0xff] %v3384
      %5104 = vst [vmem:[#allocation3 + $0x19f8] sm:$0xff] %v3385
      %5105 = vst [vmem:[#allocation3 + $0x1a00] sm:$0xff] %v3386
      %5106 = vst [vmem:[#allocation3 + $0x1a08] sm:$0xff] %v3387
      %5107 = vst [vmem:[#allocation3 + $0x1a10] sm:$0xff] %v3388
      %5108 = vst [vmem:[#allocation3 + $0x1a18] sm:$0xff] %v3389
      %5109 = vst [vmem:[#allocation3 + $0x1a20] sm:$0xff] %v3390
      %5110 = vst [vmem:[#allocation3 + $0x1a28] sm:$0xff] %v3391
      %5111 = vst [vmem:[#allocation3 + $0x1a30] sm:$0xff] %v3392
      %5112 = vst [vmem:[#allocation3 + $0x1a38] sm:$0xff] %v3393
      %5113 = vst [vmem:[#allocation3 + $0x1a40] sm:$0xff] %v3394
      %5114 = vst [vmem:[#allocation3 + $0x1a48] sm:$0xff] %v3395
      %5115 = vst [vmem:[#allocation3 + $0x1a50] sm:$0xff] %v3396
      %5116 = vst [vmem:[#allocation3 + $0x1a58] sm:$0xff] %v3397
      %5117 = vst [vmem:[#allocation3 + $0x1a60] sm:$0xff] %v3398
      %5118 = vst [vmem:[#allocation3 + $0x1a68] sm:$0xff] %v3399
      %5119 = vst [vmem:[#allocation3 + $0x1a70] sm:$0xff] %v3400
      %5120 = vst [vmem:[#allocation3 + $0x1a78] sm:$0xff] %v3401
      %5121 = vst [vmem:[#allocation3 + $0x1a80] sm:$0xff] %v3402
      %5122 = vst [vmem:[#allocation3 + $0x1a88] sm:$0xff] %v3403
      %5123 = vst [vmem:[#allocation3 + $0x1a90] sm:$0xff] %v3404
      %5124 = vst [vmem:[#allocation3 + $0x1a98] sm:$0xff] %v3405
      %5125 = vst [vmem:[#allocation3 + $0x1aa0] sm:$0xff] %v3406
      %5126 = vst [vmem:[#allocation3 + $0x1aa8] sm:$0xff] %v3407
      %5127 = vst [vmem:[#allocation3 + $0x1ab0] sm:$0xff] %v3408
      %5128 = vst [vmem:[#allocation3 + $0x1ab8] sm:$0xff] %v3409
      %5129 = vst [vmem:[#allocation3 + $0x1ac0] sm:$0xff] %v3410
      %5130 = vst [vmem:[#allocation3 + $0x1ac8] sm:$0xff] %v3411
      %5131 = vst [vmem:[#allocation3 + $0x1ad0] sm:$0xff] %v3412
      %5132 = vst [vmem:[#allocation3 + $0x1ad8] sm:$0xff] %v3413
      %5133 = vst [vmem:[#allocation3 + $0x1ae0] sm:$0xff] %v3414
      %5134 = vst [vmem:[#allocation3 + $0x1ae8] sm:$0xff] %v4697
      %5135 = vst [vmem:[#allocation3 + $0x1af0] sm:$0xff] %v5098
      %5136 = vst.msk [vmem:[#allocation3 + $0x1af8] sm:$0xff] %vm2912, %v5097
      %5137 = vrot.lane.b32.xlu0 %v2876, 124
      %v5138 = vpop.permute.xlu0 %5137
      %v5139 = vsel %vm456, %v4737, %v5138
      %5142 = vst [vmem:[#allocation3 + $0x1b00] sm:$0xff] %v3561
      %5143 = vst [vmem:[#allocation3 + $0x1b08] sm:$0xff] %v3562
      %5144 = vst [vmem:[#allocation3 + $0x1b10] sm:$0xff] %v3563
      %5145 = vst [vmem:[#allocation3 + $0x1b18] sm:$0xff] %v3564
      %5146 = vst [vmem:[#allocation3 + $0x1b20] sm:$0xff] %v3565
      %5147 = vst [vmem:[#allocation3 + $0x1b28] sm:$0xff] %v3566
      %5148 = vst [vmem:[#allocation3 + $0x1b30] sm:$0xff] %v3567
      %5149 = vst [vmem:[#allocation3 + $0x1b38] sm:$0xff] %v3568
      %5150 = vst [vmem:[#allocation3 + $0x1b40] sm:$0xff] %v3569
      %5151 = vst [vmem:[#allocation3 + $0x1b48] sm:$0xff] %v3570
      %5152 = vst [vmem:[#allocation3 + $0x1b50] sm:$0xff] %v3571
      %5153 = vst [vmem:[#allocation3 + $0x1b58] sm:$0xff] %v3572
      %5154 = vst [vmem:[#allocation3 + $0x1b60] sm:$0xff] %v3573
      %5155 = vst [vmem:[#allocation3 + $0x1b68] sm:$0xff] %v3574
      %5156 = vst [vmem:[#allocation3 + $0x1b70] sm:$0xff] %v3575
      %5157 = vst [vmem:[#allocation3 + $0x1b78] sm:$0xff] %v3576
      %5158 = vst [vmem:[#allocation3 + $0x1b80] sm:$0xff] %v3577
      %5159 = vst [vmem:[#allocation3 + $0x1b88] sm:$0xff] %v3578
      %5160 = vst [vmem:[#allocation3 + $0x1b90] sm:$0xff] %v3579
      %5161 = vst [vmem:[#allocation3 + $0x1b98] sm:$0xff] %v3580
      %5162 = vst [vmem:[#allocation3 + $0x1ba0] sm:$0xff] %v3581
      %5163 = vst [vmem:[#allocation3 + $0x1ba8] sm:$0xff] %v3582
      %5164 = vst [vmem:[#allocation3 + $0x1bb0] sm:$0xff] %v3583
      %5165 = vst [vmem:[#allocation3 + $0x1bb8] sm:$0xff] %v3584
      %5166 = vst [vmem:[#allocation3 + $0x1bc0] sm:$0xff] %v3585
      %5167 = vst [vmem:[#allocation3 + $0x1bc8] sm:$0xff] %v3586
      %5168 = vst [vmem:[#allocation3 + $0x1bd0] sm:$0xff] %v3587
      %5169 = vst [vmem:[#allocation3 + $0x1bd8] sm:$0xff] %v3588
      %5170 = vst [vmem:[#allocation3 + $0x1be0] sm:$0xff] %v3589
      %5171 = vst [vmem:[#allocation3 + $0x1be8] sm:$0xff] %v3590
      %5172 = vst [vmem:[#allocation3 + $0x1bf0] sm:$0xff] %v3591
      %5173 = vst [vmem:[#allocation3 + $0x1bf8] sm:$0xff] %v3592
      %5174 = vst [vmem:[#allocation3 + $0x1c00] sm:$0xff] %v3593
      %5175 = vst [vmem:[#allocation3 + $0x1c08] sm:$0xff] %v4738
      %5176 = vst [vmem:[#allocation3 + $0x1c10] sm:$0xff] %v5139
      %5177 = vst.msk [vmem:[#allocation3 + $0x1c18] sm:$0xff] %vm2912, %v5138
      %v5178 = vld [vmem:[%s3] sm:$0xff]
      %v5179 = vld [vmem:[%s3 + $0x8] sm:$0xff]
      %v5180 = vld [vmem:[#allocation3] sm:$0xff]
      %v5181 = vld [vmem:[#allocation3 + $0x8] sm:$0xff]
      %v5182 = vld [vmem:[#allocation3 + $0x10] sm:$0xff]
      %v5183 = vld [vmem:[#allocation3 + $0x18] sm:$0xff]
      %v5184 = vld [vmem:[#allocation3 + $0x20] sm:$0xff]
      %v5185 = vld [vmem:[#allocation3 + $0x28] sm:$0xff]
      %v5186 = vld [vmem:[#allocation3 + $0x30] sm:$0xff]
      %v5187 = vld [vmem:[#allocation3 + $0x38] sm:$0xff]
      %v5188 = vld [vmem:[#allocation3 + $0x40] sm:$0xff]
      %v5189 = vld [vmem:[#allocation3 + $0x48] sm:$0xff]
      %v5190 = vld [vmem:[#allocation3 + $0x50] sm:$0xff]
      %v5191 = vld [vmem:[#allocation3 + $0x58] sm:$0xff]
      %v5192 = vld [vmem:[#allocation3 + $0x60] sm:$0xff]
      %v5193 = vld [vmem:[#allocation3 + $0x68] sm:$0xff]
      %v5194 = vld [vmem:[#allocation3 + $0x70] sm:$0xff]
      %v5195 = vld [vmem:[#allocation3 + $0x78] sm:$0xff]
      %v5196 = vld [vmem:[#allocation3 + $0x80] sm:$0xff]
      %v5197 = vld [vmem:[#allocation3 + $0x88] sm:$0xff]
      %v5198 = vld [vmem:[#allocation3 + $0x90] sm:$0xff]
      %v5199 = vld [vmem:[#allocation3 + $0x98] sm:$0xff]
      %v5200 = vld [vmem:[#allocation3 + $0xa0] sm:$0xff]
      %v5201 = vld [vmem:[#allocation3 + $0xa8] sm:$0xff]
      %v5202 = vld [vmem:[#allocation3 + $0xb0] sm:$0xff]
      %v5203 = vld [vmem:[#allocation3 + $0xb8] sm:$0xff]
      %v5204 = vld [vmem:[#allocation3 + $0xc0] sm:$0xff]
      %v5205 = vld [vmem:[#allocation3 + $0xc8] sm:$0xff]
      %v5206 = vld [vmem:[#allocation3 + $0xd0] sm:$0xff]
      %v5207 = vld [vmem:[#allocation3 + $0xd8] sm:$0xff]
      %v5208 = vld [vmem:[#allocation3 + $0xe0] sm:$0xff]
      %v5209 = vld [vmem:[#allocation3 + $0xe8] sm:$0xff]
      %v5210 = vld [vmem:[#allocation3 + $0xf0] sm:$0xff]
      %v5211 = vld [vmem:[#allocation3 + $0xf8] sm:$0xff]
      %v5212 = vld [vmem:[#allocation3 + $0x100] sm:$0xff]
      %v5213 = vld [vmem:[#allocation3 + $0x108] sm:$0xff]
      %v5214 = vld [vmem:[#allocation3 + $0x110] sm:$0xff]
      %v5215 = vld [vmem:[#allocation3 + $0x118] sm:$0xff]
      %v5216 = vld [vmem:[#allocation3 + $0x120] sm:$0xff]
      %v5217 = vld [vmem:[#allocation3 + $0x128] sm:$0xff]
      %v5218 = vld [vmem:[#allocation3 + $0x130] sm:$0xff]
      %v5219 = vld [vmem:[#allocation3 + $0x138] sm:$0xff]
      %v5220 = vld [vmem:[#allocation3 + $0x140] sm:$0xff]
      %v5221 = vld [vmem:[#allocation3 + $0x148] sm:$0xff]
      %v5222 = vld [vmem:[#allocation3 + $0x150] sm:$0xff]
      %v5223 = vld [vmem:[#allocation3 + $0x158] sm:$0xff]
      %v5224 = vld [vmem:[#allocation3 + $0x160] sm:$0xff]
      %v5225 = vld [vmem:[#allocation3 + $0x168] sm:$0xff]
      %v5226 = vld [vmem:[#allocation3 + $0x170] sm:$0xff]
      %v5227 = vld [vmem:[#allocation3 + $0x178] sm:$0xff]
      %v5228 = vld [vmem:[#allocation3 + $0x180] sm:$0xff]
      %v5229 = vld [vmem:[#allocation3 + $0x188] sm:$0xff]
      %v5230 = vld [vmem:[#allocation3 + $0x190] sm:$0xff]
      %v5231 = vld [vmem:[#allocation3 + $0x198] sm:$0xff]
      %v5232 = vld [vmem:[#allocation3 + $0x1a0] sm:$0xff]
      %v5233 = vld [vmem:[#allocation3 + $0x1a8] sm:$0xff]
      %v5234 = vld [vmem:[#allocation3 + $0x1b0] sm:$0xff]
      %v5235 = vld [vmem:[#allocation3 + $0x1b8] sm:$0xff]
      %v5236 = vld [vmem:[#allocation3 + $0x1c0] sm:$0xff]
      %v5237 = vld [vmem:[#allocation3 + $0x1c8] sm:$0xff]
      %v5238 = vld [vmem:[#allocation3 + $0x1d0] sm:$0xff]
      %v5239 = vld [vmem:[#allocation3 + $0x1d8] sm:$0xff]
      %v5240 = vld [vmem:[#allocation3 + $0x1e0] sm:$0xff]
      %v5241 = vld [vmem:[#allocation3 + $0x1e8] sm:$0xff]
      %v5242 = vld [vmem:[#allocation3 + $0x1f0] sm:$0xff]
      %v5243 = vld [vmem:[#allocation3 + $0x1f8] sm:$0xff]
      %v5244 = vld [vmem:[#allocation3 + $0x200] sm:$0xff]
      %v5245 = vld [vmem:[#allocation3 + $0x208] sm:$0xff]
      %v5246 = vld [vmem:[#allocation3 + $0x210] sm:$0xff]
      %v5247 = vld [vmem:[#allocation3 + $0x218] sm:$0xff]
      %v5248 = vld [vmem:[#allocation3 + $0x220] sm:$0xff]
      %v5249 = vld [vmem:[#allocation3 + $0x228] sm:$0xff]
      %v5250 = vld [vmem:[#allocation3 + $0x230] sm:$0xff]
      %v5251 = vld [vmem:[#allocation3 + $0x238] sm:$0xff]
      %v5252 = vld [vmem:[#allocation3 + $0x240] sm:$0xff]
      %v5253 = vld [vmem:[#allocation3 + $0x248] sm:$0xff]
      %v5254 = vld [vmem:[#allocation3 + $0x250] sm:$0xff]
      %v5255 = vld [vmem:[#allocation3 + $0x258] sm:$0xff]
      %v5256 = vld [vmem:[#allocation3 + $0x260] sm:$0xff]
      %v5257 = vld [vmem:[#allocation3 + $0x268] sm:$0xff]
      %v5258 = vld [vmem:[#allocation3 + $0x270] sm:$0xff]
      %v5259 = vld [vmem:[#allocation3 + $0x278] sm:$0xff]
      %v5260 = vld [vmem:[#allocation3 + $0x280] sm:$0xff]
      %v5261 = vld [vmem:[#allocation3 + $0x288] sm:$0xff]
      %v5262 = vld [vmem:[#allocation3 + $0x290] sm:$0xff]
      %v5263 = vld [vmem:[#allocation3 + $0x298] sm:$0xff]
      %v5264 = vld [vmem:[#allocation3 + $0x2a0] sm:$0xff]
      %v5265 = vld [vmem:[#allocation3 + $0x2a8] sm:$0xff]
      %v5266 = vld [vmem:[#allocation3 + $0x2b0] sm:$0xff]
      %v5267 = vld [vmem:[#allocation3 + $0x2b8] sm:$0xff]
      %v5268 = vld [vmem:[#allocation3 + $0x2c0] sm:$0xff]
      %v5269 = vld [vmem:[#allocation3 + $0x2c8] sm:$0xff]
      %v5270 = vld [vmem:[#allocation3 + $0x2d0] sm:$0xff]
      %v5271 = vld [vmem:[#allocation3 + $0x2d8] sm:$0xff]
      %v5272 = vld [vmem:[#allocation3 + $0x2e0] sm:$0xff]
      %v5273 = vld [vmem:[#allocation3 + $0x2e8] sm:$0xff]
      %v5274 = vld [vmem:[#allocation3 + $0x2f0] sm:$0xff]
      %v5275 = vld [vmem:[#allocation3 + $0x2f8] sm:$0xff]
      %v5276 = vld [vmem:[#allocation3 + $0x300] sm:$0xff]
      %v5277 = vld [vmem:[#allocation3 + $0x308] sm:$0xff]
      %v5278 = vld [vmem:[#allocation3 + $0x310] sm:$0xff]
      %v5279 = vld [vmem:[#allocation3 + $0x318] sm:$0xff]
      %v5280 = vld [vmem:[#allocation3 + $0x320] sm:$0xff]
      %v5281 = vld [vmem:[#allocation3 + $0x328] sm:$0xff]
      %v5282 = vld [vmem:[#allocation3 + $0x330] sm:$0xff]
      %v5283 = vld [vmem:[#allocation3 + $0x338] sm:$0xff]
      %v5284 = vld [vmem:[#allocation3 + $0x340] sm:$0xff]
      %v5285 = vld [vmem:[#allocation3 + $0x348] sm:$0xff]
      %v5286 = vld [vmem:[#allocation3 + $0x350] sm:$0xff]
      %v5287 = vld [vmem:[#allocation3 + $0x358] sm:$0xff]
      %v5288 = vld [vmem:[#allocation3 + $0x360] sm:$0xff]
      %v5289 = vld [vmem:[#allocation3 + $0x368] sm:$0xff]
      %v5290 = vld [vmem:[#allocation3 + $0x370] sm:$0xff]
      %v5291 = vld [vmem:[#allocation3 + $0x378] sm:$0xff]
      %v5292 = vld [vmem:[#allocation3 + $0x380] sm:$0xff]
      %v5293 = vld [vmem:[#allocation3 + $0x388] sm:$0xff]
      %v5294 = vld [vmem:[#allocation3 + $0x390] sm:$0xff]
      %v5295 = vld [vmem:[#allocation3 + $0x398] sm:$0xff]
      %v5296 = vld [vmem:[#allocation3 + $0x3a0] sm:$0xff]
      %v5297 = vld [vmem:[#allocation3 + $0x3a8] sm:$0xff]
      %v5298 = vld [vmem:[#allocation3 + $0x3b0] sm:$0xff]
      %v5299 = vld [vmem:[#allocation3 + $0x3b8] sm:$0xff]
      %v5300 = vld [vmem:[#allocation3 + $0x3c0] sm:$0xff]
      %v5301 = vld [vmem:[#allocation3 + $0x3c8] sm:$0xff]
      %v5302 = vld [vmem:[#allocation3 + $0x3d0] sm:$0xff]
      %v5303 = vld [vmem:[#allocation3 + $0x3d8] sm:$0xff]
      %v5304 = vld [vmem:[#allocation3 + $0x3e0] sm:$0xff]
      %v5305 = vld [vmem:[#allocation3 + $0x3e8] sm:$0xff]
      %v5306 = vld [vmem:[#allocation3 + $0x3f0] sm:$0xff]
      %v5307 = vld [vmem:[#allocation3 + $0x3f8] sm:$0xff]
      %v5308 = vld [vmem:[#allocation3 + $0x400] sm:$0xff]
      %v5309 = vld [vmem:[#allocation3 + $0x408] sm:$0xff]
      %v5310 = vld [vmem:[#allocation3 + $0x410] sm:$0xff]
      %v5311 = vld [vmem:[#allocation3 + $0x418] sm:$0xff]
      %v5312 = vld [vmem:[#allocation3 + $0x420] sm:$0xff]
      %v5313 = vld [vmem:[#allocation3 + $0x428] sm:$0xff]
      %v5314 = vld [vmem:[#allocation3 + $0x430] sm:$0xff]
      %v5315 = vld [vmem:[#allocation3 + $0x438] sm:$0xff]
      %v5316 = vld [vmem:[#allocation3 + $0x440] sm:$0xff]
      %v5317 = vld [vmem:[#allocation3 + $0x448] sm:$0xff]
      %v5318 = vld [vmem:[#allocation3 + $0x450] sm:$0xff]
      %v5319 = vld [vmem:[#allocation3 + $0x458] sm:$0xff]
      %v5320 = vld [vmem:[#allocation3 + $0x460] sm:$0xff]
      %v5321 = vld [vmem:[#allocation3 + $0x468] sm:$0xff]
      %v5322 = vld [vmem:[#allocation3 + $0x470] sm:$0xff]
      %v5323 = vld [vmem:[#allocation3 + $0x478] sm:$0xff]
      %v5324 = vld [vmem:[#allocation3 + $0x480] sm:$0xff]
      %v5325 = vld [vmem:[#allocation3 + $0x488] sm:$0xff]
      %v5326 = vld [vmem:[#allocation3 + $0x490] sm:$0xff]
      %v5327 = vld [vmem:[#allocation3 + $0x498] sm:$0xff]
      %v5328 = vld [vmem:[#allocation3 + $0x4a0] sm:$0xff]
      %v5329 = vld [vmem:[#allocation3 + $0x4a8] sm:$0xff]
      %v5330 = vld [vmem:[#allocation3 + $0x4b0] sm:$0xff]
      %v5331 = vld [vmem:[#allocation3 + $0x4b8] sm:$0xff]
      %v5332 = vld [vmem:[#allocation3 + $0x4c0] sm:$0xff]
      %v5333 = vld [vmem:[#allocation3 + $0x4c8] sm:$0xff]
      %v5334 = vld [vmem:[#allocation3 + $0x4d0] sm:$0xff]
      %v5335 = vld [vmem:[#allocation3 + $0x4d8] sm:$0xff]
      %v5336 = vld [vmem:[#allocation3 + $0x4e0] sm:$0xff]
      %v5337 = vld [vmem:[#allocation3 + $0x4e8] sm:$0xff]
      %v5338 = vld [vmem:[#allocation3 + $0x4f0] sm:$0xff]
      %v5339 = vld [vmem:[#allocation3 + $0x4f8] sm:$0xff]
      %v5340 = vld [vmem:[#allocation3 + $0x500] sm:$0xff]
      %v5341 = vld [vmem:[#allocation3 + $0x508] sm:$0xff]
      %v5342 = vld [vmem:[#allocation3 + $0x510] sm:$0xff]
      %v5343 = vld [vmem:[#allocation3 + $0x518] sm:$0xff]
      %v5344 = vld [vmem:[#allocation3 + $0x520] sm:$0xff]
      %v5345 = vld [vmem:[#allocation3 + $0x528] sm:$0xff]
      %v5346 = vld [vmem:[#allocation3 + $0x530] sm:$0xff]
      %v5347 = vld [vmem:[#allocation3 + $0x538] sm:$0xff]
      %v5348 = vld [vmem:[#allocation3 + $0x540] sm:$0xff]
      %v5349 = vld [vmem:[#allocation3 + $0x548] sm:$0xff]
      %v5350 = vld [vmem:[#allocation3 + $0x550] sm:$0xff]
      %v5351 = vld [vmem:[#allocation3 + $0x558] sm:$0xff]
      %v5352 = vld [vmem:[#allocation3 + $0x560] sm:$0xff]
      %v5353 = vld [vmem:[#allocation3 + $0x568] sm:$0xff]
      %v5354 = vld [vmem:[#allocation3 + $0x570] sm:$0xff]
      %v5355 = vld [vmem:[#allocation3 + $0x578] sm:$0xff]
      %v5356 = vld [vmem:[#allocation3 + $0x580] sm:$0xff]
      %v5357 = vld [vmem:[#allocation3 + $0x588] sm:$0xff]
      %v5358 = vld [vmem:[#allocation3 + $0x590] sm:$0xff]
      %v5359 = vld [vmem:[#allocation3 + $0x598] sm:$0xff]
      %v5360 = vld [vmem:[#allocation3 + $0x5a0] sm:$0xff]
      %v5361 = vld [vmem:[#allocation3 + $0x5a8] sm:$0xff]
      %v5362 = vld [vmem:[#allocation3 + $0x5b0] sm:$0xff]
      %v5363 = vld [vmem:[#allocation3 + $0x5b8] sm:$0xff]
      %v5364 = vld [vmem:[#allocation3 + $0x5c0] sm:$0xff]
      %v5365 = vld [vmem:[#allocation3 + $0x5c8] sm:$0xff]
      %v5366 = vld [vmem:[#allocation3 + $0x5d0] sm:$0xff]
      %v5367 = vld [vmem:[#allocation3 + $0x5d8] sm:$0xff]
      %v5368 = vld [vmem:[#allocation3 + $0x5e0] sm:$0xff]
      %v5369 = vld [vmem:[#allocation3 + $0x5e8] sm:$0xff]
      %v5370 = vld [vmem:[#allocation3 + $0x5f0] sm:$0xff]
      %v5371 = vld [vmem:[#allocation3 + $0x5f8] sm:$0xff]
      %v5372 = vld [vmem:[#allocation3 + $0x600] sm:$0xff]
      %v5373 = vld [vmem:[#allocation3 + $0x608] sm:$0xff]
      %v5374 = vld [vmem:[#allocation3 + $0x610] sm:$0xff]
      %v5375 = vld [vmem:[#allocation3 + $0x618] sm:$0xff]
      %v5376 = vld [vmem:[#allocation3 + $0x620] sm:$0xff]
      %v5377 = vld [vmem:[#allocation3 + $0x628] sm:$0xff]
      %v5378 = vld [vmem:[#allocation3 + $0x630] sm:$0xff]
      %v5379 = vld [vmem:[#allocation3 + $0x638] sm:$0xff]
      %v5380 = vld [vmem:[#allocation3 + $0x640] sm:$0xff]
      %v5381 = vld [vmem:[#allocation3 + $0x648] sm:$0xff]
      %v5382 = vld [vmem:[#allocation3 + $0x650] sm:$0xff]
      %v5383 = vld [vmem:[#allocation3 + $0x658] sm:$0xff]
      %v5384 = vld [vmem:[#allocation3 + $0x660] sm:$0xff]
      %v5385 = vld [vmem:[#allocation3 + $0x668] sm:$0xff]
      %v5386 = vld [vmem:[#allocation3 + $0x670] sm:$0xff]
      %v5387 = vld [vmem:[#allocation3 + $0x678] sm:$0xff]
      %v5388 = vld [vmem:[#allocation3 + $0x680] sm:$0xff]
      %v5389 = vld [vmem:[#allocation3 + $0x688] sm:$0xff]
      %v5390 = vld [vmem:[#allocation3 + $0x690] sm:$0xff]
      %v5391 = vld [vmem:[#allocation3 + $0x698] sm:$0xff]
      %v5392 = vld [vmem:[#allocation3 + $0x6a0] sm:$0xff]
      %v5393 = vld [vmem:[#allocation3 + $0x6a8] sm:$0xff]
      %v5394 = vld [vmem:[#allocation3 + $0x6b0] sm:$0xff]
      %v5395 = vld [vmem:[#allocation3 + $0x6b8] sm:$0xff]
      %v5396 = vld [vmem:[#allocation3 + $0x6c0] sm:$0xff]
      %v5397 = vld [vmem:[#allocation3 + $0x6c8] sm:$0xff]
      %v5398 = vld [vmem:[#allocation3 + $0x6d0] sm:$0xff]
      %v5399 = vld [vmem:[#allocation3 + $0x6d8] sm:$0xff]
      %v5400 = vld [vmem:[#allocation3 + $0x6e0] sm:$0xff]
      %v5401 = vld [vmem:[#allocation3 + $0x6e8] sm:$0xff]
      %v5402 = vld [vmem:[#allocation3 + $0x6f0] sm:$0xff]
      %v5403 = vld [vmem:[#allocation3 + $0x6f8] sm:$0xff]
      %v5404 = vld [vmem:[#allocation3 + $0x700] sm:$0xff]
      %v5405 = vld [vmem:[#allocation3 + $0x708] sm:$0xff]
      %v5406 = vld [vmem:[#allocation3 + $0x710] sm:$0xff]
      %v5407 = vld [vmem:[#allocation3 + $0x718] sm:$0xff]
      %v5408 = vld [vmem:[#allocation3 + $0x720] sm:$0xff]
      %v5409 = vld [vmem:[#allocation3 + $0x728] sm:$0xff]
      %v5410 = vld [vmem:[#allocation3 + $0x730] sm:$0xff]
      %v5411 = vld [vmem:[#allocation3 + $0x738] sm:$0xff]
      %v5412 = vld [vmem:[#allocation3 + $0x740] sm:$0xff]
      %v5413 = vld [vmem:[#allocation3 + $0x748] sm:$0xff]
      %v5414 = vld [vmem:[#allocation3 + $0x750] sm:$0xff]
      %v5415 = vld [vmem:[#allocation3 + $0x758] sm:$0xff]
      %v5416 = vld [vmem:[#allocation3 + $0x760] sm:$0xff]
      %v5417 = vld [vmem:[#allocation3 + $0x768] sm:$0xff]
      %v5418 = vld [vmem:[#allocation3 + $0x770] sm:$0xff]
      %v5419 = vld [vmem:[#allocation3 + $0x778] sm:$0xff]
      %v5420 = vld [vmem:[#allocation3 + $0x780] sm:$0xff]
      %v5421 = vld [vmem:[#allocation3 + $0x788] sm:$0xff]
      %v5422 = vld [vmem:[#allocation3 + $0x790] sm:$0xff]
      %v5423 = vld [vmem:[#allocation3 + $0x798] sm:$0xff]
      %v5424 = vld [vmem:[#allocation3 + $0x7a0] sm:$0xff]
      %v5425 = vld [vmem:[#allocation3 + $0x7a8] sm:$0xff]
      %v5426 = vld [vmem:[#allocation3 + $0x7b0] sm:$0xff]
      %v5427 = vld [vmem:[#allocation3 + $0x7b8] sm:$0xff]
      %v5428 = vld [vmem:[#allocation3 + $0x7c0] sm:$0xff]
      %v5429 = vld [vmem:[#allocation3 + $0x7c8] sm:$0xff]
      %v5430 = vld [vmem:[#allocation3 + $0x7d0] sm:$0xff]
      %v5431 = vld [vmem:[#allocation3 + $0x7d8] sm:$0xff]
      %v5432 = vld [vmem:[#allocation3 + $0x7e0] sm:$0xff]
      %v5433 = vld [vmem:[#allocation3 + $0x7e8] sm:$0xff]
      %v5434 = vld [vmem:[#allocation3 + $0x7f0] sm:$0xff]
      %v5435 = vld [vmem:[#allocation3 + $0x7f8] sm:$0xff]
      %v5436 = vld [vmem:[#allocation3 + $0x800] sm:$0xff]
      %v5437 = vld [vmem:[#allocation3 + $0x808] sm:$0xff]
      %v5438 = vld [vmem:[#allocation3 + $0x810] sm:$0xff]
      %v5439 = vld [vmem:[#allocation3 + $0x818] sm:$0xff]
      %v5440 = vld [vmem:[#allocation3 + $0x820] sm:$0xff]
      %v5441 = vld [vmem:[#allocation3 + $0x828] sm:$0xff]
      %v5442 = vld [vmem:[#allocation3 + $0x830] sm:$0xff]
      %v5443 = vld [vmem:[#allocation3 + $0x838] sm:$0xff]
      %v5444 = vld [vmem:[#allocation3 + $0x840] sm:$0xff]
      %v5445 = vld [vmem:[#allocation3 + $0x848] sm:$0xff]
      %v5446 = vld [vmem:[#allocation3 + $0x850] sm:$0xff]
      %v5447 = vld [vmem:[#allocation3 + $0x858] sm:$0xff]
      %v5448 = vld [vmem:[#allocation3 + $0x860] sm:$0xff]
      %v5449 = vld [vmem:[#allocation3 + $0x868] sm:$0xff]
      %v5450 = vld [vmem:[#allocation3 + $0x870] sm:$0xff]
      %v5451 = vld [vmem:[#allocation3 + $0x878] sm:$0xff]
      %v5452 = vld [vmem:[#allocation3 + $0x880] sm:$0xff]
      %v5453 = vld [vmem:[#allocation3 + $0x888] sm:$0xff]
      %v5454 = vld [vmem:[#allocation3 + $0x890] sm:$0xff]
      %v5455 = vld [vmem:[#allocation3 + $0x898] sm:$0xff]
      %v5456 = vld [vmem:[#allocation3 + $0x8a0] sm:$0xff]
      %v5457 = vld [vmem:[#allocation3 + $0x8a8] sm:$0xff]
      %v5458 = vld [vmem:[#allocation3 + $0x8b0] sm:$0xff]
      %v5459 = vld [vmem:[#allocation3 + $0x8b8] sm:$0xff]
      %v5460 = vld [vmem:[#allocation3 + $0x8c0] sm:$0xff]
      %v5461 = vld [vmem:[#allocation3 + $0x8c8] sm:$0xff]
      %v5462 = vld [vmem:[#allocation3 + $0x8d0] sm:$0xff]
      %v5463 = vld [vmem:[#allocation3 + $0x8d8] sm:$0xff]
      %v5464 = vld [vmem:[#allocation3 + $0x8e0] sm:$0xff]
      %v5465 = vld [vmem:[#allocation3 + $0x8e8] sm:$0xff]
      %v5466 = vld [vmem:[#allocation3 + $0x8f0] sm:$0xff]
      %v5467 = vld [vmem:[#allocation3 + $0x8f8] sm:$0xff]
      %v5468 = vld [vmem:[#allocation3 + $0x900] sm:$0xff]
      %v5469 = vld [vmem:[#allocation3 + $0x908] sm:$0xff]
      %v5470 = vld [vmem:[#allocation3 + $0x910] sm:$0xff]
      %v5471 = vld [vmem:[#allocation3 + $0x918] sm:$0xff]
      %v5472 = vld [vmem:[#allocation3 + $0x920] sm:$0xff]
      %v5473 = vld [vmem:[#allocation3 + $0x928] sm:$0xff]
      %v5474 = vld [vmem:[#allocation3 + $0x930] sm:$0xff]
      %v5475 = vld [vmem:[#allocation3 + $0x938] sm:$0xff]
      %v5476 = vld [vmem:[#allocation3 + $0x940] sm:$0xff]
      %v5477 = vld [vmem:[#allocation3 + $0x948] sm:$0xff]
      %v5478 = vld [vmem:[#allocation3 + $0x950] sm:$0xff]
      %v5479 = vld [vmem:[#allocation3 + $0x958] sm:$0xff]
      %v5480 = vld [vmem:[#allocation3 + $0x960] sm:$0xff]
      %v5481 = vld [vmem:[#allocation3 + $0x968] sm:$0xff]
      %v5482 = vld [vmem:[#allocation3 + $0x970] sm:$0xff]
      %v5483 = vld [vmem:[#allocation3 + $0x978] sm:$0xff]
      %v5484 = vld [vmem:[#allocation3 + $0x980] sm:$0xff]
      %v5485 = vld [vmem:[#allocation3 + $0x988] sm:$0xff]
      %v5486 = vld [vmem:[#allocation3 + $0x990] sm:$0xff]
      %v5487 = vld [vmem:[#allocation3 + $0x998] sm:$0xff]
      %v5488 = vld [vmem:[#allocation3 + $0x9a0] sm:$0xff]
      %v5489 = vld [vmem:[#allocation3 + $0x9a8] sm:$0xff]
      %v5490 = vld [vmem:[#allocation3 + $0x9b0] sm:$0xff]
      %v5491 = vld [vmem:[#allocation3 + $0x9b8] sm:$0xff]
      %v5492 = vld [vmem:[#allocation3 + $0x9c0] sm:$0xff]
      %v5493 = vld [vmem:[#allocation3 + $0x9c8] sm:$0xff]
      %v5494 = vld [vmem:[#allocation3 + $0x9d0] sm:$0xff]
      %v5495 = vld [vmem:[#allocation3 + $0x9d8] sm:$0xff]
      %v5496 = vld [vmem:[#allocation3 + $0x9e0] sm:$0xff]
      %v5497 = vld [vmem:[#allocation3 + $0x9e8] sm:$0xff]
      %v5498 = vld [vmem:[#allocation3 + $0x9f0] sm:$0xff]
      %v5499 = vld [vmem:[#allocation3 + $0x9f8] sm:$0xff]
      %v5500 = vld [vmem:[#allocation3 + $0xa00] sm:$0xff]
      %v5501 = vld [vmem:[#allocation3 + $0xa08] sm:$0xff]
      %v5502 = vld [vmem:[#allocation3 + $0xa10] sm:$0xff]
      %v5503 = vld [vmem:[#allocation3 + $0xa18] sm:$0xff]
      %v5504 = vld [vmem:[#allocation3 + $0xa20] sm:$0xff]
      %v5505 = vld [vmem:[#allocation3 + $0xa28] sm:$0xff]
      %v5506 = vld [vmem:[#allocation3 + $0xa30] sm:$0xff]
      %v5507 = vld [vmem:[#allocation3 + $0xa38] sm:$0xff]
      %v5508 = vld [vmem:[#allocation3 + $0xa40] sm:$0xff]
      %v5509 = vld [vmem:[#allocation3 + $0xa48] sm:$0xff]
      %v5510 = vld [vmem:[#allocation3 + $0xa50] sm:$0xff]
      %v5511 = vld [vmem:[#allocation3 + $0xa58] sm:$0xff]
      %v5512 = vld [vmem:[#allocation3 + $0xa60] sm:$0xff]
      %v5513 = vld [vmem:[#allocation3 + $0xa68] sm:$0xff]
      %v5514 = vld [vmem:[#allocation3 + $0xa70] sm:$0xff]
      %v5515 = vld [vmem:[#allocation3 + $0xa78] sm:$0xff]
      %v5516 = vld [vmem:[#allocation3 + $0xa80] sm:$0xff]
      %v5517 = vld [vmem:[#allocation3 + $0xa88] sm:$0xff]
      %v5518 = vld [vmem:[#allocation3 + $0xa90] sm:$0xff]
      %v5519 = vld [vmem:[#allocation3 + $0xa98] sm:$0xff]
      %v5520 = vld [vmem:[#allocation3 + $0xaa0] sm:$0xff]
      %v5521 = vld [vmem:[#allocation3 + $0xaa8] sm:$0xff]
      %v5522 = vld [vmem:[#allocation3 + $0xab0] sm:$0xff]
      %v5523 = vld [vmem:[#allocation3 + $0xab8] sm:$0xff]
      %v5524 = vld [vmem:[#allocation3 + $0xac0] sm:$0xff]
      %v5525 = vld [vmem:[#allocation3 + $0xac8] sm:$0xff]
      %v5526 = vld [vmem:[#allocation3 + $0xad0] sm:$0xff]
      %v5527 = vld [vmem:[#allocation3 + $0xad8] sm:$0xff]
      %v5528 = vld [vmem:[#allocation3 + $0xae0] sm:$0xff]
      %v5529 = vld [vmem:[#allocation3 + $0xae8] sm:$0xff]
      %v5530 = vld [vmem:[#allocation3 + $0xaf0] sm:$0xff]
      %v5531 = vld [vmem:[#allocation3 + $0xaf8] sm:$0xff]
      %v5532 = vld [vmem:[#allocation3 + $0xb00] sm:$0xff]
      %v5533 = vld [vmem:[#allocation3 + $0xb08] sm:$0xff]
      %v5534 = vld [vmem:[#allocation3 + $0xb10] sm:$0xff]
      %v5535 = vld [vmem:[#allocation3 + $0xb18] sm:$0xff]
      %v5536 = vld [vmem:[#allocation3 + $0xb20] sm:$0xff]
      %v5537 = vld [vmem:[#allocation3 + $0xb28] sm:$0xff]
      %v5538 = vld [vmem:[#allocation3 + $0xb30] sm:$0xff]
      %v5539 = vld [vmem:[#allocation3 + $0xb38] sm:$0xff]
      %v5540 = vld [vmem:[#allocation3 + $0xb40] sm:$0xff]
      %v5541 = vld [vmem:[#allocation3 + $0xb48] sm:$0xff]
      %v5542 = vld [vmem:[#allocation3 + $0xb50] sm:$0xff]
      %v5543 = vld [vmem:[#allocation3 + $0xb58] sm:$0xff]
      %v5544 = vld [vmem:[#allocation3 + $0xb60] sm:$0xff]
      %v5545 = vld [vmem:[#allocation3 + $0xb68] sm:$0xff]
      %v5546 = vld [vmem:[#allocation3 + $0xb70] sm:$0xff]
      %v5547 = vld [vmem:[#allocation3 + $0xb78] sm:$0xff]
      %v5548 = vld [vmem:[#allocation3 + $0xb80] sm:$0xff]
      %v5549 = vld [vmem:[#allocation3 + $0xb88] sm:$0xff]
      %v5550 = vld [vmem:[#allocation3 + $0xb90] sm:$0xff]
      %v5551 = vld [vmem:[#allocation3 + $0xb98] sm:$0xff]
      %v5552 = vld [vmem:[#allocation3 + $0xba0] sm:$0xff]
      %v5553 = vld [vmem:[#allocation3 + $0xba8] sm:$0xff]
      %v5554 = vld [vmem:[#allocation3 + $0xbb0] sm:$0xff]
      %v5555 = vld [vmem:[#allocation3 + $0xbb8] sm:$0xff]
      %v5556 = vld [vmem:[#allocation3 + $0xbc0] sm:$0xff]
      %v5557 = vld [vmem:[#allocation3 + $0xbc8] sm:$0xff]
      %v5558 = vld [vmem:[#allocation3 + $0xbd0] sm:$0xff]
      %v5559 = vld [vmem:[#allocation3 + $0xbd8] sm:$0xff]
      %v5560 = vld [vmem:[#allocation3 + $0xbe0] sm:$0xff]
      %v5561 = vld [vmem:[#allocation3 + $0xbe8] sm:$0xff]
      %v5562 = vld [vmem:[#allocation3 + $0xbf0] sm:$0xff]
      %v5563 = vld [vmem:[#allocation3 + $0xbf8] sm:$0xff]
      %v5564 = vld [vmem:[#allocation3 + $0xc00] sm:$0xff]
      %v5565 = vld [vmem:[#allocation3 + $0xc08] sm:$0xff]
      %v5566 = vld [vmem:[#allocation3 + $0xc10] sm:$0xff]
      %v5567 = vld [vmem:[#allocation3 + $0xc18] sm:$0xff]
      %v5568 = vld [vmem:[#allocation3 + $0xc20] sm:$0xff]
      %v5569 = vld [vmem:[#allocation3 + $0xc28] sm:$0xff]
      %v5570 = vld [vmem:[#allocation3 + $0xc30] sm:$0xff]
      %v5571 = vld [vmem:[#allocation3 + $0xc38] sm:$0xff]
      %v5572 = vld [vmem:[#allocation3 + $0xc40] sm:$0xff]
      %v5573 = vld [vmem:[#allocation3 + $0xc48] sm:$0xff]
      %v5574 = vld [vmem:[#allocation3 + $0xc50] sm:$0xff]
      %v5575 = vld [vmem:[#allocation3 + $0xc58] sm:$0xff]
      %v5576 = vld [vmem:[#allocation3 + $0xc60] sm:$0xff]
      %v5577 = vld [vmem:[#allocation3 + $0xc68] sm:$0xff]
      %v5578 = vld [vmem:[#allocation3 + $0xc70] sm:$0xff]
      %v5579 = vld [vmem:[#allocation3 + $0xc78] sm:$0xff]
      %v5580 = vld [vmem:[#allocation3 + $0xc80] sm:$0xff]
      %v5581 = vld [vmem:[#allocation3 + $0xc88] sm:$0xff]
      %v5582 = vld [vmem:[#allocation3 + $0xc90] sm:$0xff]
      %v5583 = vld [vmem:[#allocation3 + $0xc98] sm:$0xff]
      %v5584 = vld [vmem:[#allocation3 + $0xca0] sm:$0xff]
      %v5585 = vld [vmem:[#allocation3 + $0xca8] sm:$0xff]
      %v5586 = vld [vmem:[#allocation3 + $0xcb0] sm:$0xff]
      %v5587 = vld [vmem:[#allocation3 + $0xcb8] sm:$0xff]
      %v5588 = vld [vmem:[#allocation3 + $0xcc0] sm:$0xff]
      %v5589 = vld [vmem:[#allocation3 + $0xcc8] sm:$0xff]
      %v5590 = vld [vmem:[#allocation3 + $0xcd0] sm:$0xff]
      %v5591 = vld [vmem:[#allocation3 + $0xcd8] sm:$0xff]
      %v5592 = vld [vmem:[#allocation3 + $0xce0] sm:$0xff]
      %v5593 = vld [vmem:[#allocation3 + $0xce8] sm:$0xff]
      %v5594 = vld [vmem:[#allocation3 + $0xcf0] sm:$0xff]
      %v5595 = vld [vmem:[#allocation3 + $0xcf8] sm:$0xff]
      %v5596 = vld [vmem:[#allocation3 + $0xd00] sm:$0xff]
      %v5597 = vld [vmem:[#allocation3 + $0xd08] sm:$0xff]
      %v5598 = vld [vmem:[#allocation3 + $0xd10] sm:$0xff]
      %v5599 = vld [vmem:[#allocation3 + $0xd18] sm:$0xff]
      %v5600 = vld [vmem:[#allocation3 + $0xd20] sm:$0xff]
      %v5601 = vld [vmem:[#allocation3 + $0xd28] sm:$0xff]
      %v5602 = vld [vmem:[#allocation3 + $0xd30] sm:$0xff]
      %v5603 = vld [vmem:[#allocation3 + $0xd38] sm:$0xff]
      %v5604 = vld [vmem:[#allocation3 + $0xd40] sm:$0xff]
      %v5605 = vld [vmem:[#allocation3 + $0xd48] sm:$0xff]
      %v5606 = vld [vmem:[#allocation3 + $0xd50] sm:$0xff]
      %v5607 = vld [vmem:[#allocation3 + $0xd58] sm:$0xff]
      %v5608 = vld [vmem:[#allocation3 + $0xd60] sm:$0xff]
      %v5609 = vld [vmem:[#allocation3 + $0xd68] sm:$0xff]
      %v5610 = vld [vmem:[#allocation3 + $0xd70] sm:$0xff]
      %v5611 = vld [vmem:[#allocation3 + $0xd78] sm:$0xff]
      %v5612 = vld [vmem:[#allocation3 + $0xd80] sm:$0xff]
      %v5613 = vld [vmem:[#allocation3 + $0xd88] sm:$0xff]
      %v5614 = vld [vmem:[#allocation3 + $0xd90] sm:$0xff]
      %v5615 = vld [vmem:[#allocation3 + $0xd98] sm:$0xff]
      %v5616 = vld [vmem:[#allocation3 + $0xda0] sm:$0xff]
      %v5617 = vld [vmem:[#allocation3 + $0xda8] sm:$0xff]
      %v5618 = vld [vmem:[#allocation3 + $0xdb0] sm:$0xff]
      %v5619 = vld [vmem:[#allocation3 + $0xdb8] sm:$0xff]
      %v5620 = vld [vmem:[#allocation3 + $0xdc0] sm:$0xff]
      %v5621 = vld [vmem:[#allocation3 + $0xdc8] sm:$0xff]
      %v5622 = vld [vmem:[#allocation3 + $0xdd0] sm:$0xff]
      %v5623 = vld [vmem:[#allocation3 + $0xdd8] sm:$0xff]
      %v5624 = vld [vmem:[#allocation3 + $0xde0] sm:$0xff]
      %v5625 = vld [vmem:[#allocation3 + $0xde8] sm:$0xff]
      %v5626 = vld [vmem:[#allocation3 + $0xdf0] sm:$0xff]
      %v5627 = vld [vmem:[#allocation3 + $0xdf8] sm:$0xff]
      %v5628 = vld [vmem:[#allocation3 + $0xe00] sm:$0xff]
      %v5629 = vld [vmem:[#allocation3 + $0xe08] sm:$0xff]
      %v5630 = vld [vmem:[#allocation3 + $0xe10] sm:$0xff]
      %v5631 = vld [vmem:[#allocation3 + $0xe18] sm:$0xff]
      %v5632 = vld [vmem:[#allocation3 + $0xe20] sm:$0xff]
      %v5633 = vld [vmem:[#allocation3 + $0xe28] sm:$0xff]
      %v5634 = vld [vmem:[#allocation3 + $0xe30] sm:$0xff]
      %v5635 = vld [vmem:[#allocation3 + $0xe38] sm:$0xff]
      %v5636 = vld [vmem:[#allocation3 + $0xe40] sm:$0xff]
      %v5637 = vld [vmem:[#allocation3 + $0xe48] sm:$0xff]
      %v5638 = vld [vmem:[#allocation3 + $0xe50] sm:$0xff]
      %v5639 = vld [vmem:[#allocation3 + $0xe58] sm:$0xff]
      %v5640 = vld [vmem:[#allocation3 + $0xe60] sm:$0xff]
      %v5641 = vld [vmem:[#allocation3 + $0xe68] sm:$0xff]
      %v5642 = vld [vmem:[#allocation3 + $0xe70] sm:$0xff]
      %v5643 = vld [vmem:[#allocation3 + $0xe78] sm:$0xff]
      %v5644 = vld [vmem:[#allocation3 + $0xe80] sm:$0xff]
      %v5645 = vld [vmem:[#allocation3 + $0xe88] sm:$0xff]
      %v5646 = vld [vmem:[#allocation3 + $0xe90] sm:$0xff]
      %v5647 = vld [vmem:[#allocation3 + $0xe98] sm:$0xff]
      %v5648 = vld [vmem:[#allocation3 + $0xea0] sm:$0xff]
      %v5649 = vld [vmem:[#allocation3 + $0xea8] sm:$0xff]
      %v5650 = vld [vmem:[#allocation3 + $0xeb0] sm:$0xff]
      %v5651 = vld [vmem:[#allocation3 + $0xeb8] sm:$0xff]
      %v5652 = vld [vmem:[#allocation3 + $0xec0] sm:$0xff]
      %v5653 = vld [vmem:[#allocation3 + $0xec8] sm:$0xff]
      %v5654 = vld [vmem:[#allocation3 + $0xed0] sm:$0xff]
      %v5655 = vld [vmem:[#allocation3 + $0xed8] sm:$0xff]
      %v5656 = vld [vmem:[#allocation3 + $0xee0] sm:$0xff]
      %v5657 = vld [vmem:[#allocation3 + $0xee8] sm:$0xff]
      %v5658 = vld [vmem:[#allocation3 + $0xef0] sm:$0xff]
      %v5659 = vld [vmem:[#allocation3 + $0xef8] sm:$0xff]
      %v5660 = vld [vmem:[#allocation3 + $0xf00] sm:$0xff]
      %v5661 = vld [vmem:[#allocation3 + $0xf08] sm:$0xff]
      %v5662 = vld [vmem:[#allocation3 + $0xf10] sm:$0xff]
      %v5663 = vld [vmem:[#allocation3 + $0xf18] sm:$0xff]
      %v5664 = vld [vmem:[#allocation3 + $0xf20] sm:$0xff]
      %v5665 = vld [vmem:[#allocation3 + $0xf28] sm:$0xff]
      %v5666 = vld [vmem:[#allocation3 + $0xf30] sm:$0xff]
      %v5667 = vld [vmem:[#allocation3 + $0xf38] sm:$0xff]
      %v5668 = vld [vmem:[#allocation3 + $0xf40] sm:$0xff]
      %v5669 = vld [vmem:[#allocation3 + $0xf48] sm:$0xff]
      %v5670 = vld [vmem:[#allocation3 + $0xf50] sm:$0xff]
      %v5671 = vld [vmem:[#allocation3 + $0xf58] sm:$0xff]
      %v5672 = vld [vmem:[#allocation3 + $0xf60] sm:$0xff]
      %v5673 = vld [vmem:[#allocation3 + $0xf68] sm:$0xff]
      %v5674 = vld [vmem:[#allocation3 + $0xf70] sm:$0xff]
      %v5675 = vld [vmem:[#allocation3 + $0xf78] sm:$0xff]
      %v5676 = vld [vmem:[#allocation3 + $0xf80] sm:$0xff]
      %v5677 = vld [vmem:[#allocation3 + $0xf88] sm:$0xff]
      %v5678 = vld [vmem:[#allocation3 + $0xf90] sm:$0xff]
      %v5679 = vld [vmem:[#allocation3 + $0xf98] sm:$0xff]
      %v5680 = vld [vmem:[#allocation3 + $0xfa0] sm:$0xff]
      %v5681 = vld [vmem:[#allocation3 + $0xfa8] sm:$0xff]
      %v5682 = vld [vmem:[#allocation3 + $0xfb0] sm:$0xff]
      %v5683 = vld [vmem:[#allocation3 + $0xfb8] sm:$0xff]
      %v5684 = vld [vmem:[#allocation3 + $0xfc0] sm:$0xff]
      %v5685 = vld [vmem:[#allocation3 + $0xfc8] sm:$0xff]
      %v5686 = vld [vmem:[#allocation3 + $0xfd0] sm:$0xff]
      %v5687 = vld [vmem:[#allocation3 + $0xfd8] sm:$0xff]
      %v5688 = vld [vmem:[#allocation3 + $0xfe0] sm:$0xff]
      %v5689 = vld [vmem:[#allocation3 + $0xfe8] sm:$0xff]
      %v5690 = vld [vmem:[#allocation3 + $0xff0] sm:$0xff]
      %v5691 = vld [vmem:[#allocation3 + $0xff8] sm:$0xff]
      %v5692 = vld [vmem:[#allocation3 + $0x1000] sm:$0xff]
      %v5693 = vld [vmem:[#allocation3 + $0x1008] sm:$0xff]
      %v5694 = vld [vmem:[#allocation3 + $0x1010] sm:$0xff]
      %v5695 = vld [vmem:[#allocation3 + $0x1018] sm:$0xff]
      %v5696 = vld [vmem:[#allocation3 + $0x1020] sm:$0xff]
      %v5697 = vld [vmem:[#allocation3 + $0x1028] sm:$0xff]
      %v5698 = vld [vmem:[#allocation3 + $0x1030] sm:$0xff]
      %v5699 = vld [vmem:[#allocation3 + $0x1038] sm:$0xff]
      %v5700 = vld [vmem:[#allocation3 + $0x1040] sm:$0xff]
      %v5701 = vld [vmem:[#allocation3 + $0x1048] sm:$0xff]
      %v5702 = vld [vmem:[#allocation3 + $0x1050] sm:$0xff]
      %v5703 = vld [vmem:[#allocation3 + $0x1058] sm:$0xff]
      %v5704 = vld [vmem:[#allocation3 + $0x1060] sm:$0xff]
      %v5705 = vld [vmem:[#allocation3 + $0x1068] sm:$0xff]
      %v5706 = vld [vmem:[#allocation3 + $0x1070] sm:$0xff]
      %v5707 = vld [vmem:[#allocation3 + $0x1078] sm:$0xff]
      %v5708 = vld [vmem:[#allocation3 + $0x1080] sm:$0xff]
      %v5709 = vld [vmem:[#allocation3 + $0x1088] sm:$0xff]
      %v5710 = vld [vmem:[#allocation3 + $0x1090] sm:$0xff]
      %v5711 = vld [vmem:[#allocation3 + $0x1098] sm:$0xff]
      %v5712 = vld [vmem:[#allocation3 + $0x10a0] sm:$0xff]
      %v5713 = vld [vmem:[#allocation3 + $0x10a8] sm:$0xff]
      %v5714 = vld [vmem:[#allocation3 + $0x10b0] sm:$0xff]
      %v5715 = vld [vmem:[#allocation3 + $0x10b8] sm:$0xff]
      %v5716 = vld [vmem:[#allocation3 + $0x10c0] sm:$0xff]
      %v5717 = vld [vmem:[#allocation3 + $0x10c8] sm:$0xff]
      %v5718 = vld [vmem:[#allocation3 + $0x10d0] sm:$0xff]
      %v5719 = vld [vmem:[#allocation3 + $0x10d8] sm:$0xff]
      %v5720 = vld [vmem:[#allocation3 + $0x10e0] sm:$0xff]
      %v5721 = vld [vmem:[#allocation3 + $0x10e8] sm:$0xff]
      %v5722 = vld [vmem:[#allocation3 + $0x10f0] sm:$0xff]
      %v5723 = vld [vmem:[#allocation3 + $0x10f8] sm:$0xff]
      %v5724 = vld [vmem:[#allocation3 + $0x1100] sm:$0xff]
      %v5725 = vld [vmem:[#allocation3 + $0x1108] sm:$0xff]
      %v5726 = vld [vmem:[#allocation3 + $0x1110] sm:$0xff]
      %v5727 = vld [vmem:[#allocation3 + $0x1118] sm:$0xff]
      %v5728 = vld [vmem:[#allocation3 + $0x1120] sm:$0xff]
      %v5729 = vld [vmem:[#allocation3 + $0x1128] sm:$0xff]
      %v5730 = vld [vmem:[#allocation3 + $0x1130] sm:$0xff]
      %v5731 = vld [vmem:[#allocation3 + $0x1138] sm:$0xff]
      %v5732 = vld [vmem:[#allocation3 + $0x1140] sm:$0xff]
      %v5733 = vld [vmem:[#allocation3 + $0x1148] sm:$0xff]
      %v5734 = vld [vmem:[#allocation3 + $0x1150] sm:$0xff]
      %v5735 = vld [vmem:[#allocation3 + $0x1158] sm:$0xff]
      %v5736 = vld [vmem:[#allocation3 + $0x1160] sm:$0xff]
      %v5737 = vld [vmem:[#allocation3 + $0x1168] sm:$0xff]
      %v5738 = vld [vmem:[#allocation3 + $0x1170] sm:$0xff]
      %v5739 = vld [vmem:[#allocation3 + $0x1178] sm:$0xff]
      %v5740 = vld [vmem:[#allocation3 + $0x1180] sm:$0xff]
      %v5741 = vld [vmem:[#allocation3 + $0x1188] sm:$0xff]
      %v5742 = vld [vmem:[#allocation3 + $0x1190] sm:$0xff]
      %v5743 = vld [vmem:[#allocation3 + $0x1198] sm:$0xff]
      %v5744 = vld [vmem:[#allocation3 + $0x11a0] sm:$0xff]
      %v5745 = vld [vmem:[#allocation3 + $0x11a8] sm:$0xff]
      %v5746 = vld [vmem:[#allocation3 + $0x11b0] sm:$0xff]
      %v5747 = vld [vmem:[#allocation3 + $0x11b8] sm:$0xff]
      %v5748 = vld [vmem:[#allocation3 + $0x11c0] sm:$0xff]
      %v5749 = vld [vmem:[#allocation3 + $0x11c8] sm:$0xff]
      %v5750 = vld [vmem:[#allocation3 + $0x11d0] sm:$0xff]
      %v5751 = vld [vmem:[#allocation3 + $0x11d8] sm:$0xff]
      %v5752 = vld [vmem:[#allocation3 + $0x11e0] sm:$0xff]
      %v5753 = vld [vmem:[#allocation3 + $0x11e8] sm:$0xff]
      %v5754 = vld [vmem:[#allocation3 + $0x11f0] sm:$0xff]
      %v5755 = vld [vmem:[#allocation3 + $0x11f8] sm:$0xff]
      %v5756 = vld [vmem:[#allocation3 + $0x1200] sm:$0xff]
      %v5757 = vld [vmem:[#allocation3 + $0x1208] sm:$0xff]
      %v5758 = vld [vmem:[#allocation3 + $0x1210] sm:$0xff]
      %v5759 = vld [vmem:[#allocation3 + $0x1218] sm:$0xff]
      %v5760 = vld [vmem:[#allocation3 + $0x1220] sm:$0xff]
      %v5761 = vld [vmem:[#allocation3 + $0x1228] sm:$0xff]
      %v5762 = vld [vmem:[#allocation3 + $0x1230] sm:$0xff]
      %v5763 = vld [vmem:[#allocation3 + $0x1238] sm:$0xff]
      %v5764 = vld [vmem:[#allocation3 + $0x1240] sm:$0xff]
      %v5765 = vld [vmem:[#allocation3 + $0x1248] sm:$0xff]
      %v5766 = vld [vmem:[#allocation3 + $0x1250] sm:$0xff]
      %v5767 = vld [vmem:[#allocation3 + $0x1258] sm:$0xff]
      %v5768 = vld [vmem:[#allocation3 + $0x1260] sm:$0xff]
      %v5769 = vld [vmem:[#allocation3 + $0x1268] sm:$0xff]
      %v5770 = vld [vmem:[#allocation3 + $0x1270] sm:$0xff]
      %v5771 = vld [vmem:[#allocation3 + $0x1278] sm:$0xff]
      %v5772 = vld [vmem:[#allocation3 + $0x1280] sm:$0xff]
      %v5773 = vld [vmem:[#allocation3 + $0x1288] sm:$0xff]
      %v5774 = vld [vmem:[#allocation3 + $0x1290] sm:$0xff]
      %v5775 = vld [vmem:[#allocation3 + $0x1298] sm:$0xff]
      %v5776 = vld [vmem:[#allocation3 + $0x12a0] sm:$0xff]
      %v5777 = vld [vmem:[#allocation3 + $0x12a8] sm:$0xff]
      %v5778 = vld [vmem:[#allocation3 + $0x12b0] sm:$0xff]
      %v5779 = vld [vmem:[#allocation3 + $0x12b8] sm:$0xff]
      %v5780 = vld [vmem:[#allocation3 + $0x12c0] sm:$0xff]
      %v5781 = vld [vmem:[#allocation3 + $0x12c8] sm:$0xff]
      %v5782 = vld [vmem:[#allocation3 + $0x12d0] sm:$0xff]
      %v5783 = vld [vmem:[#allocation3 + $0x12d8] sm:$0xff]
      %v5784 = vld [vmem:[#allocation3 + $0x12e0] sm:$0xff]
      %v5785 = vld [vmem:[#allocation3 + $0x12e8] sm:$0xff]
      %v5786 = vld [vmem:[#allocation3 + $0x12f0] sm:$0xff]
      %v5787 = vld [vmem:[#allocation3 + $0x12f8] sm:$0xff]
      %v5788 = vld [vmem:[#allocation3 + $0x1300] sm:$0xff]
      %v5789 = vld [vmem:[#allocation3 + $0x1308] sm:$0xff]
      %v5790 = vld [vmem:[#allocation3 + $0x1310] sm:$0xff]
      %v5791 = vld [vmem:[#allocation3 + $0x1318] sm:$0xff]
      %v5792 = vld [vmem:[#allocation3 + $0x1320] sm:$0xff]
      %v5793 = vld [vmem:[#allocation3 + $0x1328] sm:$0xff]
      %v5794 = vld [vmem:[#allocation3 + $0x1330] sm:$0xff]
      %v5795 = vld [vmem:[#allocation3 + $0x1338] sm:$0xff]
      %v5796 = vld [vmem:[#allocation3 + $0x1340] sm:$0xff]
      %v5797 = vld [vmem:[#allocation3 + $0x1348] sm:$0xff]
      %v5798 = vld [vmem:[#allocation3 + $0x1350] sm:$0xff]
      %v5799 = vld [vmem:[#allocation3 + $0x1358] sm:$0xff]
      %v5800 = vld [vmem:[#allocation3 + $0x1360] sm:$0xff]
      %v5801 = vld [vmem:[#allocation3 + $0x1368] sm:$0xff]
      %v5802 = vld [vmem:[#allocation3 + $0x1370] sm:$0xff]
      %v5803 = vld [vmem:[#allocation3 + $0x1378] sm:$0xff]
      %v5804 = vld [vmem:[#allocation3 + $0x1380] sm:$0xff]
      %v5805 = vld [vmem:[#allocation3 + $0x1388] sm:$0xff]
      %v5806 = vld [vmem:[#allocation3 + $0x1390] sm:$0xff]
      %v5807 = vld [vmem:[#allocation3 + $0x1398] sm:$0xff]
      %v5808 = vld [vmem:[#allocation3 + $0x13a0] sm:$0xff]
      %v5809 = vld [vmem:[#allocation3 + $0x13a8] sm:$0xff]
      %v5810 = vld [vmem:[#allocation3 + $0x13b0] sm:$0xff]
      %v5811 = vld [vmem:[#allocation3 + $0x13b8] sm:$0xff]
      %v5812 = vld [vmem:[#allocation3 + $0x13c0] sm:$0xff]
      %v5813 = vld [vmem:[#allocation3 + $0x13c8] sm:$0xff]
      %v5814 = vld [vmem:[#allocation3 + $0x13d0] sm:$0xff]
      %v5815 = vld [vmem:[#allocation3 + $0x13d8] sm:$0xff]
      %v5816 = vld [vmem:[#allocation3 + $0x13e0] sm:$0xff]
      %v5817 = vld [vmem:[#allocation3 + $0x13e8] sm:$0xff]
      %v5818 = vld [vmem:[#allocation3 + $0x13f0] sm:$0xff]
      %v5819 = vld [vmem:[#allocation3 + $0x13f8] sm:$0xff]
      %v5820 = vld [vmem:[#allocation3 + $0x1400] sm:$0xff]
      %v5821 = vld [vmem:[#allocation3 + $0x1408] sm:$0xff]
      %v5822 = vld [vmem:[#allocation3 + $0x1410] sm:$0xff]
      %v5823 = vld [vmem:[#allocation3 + $0x1418] sm:$0xff]
      %v5824 = vld [vmem:[#allocation3 + $0x1420] sm:$0xff]
      %v5825 = vld [vmem:[#allocation3 + $0x1428] sm:$0xff]
      %v5826 = vld [vmem:[#allocation3 + $0x1430] sm:$0xff]
      %v5827 = vld [vmem:[#allocation3 + $0x1438] sm:$0xff]
      %v5828 = vld [vmem:[#allocation3 + $0x1440] sm:$0xff]
      %v5829 = vld [vmem:[#allocation3 + $0x1448] sm:$0xff]
      %v5830 = vld [vmem:[#allocation3 + $0x1450] sm:$0xff]
      %v5831 = vld [vmem:[#allocation3 + $0x1458] sm:$0xff]
      %v5832 = vld [vmem:[#allocation3 + $0x1460] sm:$0xff]
      %v5833 = vld [vmem:[#allocation3 + $0x1468] sm:$0xff]
      %v5834 = vld [vmem:[#allocation3 + $0x1470] sm:$0xff]
      %v5835 = vld [vmem:[#allocation3 + $0x1478] sm:$0xff]
      %v5836 = vld [vmem:[#allocation3 + $0x1480] sm:$0xff]
      %v5837 = vld [vmem:[#allocation3 + $0x1488] sm:$0xff]
      %v5838 = vld [vmem:[#allocation3 + $0x1490] sm:$0xff]
      %v5839 = vld [vmem:[#allocation3 + $0x1498] sm:$0xff]
      %v5840 = vld [vmem:[#allocation3 + $0x14a0] sm:$0xff]
      %v5841 = vld [vmem:[#allocation3 + $0x14a8] sm:$0xff]
      %v5842 = vld [vmem:[#allocation3 + $0x14b0] sm:$0xff]
      %v5843 = vld [vmem:[#allocation3 + $0x14b8] sm:$0xff]
      %v5844 = vld [vmem:[#allocation3 + $0x14c0] sm:$0xff]
      %v5845 = vld [vmem:[#allocation3 + $0x14c8] sm:$0xff]
      %v5846 = vld [vmem:[#allocation3 + $0x14d0] sm:$0xff]
      %v5847 = vld [vmem:[#allocation3 + $0x14d8] sm:$0xff]
      %v5848 = vld [vmem:[#allocation3 + $0x14e0] sm:$0xff]
      %v5849 = vld [vmem:[#allocation3 + $0x14e8] sm:$0xff]
      %v5850 = vld [vmem:[#allocation3 + $0x14f0] sm:$0xff]
      %v5851 = vld [vmem:[#allocation3 + $0x14f8] sm:$0xff]
      %v5852 = vld [vmem:[#allocation3 + $0x1500] sm:$0xff]
      %v5853 = vld [vmem:[#allocation3 + $0x1508] sm:$0xff]
      %v5854 = vld [vmem:[#allocation3 + $0x1510] sm:$0xff]
      %v5855 = vld [vmem:[#allocation3 + $0x1518] sm:$0xff]
      %v5856 = vld [vmem:[#allocation3 + $0x1520] sm:$0xff]
      %v5857 = vld [vmem:[#allocation3 + $0x1528] sm:$0xff]
      %v5858 = vld [vmem:[#allocation3 + $0x1530] sm:$0xff]
      %v5859 = vld [vmem:[#allocation3 + $0x1538] sm:$0xff]
      %v5860 = vld [vmem:[#allocation3 + $0x1540] sm:$0xff]
      %v5861 = vld [vmem:[#allocation3 + $0x1548] sm:$0xff]
      %v5862 = vld [vmem:[#allocation3 + $0x1550] sm:$0xff]
      %v5863 = vld [vmem:[#allocation3 + $0x1558] sm:$0xff]
      %v5864 = vld [vmem:[#allocation3 + $0x1560] sm:$0xff]
      %v5865 = vld [vmem:[#allocation3 + $0x1568] sm:$0xff]
      %v5866 = vld [vmem:[#allocation3 + $0x1570] sm:$0xff]
      %v5867 = vld [vmem:[#allocation3 + $0x1578] sm:$0xff]
      %v5868 = vld [vmem:[#allocation3 + $0x1580] sm:$0xff]
      %v5869 = vld [vmem:[#allocation3 + $0x1588] sm:$0xff]
      %v5870 = vld [vmem:[#allocation3 + $0x1590] sm:$0xff]
      %v5871 = vld [vmem:[#allocation3 + $0x1598] sm:$0xff]
      %v5872 = vld [vmem:[#allocation3 + $0x15a0] sm:$0xff]
      %v5873 = vld [vmem:[#allocation3 + $0x15a8] sm:$0xff]
      %v5874 = vld [vmem:[#allocation3 + $0x15b0] sm:$0xff]
      %v5875 = vld [vmem:[#allocation3 + $0x15b8] sm:$0xff]
      %v5876 = vld [vmem:[#allocation3 + $0x15c0] sm:$0xff]
      %v5877 = vld [vmem:[#allocation3 + $0x15c8] sm:$0xff]
      %v5878 = vld [vmem:[#allocation3 + $0x15d0] sm:$0xff]
      %v5879 = vld [vmem:[#allocation3 + $0x15d8] sm:$0xff]
      %v5880 = vld [vmem:[#allocation3 + $0x15e0] sm:$0xff]
      %v5881 = vld [vmem:[#allocation3 + $0x15e8] sm:$0xff]
      %v5882 = vld [vmem:[#allocation3 + $0x15f0] sm:$0xff]
      %v5883 = vld [vmem:[#allocation3 + $0x15f8] sm:$0xff]
      %v5884 = vld [vmem:[#allocation3 + $0x1600] sm:$0xff]
      %v5885 = vld [vmem:[#allocation3 + $0x1608] sm:$0xff]
      %v5886 = vld [vmem:[#allocation3 + $0x1610] sm:$0xff]
      %v5887 = vld [vmem:[#allocation3 + $0x1618] sm:$0xff]
      %v5888 = vld [vmem:[#allocation3 + $0x1620] sm:$0xff]
      %v5889 = vld [vmem:[#allocation3 + $0x1628] sm:$0xff]
      %v5890 = vld [vmem:[#allocation3 + $0x1630] sm:$0xff]
      %v5891 = vld [vmem:[#allocation3 + $0x1638] sm:$0xff]
      %v5892 = vld [vmem:[#allocation3 + $0x1640] sm:$0xff]
      %v5893 = vld [vmem:[#allocation3 + $0x1648] sm:$0xff]
      %v5894 = vld [vmem:[#allocation3 + $0x1650] sm:$0xff]
      %v5895 = vld [vmem:[#allocation3 + $0x1658] sm:$0xff]
      %v5896 = vld [vmem:[#allocation3 + $0x1660] sm:$0xff]
      %v5897 = vld [vmem:[#allocation3 + $0x1668] sm:$0xff]
      %v5898 = vld [vmem:[#allocation3 + $0x1670] sm:$0xff]
      %v5899 = vld [vmem:[#allocation3 + $0x1678] sm:$0xff]
      %v5900 = vld [vmem:[#allocation3 + $0x1680] sm:$0xff]
      %v5901 = vld [vmem:[#allocation3 + $0x1688] sm:$0xff]
      %v5902 = vld [vmem:[#allocation3 + $0x1690] sm:$0xff]
      %v5903 = vld [vmem:[#allocation3 + $0x1698] sm:$0xff]
      %v5904 = vld [vmem:[#allocation3 + $0x16a0] sm:$0xff]
      %v5905 = vld [vmem:[#allocation3 + $0x16a8] sm:$0xff]
      %v5906 = vld [vmem:[#allocation3 + $0x16b0] sm:$0xff]
      %v5907 = vld [vmem:[#allocation3 + $0x16b8] sm:$0xff]
      %v5908 = vld [vmem:[#allocation3 + $0x16c0] sm:$0xff]
      %v5909 = vld [vmem:[#allocation3 + $0x16c8] sm:$0xff]
      %v5910 = vld [vmem:[#allocation3 + $0x16d0] sm:$0xff]
      %v5911 = vld [vmem:[#allocation3 + $0x16d8] sm:$0xff]
      %v5912 = vld [vmem:[#allocation3 + $0x16e0] sm:$0xff]
      %v5913 = vld [vmem:[#allocation3 + $0x16e8] sm:$0xff]
      %v5914 = vld [vmem:[#allocation3 + $0x16f0] sm:$0xff]
      %v5915 = vld [vmem:[#allocation3 + $0x16f8] sm:$0xff]
      %v5916 = vld [vmem:[#allocation3 + $0x1700] sm:$0xff]
      %v5917 = vld [vmem:[#allocation3 + $0x1708] sm:$0xff]
      %v5918 = vld [vmem:[#allocation3 + $0x1710] sm:$0xff]
      %v5919 = vld [vmem:[#allocation3 + $0x1718] sm:$0xff]
      %v5920 = vld [vmem:[#allocation3 + $0x1720] sm:$0xff]
      %v5921 = vld [vmem:[#allocation3 + $0x1728] sm:$0xff]
      %v5922 = vld [vmem:[#allocation3 + $0x1730] sm:$0xff]
      %v5923 = vld [vmem:[#allocation3 + $0x1738] sm:$0xff]
      %v5924 = vld [vmem:[#allocation3 + $0x1740] sm:$0xff]
      %v5925 = vld [vmem:[#allocation3 + $0x1748] sm:$0xff]
      %v5926 = vld [vmem:[#allocation3 + $0x1750] sm:$0xff]
      %v5927 = vld [vmem:[#allocation3 + $0x1758] sm:$0xff]
      %v5928 = vld [vmem:[#allocation3 + $0x1760] sm:$0xff]
      %v5929 = vld [vmem:[#allocation3 + $0x1768] sm:$0xff]
      %v5930 = vld [vmem:[#allocation3 + $0x1770] sm:$0xff]
      %v5931 = vld [vmem:[#allocation3 + $0x1778] sm:$0xff]
      %v5932 = vld [vmem:[#allocation3 + $0x1780] sm:$0xff]
      %v5933 = vld [vmem:[#allocation3 + $0x1788] sm:$0xff]
      %v5934 = vld [vmem:[#allocation3 + $0x1790] sm:$0xff]
      %v5935 = vld [vmem:[#allocation3 + $0x1798] sm:$0xff]
      %v5936 = vld [vmem:[#allocation3 + $0x17a0] sm:$0xff]
      %v5937 = vld [vmem:[#allocation3 + $0x17a8] sm:$0xff]
      %v5938 = vld [vmem:[#allocation3 + $0x17b0] sm:$0xff]
      %v5939 = vld [vmem:[#allocation3 + $0x17b8] sm:$0xff]
      %v5940 = vld [vmem:[#allocation3 + $0x17c0] sm:$0xff]
      %v5941 = vld [vmem:[#allocation3 + $0x17c8] sm:$0xff]
      %v5942 = vld [vmem:[#allocation3 + $0x17d0] sm:$0xff]
      %v5943 = vld [vmem:[#allocation3 + $0x17d8] sm:$0xff]
      %v5944 = vld [vmem:[#allocation3 + $0x17e0] sm:$0xff]
      %v5945 = vld [vmem:[#allocation3 + $0x17e8] sm:$0xff]
      %v5946 = vld [vmem:[#allocation3 + $0x17f0] sm:$0xff]
      %v5947 = vld [vmem:[#allocation3 + $0x17f8] sm:$0xff]
      %v5948 = vld [vmem:[#allocation3 + $0x1800] sm:$0xff]
      %v5949 = vld [vmem:[#allocation3 + $0x1808] sm:$0xff]
      %v5950 = vld [vmem:[#allocation3 + $0x1810] sm:$0xff]
      %v5951 = vld [vmem:[#allocation3 + $0x1818] sm:$0xff]
      %v5952 = vld [vmem:[#allocation3 + $0x1820] sm:$0xff]
      %v5953 = vld [vmem:[#allocation3 + $0x1828] sm:$0xff]
      %v5954 = vld [vmem:[#allocation3 + $0x1830] sm:$0xff]
      %v5955 = vld [vmem:[#allocation3 + $0x1838] sm:$0xff]
      %v5956 = vld [vmem:[#allocation3 + $0x1840] sm:$0xff]
      %v5957 = vld [vmem:[#allocation3 + $0x1848] sm:$0xff]
      %v5958 = vld [vmem:[#allocation3 + $0x1850] sm:$0xff]
      %v5959 = vld [vmem:[#allocation3 + $0x1858] sm:$0xff]
      %v5960 = vld [vmem:[#allocation3 + $0x1860] sm:$0xff]
      %v5961 = vld [vmem:[#allocation3 + $0x1868] sm:$0xff]
      %v5962 = vld [vmem:[#allocation3 + $0x1870] sm:$0xff]
      %v5963 = vld [vmem:[#allocation3 + $0x1878] sm:$0xff]
      %v5964 = vld [vmem:[#allocation3 + $0x1880] sm:$0xff]
      %v5965 = vld [vmem:[#allocation3 + $0x1888] sm:$0xff]
      %v5966 = vld [vmem:[#allocation3 + $0x1890] sm:$0xff]
      %v5967 = vld [vmem:[#allocation3 + $0x1898] sm:$0xff]
      %v5968 = vld [vmem:[#allocation3 + $0x18a0] sm:$0xff]
      %v5969 = vld [vmem:[#allocation3 + $0x18a8] sm:$0xff]
      %v5970 = vld [vmem:[#allocation3 + $0x18b0] sm:$0xff]
      %v5971 = vld [vmem:[#allocation3 + $0x18b8] sm:$0xff]
      %v5972 = vld [vmem:[#allocation3 + $0x18c0] sm:$0xff]
      %v5973 = vld [vmem:[#allocation3 + $0x18c8] sm:$0xff]
      %v5974 = vld [vmem:[#allocation3 + $0x18d0] sm:$0xff]
      %v5975 = vld [vmem:[#allocation3 + $0x18d8] sm:$0xff]
      %v5976 = vld [vmem:[#allocation3 + $0x18e0] sm:$0xff]
      %v5977 = vld [vmem:[#allocation3 + $0x18e8] sm:$0xff]
      %v5978 = vld [vmem:[#allocation3 + $0x18f0] sm:$0xff]
      %v5979 = vld [vmem:[#allocation3 + $0x18f8] sm:$0xff]
      %v5980 = vld [vmem:[#allocation3 + $0x1900] sm:$0xff]
      %v5981 = vld [vmem:[#allocation3 + $0x1908] sm:$0xff]
      %v5982 = vld [vmem:[#allocation3 + $0x1910] sm:$0xff]
      %v5983 = vld [vmem:[#allocation3 + $0x1918] sm:$0xff]
      %v5984 = vld [vmem:[#allocation3 + $0x1920] sm:$0xff]
      %v5985 = vld [vmem:[#allocation3 + $0x1928] sm:$0xff]
      %v5986 = vld [vmem:[#allocation3 + $0x1930] sm:$0xff]
      %v5987 = vld [vmem:[#allocation3 + $0x1938] sm:$0xff]
      %v5988 = vld [vmem:[#allocation3 + $0x1940] sm:$0xff]
      %v5989 = vld [vmem:[#allocation3 + $0x1948] sm:$0xff]
      %v5990 = vld [vmem:[#allocation3 + $0x1950] sm:$0xff]
      %v5991 = vld [vmem:[#allocation3 + $0x1958] sm:$0xff]
      %v5992 = vld [vmem:[#allocation3 + $0x1960] sm:$0xff]
      %v5993 = vld [vmem:[#allocation3 + $0x1968] sm:$0xff]
      %v5994 = vld [vmem:[#allocation3 + $0x1970] sm:$0xff]
      %v5995 = vld [vmem:[#allocation3 + $0x1978] sm:$0xff]
      %v5996 = vld [vmem:[#allocation3 + $0x1980] sm:$0xff]
      %v5997 = vld [vmem:[#allocation3 + $0x1988] sm:$0xff]
      %v5998 = vld [vmem:[#allocation3 + $0x1990] sm:$0xff]
      %v5999 = vld [vmem:[#allocation3 + $0x1998] sm:$0xff]
      %v6000 = vld [vmem:[#allocation3 + $0x19a0] sm:$0xff]
      %v6001 = vld [vmem:[#allocation3 + $0x19a8] sm:$0xff]
      %v6002 = vld [vmem:[#allocation3 + $0x19b0] sm:$0xff]
      %v6003 = vld [vmem:[#allocation3 + $0x19b8] sm:$0xff]
      %v6004 = vld [vmem:[#allocation3 + $0x19c0] sm:$0xff]
      %v6005 = vld [vmem:[#allocation3 + $0x19c8] sm:$0xff]
      %v6006 = vld [vmem:[#allocation3 + $0x19d0] sm:$0xff]
      %v6007 = vld [vmem:[#allocation3 + $0x19d8] sm:$0xff]
      %v6008 = vld [vmem:[#allocation3 + $0x19e0] sm:$0xff]
      %v6009 = vld [vmem:[#allocation3 + $0x19e8] sm:$0xff]
      %v6010 = vld [vmem:[#allocation3 + $0x19f0] sm:$0xff]
      %v6011 = vld [vmem:[#allocation3 + $0x19f8] sm:$0xff]
      %v6012 = vld [vmem:[#allocation3 + $0x1a00] sm:$0xff]
      %v6013 = vld [vmem:[#allocation3 + $0x1a08] sm:$0xff]
      %v6014 = vld [vmem:[#allocation3 + $0x1a10] sm:$0xff]
      %v6015 = vld [vmem:[#allocation3 + $0x1a18] sm:$0xff]
      %v6016 = vld [vmem:[#allocation3 + $0x1a20] sm:$0xff]
      %v6017 = vld [vmem:[#allocation3 + $0x1a28] sm:$0xff]
      %v6018 = vld [vmem:[#allocation3 + $0x1a30] sm:$0xff]
      %v6019 = vld [vmem:[#allocation3 + $0x1a38] sm:$0xff]
      %v6020 = vld [vmem:[#allocation3 + $0x1a40] sm:$0xff]
      %v6021 = vld [vmem:[#allocation3 + $0x1a48] sm:$0xff]
      %v6022 = vld [vmem:[#allocation3 + $0x1a50] sm:$0xff]
      %v6023 = vld [vmem:[#allocation3 + $0x1a58] sm:$0xff]
      %v6024 = vld [vmem:[#allocation3 + $0x1a60] sm:$0xff]
      %v6025 = vld [vmem:[#allocation3 + $0x1a68] sm:$0xff]
      %v6026 = vld [vmem:[#allocation3 + $0x1a70] sm:$0xff]
      %v6027 = vld [vmem:[#allocation3 + $0x1a78] sm:$0xff]
      %v6028 = vld [vmem:[#allocation3 + $0x1a80] sm:$0xff]
      %v6029 = vld [vmem:[#allocation3 + $0x1a88] sm:$0xff]
      %v6030 = vld [vmem:[#allocation3 + $0x1a90] sm:$0xff]
      %v6031 = vld [vmem:[#allocation3 + $0x1a98] sm:$0xff]
      %v6032 = vld [vmem:[#allocation3 + $0x1aa0] sm:$0xff]
      %v6033 = vld [vmem:[#allocation3 + $0x1aa8] sm:$0xff]
      %v6034 = vld [vmem:[#allocation3 + $0x1ab0] sm:$0xff]
      %v6035 = vld [vmem:[#allocation3 + $0x1ab8] sm:$0xff]
      %v6036 = vld [vmem:[#allocation3 + $0x1ac0] sm:$0xff]
      %v6037 = vld [vmem:[#allocation3 + $0x1ac8] sm:$0xff]
      %v6038 = vld [vmem:[#allocation3 + $0x1ad0] sm:$0xff]
      %v6039 = vld [vmem:[#allocation3 + $0x1ad8] sm:$0xff]
      %v6040 = vld [vmem:[#allocation3 + $0x1ae0] sm:$0xff]
      %v6041 = vld [vmem:[#allocation3 + $0x1ae8] sm:$0xff]
      %v6042 = vld [vmem:[#allocation3 + $0x1af0] sm:$0xff]
      %v6043 = vld [vmem:[#allocation3 + $0x1af8] sm:$0xff]
      %v6044 = vld [vmem:[#allocation3 + $0x1b00] sm:$0xff]
      %v6045 = vld [vmem:[#allocation3 + $0x1b08] sm:$0xff]
      %v6046 = vld [vmem:[#allocation3 + $0x1b10] sm:$0xff]
      %v6047 = vld [vmem:[#allocation3 + $0x1b18] sm:$0xff]
      %v6048 = vld [vmem:[#allocation3 + $0x1b20] sm:$0xff]
      %v6049 = vld [vmem:[#allocation3 + $0x1b28] sm:$0xff]
      %v6050 = vld [vmem:[#allocation3 + $0x1b30] sm:$0xff]
      %v6051 = vld [vmem:[#allocation3 + $0x1b38] sm:$0xff]
      %v6052 = vld [vmem:[#allocation3 + $0x1b40] sm:$0xff]
      %v6053 = vld [vmem:[#allocation3 + $0x1b48] sm:$0xff]
      %v6054 = vld [vmem:[#allocation3 + $0x1b50] sm:$0xff]
      %v6055 = vld [vmem:[#allocation3 + $0x1b58] sm:$0xff]
      %v6056 = vld [vmem:[#allocation3 + $0x1b60] sm:$0xff]
      %v6057 = vld [vmem:[#allocation3 + $0x1b68] sm:$0xff]
      %v6058 = vld [vmem:[#allocation3 + $0x1b70] sm:$0xff]
      %v6059 = vld [vmem:[#allocation3 + $0x1b78] sm:$0xff]
      %v6060 = vld [vmem:[#allocation3 + $0x1b80] sm:$0xff]
      %v6061 = vld [vmem:[#allocation3 + $0x1b88] sm:$0xff]
      %v6062 = vld [vmem:[#allocation3 + $0x1b90] sm:$0xff]
      %v6063 = vld [vmem:[#allocation3 + $0x1b98] sm:$0xff]
      %v6064 = vld [vmem:[#allocation3 + $0x1ba0] sm:$0xff]
      %v6065 = vld [vmem:[#allocation3 + $0x1ba8] sm:$0xff]
      %v6066 = vld [vmem:[#allocation3 + $0x1bb0] sm:$0xff]
      %v6067 = vld [vmem:[#allocation3 + $0x1bb8] sm:$0xff]
      %v6068 = vld [vmem:[#allocation3 + $0x1bc0] sm:$0xff]
      %v6069 = vld [vmem:[#allocation3 + $0x1bc8] sm:$0xff]
      %v6070 = vld [vmem:[#allocation3 + $0x1bd0] sm:$0xff]
      %v6071 = vld [vmem:[#allocation3 + $0x1bd8] sm:$0xff]
      %v6072 = vld [vmem:[#allocation3 + $0x1be0] sm:$0xff]
      %v6073 = vld [vmem:[#allocation3 + $0x1be8] sm:$0xff]
      %v6074 = vld [vmem:[#allocation3 + $0x1bf0] sm:$0xff]
      %v6075 = vld [vmem:[#allocation3 + $0x1bf8] sm:$0xff]
      %v6076 = vld [vmem:[#allocation3 + $0x1c00] sm:$0xff]
      %v6077 = vld [vmem:[#allocation3 + $0x1c08] sm:$0xff]
      %v6078 = vld [vmem:[#allocation3 + $0x1c10] sm:$0xff]
      %v6079 = vld [vmem:[#allocation3 + $0x1c18] sm:$0xff]
      %v6080 = vld [vmem:[%s4] sm:$0xff]
      %6082 = vset.pattern.permute.xlu0 0
      %6083 = vperm.xlu0 %6082, %v6080
      %v6084 = vpop.permute.xlu0 %6083
      %vm6086 = vcmask 588800
      %v6088 = vsel %vm6086, %v5179, 0
      %6090 = vmatprep.subr.mxu0 %v5721
      %6091 = vmatpush1.msra.mxu0 %v5720
      %6092 = vmatprep.subr.mxu0 %v5685
      %6093 = vmatpush1.msra.mxu0 %v5684
      %6094 = vmatprep.subr.mxu0 %v5649
      %6095 = vmatpush1.msra.mxu0 %v5648
      %6096 = vmatprep.subr.mxu0 %v5613
      %6097 = vmatpush1.msra.mxu0 %v5612
      %6098 = vmatprep.subr.mxu0 %v5577
      %6099 = vmatpush1.msra.mxu0 %v5576
      %6100 = vmatprep.subr.mxu0 %v5541
      %6101 = vmatpush1.msra.mxu0 %v5540
      %6102 = vmatprep.subr.mxu0 %v5505
      %6103 = vmatpush1.msra.mxu0 %v5504
      %6104 = vmatprep.subr.mxu0 %v5469
      %6105 = vmatpush1.msra.mxu0 %v5468
      %6106 = vmatprep.subr.mxu0 %v5433
      %6107 = vmatpush1.msra.mxu0 %v5432
      %6108 = vmatprep.subr.mxu0 %v5397
      %6109 = vmatpush1.msra.mxu0 %v5396
      %6110 = vmatprep.subr.mxu0 %v5361
      %6111 = vmatpush1.msra.mxu0 %v5360
      %6112 = vmatprep.subr.mxu0 %v5325
      %6113 = vmatpush1.msra.mxu0 %v5324
      %6114 = vmatprep.subr.mxu0 %v5289
      %6115 = vmatpush1.msra.mxu0 %v5288
      %6116 = vmatprep.subr.mxu0 %v5253
      %6117 = vmatpush1.msra.mxu0 %v5252
      %6118 = vmatprep.subr.mxu0 %v5217
      %6119 = vmatpush1.msra.mxu0 %v5216
      %6120 = vmatprep.subr.mxu0 %v5181
      %6121 = vmatpush1.msra.mxu0 %v5180
      %6122 = vmatprep.subr.mxu0 0.0
      %6123 = vmatpush2.msra.mxu0 0.0
      %6124 = vmatprep.subr.mxu0 0.0
      %6125 = vmatpush2.msra.mxu0 0.0
      %6126 = vmatprep.subr.mxu0 0.0
      %6127 = vmatpush2.msra.mxu0 0.0
      %6128 = vmatprep.subr.mxu0 0.0
      %6129 = vmatpush2.msra.mxu0 0.0
      %6130 = vmatprep.subr.mxu0 0.0
      %6131 = vmatpush2.msra.mxu0 0.0
      %6132 = vmatprep.subr.mxu0 0.0
      %6133 = vmatpush2.msra.mxu0 0.0
      %6134 = vmatprep.subr.mxu0 0.0
      %6135 = vmatpush2.msra.mxu0 0.0
      %6136 = vmatprep.subr.mxu0 %v6045
      %6137 = vmatpush2.msra.mxu0 %v6044
      %6138 = vmatprep.subr.mxu0 %v6009
      %6139 = vmatpush2.msra.mxu0 %v6008
      %6140 = vmatprep.subr.mxu0 %v5973
      %6141 = vmatpush2.msra.mxu0 %v5972
      %6142 = vmatprep.subr.mxu0 %v5937
      %6143 = vmatpush2.msra.mxu0 %v5936
      %6144 = vmatprep.subr.mxu0 %v5901
      %6145 = vmatpush2.msra.mxu0 %v5900
      %6146 = vmatprep.subr.mxu0 %v5865
      %6147 = vmatpush2.msra.mxu0 %v5864
      %6148 = vmatprep.subr.mxu0 %v5829
      %6149 = vmatpush2.msra.mxu0 %v5828
      %6150 = vmatprep.subr.mxu0 %v5793
      %6151 = vmatpush2.msra.mxu0 %v5792
      %6152 = vmatprep.subr.mxu0 %v5757
      %6153 = vmatpush2.msra.mxu0 %v5756
      %6154 = vmatprep.mubr.f32.mxu0 %v6088
      %6155 = vmatmul.mubr.f32.gmra.mxu0 %v5178
      %v6156 = vpop.f32.mrf.mxu0
      %v6157 = vadd.f32 %v6084, %v6156
      %v6158 = vpop.f32.mrf.mxu0
      %v6159 = vadd.f32 %v6084, %v6158
      %6160 = vdwg.mxu0
      %6161 = vmatprep.subr.mxu0 %v5723
      %6162 = vmatpush1.msra.mxu0 %v5722
      %6163 = vmatprep.subr.mxu0 %v5687
      %6164 = vmatpush1.msra.mxu0 %v5686
      %6165 = vmatprep.subr.mxu0 %v5651
      %6166 = vmatpush1.msra.mxu0 %v5650
      %6167 = vmatprep.subr.mxu0 %v5615
      %6168 = vmatpush1.msra.mxu0 %v5614
      %6169 = vmatprep.subr.mxu0 %v5579
      %6170 = vmatpush1.msra.mxu0 %v5578
      %6171 = vmatprep.subr.mxu0 %v5543
      %6172 = vmatpush1.msra.mxu0 %v5542
      %6173 = vmatprep.subr.mxu0 %v5507
      %6174 = vmatpush1.msra.mxu0 %v5506
      %6175 = vmatprep.subr.mxu0 %v5471
      %6176 = vmatpush1.msra.mxu0 %v5470
      %6177 = vmatprep.subr.mxu0 %v5435
      %6178 = vmatpush1.msra.mxu0 %v5434
      %6179 = vmatprep.subr.mxu0 %v5399
      %6180 = vmatpush1.msra.mxu0 %v5398
      %6181 = vmatprep.subr.mxu0 %v5363
      %6182 = vmatpush1.msra.mxu0 %v5362
      %6183 = vmatprep.subr.mxu0 %v5327
      %6184 = vmatpush1.msra.mxu0 %v5326
      %6185 = vmatprep.subr.mxu0 %v5291
      %6186 = vmatpush1.msra.mxu0 %v5290
      %6187 = vmatprep.subr.mxu0 %v5255
      %6188 = vmatpush1.msra.mxu0 %v5254
      %6189 = vmatprep.subr.mxu0 %v5219
      %6190 = vmatpush1.msra.mxu0 %v5218
      %6191 = vmatprep.subr.mxu0 %v5183
      %6192 = vmatpush1.msra.mxu0 %v5182
      %6193 = vmatprep.subr.mxu0 0.0
      %6194 = vmatpush2.msra.mxu0 0.0
      %6195 = vmatprep.subr.mxu0 0.0
      %6196 = vmatpush2.msra.mxu0 0.0
      %6197 = vmatprep.subr.mxu0 0.0
      %6198 = vmatpush2.msra.mxu0 0.0
      %6199 = vmatprep.subr.mxu0 0.0
      %6200 = vmatpush2.msra.mxu0 0.0
      %6201 = vmatprep.subr.mxu0 0.0
      %6202 = vmatpush2.msra.mxu0 0.0
      %6203 = vmatprep.subr.mxu0 0.0
      %6204 = vmatpush2.msra.mxu0 0.0
      %6205 = vmatprep.subr.mxu0 0.0
      %6206 = vmatpush2.msra.mxu0 0.0
      %6207 = vmatprep.subr.mxu0 %v6047
      %6208 = vmatpush2.msra.mxu0 %v6046
      %6209 = vmatprep.subr.mxu0 %v6011
      %6210 = vmatpush2.msra.mxu0 %v6010
      %6211 = vmatprep.subr.mxu0 %v5975
      %6212 = vmatpush2.msra.mxu0 %v5974
      %6213 = vmatprep.subr.mxu0 %v5939
      %6214 = vmatpush2.msra.mxu0 %v5938
      %6215 = vmatprep.subr.mxu0 %v5903
      %6216 = vmatpush2.msra.mxu0 %v5902
      %6217 = vmatprep.subr.mxu0 %v5867
      %6218 = vmatpush2.msra.mxu0 %v5866
      %6219 = vmatprep.subr.mxu0 %v5831
      %6220 = vmatpush2.msra.mxu0 %v5830
      %6221 = vmatprep.subr.mxu0 %v5795
      %6222 = vmatpush2.msra.mxu0 %v5794
      %6223 = vmatprep.subr.mxu0 %v5759
      %6224 = vmatpush2.msra.mxu0 %v5758
      %6225 = vmatprep.mubr.f32.mxu0 %v6088
      %6226 = vmatmul.mubr.f32.gmra.mxu0 %v5178
      %v6227 = vpop.f32.mrf.mxu0
      %v6228 = vadd.f32 %v6084, %v6227
      %v6229 = vpop.f32.mrf.mxu0
      %v6230 = vadd.f32 %v6084, %v6229
      %6231 = vdwg.mxu0
      %6232 = vmatprep.subr.mxu0 %v5725
      %6233 = vmatpush1.msra.mxu0 %v5724
      %6234 = vmatprep.subr.mxu0 %v5689
      %6235 = vmatpush1.msra.mxu0 %v5688
      %6236 = vmatprep.subr.mxu0 %v5653
      %6237 = vmatpush1.msra.mxu0 %v5652
      %6238 = vmatprep.subr.mxu0 %v5617
      %6239 = vmatpush1.msra.mxu0 %v5616
      %6240 = vmatprep.subr.mxu0 %v5581
      %6241 = vmatpush1.msra.mxu0 %v5580
      %6242 = vmatprep.subr.mxu0 %v5545
      %6243 = vmatpush1.msra.mxu0 %v5544
      %6244 = vmatprep.subr.mxu0 %v5509
      %6245 = vmatpush1.msra.mxu0 %v5508
      %6246 = vmatprep.subr.mxu0 %v5473
      %6247 = vmatpush1.msra.mxu0 %v5472
      %6248 = vmatprep.subr.mxu0 %v5437
      %6249 = vmatpush1.msra.mxu0 %v5436
      %6250 = vmatprep.subr.mxu0 %v5401
      %6251 = vmatpush1.msra.mxu0 %v5400
      %6252 = vmatprep.subr.mxu0 %v5365
      %6253 = vmatpush1.msra.mxu0 %v5364
      %6254 = vmatprep.subr.mxu0 %v5329
      %6255 = vmatpush1.msra.mxu0 %v5328
      %6256 = vmatprep.subr.mxu0 %v5293
      %6257 = vmatpush1.msra.mxu0 %v5292
      %6258 = vmatprep.subr.mxu0 %v5257
      %6259 = vmatpush1.msra.mxu0 %v5256
      %6260 = vmatprep.subr.mxu0 %v5221
      %6261 = vmatpush1.msra.mxu0 %v5220
      %6262 = vmatprep.subr.mxu0 %v5185
      %6263 = vmatpush1.msra.mxu0 %v5184
      %6264 = vmatprep.subr.mxu0 0.0
      %6265 = vmatpush2.msra.mxu0 0.0
      %6266 = vmatprep.subr.mxu0 0.0
      %6267 = vmatpush2.msra.mxu0 0.0
      %6268 = vmatprep.subr.mxu0 0.0
      %6269 = vmatpush2.msra.mxu0 0.0
      %6270 = vmatprep.subr.mxu0 0.0
      %6271 = vmatpush2.msra.mxu0 0.0
      %6272 = vmatprep.subr.mxu0 0.0
      %6273 = vmatpush2.msra.mxu0 0.0
      %6274 = vmatprep.subr.mxu0 0.0
      %6275 = vmatpush2.msra.mxu0 0.0
      %6276 = vmatprep.subr.mxu0 0.0
      %6277 = vmatpush2.msra.mxu0 0.0
      %6278 = vmatprep.subr.mxu0 %v6049
      %6279 = vmatpush2.msra.mxu0 %v6048
      %6280 = vmatprep.subr.mxu0 %v6013
      %6281 = vmatpush2.msra.mxu0 %v6012
      %6282 = vmatprep.subr.mxu0 %v5977
      %6283 = vmatpush2.msra.mxu0 %v5976
      %6284 = vmatprep.subr.mxu0 %v5941
      %6285 = vmatpush2.msra.mxu0 %v5940
      %6286 = vmatprep.subr.mxu0 %v5905
      %6287 = vmatpush2.msra.mxu0 %v5904
      %6288 = vmatprep.subr.mxu0 %v5869
      %6289 = vmatpush2.msra.mxu0 %v5868
      %6290 = vmatprep.subr.mxu0 %v5833
      %6291 = vmatpush2.msra.mxu0 %v5832
      %6292 = vmatprep.subr.mxu0 %v5797
      %6293 = vmatpush2.msra.mxu0 %v5796
      %6294 = vmatprep.subr.mxu0 %v5761
      %6295 = vmatpush2.msra.mxu0 %v5760
      %6296 = vmatprep.mubr.f32.mxu0 %v6088
      %6297 = vmatmul.mubr.f32.gmra.mxu0 %v5178
      %v6298 = vpop.f32.mrf.mxu0
      %v6299 = vadd.f32 %v6084, %v6298
      %v6300 = vpop.f32.mrf.mxu0
      %v6301 = vadd.f32 %v6084, %v6300
      %6302 = vdwg.mxu0
      %6303 = vmatprep.subr.mxu0 %v5727
      %6304 = vmatpush1.msra.mxu0 %v5726
      %6305 = vmatprep.subr.mxu0 %v5691
      %6306 = vmatpush1.msra.mxu0 %v5690
      %6307 = vmatprep.subr.mxu0 %v5655
      %6308 = vmatpush1.msra.mxu0 %v5654
      %6309 = vmatprep.subr.mxu0 %v5619
      %6310 = vmatpush1.msra.mxu0 %v5618
      %6311 = vmatprep.subr.mxu0 %v5583
      %6312 = vmatpush1.msra.mxu0 %v5582
      %6313 = vmatprep.subr.mxu0 %v5547
      %6314 = vmatpush1.msra.mxu0 %v5546
      %6315 = vmatprep.subr.mxu0 %v5511
      %6316 = vmatpush1.msra.mxu0 %v5510
      %6317 = vmatprep.subr.mxu0 %v5475
      %6318 = vmatpush1.msra.mxu0 %v5474
      %6319 = vmatprep.subr.mxu0 %v5439
      %6320 = vmatpush1.msra.mxu0 %v5438
      %6321 = vmatprep.subr.mxu0 %v5403
      %6322 = vmatpush1.msra.mxu0 %v5402
      %6323 = vmatprep.subr.mxu0 %v5367
      %6324 = vmatpush1.msra.mxu0 %v5366
      %6325 = vmatprep.subr.mxu0 %v5331
      %6326 = vmatpush1.msra.mxu0 %v5330
      %6327 = vmatprep.subr.mxu0 %v5295
      %6328 = vmatpush1.msra.mxu0 %v5294
      %6329 = vmatprep.subr.mxu0 %v5259
      %6330 = vmatpush1.msra.mxu0 %v5258
      %6331 = vmatprep.subr.mxu0 %v5223
      %6332 = vmatpush1.msra.mxu0 %v5222
      %6333 = vmatprep.subr.mxu0 %v5187
      %6334 = vmatpush1.msra.mxu0 %v5186
      %6335 = vmatprep.subr.mxu0 0.0
      %6336 = vmatpush2.msra.mxu0 0.0
      %6337 = vmatprep.subr.mxu0 0.0
      %6338 = vmatpush2.msra.mxu0 0.0
      %6339 = vmatprep.subr.mxu0 0.0
      %6340 = vmatpush2.msra.mxu0 0.0
      %6341 = vmatprep.subr.mxu0 0.0
      %6342 = vmatpush2.msra.mxu0 0.0
      %6343 = vmatprep.subr.mxu0 0.0
      %6344 = vmatpush2.msra.mxu0 0.0
      %6345 = vmatprep.subr.mxu0 0.0
      %6346 = vmatpush2.msra.mxu0 0.0
      %6347 = vmatprep.subr.mxu0 0.0
      %6348 = vmatpush2.msra.mxu0 0.0
      %6349 = vmatprep.subr.mxu0 %v6051
      %6350 = vmatpush2.msra.mxu0 %v6050
      %6351 = vmatprep.subr.mxu0 %v6015
      %6352 = vmatpush2.msra.mxu0 %v6014
      %6353 = vmatprep.subr.mxu0 %v5979
      %6354 = vmatpush2.msra.mxu0 %v5978
      %6355 = vmatprep.subr.mxu0 %v5943
      %6356 = vmatpush2.msra.mxu0 %v5942
      %6357 = vmatprep.subr.mxu0 %v5907
      %6358 = vmatpush2.msra.mxu0 %v5906
      %6359 = vmatprep.subr.mxu0 %v5871
      %6360 = vmatpush2.msra.mxu0 %v5870
      %6361 = vmatprep.subr.mxu0 %v5835
      %6362 = vmatpush2.msra.mxu0 %v5834
      %6363 = vmatprep.subr.mxu0 %v5799
      %6364 = vmatpush2.msra.mxu0 %v5798
      %6365 = vmatprep.subr.mxu0 %v5763
      %6366 = vmatpush2.msra.mxu0 %v5762
      %6367 = vmatprep.mubr.f32.mxu0 %v6088
      %6368 = vmatmul.mubr.f32.gmra.mxu0 %v5178
      %v6369 = vpop.f32.mrf.mxu0
      %v6370 = vadd.f32 %v6084, %v6369
      %v6371 = vpop.f32.mrf.mxu0
      %v6372 = vadd.f32 %v6084, %v6371
      %6373 = vdwg.mxu0
      %6374 = vmatprep.subr.mxu0 %v5729
      %6375 = vmatpush1.msra.mxu0 %v5728
      %6376 = vmatprep.subr.mxu0 %v5693
      %6377 = vmatpush1.msra.mxu0 %v5692
      %6378 = vmatprep.subr.mxu0 %v5657
      %6379 = vmatpush1.msra.mxu0 %v5656
      %6380 = vmatprep.subr.mxu0 %v5621
      %6381 = vmatpush1.msra.mxu0 %v5620
      %6382 = vmatprep.subr.mxu0 %v5585
      %6383 = vmatpush1.msra.mxu0 %v5584
      %6384 = vmatprep.subr.mxu0 %v5549
      %6385 = vmatpush1.msra.mxu0 %v5548
      %6386 = vmatprep.subr.mxu0 %v5513
      %6387 = vmatpush1.msra.mxu0 %v5512
      %6388 = vmatprep.subr.mxu0 %v5477
      %6389 = vmatpush1.msra.mxu0 %v5476
      %6390 = vmatprep.subr.mxu0 %v5441
      %6391 = vmatpush1.msra.mxu0 %v5440
      %6392 = vmatprep.subr.mxu0 %v5405
      %6393 = vmatpush1.msra.mxu0 %v5404
      %6394 = vmatprep.subr.mxu0 %v5369
      %6395 = vmatpush1.msra.mxu0 %v5368
      %6396 = vmatprep.subr.mxu0 %v5333
      %6397 = vmatpush1.msra.mxu0 %v5332
      %6398 = vmatprep.subr.mxu0 %v5297
      %6399 = vmatpush1.msra.mxu0 %v5296
      %6400 = vmatprep.subr.mxu0 %v5261
      %6401 = vmatpush1.msra.mxu0 %v5260
      %6402 = vmatprep.subr.mxu0 %v5225
      %6403 = vmatpush1.msra.mxu0 %v5224
      %6404 = vmatprep.subr.mxu0 %v5189
      %6405 = vmatpush1.msra.mxu0 %v5188
      %6406 = vmatprep.subr.mxu0 0.0
      %6407 = vmatpush2.msra.mxu0 0.0
      %6408 = vmatprep.subr.mxu0 0.0
      %6409 = vmatpush2.msra.mxu0 0.0
      %6410 = vmatprep.subr.mxu0 0.0
      %6411 = vmatpush2.msra.mxu0 0.0
      %6412 = vmatprep.subr.mxu0 0.0
      %6413 = vmatpush2.msra.mxu0 0.0
      %6414 = vmatprep.subr.mxu0 0.0
      %6415 = vmatpush2.msra.mxu0 0.0
      %6416 = vmatprep.subr.mxu0 0.0
      %6417 = vmatpush2.msra.mxu0 0.0
      %6418 = vmatprep.subr.mxu0 0.0
      %6419 = vmatpush2.msra.mxu0 0.0
      %6420 = vmatprep.subr.mxu0 %v6053
      %6421 = vmatpush2.msra.mxu0 %v6052
      %6422 = vmatprep.subr.mxu0 %v6017
      %6423 = vmatpush2.msra.mxu0 %v6016
      %6424 = vmatprep.subr.mxu0 %v5981
      %6425 = vmatpush2.msra.mxu0 %v5980
      %6426 = vmatprep.subr.mxu0 %v5945
      %6427 = vmatpush2.msra.mxu0 %v5944
      %6428 = vmatprep.subr.mxu0 %v5909
      %6429 = vmatpush2.msra.mxu0 %v5908
      %6430 = vmatprep.subr.mxu0 %v5873
      %6431 = vmatpush2.msra.mxu0 %v5872
      %6432 = vmatprep.subr.mxu0 %v5837
      %6433 = vmatpush2.msra.mxu0 %v5836
      %6434 = vmatprep.subr.mxu0 %v5801
      %6435 = vmatpush2.msra.mxu0 %v5800
      %6436 = vmatprep.subr.mxu0 %v5765
      %6437 = vmatpush2.msra.mxu0 %v5764
      %6438 = vmatprep.mubr.f32.mxu0 %v6088
      %6439 = vmatmul.mubr.f32.gmra.mxu0 %v5178
      %v6440 = vpop.f32.mrf.mxu0
      %v6441 = vadd.f32 %v6084, %v6440
      %v6442 = vpop.f32.mrf.mxu0
      %v6443 = vadd.f32 %v6084, %v6442
      %6444 = vdwg.mxu0
      %6445 = vmatprep.subr.mxu0 %v5731
      %6446 = vmatpush1.msra.mxu0 %v5730
      %6447 = vmatprep.subr.mxu0 %v5695
      %6448 = vmatpush1.msra.mxu0 %v5694
      %6449 = vmatprep.subr.mxu0 %v5659
      %6450 = vmatpush1.msra.mxu0 %v5658
      %6451 = vmatprep.subr.mxu0 %v5623
      %6452 = vmatpush1.msra.mxu0 %v5622
      %6453 = vmatprep.subr.mxu0 %v5587
      %6454 = vmatpush1.msra.mxu0 %v5586
      %6455 = vmatprep.subr.mxu0 %v5551
      %6456 = vmatpush1.msra.mxu0 %v5550
      %6457 = vmatprep.subr.mxu0 %v5515
      %6458 = vmatpush1.msra.mxu0 %v5514
      %6459 = vmatprep.subr.mxu0 %v5479
      %6460 = vmatpush1.msra.mxu0 %v5478
      %6461 = vmatprep.subr.mxu0 %v5443
      %6462 = vmatpush1.msra.mxu0 %v5442
      %6463 = vmatprep.subr.mxu0 %v5407
      %6464 = vmatpush1.msra.mxu0 %v5406
      %6465 = vmatprep.subr.mxu0 %v5371
      %6466 = vmatpush1.msra.mxu0 %v5370
      %6467 = vmatprep.subr.mxu0 %v5335
      %6468 = vmatpush1.msra.mxu0 %v5334
      %6469 = vmatprep.subr.mxu0 %v5299
      %6470 = vmatpush1.msra.mxu0 %v5298
      %6471 = vmatprep.subr.mxu0 %v5263
      %6472 = vmatpush1.msra.mxu0 %v5262
      %6473 = vmatprep.subr.mxu0 %v5227
      %6474 = vmatpush1.msra.mxu0 %v5226
      %6475 = vmatprep.subr.mxu0 %v5191
      %6476 = vmatpush1.msra.mxu0 %v5190
      %6477 = vmatprep.subr.mxu0 0.0
      %6478 = vmatpush2.msra.mxu0 0.0
      %6479 = vmatprep.subr.mxu0 0.0
      %6480 = vmatpush2.msra.mxu0 0.0
      %6481 = vmatprep.subr.mxu0 0.0
      %6482 = vmatpush2.msra.mxu0 0.0
      %6483 = vmatprep.subr.mxu0 0.0
      %6484 = vmatpush2.msra.mxu0 0.0
      %6485 = vmatprep.subr.mxu0 0.0
      %6486 = vmatpush2.msra.mxu0 0.0
      %6487 = vmatprep.subr.mxu0 0.0
      %6488 = vmatpush2.msra.mxu0 0.0
      %6489 = vmatprep.subr.mxu0 0.0
      %6490 = vmatpush2.msra.mxu0 0.0
      %6491 = vmatprep.subr.mxu0 %v6055
      %6492 = vmatpush2.msra.mxu0 %v6054
      %6493 = vmatprep.subr.mxu0 %v6019
      %6494 = vmatpush2.msra.mxu0 %v6018
      %6495 = vmatprep.subr.mxu0 %v5983
      %6496 = vmatpush2.msra.mxu0 %v5982
      %6497 = vmatprep.subr.mxu0 %v5947
      %6498 = vmatpush2.msra.mxu0 %v5946
      %6499 = vmatprep.subr.mxu0 %v5911
      %6500 = vmatpush2.msra.mxu0 %v5910
      %6501 = vmatprep.subr.mxu0 %v5875
      %6502 = vmatpush2.msra.mxu0 %v5874
      %6503 = vmatprep.subr.mxu0 %v5839
      %6504 = vmatpush2.msra.mxu0 %v5838
      %6505 = vmatprep.subr.mxu0 %v5803
      %6506 = vmatpush2.msra.mxu0 %v5802
      %6507 = vmatprep.subr.mxu0 %v5767
      %6508 = vmatpush2.msra.mxu0 %v5766
      %6509 = vmatprep.mubr.f32.mxu0 %v6088
      %6510 = vmatmul.mubr.f32.gmra.mxu0 %v5178
      %v6511 = vpop.f32.mrf.mxu0
      %v6512 = vadd.f32 %v6084, %v6511
      %v6513 = vpop.f32.mrf.mxu0
      %v6514 = vadd.f32 %v6084, %v6513
      %6515 = vdwg.mxu0
      %6516 = vmatprep.subr.mxu0 %v5733
      %6517 = vmatpush1.msra.mxu0 %v5732
      %6518 = vmatprep.subr.mxu0 %v5697
      %6519 = vmatpush1.msra.mxu0 %v5696
      %6520 = vmatprep.subr.mxu0 %v5661
      %6521 = vmatpush1.msra.mxu0 %v5660
      %6522 = vmatprep.subr.mxu0 %v5625
      %6523 = vmatpush1.msra.mxu0 %v5624
      %6524 = vmatprep.subr.mxu0 %v5589
      %6525 = vmatpush1.msra.mxu0 %v5588
      %6526 = vmatprep.subr.mxu0 %v5553
      %6527 = vmatpush1.msra.mxu0 %v5552
      %6528 = vmatprep.subr.mxu0 %v5517
      %6529 = vmatpush1.msra.mxu0 %v5516
      %6530 = vmatprep.subr.mxu0 %v5481
      %6531 = vmatpush1.msra.mxu0 %v5480
      %6532 = vmatprep.subr.mxu0 %v5445
      %6533 = vmatpush1.msra.mxu0 %v5444
      %6534 = vmatprep.subr.mxu0 %v5409
      %6535 = vmatpush1.msra.mxu0 %v5408
      %6536 = vmatprep.subr.mxu0 %v5373
      %6537 = vmatpush1.msra.mxu0 %v5372
      %6538 = vmatprep.subr.mxu0 %v5337
      %6539 = vmatpush1.msra.mxu0 %v5336
      %6540 = vmatprep.subr.mxu0 %v5301
      %6541 = vmatpush1.msra.mxu0 %v5300
      %6542 = vmatprep.subr.mxu0 %v5265
      %6543 = vmatpush1.msra.mxu0 %v5264
      %6544 = vmatprep.subr.mxu0 %v5229
      %6545 = vmatpush1.msra.mxu0 %v5228
      %6546 = vmatprep.subr.mxu0 %v5193
      %6547 = vmatpush1.msra.mxu0 %v5192
      %6548 = vmatprep.subr.mxu0 0.0
      %6549 = vmatpush2.msra.mxu0 0.0
      %6550 = vmatprep.subr.mxu0 0.0
      %6551 = vmatpush2.msra.mxu0 0.0
      %6552 = vmatprep.subr.mxu0 0.0
      %6553 = vmatpush2.msra.mxu0 0.0
      %6554 = vmatprep.subr.mxu0 0.0
      %6555 = vmatpush2.msra.mxu0 0.0
      %6556 = vmatprep.subr.mxu0 0.0
      %6557 = vmatpush2.msra.mxu0 0.0
      %6558 = vmatprep.subr.mxu0 0.0
      %6559 = vmatpush2.msra.mxu0 0.0
      %6560 = vmatprep.subr.mxu0 0.0
      %6561 = vmatpush2.msra.mxu0 0.0
      %6562 = vmatprep.subr.mxu0 %v6057
      %6563 = vmatpush2.msra.mxu0 %v6056
      %6564 = vmatprep.subr.mxu0 %v6021
      %6565 = vmatpush2.msra.mxu0 %v6020
      %6566 = vmatprep.subr.mxu0 %v5985
      %6567 = vmatpush2.msra.mxu0 %v5984
      %6568 = vmatprep.subr.mxu0 %v5949
      %6569 = vmatpush2.msra.mxu0 %v5948
      %6570 = vmatprep.subr.mxu0 %v5913
      %6571 = vmatpush2.msra.mxu0 %v5912
      %6572 = vmatprep.subr.mxu0 %v5877
      %6573 = vmatpush2.msra.mxu0 %v5876
      %6574 = vmatprep.subr.mxu0 %v5841
      %6575 = vmatpush2.msra.mxu0 %v5840
      %6576 = vmatprep.subr.mxu0 %v5805
      %6577 = vmatpush2.msra.mxu0 %v5804
      %6578 = vmatprep.subr.mxu0 %v5769
      %6579 = vmatpush2.msra.mxu0 %v5768
      %6580 = vmatprep.mubr.f32.mxu0 %v6088
      %6581 = vmatmul.mubr.f32.gmra.mxu0 %v5178
      %v6582 = vpop.f32.mrf.mxu0
      %v6583 = vadd.f32 %v6084, %v6582
      %v6584 = vpop.f32.mrf.mxu0
      %v6585 = vadd.f32 %v6084, %v6584
      %6586 = vdwg.mxu0
      %6587 = vmatprep.subr.mxu0 %v5735
      %6588 = vmatpush1.msra.mxu0 %v5734
      %6589 = vmatprep.subr.mxu0 %v5699
      %6590 = vmatpush1.msra.mxu0 %v5698
      %6591 = vmatprep.subr.mxu0 %v5663
      %6592 = vmatpush1.msra.mxu0 %v5662
      %6593 = vmatprep.subr.mxu0 %v5627
      %6594 = vmatpush1.msra.mxu0 %v5626
      %6595 = vmatprep.subr.mxu0 %v5591
      %6596 = vmatpush1.msra.mxu0 %v5590
      %6597 = vmatprep.subr.mxu0 %v5555
      %6598 = vmatpush1.msra.mxu0 %v5554
      %6599 = vmatprep.subr.mxu0 %v5519
      %6600 = vmatpush1.msra.mxu0 %v5518
      %6601 = vmatprep.subr.mxu0 %v5483
      %6602 = vmatpush1.msra.mxu0 %v5482
      %6603 = vmatprep.subr.mxu0 %v5447
      %6604 = vmatpush1.msra.mxu0 %v5446
      %6605 = vmatprep.subr.mxu0 %v5411
      %6606 = vmatpush1.msra.mxu0 %v5410
      %6607 = vmatprep.subr.mxu0 %v5375
      %6608 = vmatpush1.msra.mxu0 %v5374
      %6609 = vmatprep.subr.mxu0 %v5339
      %6610 = vmatpush1.msra.mxu0 %v5338
      %6611 = vmatprep.subr.mxu0 %v5303
      %6612 = vmatpush1.msra.mxu0 %v5302
      %6613 = vmatprep.subr.mxu0 %v5267
      %6614 = vmatpush1.msra.mxu0 %v5266
      %6615 = vmatprep.subr.mxu0 %v5231
      %6616 = vmatpush1.msra.mxu0 %v5230
      %6617 = vmatprep.subr.mxu0 %v5195
      %6618 = vmatpush1.msra.mxu0 %v5194
      %6619 = vmatprep.subr.mxu0 0.0
      %6620 = vmatpush2.msra.mxu0 0.0
      %6621 = vmatprep.subr.mxu0 0.0
      %6622 = vmatpush2.msra.mxu0 0.0
      %6623 = vmatprep.subr.mxu0 0.0
      %6624 = vmatpush2.msra.mxu0 0.0
      %6625 = vmatprep.subr.mxu0 0.0
      %6626 = vmatpush2.msra.mxu0 0.0
      %6627 = vmatprep.subr.mxu0 0.0
      %6628 = vmatpush2.msra.mxu0 0.0
      %6629 = vmatprep.subr.mxu0 0.0
      %6630 = vmatpush2.msra.mxu0 0.0
      %6631 = vmatprep.subr.mxu0 0.0
      %6632 = vmatpush2.msra.mxu0 0.0
      %6633 = vmatprep.subr.mxu0 %v6059
      %6634 = vmatpush2.msra.mxu0 %v6058
      %6635 = vmatprep.subr.mxu0 %v6023
      %6636 = vmatpush2.msra.mxu0 %v6022
      %6637 = vmatprep.subr.mxu0 %v5987
      %6638 = vmatpush2.msra.mxu0 %v5986
      %6639 = vmatprep.subr.mxu0 %v5951
      %6640 = vmatpush2.msra.mxu0 %v5950
      %6641 = vmatprep.subr.mxu0 %v5915
      %6642 = vmatpush2.msra.mxu0 %v5914
      %6643 = vmatprep.subr.mxu0 %v5879
      %6644 = vmatpush2.msra.mxu0 %v5878
      %6645 = vmatprep.subr.mxu0 %v5843
      %6646 = vmatpush2.msra.mxu0 %v5842
      %6647 = vmatprep.subr.mxu0 %v5807
      %6648 = vmatpush2.msra.mxu0 %v5806
      %6649 = vmatprep.subr.mxu0 %v5771
      %6650 = vmatpush2.msra.mxu0 %v5770
      %6651 = vmatprep.mubr.f32.mxu0 %v6088
      %6652 = vmatmul.mubr.f32.gmra.mxu0 %v5178
      %v6653 = vpop.f32.mrf.mxu0
      %v6654 = vadd.f32 %v6084, %v6653
      %v6655 = vpop.f32.mrf.mxu0
      %v6656 = vadd.f32 %v6084, %v6655
      %6657 = vdwg.mxu0
      %6658 = vmatprep.subr.mxu0 %v5737
      %6659 = vmatpush1.msra.mxu0 %v5736
      %6660 = vmatprep.subr.mxu0 %v5701
      %6661 = vmatpush1.msra.mxu0 %v5700
      %6662 = vmatprep.subr.mxu0 %v5665
      %6663 = vmatpush1.msra.mxu0 %v5664
      %6664 = vmatprep.subr.mxu0 %v5629
      %6665 = vmatpush1.msra.mxu0 %v5628
      %6666 = vmatprep.subr.mxu0 %v5593
      %6667 = vmatpush1.msra.mxu0 %v5592
      %6668 = vmatprep.subr.mxu0 %v5557
      %6669 = vmatpush1.msra.mxu0 %v5556
      %6670 = vmatprep.subr.mxu0 %v5521
      %6671 = vmatpush1.msra.mxu0 %v5520
      %6672 = vmatprep.subr.mxu0 %v5485
      %6673 = vmatpush1.msra.mxu0 %v5484
      %6674 = vmatprep.subr.mxu0 %v5449
      %6675 = vmatpush1.msra.mxu0 %v5448
      %6676 = vmatprep.subr.mxu0 %v5413
      %6677 = vmatpush1.msra.mxu0 %v5412
      %6678 = vmatprep.subr.mxu0 %v5377
      %6679 = vmatpush1.msra.mxu0 %v5376
      %6680 = vmatprep.subr.mxu0 %v5341
      %6681 = vmatpush1.msra.mxu0 %v5340
      %6682 = vmatprep.subr.mxu0 %v5305
      %6683 = vmatpush1.msra.mxu0 %v5304
      %6684 = vmatprep.subr.mxu0 %v5269
      %6685 = vmatpush1.msra.mxu0 %v5268
      %6686 = vmatprep.subr.mxu0 %v5233
      %6687 = vmatpush1.msra.mxu0 %v5232
      %6688 = vmatprep.subr.mxu0 %v5197
      %6689 = vmatpush1.msra.mxu0 %v5196
      %6690 = vmatprep.subr.mxu0 0.0
      %6691 = vmatpush2.msra.mxu0 0.0
      %6692 = vmatprep.subr.mxu0 0.0
      %6693 = vmatpush2.msra.mxu0 0.0
      %6694 = vmatprep.subr.mxu0 0.0
      %6695 = vmatpush2.msra.mxu0 0.0
      %6696 = vmatprep.subr.mxu0 0.0
      %6697 = vmatpush2.msra.mxu0 0.0
      %6698 = vmatprep.subr.mxu0 0.0
      %6699 = vmatpush2.msra.mxu0 0.0
      %6700 = vmatprep.subr.mxu0 0.0
      %6701 = vmatpush2.msra.mxu0 0.0
      %6702 = vmatprep.subr.mxu0 0.0
      %6703 = vmatpush2.msra.mxu0 0.0
      %6704 = vmatprep.subr.mxu0 %v6061
      %6705 = vmatpush2.msra.mxu0 %v6060
      %6706 = vmatprep.subr.mxu0 %v6025
      %6707 = vmatpush2.msra.mxu0 %v6024
      %6708 = vmatprep.subr.mxu0 %v5989
      %6709 = vmatpush2.msra.mxu0 %v5988
      %6710 = vmatprep.subr.mxu0 %v5953
      %6711 = vmatpush2.msra.mxu0 %v5952
      %6712 = vmatprep.subr.mxu0 %v5917
      %6713 = vmatpush2.msra.mxu0 %v5916
      %6714 = vmatprep.subr.mxu0 %v5881
      %6715 = vmatpush2.msra.mxu0 %v5880
      %6716 = vmatprep.subr.mxu0 %v5845
      %6717 = vmatpush2.msra.mxu0 %v5844
      %6718 = vmatprep.subr.mxu0 %v5809
      %6719 = vmatpush2.msra.mxu0 %v5808
      %6720 = vmatprep.subr.mxu0 %v5773
      %6721 = vmatpush2.msra.mxu0 %v5772
      %6722 = vmatprep.mubr.f32.mxu0 %v6088
      %6723 = vmatmul.mubr.f32.gmra.mxu0 %v5178
      %v6724 = vpop.f32.mrf.mxu0
      %v6725 = vadd.f32 %v6084, %v6724
      %v6726 = vpop.f32.mrf.mxu0
      %v6727 = vadd.f32 %v6084, %v6726
      %6728 = vdwg.mxu0
      %6729 = vmatprep.subr.mxu0 %v5739
      %6730 = vmatpush1.msra.mxu0 %v5738
      %6731 = vmatprep.subr.mxu0 %v5703
      %6732 = vmatpush1.msra.mxu0 %v5702
      %6733 = vmatprep.subr.mxu0 %v5667
      %6734 = vmatpush1.msra.mxu0 %v5666
      %6735 = vmatprep.subr.mxu0 %v5631
      %6736 = vmatpush1.msra.mxu0 %v5630
      %6737 = vmatprep.subr.mxu0 %v5595
      %6738 = vmatpush1.msra.mxu0 %v5594
      %6739 = vmatprep.subr.mxu0 %v5559
      %6740 = vmatpush1.msra.mxu0 %v5558
      %6741 = vmatprep.subr.mxu0 %v5523
      %6742 = vmatpush1.msra.mxu0 %v5522
      %6743 = vmatprep.subr.mxu0 %v5487
      %6744 = vmatpush1.msra.mxu0 %v5486
      %6745 = vmatprep.subr.mxu0 %v5451
      %6746 = vmatpush1.msra.mxu0 %v5450
      %6747 = vmatprep.subr.mxu0 %v5415
      %6748 = vmatpush1.msra.mxu0 %v5414
      %6749 = vmatprep.subr.mxu0 %v5379
      %6750 = vmatpush1.msra.mxu0 %v5378
      %6751 = vmatprep.subr.mxu0 %v5343
      %6752 = vmatpush1.msra.mxu0 %v5342
      %6753 = vmatprep.subr.mxu0 %v5307
      %6754 = vmatpush1.msra.mxu0 %v5306
      %6755 = vmatprep.subr.mxu0 %v5271
      %6756 = vmatpush1.msra.mxu0 %v5270
      %6757 = vmatprep.subr.mxu0 %v5235
      %6758 = vmatpush1.msra.mxu0 %v5234
      %6759 = vmatprep.subr.mxu0 %v5199
      %6760 = vmatpush1.msra.mxu0 %v5198
      %6761 = vmatprep.subr.mxu0 0.0
      %6762 = vmatpush2.msra.mxu0 0.0
      %6763 = vmatprep.subr.mxu0 0.0
      %6764 = vmatpush2.msra.mxu0 0.0
      %6765 = vmatprep.subr.mxu0 0.0
      %6766 = vmatpush2.msra.mxu0 0.0
      %6767 = vmatprep.subr.mxu0 0.0
      %6768 = vmatpush2.msra.mxu0 0.0
      %6769 = vmatprep.subr.mxu0 0.0
      %6770 = vmatpush2.msra.mxu0 0.0
      %6771 = vmatprep.subr.mxu0 0.0
      %6772 = vmatpush2.msra.mxu0 0.0
      %6773 = vmatprep.subr.mxu0 0.0
      %6774 = vmatpush2.msra.mxu0 0.0
      %6775 = vmatprep.subr.mxu0 %v6063
      %6776 = vmatpush2.msra.mxu0 %v6062
      %6777 = vmatprep.subr.mxu0 %v6027
      %6778 = vmatpush2.msra.mxu0 %v6026
      %6779 = vmatprep.subr.mxu0 %v5991
      %6780 = vmatpush2.msra.mxu0 %v5990
      %6781 = vmatprep.subr.mxu0 %v5955
      %6782 = vmatpush2.msra.mxu0 %v5954
      %6783 = vmatprep.subr.mxu0 %v5919
      %6784 = vmatpush2.msra.mxu0 %v5918
      %6785 = vmatprep.subr.mxu0 %v5883
      %6786 = vmatpush2.msra.mxu0 %v5882
      %6787 = vmatprep.subr.mxu0 %v5847
      %6788 = vmatpush2.msra.mxu0 %v5846
      %6789 = vmatprep.subr.mxu0 %v5811
      %6790 = vmatpush2.msra.mxu0 %v5810
      %6791 = vmatprep.subr.mxu0 %v5775
      %6792 = vmatpush2.msra.mxu0 %v5774
      %6793 = vmatprep.mubr.f32.mxu0 %v6088
      %6794 = vmatmul.mubr.f32.gmra.mxu0 %v5178
      %v6795 = vpop.f32.mrf.mxu0
      %v6796 = vadd.f32 %v6084, %v6795
      %v6797 = vpop.f32.mrf.mxu0
      %v6798 = vadd.f32 %v6084, %v6797
      %6799 = vdwg.mxu0
      %6800 = vmatprep.subr.mxu0 %v5741
      %6801 = vmatpush1.msra.mxu0 %v5740
      %6802 = vmatprep.subr.mxu0 %v5705
      %6803 = vmatpush1.msra.mxu0 %v5704
      %6804 = vmatprep.subr.mxu0 %v5669
      %6805 = vmatpush1.msra.mxu0 %v5668
      %6806 = vmatprep.subr.mxu0 %v5633
      %6807 = vmatpush1.msra.mxu0 %v5632
      %6808 = vmatprep.subr.mxu0 %v5597
      %6809 = vmatpush1.msra.mxu0 %v5596
      %6810 = vmatprep.subr.mxu0 %v5561
      %6811 = vmatpush1.msra.mxu0 %v5560
      %6812 = vmatprep.subr.mxu0 %v5525
      %6813 = vmatpush1.msra.mxu0 %v5524
      %6814 = vmatprep.subr.mxu0 %v5489
      %6815 = vmatpush1.msra.mxu0 %v5488
      %6816 = vmatprep.subr.mxu0 %v5453
      %6817 = vmatpush1.msra.mxu0 %v5452
      %6818 = vmatprep.subr.mxu0 %v5417
      %6819 = vmatpush1.msra.mxu0 %v5416
      %6820 = vmatprep.subr.mxu0 %v5381
      %6821 = vmatpush1.msra.mxu0 %v5380
      %6822 = vmatprep.subr.mxu0 %v5345
      %6823 = vmatpush1.msra.mxu0 %v5344
      %6824 = vmatprep.subr.mxu0 %v5309
      %6825 = vmatpush1.msra.mxu0 %v5308
      %6826 = vmatprep.subr.mxu0 %v5273
      %6827 = vmatpush1.msra.mxu0 %v5272
      %6828 = vmatprep.subr.mxu0 %v5237
      %6829 = vmatpush1.msra.mxu0 %v5236
      %6830 = vmatprep.subr.mxu0 %v5201
      %6831 = vmatpush1.msra.mxu0 %v5200
      %6832 = vmatprep.subr.mxu0 0.0
      %6833 = vmatpush2.msra.mxu0 0.0
      %6834 = vmatprep.subr.mxu0 0.0
      %6835 = vmatpush2.msra.mxu0 0.0
      %6836 = vmatprep.subr.mxu0 0.0
      %6837 = vmatpush2.msra.mxu0 0.0
      %6838 = vmatprep.subr.mxu0 0.0
      %6839 = vmatpush2.msra.mxu0 0.0
      %6840 = vmatprep.subr.mxu0 0.0
      %6841 = vmatpush2.msra.mxu0 0.0
      %6842 = vmatprep.subr.mxu0 0.0
      %6843 = vmatpush2.msra.mxu0 0.0
      %6844 = vmatprep.subr.mxu0 0.0
      %6845 = vmatpush2.msra.mxu0 0.0
      %6846 = vmatprep.subr.mxu0 %v6065
      %6847 = vmatpush2.msra.mxu0 %v6064
      %6848 = vmatprep.subr.mxu0 %v6029
      %6849 = vmatpush2.msra.mxu0 %v6028
      %6850 = vmatprep.subr.mxu0 %v5993
      %6851 = vmatpush2.msra.mxu0 %v5992
      %6852 = vmatprep.subr.mxu0 %v5957
      %6853 = vmatpush2.msra.mxu0 %v5956
      %6854 = vmatprep.subr.mxu0 %v5921
      %6855 = vmatpush2.msra.mxu0 %v5920
      %6856 = vmatprep.subr.mxu0 %v5885
      %6857 = vmatpush2.msra.mxu0 %v5884
      %6858 = vmatprep.subr.mxu0 %v5849
      %6859 = vmatpush2.msra.mxu0 %v5848
      %6860 = vmatprep.subr.mxu0 %v5813
      %6861 = vmatpush2.msra.mxu0 %v5812
      %6862 = vmatprep.subr.mxu0 %v5777
      %6863 = vmatpush2.msra.mxu0 %v5776
      %6864 = vmatprep.mubr.f32.mxu0 %v6088
      %6865 = vmatmul.mubr.f32.gmra.mxu0 %v5178
      %v6866 = vpop.f32.mrf.mxu0
      %v6867 = vadd.f32 %v6084, %v6866
      %v6868 = vpop.f32.mrf.mxu0
      %v6869 = vadd.f32 %v6084, %v6868
      %6870 = vdwg.mxu0
      %6871 = vmatprep.subr.mxu0 %v5743
      %6872 = vmatpush1.msra.mxu0 %v5742
      %6873 = vmatprep.subr.mxu0 %v5707
      %6874 = vmatpush1.msra.mxu0 %v5706
      %6875 = vmatprep.subr.mxu0 %v5671
      %6876 = vmatpush1.msra.mxu0 %v5670
      %6877 = vmatprep.subr.mxu0 %v5635
      %6878 = vmatpush1.msra.mxu0 %v5634
      %6879 = vmatprep.subr.mxu0 %v5599
      %6880 = vmatpush1.msra.mxu0 %v5598
      %6881 = vmatprep.subr.mxu0 %v5563
      %6882 = vmatpush1.msra.mxu0 %v5562
      %6883 = vmatprep.subr.mxu0 %v5527
      %6884 = vmatpush1.msra.mxu0 %v5526
      %6885 = vmatprep.subr.mxu0 %v5491
      %6886 = vmatpush1.msra.mxu0 %v5490
      %6887 = vmatprep.subr.mxu0 %v5455
      %6888 = vmatpush1.msra.mxu0 %v5454
      %6889 = vmatprep.subr.mxu0 %v5419
      %6890 = vmatpush1.msra.mxu0 %v5418
      %6891 = vmatprep.subr.mxu0 %v5383
      %6892 = vmatpush1.msra.mxu0 %v5382
      %6893 = vmatprep.subr.mxu0 %v5347
      %6894 = vmatpush1.msra.mxu0 %v5346
      %6895 = vmatprep.subr.mxu0 %v5311
      %6896 = vmatpush1.msra.mxu0 %v5310
      %6897 = vmatprep.subr.mxu0 %v5275
      %6898 = vmatpush1.msra.mxu0 %v5274
      %6899 = vmatprep.subr.mxu0 %v5239
      %6900 = vmatpush1.msra.mxu0 %v5238
      %6901 = vmatprep.subr.mxu0 %v5203
      %6902 = vmatpush1.msra.mxu0 %v5202
      %6903 = vmatprep.subr.mxu0 0.0
      %6904 = vmatpush2.msra.mxu0 0.0
      %6905 = vmatprep.subr.mxu0 0.0
      %6906 = vmatpush2.msra.mxu0 0.0
      %6907 = vmatprep.subr.mxu0 0.0
      %6908 = vmatpush2.msra.mxu0 0.0
      %6909 = vmatprep.subr.mxu0 0.0
      %6910 = vmatpush2.msra.mxu0 0.0
      %6911 = vmatprep.subr.mxu0 0.0
      %6912 = vmatpush2.msra.mxu0 0.0
      %6913 = vmatprep.subr.mxu0 0.0
      %6914 = vmatpush2.msra.mxu0 0.0
      %6915 = vmatprep.subr.mxu0 0.0
      %6916 = vmatpush2.msra.mxu0 0.0
      %6917 = vmatprep.subr.mxu0 %v6067
      %6918 = vmatpush2.msra.mxu0 %v6066
      %6919 = vmatprep.subr.mxu0 %v6031
      %6920 = vmatpush2.msra.mxu0 %v6030
      %6921 = vmatprep.subr.mxu0 %v5995
      %6922 = vmatpush2.msra.mxu0 %v5994
      %6923 = vmatprep.subr.mxu0 %v5959
      %6924 = vmatpush2.msra.mxu0 %v5958
      %6925 = vmatprep.subr.mxu0 %v5923
      %6926 = vmatpush2.msra.mxu0 %v5922
      %6927 = vmatprep.subr.mxu0 %v5887
      %6928 = vmatpush2.msra.mxu0 %v5886
      %6929 = vmatprep.subr.mxu0 %v5851
      %6930 = vmatpush2.msra.mxu0 %v5850
      %6931 = vmatprep.subr.mxu0 %v5815
      %6932 = vmatpush2.msra.mxu0 %v5814
      %6933 = vmatprep.subr.mxu0 %v5779
      %6934 = vmatpush2.msra.mxu0 %v5778
      %6935 = vmatprep.mubr.f32.mxu0 %v6088
      %6936 = vmatmul.mubr.f32.gmra.mxu0 %v5178
      %v6937 = vpop.f32.mrf.mxu0
      %v6938 = vadd.f32 %v6084, %v6937
      %v6939 = vpop.f32.mrf.mxu0
      %v6940 = vadd.f32 %v6084, %v6939
      %6941 = vdwg.mxu0
      %6942 = vmatprep.subr.mxu0 %v5745
      %6943 = vmatpush1.msra.mxu0 %v5744
      %6944 = vmatprep.subr.mxu0 %v5709
      %6945 = vmatpush1.msra.mxu0 %v5708
      %6946 = vmatprep.subr.mxu0 %v5673
      %6947 = vmatpush1.msra.mxu0 %v5672
      %6948 = vmatprep.subr.mxu0 %v5637
      %6949 = vmatpush1.msra.mxu0 %v5636
      %6950 = vmatprep.subr.mxu0 %v5601
      %6951 = vmatpush1.msra.mxu0 %v5600
      %6952 = vmatprep.subr.mxu0 %v5565
      %6953 = vmatpush1.msra.mxu0 %v5564
      %6954 = vmatprep.subr.mxu0 %v5529
      %6955 = vmatpush1.msra.mxu0 %v5528
      %6956 = vmatprep.subr.mxu0 %v5493
      %6957 = vmatpush1.msra.mxu0 %v5492
      %6958 = vmatprep.subr.mxu0 %v5457
      %6959 = vmatpush1.msra.mxu0 %v5456
      %6960 = vmatprep.subr.mxu0 %v5421
      %6961 = vmatpush1.msra.mxu0 %v5420
      %6962 = vmatprep.subr.mxu0 %v5385
      %6963 = vmatpush1.msra.mxu0 %v5384
      %6964 = vmatprep.subr.mxu0 %v5349
      %6965 = vmatpush1.msra.mxu0 %v5348
      %6966 = vmatprep.subr.mxu0 %v5313
      %6967 = vmatpush1.msra.mxu0 %v5312
      %6968 = vmatprep.subr.mxu0 %v5277
      %6969 = vmatpush1.msra.mxu0 %v5276
      %6970 = vmatprep.subr.mxu0 %v5241
      %6971 = vmatpush1.msra.mxu0 %v5240
      %6972 = vmatprep.subr.mxu0 %v5205
      %6973 = vmatpush1.msra.mxu0 %v5204
      %6974 = vmatprep.subr.mxu0 0.0
      %6975 = vmatpush2.msra.mxu0 0.0
      %6976 = vmatprep.subr.mxu0 0.0
      %6977 = vmatpush2.msra.mxu0 0.0
      %6978 = vmatprep.subr.mxu0 0.0
      %6979 = vmatpush2.msra.mxu0 0.0
      %6980 = vmatprep.subr.mxu0 0.0
      %6981 = vmatpush2.msra.mxu0 0.0
      %6982 = vmatprep.subr.mxu0 0.0
      %6983 = vmatpush2.msra.mxu0 0.0
      %6984 = vmatprep.subr.mxu0 0.0
      %6985 = vmatpush2.msra.mxu0 0.0
      %6986 = vmatprep.subr.mxu0 0.0
      %6987 = vmatpush2.msra.mxu0 0.0
      %6988 = vmatprep.subr.mxu0 %v6069
      %6989 = vmatpush2.msra.mxu0 %v6068
      %6990 = vmatprep.subr.mxu0 %v6033
      %6991 = vmatpush2.msra.mxu0 %v6032
      %6992 = vmatprep.subr.mxu0 %v5997
      %6993 = vmatpush2.msra.mxu0 %v5996
      %6994 = vmatprep.subr.mxu0 %v5961
      %6995 = vmatpush2.msra.mxu0 %v5960
      %6996 = vmatprep.subr.mxu0 %v5925
      %6997 = vmatpush2.msra.mxu0 %v5924
      %6998 = vmatprep.subr.mxu0 %v5889
      %6999 = vmatpush2.msra.mxu0 %v5888
      %7000 = vmatprep.subr.mxu0 %v5853
      %7001 = vmatpush2.msra.mxu0 %v5852
      %7002 = vmatprep.subr.mxu0 %v5817
      %7003 = vmatpush2.msra.mxu0 %v5816
      %7004 = vmatprep.subr.mxu0 %v5781
      %7005 = vmatpush2.msra.mxu0 %v5780
      %7006 = vmatprep.mubr.f32.mxu0 %v6088
      %7007 = vmatmul.mubr.f32.gmra.mxu0 %v5178
      %v7008 = vpop.f32.mrf.mxu0
      %v7009 = vadd.f32 %v6084, %v7008
      %v7010 = vpop.f32.mrf.mxu0
      %v7011 = vadd.f32 %v6084, %v7010
      %7012 = vdwg.mxu0
      %7013 = vmatprep.subr.mxu0 %v5747
      %7014 = vmatpush1.msra.mxu0 %v5746
      %7015 = vmatprep.subr.mxu0 %v5711
      %7016 = vmatpush1.msra.mxu0 %v5710
      %7017 = vmatprep.subr.mxu0 %v5675
      %7018 = vmatpush1.msra.mxu0 %v5674
      %7019 = vmatprep.subr.mxu0 %v5639
      %7020 = vmatpush1.msra.mxu0 %v5638
      %7021 = vmatprep.subr.mxu0 %v5603
      %7022 = vmatpush1.msra.mxu0 %v5602
      %7023 = vmatprep.subr.mxu0 %v5567
      %7024 = vmatpush1.msra.mxu0 %v5566
      %7025 = vmatprep.subr.mxu0 %v5531
      %7026 = vmatpush1.msra.mxu0 %v5530
      %7027 = vmatprep.subr.mxu0 %v5495
      %7028 = vmatpush1.msra.mxu0 %v5494
      %7029 = vmatprep.subr.mxu0 %v5459
      %7030 = vmatpush1.msra.mxu0 %v5458
      %7031 = vmatprep.subr.mxu0 %v5423
      %7032 = vmatpush1.msra.mxu0 %v5422
      %7033 = vmatprep.subr.mxu0 %v5387
      %7034 = vmatpush1.msra.mxu0 %v5386
      %7035 = vmatprep.subr.mxu0 %v5351
      %7036 = vmatpush1.msra.mxu0 %v5350
      %7037 = vmatprep.subr.mxu0 %v5315
      %7038 = vmatpush1.msra.mxu0 %v5314
      %7039 = vmatprep.subr.mxu0 %v5279
      %7040 = vmatpush1.msra.mxu0 %v5278
      %7041 = vmatprep.subr.mxu0 %v5243
      %7042 = vmatpush1.msra.mxu0 %v5242
      %7043 = vmatprep.subr.mxu0 %v5207
      %7044 = vmatpush1.msra.mxu0 %v5206
      %7045 = vmatprep.subr.mxu0 0.0
      %7046 = vmatpush2.msra.mxu0 0.0
      %7047 = vmatprep.subr.mxu0 0.0
      %7048 = vmatpush2.msra.mxu0 0.0
      %7049 = vmatprep.subr.mxu0 0.0
      %7050 = vmatpush2.msra.mxu0 0.0
      %7051 = vmatprep.subr.mxu0 0.0
      %7052 = vmatpush2.msra.mxu0 0.0
      %7053 = vmatprep.subr.mxu0 0.0
      %7054 = vmatpush2.msra.mxu0 0.0
      %7055 = vmatprep.subr.mxu0 0.0
      %7056 = vmatpush2.msra.mxu0 0.0
      %7057 = vmatprep.subr.mxu0 0.0
      %7058 = vmatpush2.msra.mxu0 0.0
      %7059 = vmatprep.subr.mxu0 %v6071
      %7060 = vmatpush2.msra.mxu0 %v6070
      %7061 = vmatprep.subr.mxu0 %v6035
      %7062 = vmatpush2.msra.mxu0 %v6034
      %7063 = vmatprep.subr.mxu0 %v5999
      %7064 = vmatpush2.msra.mxu0 %v5998
      %7065 = vmatprep.subr.mxu0 %v5963
      %7066 = vmatpush2.msra.mxu0 %v5962
      %7067 = vmatprep.subr.mxu0 %v5927
      %7068 = vmatpush2.msra.mxu0 %v5926
      %7069 = vmatprep.subr.mxu0 %v5891
      %7070 = vmatpush2.msra.mxu0 %v5890
      %7071 = vmatprep.subr.mxu0 %v5855
      %7072 = vmatpush2.msra.mxu0 %v5854
      %7073 = vmatprep.subr.mxu0 %v5819
      %7074 = vmatpush2.msra.mxu0 %v5818
      %7075 = vmatprep.subr.mxu0 %v5783
      %7076 = vmatpush2.msra.mxu0 %v5782
      %7077 = vmatprep.mubr.f32.mxu0 %v6088
      %7078 = vmatmul.mubr.f32.gmra.mxu0 %v5178
      %v7079 = vpop.f32.mrf.mxu0
      %v7080 = vadd.f32 %v6084, %v7079
      %v7081 = vpop.f32.mrf.mxu0
      %v7082 = vadd.f32 %v6084, %v7081
      %7083 = vdwg.mxu0
      %7084 = vmatprep.subr.mxu0 %v5749
      %7085 = vmatpush1.msra.mxu0 %v5748
      %7086 = vmatprep.subr.mxu0 %v5713
      %7087 = vmatpush1.msra.mxu0 %v5712
      %7088 = vmatprep.subr.mxu0 %v5677
      %7089 = vmatpush1.msra.mxu0 %v5676
      %7090 = vmatprep.subr.mxu0 %v5641
      %7091 = vmatpush1.msra.mxu0 %v5640
      %7092 = vmatprep.subr.mxu0 %v5605
      %7093 = vmatpush1.msra.mxu0 %v5604
      %7094 = vmatprep.subr.mxu0 %v5569
      %7095 = vmatpush1.msra.mxu0 %v5568
      %7096 = vmatprep.subr.mxu0 %v5533
      %7097 = vmatpush1.msra.mxu0 %v5532
      %7098 = vmatprep.subr.mxu0 %v5497
      %7099 = vmatpush1.msra.mxu0 %v5496
      %7100 = vmatprep.subr.mxu0 %v5461
      %7101 = vmatpush1.msra.mxu0 %v5460
      %7102 = vmatprep.subr.mxu0 %v5425
      %7103 = vmatpush1.msra.mxu0 %v5424
      %7104 = vmatprep.subr.mxu0 %v5389
      %7105 = vmatpush1.msra.mxu0 %v5388
      %7106 = vmatprep.subr.mxu0 %v5353
      %7107 = vmatpush1.msra.mxu0 %v5352
      %7108 = vmatprep.subr.mxu0 %v5317
      %7109 = vmatpush1.msra.mxu0 %v5316
      %7110 = vmatprep.subr.mxu0 %v5281
      %7111 = vmatpush1.msra.mxu0 %v5280
      %7112 = vmatprep.subr.mxu0 %v5245
      %7113 = vmatpush1.msra.mxu0 %v5244
      %7114 = vmatprep.subr.mxu0 %v5209
      %7115 = vmatpush1.msra.mxu0 %v5208
      %7116 = vmatprep.subr.mxu0 0.0
      %7117 = vmatpush2.msra.mxu0 0.0
      %7118 = vmatprep.subr.mxu0 0.0
      %7119 = vmatpush2.msra.mxu0 0.0
      %7120 = vmatprep.subr.mxu0 0.0
      %7121 = vmatpush2.msra.mxu0 0.0
      %7122 = vmatprep.subr.mxu0 0.0
      %7123 = vmatpush2.msra.mxu0 0.0
      %7124 = vmatprep.subr.mxu0 0.0
      %7125 = vmatpush2.msra.mxu0 0.0
      %7126 = vmatprep.subr.mxu0 0.0
      %7127 = vmatpush2.msra.mxu0 0.0
      %7128 = vmatprep.subr.mxu0 0.0
      %7129 = vmatpush2.msra.mxu0 0.0
      %7130 = vmatprep.subr.mxu0 %v6073
      %7131 = vmatpush2.msra.mxu0 %v6072
      %7132 = vmatprep.subr.mxu0 %v6037
      %7133 = vmatpush2.msra.mxu0 %v6036
      %7134 = vmatprep.subr.mxu0 %v6001
      %7135 = vmatpush2.msra.mxu0 %v6000
      %7136 = vmatprep.subr.mxu0 %v5965
      %7137 = vmatpush2.msra.mxu0 %v5964
      %7138 = vmatprep.subr.mxu0 %v5929
      %7139 = vmatpush2.msra.mxu0 %v5928
      %7140 = vmatprep.subr.mxu0 %v5893
      %7141 = vmatpush2.msra.mxu0 %v5892
      %7142 = vmatprep.subr.mxu0 %v5857
      %7143 = vmatpush2.msra.mxu0 %v5856
      %7144 = vmatprep.subr.mxu0 %v5821
      %7145 = vmatpush2.msra.mxu0 %v5820
      %7146 = vmatprep.subr.mxu0 %v5785
      %7147 = vmatpush2.msra.mxu0 %v5784
      %7148 = vmatprep.mubr.f32.mxu0 %v6088
      %7149 = vmatmul.mubr.f32.gmra.mxu0 %v5178
      %v7150 = vpop.f32.mrf.mxu0
      %v7151 = vadd.f32 %v6084, %v7150
      %v7152 = vpop.f32.mrf.mxu0
      %v7153 = vadd.f32 %v6084, %v7152
      %7154 = vdwg.mxu0
      %7155 = vmatprep.subr.mxu0 %v5751
      %7156 = vmatpush1.msra.mxu0 %v5750
      %7157 = vmatprep.subr.mxu0 %v5715
      %7158 = vmatpush1.msra.mxu0 %v5714
      %7159 = vmatprep.subr.mxu0 %v5679
      %7160 = vmatpush1.msra.mxu0 %v5678
      %7161 = vmatprep.subr.mxu0 %v5643
      %7162 = vmatpush1.msra.mxu0 %v5642
      %7163 = vmatprep.subr.mxu0 %v5607
      %7164 = vmatpush1.msra.mxu0 %v5606
      %7165 = vmatprep.subr.mxu0 %v5571
      %7166 = vmatpush1.msra.mxu0 %v5570
      %7167 = vmatprep.subr.mxu0 %v5535
      %7168 = vmatpush1.msra.mxu0 %v5534
      %7169 = vmatprep.subr.mxu0 %v5499
      %7170 = vmatpush1.msra.mxu0 %v5498
      %7171 = vmatprep.subr.mxu0 %v5463
      %7172 = vmatpush1.msra.mxu0 %v5462
      %7173 = vmatprep.subr.mxu0 %v5427
      %7174 = vmatpush1.msra.mxu0 %v5426
      %7175 = vmatprep.subr.mxu0 %v5391
      %7176 = vmatpush1.msra.mxu0 %v5390
      %7177 = vmatprep.subr.mxu0 %v5355
      %7178 = vmatpush1.msra.mxu0 %v5354
      %7179 = vmatprep.subr.mxu0 %v5319
      %7180 = vmatpush1.msra.mxu0 %v5318
      %7181 = vmatprep.subr.mxu0 %v5283
      %7182 = vmatpush1.msra.mxu0 %v5282
      %7183 = vmatprep.subr.mxu0 %v5247
      %7184 = vmatpush1.msra.mxu0 %v5246
      %7185 = vmatprep.subr.mxu0 %v5211
      %7186 = vmatpush1.msra.mxu0 %v5210
      %7187 = vmatprep.subr.mxu0 0.0
      %7188 = vmatpush2.msra.mxu0 0.0
      %7189 = vmatprep.subr.mxu0 0.0
      %7190 = vmatpush2.msra.mxu0 0.0
      %7191 = vmatprep.subr.mxu0 0.0
      %7192 = vmatpush2.msra.mxu0 0.0
      %7193 = vmatprep.subr.mxu0 0.0
      %7194 = vmatpush2.msra.mxu0 0.0
      %7195 = vmatprep.subr.mxu0 0.0
      %7196 = vmatpush2.msra.mxu0 0.0
      %7197 = vmatprep.subr.mxu0 0.0
      %7198 = vmatpush2.msra.mxu0 0.0
      %7199 = vmatprep.subr.mxu0 0.0
      %7200 = vmatpush2.msra.mxu0 0.0
      %7201 = vmatprep.subr.mxu0 %v6075
      %7202 = vmatpush2.msra.mxu0 %v6074
      %7203 = vmatprep.subr.mxu0 %v6039
      %7204 = vmatpush2.msra.mxu0 %v6038
      %7205 = vmatprep.subr.mxu0 %v6003
      %7206 = vmatpush2.msra.mxu0 %v6002
      %7207 = vmatprep.subr.mxu0 %v5967
      %7208 = vmatpush2.msra.mxu0 %v5966
      %7209 = vmatprep.subr.mxu0 %v5931
      %7210 = vmatpush2.msra.mxu0 %v5930
      %7211 = vmatprep.subr.mxu0 %v5895
      %7212 = vmatpush2.msra.mxu0 %v5894
      %7213 = vmatprep.subr.mxu0 %v5859
      %7214 = vmatpush2.msra.mxu0 %v5858
      %7215 = vmatprep.subr.mxu0 %v5823
      %7216 = vmatpush2.msra.mxu0 %v5822
      %7217 = vmatprep.subr.mxu0 %v5787
      %7218 = vmatpush2.msra.mxu0 %v5786
      %7219 = vmatprep.mubr.f32.mxu0 %v6088
      %7220 = vmatmul.mubr.f32.gmra.mxu0 %v5178
      %v7221 = vpop.f32.mrf.mxu0
      %v7222 = vadd.f32 %v6084, %v7221
      %v7223 = vpop.f32.mrf.mxu0
      %v7224 = vadd.f32 %v6084, %v7223
      %7225 = vdwg.mxu0
      %7226 = vmatprep.subr.mxu0 %v5753
      %7227 = vmatpush1.msra.mxu0 %v5752
      %7228 = vmatprep.subr.mxu0 %v5717
      %7229 = vmatpush1.msra.mxu0 %v5716
      %7230 = vmatprep.subr.mxu0 %v5681
      %7231 = vmatpush1.msra.mxu0 %v5680
      %7232 = vmatprep.subr.mxu0 %v5645
      %7233 = vmatpush1.msra.mxu0 %v5644
      %7234 = vmatprep.subr.mxu0 %v5609
      %7235 = vmatpush1.msra.mxu0 %v5608
      %7236 = vmatprep.subr.mxu0 %v5573
      %7237 = vmatpush1.msra.mxu0 %v5572
      %7238 = vmatprep.subr.mxu0 %v5537
      %7239 = vmatpush1.msra.mxu0 %v5536
      %7240 = vmatprep.subr.mxu0 %v5501
      %7241 = vmatpush1.msra.mxu0 %v5500
      %7242 = vmatprep.subr.mxu0 %v5465
      %7243 = vmatpush1.msra.mxu0 %v5464
      %7244 = vmatprep.subr.mxu0 %v5429
      %7245 = vmatpush1.msra.mxu0 %v5428
      %7246 = vmatprep.subr.mxu0 %v5393
      %7247 = vmatpush1.msra.mxu0 %v5392
      %7248 = vmatprep.subr.mxu0 %v5357
      %7249 = vmatpush1.msra.mxu0 %v5356
      %7250 = vmatprep.subr.mxu0 %v5321
      %7251 = vmatpush1.msra.mxu0 %v5320
      %7252 = vmatprep.subr.mxu0 %v5285
      %7253 = vmatpush1.msra.mxu0 %v5284
      %7254 = vmatprep.subr.mxu0 %v5249
      %7255 = vmatpush1.msra.mxu0 %v5248
      %7256 = vmatprep.subr.mxu0 %v5213
      %7257 = vmatpush1.msra.mxu0 %v5212
      %7258 = vmatprep.subr.mxu0 0.0
      %7259 = vmatpush2.msra.mxu0 0.0
      %7260 = vmatprep.subr.mxu0 0.0
      %7261 = vmatpush2.msra.mxu0 0.0
      %7262 = vmatprep.subr.mxu0 0.0
      %7263 = vmatpush2.msra.mxu0 0.0
      %7264 = vmatprep.subr.mxu0 0.0
      %7265 = vmatpush2.msra.mxu0 0.0
      %7266 = vmatprep.subr.mxu0 0.0
      %7267 = vmatpush2.msra.mxu0 0.0
      %7268 = vmatprep.subr.mxu0 0.0
      %7269 = vmatpush2.msra.mxu0 0.0
      %7270 = vmatprep.subr.mxu0 0.0
      %7271 = vmatpush2.msra.mxu0 0.0
      %7272 = vmatprep.subr.mxu0 %v6077
      %7273 = vmatpush2.msra.mxu0 %v6076
      %7274 = vmatprep.subr.mxu0 %v6041
      %7275 = vmatpush2.msra.mxu0 %v6040
      %7276 = vmatprep.subr.mxu0 %v6005
      %7277 = vmatpush2.msra.mxu0 %v6004
      %7278 = vmatprep.subr.mxu0 %v5969
      %7279 = vmatpush2.msra.mxu0 %v5968
      %7280 = vmatprep.subr.mxu0 %v5933
      %7281 = vmatpush2.msra.mxu0 %v5932
      %7282 = vmatprep.subr.mxu0 %v5897
      %7283 = vmatpush2.msra.mxu0 %v5896
      %7284 = vmatprep.subr.mxu0 %v5861
      %7285 = vmatpush2.msra.mxu0 %v5860
      %7286 = vmatprep.subr.mxu0 %v5825
      %7287 = vmatpush2.msra.mxu0 %v5824
      %7288 = vmatprep.subr.mxu0 %v5789
      %7289 = vmatpush2.msra.mxu0 %v5788
      %7290 = vmatprep.mubr.f32.mxu0 %v6088
      %7291 = vmatmul.mubr.f32.gmra.mxu0 %v5178
      %v7292 = vpop.f32.mrf.mxu0
      %v7293 = vadd.f32 %v6084, %v7292
      %v7294 = vpop.f32.mrf.mxu0
      %v7295 = vadd.f32 %v6084, %v7294
      %7296 = vdwg.mxu0
      %7297 = vmatprep.subr.mxu0 %v5755
      %7298 = vmatpush1.msra.mxu0 %v5754
      %7299 = vmatprep.subr.mxu0 %v5719
      %7300 = vmatpush1.msra.mxu0 %v5718
      %7301 = vmatprep.subr.mxu0 %v5683
      %7302 = vmatpush1.msra.mxu0 %v5682
      %7303 = vmatprep.subr.mxu0 %v5647
      %7304 = vmatpush1.msra.mxu0 %v5646
      %7305 = vmatprep.subr.mxu0 %v5611
      %7306 = vmatpush1.msra.mxu0 %v5610
      %7307 = vmatprep.subr.mxu0 %v5575
      %7308 = vmatpush1.msra.mxu0 %v5574
      %7309 = vmatprep.subr.mxu0 %v5539
      %7310 = vmatpush1.msra.mxu0 %v5538
      %7311 = vmatprep.subr.mxu0 %v5503
      %7312 = vmatpush1.msra.mxu0 %v5502
      %7313 = vmatprep.subr.mxu0 %v5467
      %7314 = vmatpush1.msra.mxu0 %v5466
      %7315 = vmatprep.subr.mxu0 %v5431
      %7316 = vmatpush1.msra.mxu0 %v5430
      %7317 = vmatprep.subr.mxu0 %v5395
      %7318 = vmatpush1.msra.mxu0 %v5394
      %7319 = vmatprep.subr.mxu0 %v5359
      %7320 = vmatpush1.msra.mxu0 %v5358
      %7321 = vmatprep.subr.mxu0 %v5323
      %7322 = vmatpush1.msra.mxu0 %v5322
      %7323 = vmatprep.subr.mxu0 %v5287
      %7324 = vmatpush1.msra.mxu0 %v5286
      %7325 = vmatprep.subr.mxu0 %v5251
      %7326 = vmatpush1.msra.mxu0 %v5250
      %7327 = vmatprep.subr.mxu0 %v5215
      %7328 = vmatpush1.msra.mxu0 %v5214
      %7329 = vmatprep.subr.mxu0 0.0
      %7330 = vmatpush2.msra.mxu0 0.0
      %7331 = vmatprep.subr.mxu0 0.0
      %7332 = vmatpush2.msra.mxu0 0.0
      %7333 = vmatprep.subr.mxu0 0.0
      %7334 = vmatpush2.msra.mxu0 0.0
      %7335 = vmatprep.subr.mxu0 0.0
      %7336 = vmatpush2.msra.mxu0 0.0
      %7337 = vmatprep.subr.mxu0 0.0
      %7338 = vmatpush2.msra.mxu0 0.0
      %7339 = vmatprep.subr.mxu0 0.0
      %7340 = vmatpush2.msra.mxu0 0.0
      %7341 = vmatprep.subr.mxu0 0.0
      %7342 = vmatpush2.msra.mxu0 0.0
      %7343 = vmatprep.subr.mxu0 %v6079
      %7344 = vmatpush2.msra.mxu0 %v6078
      %7345 = vmatprep.subr.mxu0 %v6043
      %7346 = vmatpush2.msra.mxu0 %v6042
      %7347 = vmatprep.subr.mxu0 %v6007
      %7348 = vmatpush2.msra.mxu0 %v6006
      %7349 = vmatprep.subr.mxu0 %v5971
      %7350 = vmatpush2.msra.mxu0 %v5970
      %7351 = vmatprep.subr.mxu0 %v5935
      %7352 = vmatpush2.msra.mxu0 %v5934
      %7353 = vmatprep.subr.mxu0 %v5899
      %7354 = vmatpush2.msra.mxu0 %v5898
      %7355 = vmatprep.subr.mxu0 %v5863
      %7356 = vmatpush2.msra.mxu0 %v5862
      %7357 = vmatprep.subr.mxu0 %v5827
      %7358 = vmatpush2.msra.mxu0 %v5826
      %7359 = vmatprep.subr.mxu0 %v5791
      %7360 = vmatpush2.msra.mxu0 %v5790
      %7361 = vmatprep.mubr.f32.mxu0 %v6088
      %7362 = vmatmul.mubr.f32.gmra.mxu0 %v5178
      %v7363 = vpop.f32.mrf.mxu0
      %v7364 = vadd.f32 %v6084, %v7363
      %v7365 = vpop.f32.mrf.mxu0
      %v7366 = vadd.f32 %v6084, %v7365
      %7367 = vdwg.mxu0
      %v7368 = vmax.f32 %v6157, 0.0
      %v7369 = vmax.f32 %v6159, 0.0
      %v7370 = vmax.f32 %v6228, 0.0
      %v7371 = vmax.f32 %v6230, 0.0
      %v7372 = vmax.f32 %v6299, 0.0
      %v7373 = vmax.f32 %v6301, 0.0
      %v7374 = vmax.f32 %v6370, 0.0
      %v7375 = vmax.f32 %v6372, 0.0
      %v7376 = vmax.f32 %v6441, 0.0
      %v7377 = vmax.f32 %v6443, 0.0
      %v7378 = vmax.f32 %v6512, 0.0
      %v7379 = vmax.f32 %v6514, 0.0
      %v7380 = vmax.f32 %v6583, 0.0
      %v7381 = vmax.f32 %v6585, 0.0
      %v7382 = vmax.f32 %v6654, 0.0
      %v7383 = vmax.f32 %v6656, 0.0
      %v7384 = vmax.f32 %v6725, 0.0
      %v7385 = vmax.f32 %v6727, 0.0
      %v7386 = vmax.f32 %v6796, 0.0
      %v7387 = vmax.f32 %v6798, 0.0
      %v7388 = vmax.f32 %v6867, 0.0
      %v7389 = vmax.f32 %v6869, 0.0
      %v7390 = vmax.f32 %v6938, 0.0
      %v7391 = vmax.f32 %v6940, 0.0
      %v7392 = vmax.f32 %v7009, 0.0
      %v7393 = vmax.f32 %v7011, 0.0
      %v7394 = vmax.f32 %v7080, 0.0
      %v7395 = vmax.f32 %v7082, 0.0
      %v7396 = vmax.f32 %v7151, 0.0
      %v7397 = vmax.f32 %v7153, 0.0
      %v7398 = vmax.f32 %v7222, 0.0
      %v7399 = vmax.f32 %v7224, 0.0
      %v7400 = vmax.f32 %v7293, 0.0
      %v7401 = vmax.f32 %v7295, 0.0
      %v7402 = vmax.f32 %v7364, 0.0
      %v7403 = vmax.f32 %v7366, 0.0
      %7440 = vrot.lane.b32.xlu0 %v7368, 64
      %v7441 = vpop.permute.xlu0 %7440
      %7442 = vrot.lane.b32.xlu0 %v7369, 64
      %v7443 = vpop.permute.xlu0 %7442
      %7444 = vrot.lane.b32.xlu0 %v7370, 64
      %v7445 = vpop.permute.xlu0 %7444
      %7446 = vrot.lane.b32.xlu0 %v7371, 64
      %v7447 = vpop.permute.xlu0 %7446
      %7448 = vrot.lane.b32.xlu0 %v7372, 64
      %v7449 = vpop.permute.xlu0 %7448
      %7450 = vrot.lane.b32.xlu0 %v7373, 64
      %v7451 = vpop.permute.xlu0 %7450
      %7452 = vrot.lane.b32.xlu0 %v7374, 64
      %v7453 = vpop.permute.xlu0 %7452
      %7454 = vrot.lane.b32.xlu0 %v7375, 64
      %v7455 = vpop.permute.xlu0 %7454
      %7456 = vrot.lane.b32.xlu0 %v7376, 64
      %v7457 = vpop.permute.xlu0 %7456
      %7458 = vrot.lane.b32.xlu0 %v7377, 64
      %v7459 = vpop.permute.xlu0 %7458
      %7460 = vrot.lane.b32.xlu0 %v7378, 64
      %v7461 = vpop.permute.xlu0 %7460
      %7462 = vrot.lane.b32.xlu0 %v7379, 64
      %v7463 = vpop.permute.xlu0 %7462
      %7464 = vrot.lane.b32.xlu0 %v7380, 64
      %v7465 = vpop.permute.xlu0 %7464
      %7466 = vrot.lane.b32.xlu0 %v7381, 64
      %v7467 = vpop.permute.xlu0 %7466
      %7468 = vrot.lane.b32.xlu0 %v7382, 64
      %v7469 = vpop.permute.xlu0 %7468
      %7470 = vrot.lane.b32.xlu0 %v7383, 64
      %v7471 = vpop.permute.xlu0 %7470
      %7472 = vrot.lane.b32.xlu0 %v7384, 64
      %v7473 = vpop.permute.xlu0 %7472
      %7474 = vrot.lane.b32.xlu0 %v7385, 64
      %v7475 = vpop.permute.xlu0 %7474
      %7476 = vrot.lane.b32.xlu0 %v7386, 64
      %v7477 = vpop.permute.xlu0 %7476
      %7478 = vrot.lane.b32.xlu0 %v7387, 64
      %v7479 = vpop.permute.xlu0 %7478
      %7480 = vrot.lane.b32.xlu0 %v7388, 64
      %v7481 = vpop.permute.xlu0 %7480
      %7482 = vrot.lane.b32.xlu0 %v7389, 64
      %v7483 = vpop.permute.xlu0 %7482
      %7484 = vrot.lane.b32.xlu0 %v7390, 64
      %v7485 = vpop.permute.xlu0 %7484
      %7486 = vrot.lane.b32.xlu0 %v7391, 64
      %v7487 = vpop.permute.xlu0 %7486
      %7488 = vrot.lane.b32.xlu0 %v7392, 64
      %v7489 = vpop.permute.xlu0 %7488
      %7490 = vrot.lane.b32.xlu0 %v7393, 64
      %v7491 = vpop.permute.xlu0 %7490
      %7492 = vrot.lane.b32.xlu0 %v7394, 64
      %v7493 = vpop.permute.xlu0 %7492
      %7494 = vrot.lane.b32.xlu0 %v7395, 64
      %v7495 = vpop.permute.xlu0 %7494
      %7496 = vrot.lane.b32.xlu0 %v7396, 64
      %v7497 = vpop.permute.xlu0 %7496
      %7498 = vrot.lane.b32.xlu0 %v7397, 64
      %v7499 = vpop.permute.xlu0 %7498
      %7500 = vrot.lane.b32.xlu0 %v7398, 64
      %v7501 = vpop.permute.xlu0 %7500
      %7502 = vrot.lane.b32.xlu0 %v7399, 64
      %v7503 = vpop.permute.xlu0 %7502
      %7504 = vrot.lane.b32.xlu0 %v7400, 64
      %v7505 = vpop.permute.xlu0 %7504
      %7506 = vrot.lane.b32.xlu0 %v7401, 64
      %v7507 = vpop.permute.xlu0 %7506
      %7508 = vrot.lane.b32.xlu0 %v7402, 64
      %v7509 = vpop.permute.xlu0 %7508
      %7510 = vrot.lane.b32.xlu0 %v7403, 64
      %v7511 = vpop.permute.xlu0 %7510
      %v7512 = vsel %vm501, %v7441, %v7443
      %v7513 = vsel %vm501, %v7443, %v7445
      %v7514 = vsel %vm501, %v7445, %v7447
      %v7515 = vsel %vm501, %v7447, %v7449
      %v7516 = vsel %vm501, %v7449, %v7451
      %v7517 = vsel %vm501, %v7451, %v7453
      %v7518 = vsel %vm501, %v7453, %v7455
      %v7519 = vsel %vm501, %v7455, %v7457
      %v7520 = vsel %vm501, %v7457, %v7459
      %v7521 = vsel %vm501, %v7459, %v7461
      %v7522 = vsel %vm501, %v7461, %v7463
      %v7523 = vsel %vm501, %v7463, %v7465
      %v7524 = vsel %vm501, %v7465, %v7467
      %v7525 = vsel %vm501, %v7467, %v7469
      %v7526 = vsel %vm501, %v7469, %v7471
      %v7527 = vsel %vm501, %v7471, %v7473
      %v7528 = vsel %vm501, %v7473, %v7475
      %v7529 = vsel %vm501, %v7475, %v7477
      %v7530 = vsel %vm501, %v7477, %v7479
      %v7531 = vsel %vm501, %v7479, %v7481
      %v7532 = vsel %vm501, %v7481, %v7483
      %v7533 = vsel %vm501, %v7483, %v7485
      %v7534 = vsel %vm501, %v7485, %v7487
      %v7535 = vsel %vm501, %v7487, %v7489
      %v7536 = vsel %vm501, %v7489, %v7491
      %v7537 = vsel %vm501, %v7491, %v7493
      %v7538 = vsel %vm501, %v7493, %v7495
      %v7539 = vsel %vm501, %v7495, %v7497
      %v7540 = vsel %vm501, %v7497, %v7499
      %v7541 = vsel %vm501, %v7499, %v7501
      %v7542 = vsel %vm501, %v7501, %v7503
      %v7543 = vsel %vm501, %v7503, %v7505
      %v7544 = vsel %vm501, %v7505, %v7507
      %v7545 = vsel %vm501, %v7507, %v7509
      %v7546 = vsel %vm501, %v7509, %v7511
      %v7582 = vmax.f32 %v7368, %v7512
      %v7583 = vmax.f32 %v7369, %v7513
      %v7584 = vmax.f32 %v7370, %v7514
      %v7585 = vmax.f32 %v7371, %v7515
      %v7586 = vmax.f32 %v7372, %v7516
      %v7587 = vmax.f32 %v7373, %v7517
      %v7588 = vmax.f32 %v7374, %v7518
      %v7589 = vmax.f32 %v7375, %v7519
      %v7590 = vmax.f32 %v7376, %v7520
      %v7591 = vmax.f32 %v7377, %v7521
      %v7592 = vmax.f32 %v7378, %v7522
      %v7593 = vmax.f32 %v7379, %v7523
      %v7594 = vmax.f32 %v7380, %v7524
      %v7595 = vmax.f32 %v7381, %v7525
      %v7596 = vmax.f32 %v7382, %v7526
      %v7597 = vmax.f32 %v7383, %v7527
      %v7598 = vmax.f32 %v7384, %v7528
      %v7599 = vmax.f32 %v7385, %v7529
      %v7600 = vmax.f32 %v7386, %v7530
      %v7601 = vmax.f32 %v7387, %v7531
      %v7602 = vmax.f32 %v7388, %v7532
      %v7603 = vmax.f32 %v7389, %v7533
      %v7604 = vmax.f32 %v7390, %v7534
      %v7605 = vmax.f32 %v7391, %v7535
      %v7606 = vmax.f32 %v7392, %v7536
      %v7607 = vmax.f32 %v7393, %v7537
      %v7608 = vmax.f32 %v7394, %v7538
      %v7609 = vmax.f32 %v7395, %v7539
      %v7610 = vmax.f32 %v7396, %v7540
      %v7611 = vmax.f32 %v7397, %v7541
      %v7612 = vmax.f32 %v7398, %v7542
      %v7613 = vmax.f32 %v7399, %v7543
      %v7614 = vmax.f32 %v7400, %v7544
      %v7615 = vmax.f32 %v7401, %v7545
      %v7616 = vmax.f32 %v7402, %v7546
      %v7617 = vmax.f32 %v7582, %v7369
      %v7618 = vmax.f32 %v7583, %v7370
      %v7619 = vmax.f32 %v7584, %v7371
      %v7620 = vmax.f32 %v7585, %v7372
      %v7621 = vmax.f32 %v7586, %v7373
      %v7622 = vmax.f32 %v7587, %v7374
      %v7623 = vmax.f32 %v7588, %v7375
      %v7624 = vmax.f32 %v7589, %v7376
      %v7625 = vmax.f32 %v7590, %v7377
      %v7626 = vmax.f32 %v7591, %v7378
      %v7627 = vmax.f32 %v7592, %v7379
      %v7628 = vmax.f32 %v7593, %v7380
      %v7629 = vmax.f32 %v7594, %v7381
      %v7630 = vmax.f32 %v7595, %v7382
      %v7631 = vmax.f32 %v7596, %v7383
      %v7632 = vmax.f32 %v7597, %v7384
      %v7633 = vmax.f32 %v7598, %v7385
      %v7634 = vmax.f32 %v7599, %v7386
      %v7635 = vmax.f32 %v7600, %v7387
      %v7636 = vmax.f32 %v7601, %v7388
      %v7637 = vmax.f32 %v7602, %v7389
      %v7638 = vmax.f32 %v7603, %v7390
      %v7639 = vmax.f32 %v7604, %v7391
      %v7640 = vmax.f32 %v7605, %v7392
      %v7641 = vmax.f32 %v7606, %v7393
      %v7642 = vmax.f32 %v7607, %v7394
      %v7643 = vmax.f32 %v7608, %v7395
      %v7644 = vmax.f32 %v7609, %v7396
      %v7645 = vmax.f32 %v7610, %v7397
      %v7646 = vmax.f32 %v7611, %v7398
      %v7647 = vmax.f32 %v7612, %v7399
      %v7648 = vmax.f32 %v7613, %v7400
      %v7649 = vmax.f32 %v7614, %v7401
      %v7650 = vmax.f32 %v7615, %v7402
      %v7651 = vmax.f32 %v7616, %v7403
      %7687 = vrot.lane.b32.xlu0 %v7617, 127
      %v7688 = vpop.permute.xlu0 %7687
      %7689 = vrot.lane.b32.xlu0 %v7618, 127
      %v7690 = vpop.permute.xlu0 %7689
      %7691 = vrot.lane.b32.xlu0 %v7619, 127
      %v7692 = vpop.permute.xlu0 %7691
      %7693 = vrot.lane.b32.xlu0 %v7620, 127
      %v7694 = vpop.permute.xlu0 %7693
      %7695 = vrot.lane.b32.xlu0 %v7621, 127
      %v7696 = vpop.permute.xlu0 %7695
      %7697 = vrot.lane.b32.xlu0 %v7622, 127
      %v7698 = vpop.permute.xlu0 %7697
      %7699 = vrot.lane.b32.xlu0 %v7623, 127
      %v7700 = vpop.permute.xlu0 %7699
      %7701 = vrot.lane.b32.xlu0 %v7624, 127
      %v7702 = vpop.permute.xlu0 %7701
      %7703 = vrot.lane.b32.xlu0 %v7625, 127
      %v7704 = vpop.permute.xlu0 %7703
      %7705 = vrot.lane.b32.xlu0 %v7626, 127
      %v7706 = vpop.permute.xlu0 %7705
      %7707 = vrot.lane.b32.xlu0 %v7627, 127
      %v7708 = vpop.permute.xlu0 %7707
      %7709 = vrot.lane.b32.xlu0 %v7628, 127
      %v7710 = vpop.permute.xlu0 %7709
      %7711 = vrot.lane.b32.xlu0 %v7629, 127
      %v7712 = vpop.permute.xlu0 %7711
      %7713 = vrot.lane.b32.xlu0 %v7630, 127
      %v7714 = vpop.permute.xlu0 %7713
      %7715 = vrot.lane.b32.xlu0 %v7631, 127
      %v7716 = vpop.permute.xlu0 %7715
      %7717 = vrot.lane.b32.xlu0 %v7632, 127
      %v7718 = vpop.permute.xlu0 %7717
      %7719 = vrot.lane.b32.xlu0 %v7633, 127
      %v7720 = vpop.permute.xlu0 %7719
      %7721 = vrot.lane.b32.xlu0 %v7634, 127
      %v7722 = vpop.permute.xlu0 %7721
      %7723 = vrot.lane.b32.xlu0 %v7635, 127
      %v7724 = vpop.permute.xlu0 %7723
      %7725 = vrot.lane.b32.xlu0 %v7636, 127
      %v7726 = vpop.permute.xlu0 %7725
      %7727 = vrot.lane.b32.xlu0 %v7637, 127
      %v7728 = vpop.permute.xlu0 %7727
      %7729 = vrot.lane.b32.xlu0 %v7638, 127
      %v7730 = vpop.permute.xlu0 %7729
      %7731 = vrot.lane.b32.xlu0 %v7639, 127
      %v7732 = vpop.permute.xlu0 %7731
      %7733 = vrot.lane.b32.xlu0 %v7640, 127
      %v7734 = vpop.permute.xlu0 %7733
      %7735 = vrot.lane.b32.xlu0 %v7641, 127
      %v7736 = vpop.permute.xlu0 %7735
      %7737 = vrot.lane.b32.xlu0 %v7642, 127
      %v7738 = vpop.permute.xlu0 %7737
      %7739 = vrot.lane.b32.xlu0 %v7643, 127
      %v7740 = vpop.permute.xlu0 %7739
      %7741 = vrot.lane.b32.xlu0 %v7644, 127
      %v7742 = vpop.permute.xlu0 %7741
      %7743 = vrot.lane.b32.xlu0 %v7645, 127
      %v7744 = vpop.permute.xlu0 %7743
      %7745 = vrot.lane.b32.xlu0 %v7646, 127
      %v7746 = vpop.permute.xlu0 %7745
      %7747 = vrot.lane.b32.xlu0 %v7647, 127
      %v7748 = vpop.permute.xlu0 %7747
      %7749 = vrot.lane.b32.xlu0 %v7648, 127
      %v7750 = vpop.permute.xlu0 %7749
      %7751 = vrot.lane.b32.xlu0 %v7649, 127
      %v7752 = vpop.permute.xlu0 %7751
      %7753 = vrot.lane.b32.xlu0 %v7650, 127
      %v7754 = vpop.permute.xlu0 %7753
      %7755 = vrot.lane.b32.xlu0 %v7651, 127
      %v7756 = vpop.permute.xlu0 %7755
      %v7757 = vsel %vm321, %v7688, %v7690
      %v7758 = vsel %vm321, %v7690, %v7692
      %v7759 = vsel %vm321, %v7692, %v7694
      %v7760 = vsel %vm321, %v7694, %v7696
      %v7761 = vsel %vm321, %v7696, %v7698
      %v7762 = vsel %vm321, %v7698, %v7700
      %v7763 = vsel %vm321, %v7700, %v7702
      %v7764 = vsel %vm321, %v7702, %v7704
      %v7765 = vsel %vm321, %v7704, %v7706
      %v7766 = vsel %vm321, %v7706, %v7708
      %v7767 = vsel %vm321, %v7708, %v7710
      %v7768 = vsel %vm321, %v7710, %v7712
      %v7769 = vsel %vm321, %v7712, %v7714
      %v7770 = vsel %vm321, %v7714, %v7716
      %v7771 = vsel %vm321, %v7716, %v7718
      %v7772 = vsel %vm321, %v7718, %v7720
      %v7773 = vsel %vm321, %v7720, %v7722
      %v7774 = vsel %vm321, %v7722, %v7724
      %v7775 = vsel %vm321, %v7724, %v7726
      %v7776 = vsel %vm321, %v7726, %v7728
      %v7777 = vsel %vm321, %v7728, %v7730
      %v7778 = vsel %vm321, %v7730, %v7732
      %v7779 = vsel %vm321, %v7732, %v7734
      %v7780 = vsel %vm321, %v7734, %v7736
      %v7781 = vsel %vm321, %v7736, %v7738
      %v7782 = vsel %vm321, %v7738, %v7740
      %v7783 = vsel %vm321, %v7740, %v7742
      %v7784 = vsel %vm321, %v7742, %v7744
      %v7785 = vsel %vm321, %v7744, %v7746
      %v7786 = vsel %vm321, %v7746, %v7748
      %v7787 = vsel %vm321, %v7748, %v7750
      %v7788 = vsel %vm321, %v7750, %v7752
      %v7789 = vsel %vm321, %v7752, %v7754
      %v7790 = vsel %vm321, %v7754, %v7756
      %v7826 = vmax.f32 %v7617, %v7757
      %v7827 = vmax.f32 %v7618, %v7758
      %v7828 = vmax.f32 %v7619, %v7759
      %v7829 = vmax.f32 %v7620, %v7760
      %v7830 = vmax.f32 %v7621, %v7761
      %v7831 = vmax.f32 %v7622, %v7762
      %v7832 = vmax.f32 %v7623, %v7763
      %v7833 = vmax.f32 %v7624, %v7764
      %v7834 = vmax.f32 %v7625, %v7765
      %v7835 = vmax.f32 %v7626, %v7766
      %v7836 = vmax.f32 %v7627, %v7767
      %v7837 = vmax.f32 %v7628, %v7768
      %v7838 = vmax.f32 %v7629, %v7769
      %v7839 = vmax.f32 %v7630, %v7770
      %v7840 = vmax.f32 %v7631, %v7771
      %v7841 = vmax.f32 %v7632, %v7772
      %v7842 = vmax.f32 %v7633, %v7773
      %v7843 = vmax.f32 %v7634, %v7774
      %v7844 = vmax.f32 %v7635, %v7775
      %v7845 = vmax.f32 %v7636, %v7776
      %v7846 = vmax.f32 %v7637, %v7777
      %v7847 = vmax.f32 %v7638, %v7778
      %v7848 = vmax.f32 %v7639, %v7779
      %v7849 = vmax.f32 %v7640, %v7780
      %v7850 = vmax.f32 %v7641, %v7781
      %v7851 = vmax.f32 %v7642, %v7782
      %v7852 = vmax.f32 %v7643, %v7783
      %v7853 = vmax.f32 %v7644, %v7784
      %v7854 = vmax.f32 %v7645, %v7785
      %v7855 = vmax.f32 %v7646, %v7786
      %v7856 = vmax.f32 %v7647, %v7787
      %v7857 = vmax.f32 %v7648, %v7788
      %v7858 = vmax.f32 %v7649, %v7789
      %v7859 = vmax.f32 %v7650, %v7790
      %v7860 = vmax.f32 %v7651, %v7756
      %7861 = vrot.lane.b32.xlu0 %v7617, 126
      %v7862 = vpop.permute.xlu0 %7861
      %7863 = vrot.lane.b32.xlu0 %v7618, 126
      %v7864 = vpop.permute.xlu0 %7863
      %7865 = vrot.lane.b32.xlu0 %v7619, 126
      %v7866 = vpop.permute.xlu0 %7865
      %7867 = vrot.lane.b32.xlu0 %v7620, 126
      %v7868 = vpop.permute.xlu0 %7867
      %7869 = vrot.lane.b32.xlu0 %v7621, 126
      %v7870 = vpop.permute.xlu0 %7869
      %7871 = vrot.lane.b32.xlu0 %v7622, 126
      %v7872 = vpop.permute.xlu0 %7871
      %7873 = vrot.lane.b32.xlu0 %v7623, 126
      %v7874 = vpop.permute.xlu0 %7873
      %7875 = vrot.lane.b32.xlu0 %v7624, 126
      %v7876 = vpop.permute.xlu0 %7875
      %7877 = vrot.lane.b32.xlu0 %v7625, 126
      %v7878 = vpop.permute.xlu0 %7877
      %7879 = vrot.lane.b32.xlu0 %v7626, 126
      %v7880 = vpop.permute.xlu0 %7879
      %7881 = vrot.lane.b32.xlu0 %v7627, 126
      %v7882 = vpop.permute.xlu0 %7881
      %7883 = vrot.lane.b32.xlu0 %v7628, 126
      %v7884 = vpop.permute.xlu0 %7883
      %7885 = vrot.lane.b32.xlu0 %v7629, 126
      %v7886 = vpop.permute.xlu0 %7885
      %7887 = vrot.lane.b32.xlu0 %v7630, 126
      %v7888 = vpop.permute.xlu0 %7887
      %7889 = vrot.lane.b32.xlu0 %v7631, 126
      %v7890 = vpop.permute.xlu0 %7889
      %7891 = vrot.lane.b32.xlu0 %v7632, 126
      %v7892 = vpop.permute.xlu0 %7891
      %7893 = vrot.lane.b32.xlu0 %v7633, 126
      %v7894 = vpop.permute.xlu0 %7893
      %7895 = vrot.lane.b32.xlu0 %v7634, 126
      %v7896 = vpop.permute.xlu0 %7895
      %7897 = vrot.lane.b32.xlu0 %v7635, 126
      %v7898 = vpop.permute.xlu0 %7897
      %7899 = vrot.lane.b32.xlu0 %v7636, 126
      %v7900 = vpop.permute.xlu0 %7899
      %7901 = vrot.lane.b32.xlu0 %v7637, 126
      %v7902 = vpop.permute.xlu0 %7901
      %7903 = vrot.lane.b32.xlu0 %v7638, 126
      %v7904 = vpop.permute.xlu0 %7903
      %7905 = vrot.lane.b32.xlu0 %v7639, 126
      %v7906 = vpop.permute.xlu0 %7905
      %7907 = vrot.lane.b32.xlu0 %v7640, 126
      %v7908 = vpop.permute.xlu0 %7907
      %7909 = vrot.lane.b32.xlu0 %v7641, 126
      %v7910 = vpop.permute.xlu0 %7909
      %7911 = vrot.lane.b32.xlu0 %v7642, 126
      %v7912 = vpop.permute.xlu0 %7911
      %7913 = vrot.lane.b32.xlu0 %v7643, 126
      %v7914 = vpop.permute.xlu0 %7913
      %7915 = vrot.lane.b32.xlu0 %v7644, 126
      %v7916 = vpop.permute.xlu0 %7915
      %7917 = vrot.lane.b32.xlu0 %v7645, 126
      %v7918 = vpop.permute.xlu0 %7917
      %7919 = vrot.lane.b32.xlu0 %v7646, 126
      %v7920 = vpop.permute.xlu0 %7919
      %7921 = vrot.lane.b32.xlu0 %v7647, 126
      %v7922 = vpop.permute.xlu0 %7921
      %7923 = vrot.lane.b32.xlu0 %v7648, 126
      %v7924 = vpop.permute.xlu0 %7923
      %7925 = vrot.lane.b32.xlu0 %v7649, 126
      %v7926 = vpop.permute.xlu0 %7925
      %7927 = vrot.lane.b32.xlu0 %v7650, 126
      %v7928 = vpop.permute.xlu0 %7927
      %7929 = vrot.lane.b32.xlu0 %v7651, 126
      %v7930 = vpop.permute.xlu0 %7929
      %v7931 = vsel %vm366, %v7862, %v7864
      %v7932 = vsel %vm366, %v7864, %v7866
      %v7933 = vsel %vm366, %v7866, %v7868
      %v7934 = vsel %vm366, %v7868, %v7870
      %v7935 = vsel %vm366, %v7870, %v7872
      %v7936 = vsel %vm366, %v7872, %v7874
      %v7937 = vsel %vm366, %v7874, %v7876
      %v7938 = vsel %vm366, %v7876, %v7878
      %v7939 = vsel %vm366, %v7878, %v7880
      %v7940 = vsel %vm366, %v7880, %v7882
      %v7941 = vsel %vm366, %v7882, %v7884
      %v7942 = vsel %vm366, %v7884, %v7886
      %v7943 = vsel %vm366, %v7886, %v7888
      %v7944 = vsel %vm366, %v7888, %v7890
      %v7945 = vsel %vm366, %v7890, %v7892
      %v7946 = vsel %vm366, %v7892, %v7894
      %v7947 = vsel %vm366, %v7894, %v7896
      %v7948 = vsel %vm366, %v7896, %v7898
      %v7949 = vsel %vm366, %v7898, %v7900
      %v7950 = vsel %vm366, %v7900, %v7902
      %v7951 = vsel %vm366, %v7902, %v7904
      %v7952 = vsel %vm366, %v7904, %v7906
      %v7953 = vsel %vm366, %v7906, %v7908
      %v7954 = vsel %vm366, %v7908, %v7910
      %v7955 = vsel %vm366, %v7910, %v7912
      %v7956 = vsel %vm366, %v7912, %v7914
      %v7957 = vsel %vm366, %v7914, %v7916
      %v7958 = vsel %vm366, %v7916, %v7918
      %v7959 = vsel %vm366, %v7918, %v7920
      %v7960 = vsel %vm366, %v7920, %v7922
      %v7961 = vsel %vm366, %v7922, %v7924
      %v7962 = vsel %vm366, %v7924, %v7926
      %v7963 = vsel %vm366, %v7926, %v7928
      %v7964 = vsel %vm366, %v7928, %v7930
      %v8000 = vmax.f32 %v7826, %v7931
      %v8001 = vmax.f32 %v7827, %v7932
      %v8002 = vmax.f32 %v7828, %v7933
      %v8003 = vmax.f32 %v7829, %v7934
      %v8004 = vmax.f32 %v7830, %v7935
      %v8005 = vmax.f32 %v7831, %v7936
      %v8006 = vmax.f32 %v7832, %v7937
      %v8007 = vmax.f32 %v7833, %v7938
      %v8008 = vmax.f32 %v7834, %v7939
      %v8009 = vmax.f32 %v7835, %v7940
      %v8010 = vmax.f32 %v7836, %v7941
      %v8011 = vmax.f32 %v7837, %v7942
      %v8012 = vmax.f32 %v7838, %v7943
      %v8013 = vmax.f32 %v7839, %v7944
      %v8014 = vmax.f32 %v7840, %v7945
      %v8015 = vmax.f32 %v7841, %v7946
      %v8016 = vmax.f32 %v7842, %v7947
      %v8017 = vmax.f32 %v7843, %v7948
      %v8018 = vmax.f32 %v7844, %v7949
      %v8019 = vmax.f32 %v7845, %v7950
      %v8020 = vmax.f32 %v7846, %v7951
      %v8021 = vmax.f32 %v7847, %v7952
      %v8022 = vmax.f32 %v7848, %v7953
      %v8023 = vmax.f32 %v7849, %v7954
      %v8024 = vmax.f32 %v7850, %v7955
      %v8025 = vmax.f32 %v7851, %v7956
      %v8026 = vmax.f32 %v7852, %v7957
      %v8027 = vmax.f32 %v7853, %v7958
      %v8028 = vmax.f32 %v7854, %v7959
      %v8029 = vmax.f32 %v7855, %v7960
      %v8030 = vmax.f32 %v7856, %v7961
      %v8031 = vmax.f32 %v7857, %v7962
      %v8032 = vmax.f32 %v7858, %v7963
      %v8033 = vmax.f32 %v7859, %v7964
      %v8034 = vmax.f32 %v7860, %v7930
      %8035 = vst [vmem:[#allocation4] sm:$0xff] %v8000
      %8036 = vst [vmem:[#allocation4 + $0x8] sm:$0xff] %v8001
      %8037 = vst [vmem:[#allocation4 + $0x10] sm:$0xff] %v8002
      %8038 = vst [vmem:[#allocation4 + $0x18] sm:$0xff] %v8003
      %8039 = vst [vmem:[#allocation4 + $0x20] sm:$0xff] %v8004
      %8040 = vst [vmem:[#allocation4 + $0x28] sm:$0xff] %v8005
      %8041 = vst [vmem:[#allocation4 + $0x30] sm:$0xff] %v8006
      %8042 = vst [vmem:[#allocation4 + $0x38] sm:$0xff] %v8007
      %8043 = vst [vmem:[#allocation4 + $0x40] sm:$0xff] %v8008
      %8044 = vst [vmem:[#allocation4 + $0x48] sm:$0xff] %v8009
      %8045 = vst [vmem:[#allocation4 + $0x50] sm:$0xff] %v8010
      %8046 = vst [vmem:[#allocation4 + $0x58] sm:$0xff] %v8011
      %8047 = vst [vmem:[#allocation4 + $0x60] sm:$0xff] %v8012
      %8048 = vst [vmem:[#allocation4 + $0x68] sm:$0xff] %v8013
      %8049 = vst [vmem:[#allocation4 + $0x70] sm:$0xff] %v8014
      %8050 = vst [vmem:[#allocation4 + $0x78] sm:$0xff] %v8015
      %8051 = vst [vmem:[#allocation4 + $0x80] sm:$0xff] %v8016
      %8052 = vst [vmem:[#allocation4 + $0x88] sm:$0xff] %v8017
      %8053 = vst [vmem:[#allocation4 + $0x90] sm:$0xff] %v8018
      %8054 = vst [vmem:[#allocation4 + $0x98] sm:$0xff] %v8019
      %8055 = vst [vmem:[#allocation4 + $0xa0] sm:$0xff] %v8020
      %8056 = vst [vmem:[#allocation4 + $0xa8] sm:$0xff] %v8021
      %8057 = vst [vmem:[#allocation4 + $0xb0] sm:$0xff] %v8022
      %8058 = vst [vmem:[#allocation4 + $0xb8] sm:$0xff] %v8023
      %8059 = vst [vmem:[#allocation4 + $0xc0] sm:$0xff] %v8024
      %8060 = vst [vmem:[#allocation4 + $0xc8] sm:$0xff] %v8025
      %8061 = vst [vmem:[#allocation4 + $0xd0] sm:$0xff] %v8026
      %8062 = vst [vmem:[#allocation4 + $0xd8] sm:$0xff] %v8027
      %8063 = vst [vmem:[#allocation4 + $0xe0] sm:$0xff] %v8028
      %8064 = vst [vmem:[#allocation4 + $0xe8] sm:$0xff] %v8029
      %8065 = vst [vmem:[#allocation4 + $0xf0] sm:$0xff] %v8030
      %vm8066 = vcmask 932864
      %8067 = vst.msk [vmem:[#allocation4 + $0xf8] sm:$0xff] %vm8066, %v8031
      %8100 = vrot.lane.b32.xlu0 %v8000, 126
      %v8101 = vpop.permute.xlu0 %8100
      %8102 = vrot.lane.b32.xlu0 %v8001, 126
      %v8103 = vpop.permute.xlu0 %8102
      %8104 = vrot.lane.b32.xlu0 %v8002, 126
      %v8105 = vpop.permute.xlu0 %8104
      %8106 = vrot.lane.b32.xlu0 %v8003, 126
      %v8107 = vpop.permute.xlu0 %8106
      %8108 = vrot.lane.b32.xlu0 %v8004, 126
      %v8109 = vpop.permute.xlu0 %8108
      %8110 = vrot.lane.b32.xlu0 %v8005, 126
      %v8111 = vpop.permute.xlu0 %8110
      %8112 = vrot.lane.b32.xlu0 %v8006, 126
      %v8113 = vpop.permute.xlu0 %8112
      %8114 = vrot.lane.b32.xlu0 %v8007, 126
      %v8115 = vpop.permute.xlu0 %8114
      %8116 = vrot.lane.b32.xlu0 %v8008, 126
      %v8117 = vpop.permute.xlu0 %8116
      %8118 = vrot.lane.b32.xlu0 %v8009, 126
      %v8119 = vpop.permute.xlu0 %8118
      %8120 = vrot.lane.b32.xlu0 %v8010, 126
      %v8121 = vpop.permute.xlu0 %8120
      %8122 = vrot.lane.b32.xlu0 %v8011, 126
      %v8123 = vpop.permute.xlu0 %8122
      %8124 = vrot.lane.b32.xlu0 %v8012, 126
      %v8125 = vpop.permute.xlu0 %8124
      %8126 = vrot.lane.b32.xlu0 %v8013, 126
      %v8127 = vpop.permute.xlu0 %8126
      %8128 = vrot.lane.b32.xlu0 %v8014, 126
      %v8129 = vpop.permute.xlu0 %8128
      %8130 = vrot.lane.b32.xlu0 %v8015, 126
      %v8131 = vpop.permute.xlu0 %8130
      %8132 = vrot.lane.b32.xlu0 %v8016, 126
      %v8133 = vpop.permute.xlu0 %8132
      %8134 = vrot.lane.b32.xlu0 %v8017, 126
      %v8135 = vpop.permute.xlu0 %8134
      %8136 = vrot.lane.b32.xlu0 %v8018, 126
      %v8137 = vpop.permute.xlu0 %8136
      %8138 = vrot.lane.b32.xlu0 %v8019, 126
      %v8139 = vpop.permute.xlu0 %8138
      %8140 = vrot.lane.b32.xlu0 %v8020, 126
      %v8141 = vpop.permute.xlu0 %8140
      %8142 = vrot.lane.b32.xlu0 %v8021, 126
      %v8143 = vpop.permute.xlu0 %8142
      %8144 = vrot.lane.b32.xlu0 %v8022, 126
      %v8145 = vpop.permute.xlu0 %8144
      %8146 = vrot.lane.b32.xlu0 %v8023, 126
      %v8147 = vpop.permute.xlu0 %8146
      %8148 = vrot.lane.b32.xlu0 %v8024, 126
      %v8149 = vpop.permute.xlu0 %8148
      %8150 = vrot.lane.b32.xlu0 %v8025, 126
      %v8151 = vpop.permute.xlu0 %8150
      %8152 = vrot.lane.b32.xlu0 %v8026, 126
      %v8153 = vpop.permute.xlu0 %8152
      %8154 = vrot.lane.b32.xlu0 %v8027, 126
      %v8155 = vpop.permute.xlu0 %8154
      %8156 = vrot.lane.b32.xlu0 %v8028, 126
      %v8157 = vpop.permute.xlu0 %8156
      %8158 = vrot.lane.b32.xlu0 %v8029, 126
      %v8159 = vpop.permute.xlu0 %8158
      %8160 = vrot.lane.b32.xlu0 %v8030, 126
      %v8161 = vpop.permute.xlu0 %8160
      %8162 = vrot.lane.b32.xlu0 %v8031, 126
      %v8163 = vpop.permute.xlu0 %8162
      %v8164 = vsel %vm366, %v8101, %v8103
      %v8165 = vsel %vm366, %v8103, %v8105
      %v8166 = vsel %vm366, %v8105, %v8107
      %v8167 = vsel %vm366, %v8107, %v8109
      %v8168 = vsel %vm366, %v8109, %v8111
      %v8169 = vsel %vm366, %v8111, %v8113
      %v8170 = vsel %vm366, %v8113, %v8115
      %v8171 = vsel %vm366, %v8115, %v8117
      %v8172 = vsel %vm366, %v8117, %v8119
      %v8173 = vsel %vm366, %v8119, %v8121
      %v8174 = vsel %vm366, %v8121, %v8123
      %v8175 = vsel %vm366, %v8123, %v8125
      %v8176 = vsel %vm366, %v8125, %v8127
      %v8177 = vsel %vm366, %v8127, %v8129
      %v8178 = vsel %vm366, %v8129, %v8131
      %v8179 = vsel %vm366, %v8131, %v8133
      %v8180 = vsel %vm366, %v8133, %v8135
      %v8181 = vsel %vm366, %v8135, %v8137
      %v8182 = vsel %vm366, %v8137, %v8139
      %v8183 = vsel %vm366, %v8139, %v8141
      %v8184 = vsel %vm366, %v8141, %v8143
      %v8185 = vsel %vm366, %v8143, %v8145
      %v8186 = vsel %vm366, %v8145, %v8147
      %v8187 = vsel %vm366, %v8147, %v8149
      %v8188 = vsel %vm366, %v8149, %v8151
      %v8189 = vsel %vm366, %v8151, %v8153
      %v8190 = vsel %vm366, %v8153, %v8155
      %v8191 = vsel %vm366, %v8155, %v8157
      %v8192 = vsel %vm366, %v8157, %v8159
      %v8193 = vsel %vm366, %v8159, %v8161
      %v8194 = vsel %vm366, %v8161, %v8163
      %8227 = vst [vmem:[#allocation4 + $0x100] sm:$0xff] %v8164
      %8228 = vst [vmem:[#allocation4 + $0x108] sm:$0xff] %v8165
      %8229 = vst [vmem:[#allocation4 + $0x110] sm:$0xff] %v8166
      %8230 = vst [vmem:[#allocation4 + $0x118] sm:$0xff] %v8167
      %8231 = vst [vmem:[#allocation4 + $0x120] sm:$0xff] %v8168
      %8232 = vst [vmem:[#allocation4 + $0x128] sm:$0xff] %v8169
      %8233 = vst [vmem:[#allocation4 + $0x130] sm:$0xff] %v8170
      %8234 = vst [vmem:[#allocation4 + $0x138] sm:$0xff] %v8171
      %8235 = vst [vmem:[#allocation4 + $0x140] sm:$0xff] %v8172
      %8236 = vst [vmem:[#allocation4 + $0x148] sm:$0xff] %v8173
      %8237 = vst [vmem:[#allocation4 + $0x150] sm:$0xff] %v8174
      %8238 = vst [vmem:[#allocation4 + $0x158] sm:$0xff] %v8175
      %8239 = vst [vmem:[#allocation4 + $0x160] sm:$0xff] %v8176
      %8240 = vst [vmem:[#allocation4 + $0x168] sm:$0xff] %v8177
      %8241 = vst [vmem:[#allocation4 + $0x170] sm:$0xff] %v8178
      %8242 = vst [vmem:[#allocation4 + $0x178] sm:$0xff] %v8179
      %8243 = vst [vmem:[#allocation4 + $0x180] sm:$0xff] %v8180
      %8244 = vst [vmem:[#allocation4 + $0x188] sm:$0xff] %v8181
      %8245 = vst [vmem:[#allocation4 + $0x190] sm:$0xff] %v8182
      %8246 = vst [vmem:[#allocation4 + $0x198] sm:$0xff] %v8183
      %8247 = vst [vmem:[#allocation4 + $0x1a0] sm:$0xff] %v8184
      %8248 = vst [vmem:[#allocation4 + $0x1a8] sm:$0xff] %v8185
      %8249 = vst [vmem:[#allocation4 + $0x1b0] sm:$0xff] %v8186
      %8250 = vst [vmem:[#allocation4 + $0x1b8] sm:$0xff] %v8187
      %8251 = vst [vmem:[#allocation4 + $0x1c0] sm:$0xff] %v8188
      %8252 = vst [vmem:[#allocation4 + $0x1c8] sm:$0xff] %v8189
      %8253 = vst [vmem:[#allocation4 + $0x1d0] sm:$0xff] %v8190
      %8254 = vst [vmem:[#allocation4 + $0x1d8] sm:$0xff] %v8191
      %8255 = vst [vmem:[#allocation4 + $0x1e0] sm:$0xff] %v8192
      %8256 = vst [vmem:[#allocation4 + $0x1e8] sm:$0xff] %v8193
      %8257 = vst [vmem:[#allocation4 + $0x1f0] sm:$0xff] %v8194
      %8258 = vst.msk [vmem:[#allocation4 + $0x1f8] sm:$0xff] %vm8066, %v8163
      %8259 = vrot.lane.b32.xlu0 %v8000, 124
      %v8260 = vpop.permute.xlu0 %8259
      %8261 = vrot.lane.b32.xlu0 %v8001, 124
      %v8262 = vpop.permute.xlu0 %8261
      %8263 = vrot.lane.b32.xlu0 %v8002, 124
      %v8264 = vpop.permute.xlu0 %8263
      %8265 = vrot.lane.b32.xlu0 %v8003, 124
      %v8266 = vpop.permute.xlu0 %8265
      %8267 = vrot.lane.b32.xlu0 %v8004, 124
      %v8268 = vpop.permute.xlu0 %8267
      %8269 = vrot.lane.b32.xlu0 %v8005, 124
      %v8270 = vpop.permute.xlu0 %8269
      %8271 = vrot.lane.b32.xlu0 %v8006, 124
      %v8272 = vpop.permute.xlu0 %8271
      %8273 = vrot.lane.b32.xlu0 %v8007, 124
      %v8274 = vpop.permute.xlu0 %8273
      %8275 = vrot.lane.b32.xlu0 %v8008, 124
      %v8276 = vpop.permute.xlu0 %8275
      %8277 = vrot.lane.b32.xlu0 %v8009, 124
      %v8278 = vpop.permute.xlu0 %8277
      %8279 = vrot.lane.b32.xlu0 %v8010, 124
      %v8280 = vpop.permute.xlu0 %8279
      %8281 = vrot.lane.b32.xlu0 %v8011, 124
      %v8282 = vpop.permute.xlu0 %8281
      %8283 = vrot.lane.b32.xlu0 %v8012, 124
      %v8284 = vpop.permute.xlu0 %8283
      %8285 = vrot.lane.b32.xlu0 %v8013, 124
      %v8286 = vpop.permute.xlu0 %8285
      %8287 = vrot.lane.b32.xlu0 %v8014, 124
      %v8288 = vpop.permute.xlu0 %8287
      %8289 = vrot.lane.b32.xlu0 %v8015, 124
      %v8290 = vpop.permute.xlu0 %8289
      %8291 = vrot.lane.b32.xlu0 %v8016, 124
      %v8292 = vpop.permute.xlu0 %8291
      %8293 = vrot.lane.b32.xlu0 %v8017, 124
      %v8294 = vpop.permute.xlu0 %8293
      %8295 = vrot.lane.b32.xlu0 %v8018, 124
      %v8296 = vpop.permute.xlu0 %8295
      %8297 = vrot.lane.b32.xlu0 %v8019, 124
      %v8298 = vpop.permute.xlu0 %8297
      %8299 = vrot.lane.b32.xlu0 %v8020, 124
      %v8300 = vpop.permute.xlu0 %8299
      %8301 = vrot.lane.b32.xlu0 %v8021, 124
      %v8302 = vpop.permute.xlu0 %8301
      %8303 = vrot.lane.b32.xlu0 %v8022, 124
      %v8304 = vpop.permute.xlu0 %8303
      %8305 = vrot.lane.b32.xlu0 %v8023, 124
      %v8306 = vpop.permute.xlu0 %8305
      %8307 = vrot.lane.b32.xlu0 %v8024, 124
      %v8308 = vpop.permute.xlu0 %8307
      %8309 = vrot.lane.b32.xlu0 %v8025, 124
      %v8310 = vpop.permute.xlu0 %8309
      %8311 = vrot.lane.b32.xlu0 %v8026, 124
      %v8312 = vpop.permute.xlu0 %8311
      %8313 = vrot.lane.b32.xlu0 %v8027, 124
      %v8314 = vpop.permute.xlu0 %8313
      %8315 = vrot.lane.b32.xlu0 %v8028, 124
      %v8316 = vpop.permute.xlu0 %8315
      %8317 = vrot.lane.b32.xlu0 %v8029, 124
      %v8318 = vpop.permute.xlu0 %8317
      %8319 = vrot.lane.b32.xlu0 %v8030, 124
      %v8320 = vpop.permute.xlu0 %8319
      %8321 = vrot.lane.b32.xlu0 %v8031, 124
      %v8322 = vpop.permute.xlu0 %8321
      %v8323 = vsel %vm456, %v8260, %v8262
      %v8324 = vsel %vm456, %v8262, %v8264
      %v8325 = vsel %vm456, %v8264, %v8266
      %v8326 = vsel %vm456, %v8266, %v8268
      %v8327 = vsel %vm456, %v8268, %v8270
      %v8328 = vsel %vm456, %v8270, %v8272
      %v8329 = vsel %vm456, %v8272, %v8274
      %v8330 = vsel %vm456, %v8274, %v8276
      %v8331 = vsel %vm456, %v8276, %v8278
      %v8332 = vsel %vm456, %v8278, %v8280
      %v8333 = vsel %vm456, %v8280, %v8282
      %v8334 = vsel %vm456, %v8282, %v8284
      %v8335 = vsel %vm456, %v8284, %v8286
      %v8336 = vsel %vm456, %v8286, %v8288
      %v8337 = vsel %vm456, %v8288, %v8290
      %v8338 = vsel %vm456, %v8290, %v8292
      %v8339 = vsel %vm456, %v8292, %v8294
      %v8340 = vsel %vm456, %v8294, %v8296
      %v8341 = vsel %vm456, %v8296, %v8298
      %v8342 = vsel %vm456, %v8298, %v8300
      %v8343 = vsel %vm456, %v8300, %v8302
      %v8344 = vsel %vm456, %v8302, %v8304
      %v8345 = vsel %vm456, %v8304, %v8306
      %v8346 = vsel %vm456, %v8306, %v8308
      %v8347 = vsel %vm456, %v8308, %v8310
      %v8348 = vsel %vm456, %v8310, %v8312
      %v8349 = vsel %vm456, %v8312, %v8314
      %v8350 = vsel %vm456, %v8314, %v8316
      %v8351 = vsel %vm456, %v8316, %v8318
      %v8352 = vsel %vm456, %v8318, %v8320
      %v8353 = vsel %vm456, %v8320, %v8322
      %8386 = vst [vmem:[#allocation4 + $0x200] sm:$0xff] %v8323
      %8387 = vst [vmem:[#allocation4 + $0x208] sm:$0xff] %v8324
      %8388 = vst [vmem:[#allocation4 + $0x210] sm:$0xff] %v8325
      %8389 = vst [vmem:[#allocation4 + $0x218] sm:$0xff] %v8326
      %8390 = vst [vmem:[#allocation4 + $0x220] sm:$0xff] %v8327
      %8391 = vst [vmem:[#allocation4 + $0x228] sm:$0xff] %v8328
      %8392 = vst [vmem:[#allocation4 + $0x230] sm:$0xff] %v8329
      %8393 = vst [vmem:[#allocation4 + $0x238] sm:$0xff] %v8330
      %8394 = vst [vmem:[#allocation4 + $0x240] sm:$0xff] %v8331
      %8395 = vst [vmem:[#allocation4 + $0x248] sm:$0xff] %v8332
      %8396 = vst [vmem:[#allocation4 + $0x250] sm:$0xff] %v8333
      %8397 = vst [vmem:[#allocation4 + $0x258] sm:$0xff] %v8334
      %8398 = vst [vmem:[#allocation4 + $0x260] sm:$0xff] %v8335
      %8399 = vst [vmem:[#allocation4 + $0x268] sm:$0xff] %v8336
      %8400 = vst [vmem:[#allocation4 + $0x270] sm:$0xff] %v8337
      %8401 = vst [vmem:[#allocation4 + $0x278] sm:$0xff] %v8338
      %8402 = vst [vmem:[#allocation4 + $0x280] sm:$0xff] %v8339
      %8403 = vst [vmem:[#allocation4 + $0x288] sm:$0xff] %v8340
      %8404 = vst [vmem:[#allocation4 + $0x290] sm:$0xff] %v8341
      %8405 = vst [vmem:[#allocation4 + $0x298] sm:$0xff] %v8342
      %8406 = vst [vmem:[#allocation4 + $0x2a0] sm:$0xff] %v8343
      %8407 = vst [vmem:[#allocation4 + $0x2a8] sm:$0xff] %v8344
      %8408 = vst [vmem:[#allocation4 + $0x2b0] sm:$0xff] %v8345
      %8409 = vst [vmem:[#allocation4 + $0x2b8] sm:$0xff] %v8346
      %8410 = vst [vmem:[#allocation4 + $0x2c0] sm:$0xff] %v8347
      %8411 = vst [vmem:[#allocation4 + $0x2c8] sm:$0xff] %v8348
      %8412 = vst [vmem:[#allocation4 + $0x2d0] sm:$0xff] %v8349
      %8413 = vst [vmem:[#allocation4 + $0x2d8] sm:$0xff] %v8350
      %8414 = vst [vmem:[#allocation4 + $0x2e0] sm:$0xff] %v8351
      %8415 = vst [vmem:[#allocation4 + $0x2e8] sm:$0xff] %v8352
      %8416 = vst [vmem:[#allocation4 + $0x2f0] sm:$0xff] %v8353
      %8417 = vst.msk [vmem:[#allocation4 + $0x2f8] sm:$0xff] %vm8066, %v8322
      %8420 = vrot.lane.b32.xlu0 %v8001, 64
      %v8421 = vpop.permute.xlu0 %8420
      %8422 = vrot.lane.b32.xlu0 %v8002, 64
      %v8423 = vpop.permute.xlu0 %8422
      %8424 = vrot.lane.b32.xlu0 %v8003, 64
      %v8425 = vpop.permute.xlu0 %8424
      %8426 = vrot.lane.b32.xlu0 %v8004, 64
      %v8427 = vpop.permute.xlu0 %8426
      %8428 = vrot.lane.b32.xlu0 %v8005, 64
      %v8429 = vpop.permute.xlu0 %8428
      %8430 = vrot.lane.b32.xlu0 %v8006, 64
      %v8431 = vpop.permute.xlu0 %8430
      %8432 = vrot.lane.b32.xlu0 %v8007, 64
      %v8433 = vpop.permute.xlu0 %8432
      %8434 = vrot.lane.b32.xlu0 %v8008, 64
      %v8435 = vpop.permute.xlu0 %8434
      %8436 = vrot.lane.b32.xlu0 %v8009, 64
      %v8437 = vpop.permute.xlu0 %8436
      %8438 = vrot.lane.b32.xlu0 %v8010, 64
      %v8439 = vpop.permute.xlu0 %8438
      %8440 = vrot.lane.b32.xlu0 %v8011, 64
      %v8441 = vpop.permute.xlu0 %8440
      %8442 = vrot.lane.b32.xlu0 %v8012, 64
      %v8443 = vpop.permute.xlu0 %8442
      %8444 = vrot.lane.b32.xlu0 %v8013, 64
      %v8445 = vpop.permute.xlu0 %8444
      %8446 = vrot.lane.b32.xlu0 %v8014, 64
      %v8447 = vpop.permute.xlu0 %8446
      %8448 = vrot.lane.b32.xlu0 %v8015, 64
      %v8449 = vpop.permute.xlu0 %8448
      %8450 = vrot.lane.b32.xlu0 %v8016, 64
      %v8451 = vpop.permute.xlu0 %8450
      %8452 = vrot.lane.b32.xlu0 %v8017, 64
      %v8453 = vpop.permute.xlu0 %8452
      %8454 = vrot.lane.b32.xlu0 %v8018, 64
      %v8455 = vpop.permute.xlu0 %8454
      %8456 = vrot.lane.b32.xlu0 %v8019, 64
      %v8457 = vpop.permute.xlu0 %8456
      %8458 = vrot.lane.b32.xlu0 %v8020, 64
      %v8459 = vpop.permute.xlu0 %8458
      %8460 = vrot.lane.b32.xlu0 %v8021, 64
      %v8461 = vpop.permute.xlu0 %8460
      %8462 = vrot.lane.b32.xlu0 %v8022, 64
      %v8463 = vpop.permute.xlu0 %8462
      %8464 = vrot.lane.b32.xlu0 %v8023, 64
      %v8465 = vpop.permute.xlu0 %8464
      %8466 = vrot.lane.b32.xlu0 %v8024, 64
      %v8467 = vpop.permute.xlu0 %8466
      %8468 = vrot.lane.b32.xlu0 %v8025, 64
      %v8469 = vpop.permute.xlu0 %8468
      %8470 = vrot.lane.b32.xlu0 %v8026, 64
      %v8471 = vpop.permute.xlu0 %8470
      %8472 = vrot.lane.b32.xlu0 %v8027, 64
      %v8473 = vpop.permute.xlu0 %8472
      %8474 = vrot.lane.b32.xlu0 %v8028, 64
      %v8475 = vpop.permute.xlu0 %8474
      %8476 = vrot.lane.b32.xlu0 %v8029, 64
      %v8477 = vpop.permute.xlu0 %8476
      %8478 = vrot.lane.b32.xlu0 %v8030, 64
      %v8479 = vpop.permute.xlu0 %8478
      %8480 = vrot.lane.b32.xlu0 %v8031, 64
      %v8481 = vpop.permute.xlu0 %8480
      %8482 = vrot.lane.b32.xlu0 %v8032, 64
      %v8483 = vpop.permute.xlu0 %8482
      %8484 = vrot.lane.b32.xlu0 %v8033, 64
      %v8485 = vpop.permute.xlu0 %8484
      %v8486 = vsel %vm501, %v8421, %v8423
      %v8487 = vsel %vm501, %v8423, %v8425
      %v8488 = vsel %vm501, %v8425, %v8427
      %v8489 = vsel %vm501, %v8427, %v8429
      %v8490 = vsel %vm501, %v8429, %v8431
      %v8491 = vsel %vm501, %v8431, %v8433
      %v8492 = vsel %vm501, %v8433, %v8435
      %v8493 = vsel %vm501, %v8435, %v8437
      %v8494 = vsel %vm501, %v8437, %v8439
      %v8495 = vsel %vm501, %v8439, %v8441
      %v8496 = vsel %vm501, %v8441, %v8443
      %v8497 = vsel %vm501, %v8443, %v8445
      %v8498 = vsel %vm501, %v8445, %v8447
      %v8499 = vsel %vm501, %v8447, %v8449
      %v8500 = vsel %vm501, %v8449, %v8451
      %v8501 = vsel %vm501, %v8451, %v8453
      %v8502 = vsel %vm501, %v8453, %v8455
      %v8503 = vsel %vm501, %v8455, %v8457
      %v8504 = vsel %vm501, %v8457, %v8459
      %v8505 = vsel %vm501, %v8459, %v8461
      %v8506 = vsel %vm501, %v8461, %v8463
      %v8507 = vsel %vm501, %v8463, %v8465
      %v8508 = vsel %vm501, %v8465, %v8467
      %v8509 = vsel %vm501, %v8467, %v8469
      %v8510 = vsel %vm501, %v8469, %v8471
      %v8511 = vsel %vm501, %v8471, %v8473
      %v8512 = vsel %vm501, %v8473, %v8475
      %v8513 = vsel %vm501, %v8475, %v8477
      %v8514 = vsel %vm501, %v8477, %v8479
      %v8515 = vsel %vm501, %v8479, %v8481
      %v8516 = vsel %vm501, %v8481, %v8483
      %v8517 = vsel %vm501, %v8483, %v8485
      %8550 = vst [vmem:[#allocation4 + $0x300] sm:$0xff] %v8486
      %8551 = vst [vmem:[#allocation4 + $0x308] sm:$0xff] %v8487
      %8552 = vst [vmem:[#allocation4 + $0x310] sm:$0xff] %v8488
      %8553 = vst [vmem:[#allocation4 + $0x318] sm:$0xff] %v8489
      %8554 = vst [vmem:[#allocation4 + $0x320] sm:$0xff] %v8490
      %8555 = vst [vmem:[#allocation4 + $0x328] sm:$0xff] %v8491
      %8556 = vst [vmem:[#allocation4 + $0x330] sm:$0xff] %v8492
      %8557 = vst [vmem:[#allocation4 + $0x338] sm:$0xff] %v8493
      %8558 = vst [vmem:[#allocation4 + $0x340] sm:$0xff] %v8494
      %8559 = vst [vmem:[#allocation4 + $0x348] sm:$0xff] %v8495
      %8560 = vst [vmem:[#allocation4 + $0x350] sm:$0xff] %v8496
      %8561 = vst [vmem:[#allocation4 + $0x358] sm:$0xff] %v8497
      %8562 = vst [vmem:[#allocation4 + $0x360] sm:$0xff] %v8498
      %8563 = vst [vmem:[#allocation4 + $0x368] sm:$0xff] %v8499
      %8564 = vst [vmem:[#allocation4 + $0x370] sm:$0xff] %v8500
      %8565 = vst [vmem:[#allocation4 + $0x378] sm:$0xff] %v8501
      %8566 = vst [vmem:[#allocation4 + $0x380] sm:$0xff] %v8502
      %8567 = vst [vmem:[#allocation4 + $0x388] sm:$0xff] %v8503
      %8568 = vst [vmem:[#allocation4 + $0x390] sm:$0xff] %v8504
      %8569 = vst [vmem:[#allocation4 + $0x398] sm:$0xff] %v8505
      %8570 = vst [vmem:[#allocation4 + $0x3a0] sm:$0xff] %v8506
      %8571 = vst [vmem:[#allocation4 + $0x3a8] sm:$0xff] %v8507
      %8572 = vst [vmem:[#allocation4 + $0x3b0] sm:$0xff] %v8508
      %8573 = vst [vmem:[#allocation4 + $0x3b8] sm:$0xff] %v8509
      %8574 = vst [vmem:[#allocation4 + $0x3c0] sm:$0xff] %v8510
      %8575 = vst [vmem:[#allocation4 + $0x3c8] sm:$0xff] %v8511
      %8576 = vst [vmem:[#allocation4 + $0x3d0] sm:$0xff] %v8512
      %8577 = vst [vmem:[#allocation4 + $0x3d8] sm:$0xff] %v8513
      %8578 = vst [vmem:[#allocation4 + $0x3e0] sm:$0xff] %v8514
      %8579 = vst [vmem:[#allocation4 + $0x3e8] sm:$0xff] %v8515
      %8580 = vst [vmem:[#allocation4 + $0x3f0] sm:$0xff] %v8516
      %8581 = vst.msk [vmem:[#allocation4 + $0x3f8] sm:$0xff] %vm8066, %v8517
      %8582 = vrot.lane.b32.xlu0 %v8001, 62
      %v8583 = vpop.permute.xlu0 %8582
      %8584 = vrot.lane.b32.xlu0 %v8002, 62
      %v8585 = vpop.permute.xlu0 %8584
      %8586 = vrot.lane.b32.xlu0 %v8003, 62
      %v8587 = vpop.permute.xlu0 %8586
      %8588 = vrot.lane.b32.xlu0 %v8004, 62
      %v8589 = vpop.permute.xlu0 %8588
      %8590 = vrot.lane.b32.xlu0 %v8005, 62
      %v8591 = vpop.permute.xlu0 %8590
      %8592 = vrot.lane.b32.xlu0 %v8006, 62
      %v8593 = vpop.permute.xlu0 %8592
      %8594 = vrot.lane.b32.xlu0 %v8007, 62
      %v8595 = vpop.permute.xlu0 %8594
      %8596 = vrot.lane.b32.xlu0 %v8008, 62
      %v8597 = vpop.permute.xlu0 %8596
      %8598 = vrot.lane.b32.xlu0 %v8009, 62
      %v8599 = vpop.permute.xlu0 %8598
      %8600 = vrot.lane.b32.xlu0 %v8010, 62
      %v8601 = vpop.permute.xlu0 %8600
      %8602 = vrot.lane.b32.xlu0 %v8011, 62
      %v8603 = vpop.permute.xlu0 %8602
      %8604 = vrot.lane.b32.xlu0 %v8012, 62
      %v8605 = vpop.permute.xlu0 %8604
      %8606 = vrot.lane.b32.xlu0 %v8013, 62
      %v8607 = vpop.permute.xlu0 %8606
      %8608 = vrot.lane.b32.xlu0 %v8014, 62
      %v8609 = vpop.permute.xlu0 %8608
      %8610 = vrot.lane.b32.xlu0 %v8015, 62
      %v8611 = vpop.permute.xlu0 %8610
      %8612 = vrot.lane.b32.xlu0 %v8016, 62
      %v8613 = vpop.permute.xlu0 %8612
      %8614 = vrot.lane.b32.xlu0 %v8017, 62
      %v8615 = vpop.permute.xlu0 %8614
      %8616 = vrot.lane.b32.xlu0 %v8018, 62
      %v8617 = vpop.permute.xlu0 %8616
      %8618 = vrot.lane.b32.xlu0 %v8019, 62
      %v8619 = vpop.permute.xlu0 %8618
      %8620 = vrot.lane.b32.xlu0 %v8020, 62
      %v8621 = vpop.permute.xlu0 %8620
      %8622 = vrot.lane.b32.xlu0 %v8021, 62
      %v8623 = vpop.permute.xlu0 %8622
      %8624 = vrot.lane.b32.xlu0 %v8022, 62
      %v8625 = vpop.permute.xlu0 %8624
      %8626 = vrot.lane.b32.xlu0 %v8023, 62
      %v8627 = vpop.permute.xlu0 %8626
      %8628 = vrot.lane.b32.xlu0 %v8024, 62
      %v8629 = vpop.permute.xlu0 %8628
      %8630 = vrot.lane.b32.xlu0 %v8025, 62
      %v8631 = vpop.permute.xlu0 %8630
      %8632 = vrot.lane.b32.xlu0 %v8026, 62
      %v8633 = vpop.permute.xlu0 %8632
      %8634 = vrot.lane.b32.xlu0 %v8027, 62
      %v8635 = vpop.permute.xlu0 %8634
      %8636 = vrot.lane.b32.xlu0 %v8028, 62
      %v8637 = vpop.permute.xlu0 %8636
      %8638 = vrot.lane.b32.xlu0 %v8029, 62
      %v8639 = vpop.permute.xlu0 %8638
      %8640 = vrot.lane.b32.xlu0 %v8030, 62
      %v8641 = vpop.permute.xlu0 %8640
      %8642 = vrot.lane.b32.xlu0 %v8031, 62
      %v8643 = vpop.permute.xlu0 %8642
      %8644 = vrot.lane.b32.xlu0 %v8032, 62
      %v8645 = vpop.permute.xlu0 %8644
      %8646 = vrot.lane.b32.xlu0 %v8033, 62
      %v8647 = vpop.permute.xlu0 %8646
      %v8648 = vsel %vm591, %v8583, %v8585
      %v8649 = vsel %vm591, %v8585, %v8587
      %v8650 = vsel %vm591, %v8587, %v8589
      %v8651 = vsel %vm591, %v8589, %v8591
      %v8652 = vsel %vm591, %v8591, %v8593
      %v8653 = vsel %vm591, %v8593, %v8595
      %v8654 = vsel %vm591, %v8595, %v8597
      %v8655 = vsel %vm591, %v8597, %v8599
      %v8656 = vsel %vm591, %v8599, %v8601
      %v8657 = vsel %vm591, %v8601, %v8603
      %v8658 = vsel %vm591, %v8603, %v8605
      %v8659 = vsel %vm591, %v8605, %v8607
      %v8660 = vsel %vm591, %v8607, %v8609
      %v8661 = vsel %vm591, %v8609, %v8611
      %v8662 = vsel %vm591, %v8611, %v8613
      %v8663 = vsel %vm591, %v8613, %v8615
      %v8664 = vsel %vm591, %v8615, %v8617
      %v8665 = vsel %vm591, %v8617, %v8619
      %v8666 = vsel %vm591, %v8619, %v8621
      %v8667 = vsel %vm591, %v8621, %v8623
      %v8668 = vsel %vm591, %v8623, %v8625
      %v8669 = vsel %vm591, %v8625, %v8627
      %v8670 = vsel %vm591, %v8627, %v8629
      %v8671 = vsel %vm591, %v8629, %v8631
      %v8672 = vsel %vm591, %v8631, %v8633
      %v8673 = vsel %vm591, %v8633, %v8635
      %v8674 = vsel %vm591, %v8635, %v8637
      %v8675 = vsel %vm591, %v8637, %v8639
      %v8676 = vsel %vm591, %v8639, %v8641
      %v8677 = vsel %vm591, %v8641, %v8643
      %v8678 = vsel %vm591, %v8643, %v8645
      %v8679 = vsel %vm591, %v8645, %v8647
      %8712 = vst [vmem:[#allocation4 + $0x400] sm:$0xff] %v8648
      %8713 = vst [vmem:[#allocation4 + $0x408] sm:$0xff] %v8649
      %8714 = vst [vmem:[#allocation4 + $0x410] sm:$0xff] %v8650
      %8715 = vst [vmem:[#allocation4 + $0x418] sm:$0xff] %v8651
      %8716 = vst [vmem:[#allocation4 + $0x420] sm:$0xff] %v8652
      %8717 = vst [vmem:[#allocation4 + $0x428] sm:$0xff] %v8653
      %8718 = vst [vmem:[#allocation4 + $0x430] sm:$0xff] %v8654
      %8719 = vst [vmem:[#allocation4 + $0x438] sm:$0xff] %v8655
      %8720 = vst [vmem:[#allocation4 + $0x440] sm:$0xff] %v8656
      %8721 = vst [vmem:[#allocation4 + $0x448] sm:$0xff] %v8657
      %8722 = vst [vmem:[#allocation4 + $0x450] sm:$0xff] %v8658
      %8723 = vst [vmem:[#allocation4 + $0x458] sm:$0xff] %v8659
      %8724 = vst [vmem:[#allocation4 + $0x460] sm:$0xff] %v8660
      %8725 = vst [vmem:[#allocation4 + $0x468] sm:$0xff] %v8661
      %8726 = vst [vmem:[#allocation4 + $0x470] sm:$0xff] %v8662
      %8727 = vst [vmem:[#allocation4 + $0x478] sm:$0xff] %v8663
      %8728 = vst [vmem:[#allocation4 + $0x480] sm:$0xff] %v8664
      %8729 = vst [vmem:[#allocation4 + $0x488] sm:$0xff] %v8665
      %8730 = vst [vmem:[#allocation4 + $0x490] sm:$0xff] %v8666
      %8731 = vst [vmem:[#allocation4 + $0x498] sm:$0xff] %v8667
      %8732 = vst [vmem:[#allocation4 + $0x4a0] sm:$0xff] %v8668
      %8733 = vst [vmem:[#allocation4 + $0x4a8] sm:$0xff] %v8669
      %8734 = vst [vmem:[#allocation4 + $0x4b0] sm:$0xff] %v8670
      %8735 = vst [vmem:[#allocation4 + $0x4b8] sm:$0xff] %v8671
      %8736 = vst [vmem:[#allocation4 + $0x4c0] sm:$0xff] %v8672
      %8737 = vst [vmem:[#allocation4 + $0x4c8] sm:$0xff] %v8673
      %8738 = vst [vmem:[#allocation4 + $0x4d0] sm:$0xff] %v8674
      %8739 = vst [vmem:[#allocation4 + $0x4d8] sm:$0xff] %v8675
      %8740 = vst [vmem:[#allocation4 + $0x4e0] sm:$0xff] %v8676
      %8741 = vst [vmem:[#allocation4 + $0x4e8] sm:$0xff] %v8677
      %8742 = vst [vmem:[#allocation4 + $0x4f0] sm:$0xff] %v8678
      %8743 = vst.msk [vmem:[#allocation4 + $0x4f8] sm:$0xff] %vm8066, %v8679
      %8744 = vrot.lane.b32.xlu0 %v8001, 60
      %v8745 = vpop.permute.xlu0 %8744
      %8746 = vrot.lane.b32.xlu0 %v8002, 60
      %v8747 = vpop.permute.xlu0 %8746
      %8748 = vrot.lane.b32.xlu0 %v8003, 60
      %v8749 = vpop.permute.xlu0 %8748
      %8750 = vrot.lane.b32.xlu0 %v8004, 60
      %v8751 = vpop.permute.xlu0 %8750
      %8752 = vrot.lane.b32.xlu0 %v8005, 60
      %v8753 = vpop.permute.xlu0 %8752
      %8754 = vrot.lane.b32.xlu0 %v8006, 60
      %v8755 = vpop.permute.xlu0 %8754
      %8756 = vrot.lane.b32.xlu0 %v8007, 60
      %v8757 = vpop.permute.xlu0 %8756
      %8758 = vrot.lane.b32.xlu0 %v8008, 60
      %v8759 = vpop.permute.xlu0 %8758
      %8760 = vrot.lane.b32.xlu0 %v8009, 60
      %v8761 = vpop.permute.xlu0 %8760
      %8762 = vrot.lane.b32.xlu0 %v8010, 60
      %v8763 = vpop.permute.xlu0 %8762
      %8764 = vrot.lane.b32.xlu0 %v8011, 60
      %v8765 = vpop.permute.xlu0 %8764
      %8766 = vrot.lane.b32.xlu0 %v8012, 60
      %v8767 = vpop.permute.xlu0 %8766
      %8768 = vrot.lane.b32.xlu0 %v8013, 60
      %v8769 = vpop.permute.xlu0 %8768
      %8770 = vrot.lane.b32.xlu0 %v8014, 60
      %v8771 = vpop.permute.xlu0 %8770
      %8772 = vrot.lane.b32.xlu0 %v8015, 60
      %v8773 = vpop.permute.xlu0 %8772
      %8774 = vrot.lane.b32.xlu0 %v8016, 60
      %v8775 = vpop.permute.xlu0 %8774
      %8776 = vrot.lane.b32.xlu0 %v8017, 60
      %v8777 = vpop.permute.xlu0 %8776
      %8778 = vrot.lane.b32.xlu0 %v8018, 60
      %v8779 = vpop.permute.xlu0 %8778
      %8780 = vrot.lane.b32.xlu0 %v8019, 60
      %v8781 = vpop.permute.xlu0 %8780
      %8782 = vrot.lane.b32.xlu0 %v8020, 60
      %v8783 = vpop.permute.xlu0 %8782
      %8784 = vrot.lane.b32.xlu0 %v8021, 60
      %v8785 = vpop.permute.xlu0 %8784
      %8786 = vrot.lane.b32.xlu0 %v8022, 60
      %v8787 = vpop.permute.xlu0 %8786
      %8788 = vrot.lane.b32.xlu0 %v8023, 60
      %v8789 = vpop.permute.xlu0 %8788
      %8790 = vrot.lane.b32.xlu0 %v8024, 60
      %v8791 = vpop.permute.xlu0 %8790
      %8792 = vrot.lane.b32.xlu0 %v8025, 60
      %v8793 = vpop.permute.xlu0 %8792
      %8794 = vrot.lane.b32.xlu0 %v8026, 60
      %v8795 = vpop.permute.xlu0 %8794
      %8796 = vrot.lane.b32.xlu0 %v8027, 60
      %v8797 = vpop.permute.xlu0 %8796
      %8798 = vrot.lane.b32.xlu0 %v8028, 60
      %v8799 = vpop.permute.xlu0 %8798
      %8800 = vrot.lane.b32.xlu0 %v8029, 60
      %v8801 = vpop.permute.xlu0 %8800
      %8802 = vrot.lane.b32.xlu0 %v8030, 60
      %v8803 = vpop.permute.xlu0 %8802
      %8804 = vrot.lane.b32.xlu0 %v8031, 60
      %v8805 = vpop.permute.xlu0 %8804
      %8806 = vrot.lane.b32.xlu0 %v8032, 60
      %v8807 = vpop.permute.xlu0 %8806
      %8808 = vrot.lane.b32.xlu0 %v8033, 60
      %v8809 = vpop.permute.xlu0 %8808
      %v8810 = vsel %vm681, %v8745, %v8747
      %v8811 = vsel %vm681, %v8747, %v8749
      %v8812 = vsel %vm681, %v8749, %v8751
      %v8813 = vsel %vm681, %v8751, %v8753
      %v8814 = vsel %vm681, %v8753, %v8755
      %v8815 = vsel %vm681, %v8755, %v8757
      %v8816 = vsel %vm681, %v8757, %v8759
      %v8817 = vsel %vm681, %v8759, %v8761
      %v8818 = vsel %vm681, %v8761, %v8763
      %v8819 = vsel %vm681, %v8763, %v8765
      %v8820 = vsel %vm681, %v8765, %v8767
      %v8821 = vsel %vm681, %v8767, %v8769
      %v8822 = vsel %vm681, %v8769, %v8771
      %v8823 = vsel %vm681, %v8771, %v8773
      %v8824 = vsel %vm681, %v8773, %v8775
      %v8825 = vsel %vm681, %v8775, %v8777
      %v8826 = vsel %vm681, %v8777, %v8779
      %v8827 = vsel %vm681, %v8779, %v8781
      %v8828 = vsel %vm681, %v8781, %v8783
      %v8829 = vsel %vm681, %v8783, %v8785
      %v8830 = vsel %vm681, %v8785, %v8787
      %v8831 = vsel %vm681, %v8787, %v8789
      %v8832 = vsel %vm681, %v8789, %v8791
      %v8833 = vsel %vm681, %v8791, %v8793
      %v8834 = vsel %vm681, %v8793, %v8795
      %v8835 = vsel %vm681, %v8795, %v8797
      %v8836 = vsel %vm681, %v8797, %v8799
      %v8837 = vsel %vm681, %v8799, %v8801
      %v8838 = vsel %vm681, %v8801, %v8803
      %v8839 = vsel %vm681, %v8803, %v8805
      %v8840 = vsel %vm681, %v8805, %v8807
      %v8841 = vsel %vm681, %v8807, %v8809
      %8874 = vst [vmem:[#allocation4 + $0x500] sm:$0xff] %v8810
      %8875 = vst [vmem:[#allocation4 + $0x508] sm:$0xff] %v8811
      %8876 = vst [vmem:[#allocation4 + $0x510] sm:$0xff] %v8812
      %8877 = vst [vmem:[#allocation4 + $0x518] sm:$0xff] %v8813
      %8878 = vst [vmem:[#allocation4 + $0x520] sm:$0xff] %v8814
      %8879 = vst [vmem:[#allocation4 + $0x528] sm:$0xff] %v8815
      %8880 = vst [vmem:[#allocation4 + $0x530] sm:$0xff] %v8816
      %8881 = vst [vmem:[#allocation4 + $0x538] sm:$0xff] %v8817
      %8882 = vst [vmem:[#allocation4 + $0x540] sm:$0xff] %v8818
      %8883 = vst [vmem:[#allocation4 + $0x548] sm:$0xff] %v8819
      %8884 = vst [vmem:[#allocation4 + $0x550] sm:$0xff] %v8820
      %8885 = vst [vmem:[#allocation4 + $0x558] sm:$0xff] %v8821
      %8886 = vst [vmem:[#allocation4 + $0x560] sm:$0xff] %v8822
      %8887 = vst [vmem:[#allocation4 + $0x568] sm:$0xff] %v8823
      %8888 = vst [vmem:[#allocation4 + $0x570] sm:$0xff] %v8824
      %8889 = vst [vmem:[#allocation4 + $0x578] sm:$0xff] %v8825
      %8890 = vst [vmem:[#allocation4 + $0x580] sm:$0xff] %v8826
      %8891 = vst [vmem:[#allocation4 + $0x588] sm:$0xff] %v8827
      %8892 = vst [vmem:[#allocation4 + $0x590] sm:$0xff] %v8828
      %8893 = vst [vmem:[#allocation4 + $0x598] sm:$0xff] %v8829
      %8894 = vst [vmem:[#allocation4 + $0x5a0] sm:$0xff] %v8830
      %8895 = vst [vmem:[#allocation4 + $0x5a8] sm:$0xff] %v8831
      %8896 = vst [vmem:[#allocation4 + $0x5b0] sm:$0xff] %v8832
      %8897 = vst [vmem:[#allocation4 + $0x5b8] sm:$0xff] %v8833
      %8898 = vst [vmem:[#allocation4 + $0x5c0] sm:$0xff] %v8834
      %8899 = vst [vmem:[#allocation4 + $0x5c8] sm:$0xff] %v8835
      %8900 = vst [vmem:[#allocation4 + $0x5d0] sm:$0xff] %v8836
      %8901 = vst [vmem:[#allocation4 + $0x5d8] sm:$0xff] %v8837
      %8902 = vst [vmem:[#allocation4 + $0x5e0] sm:$0xff] %v8838
      %8903 = vst [vmem:[#allocation4 + $0x5e8] sm:$0xff] %v8839
      %8904 = vst [vmem:[#allocation4 + $0x5f0] sm:$0xff] %v8840
      %8905 = vst.msk [vmem:[#allocation4 + $0x5f8] sm:$0xff] %vm8066, %v8841
      %8906 = vst [vmem:[#allocation4 + $0x600] sm:$0xff] %v8003
      %8907 = vst [vmem:[#allocation4 + $0x608] sm:$0xff] %v8004
      %8908 = vst [vmem:[#allocation4 + $0x610] sm:$0xff] %v8005
      %8909 = vst [vmem:[#allocation4 + $0x618] sm:$0xff] %v8006
      %8910 = vst [vmem:[#allocation4 + $0x620] sm:$0xff] %v8007
      %8911 = vst [vmem:[#allocation4 + $0x628] sm:$0xff] %v8008
      %8912 = vst [vmem:[#allocation4 + $0x630] sm:$0xff] %v8009
      %8913 = vst [vmem:[#allocation4 + $0x638] sm:$0xff] %v8010
      %8914 = vst [vmem:[#allocation4 + $0x640] sm:$0xff] %v8011
      %8915 = vst [vmem:[#allocation4 + $0x648] sm:$0xff] %v8012
      %8916 = vst [vmem:[#allocation4 + $0x650] sm:$0xff] %v8013
      %8917 = vst [vmem:[#allocation4 + $0x658] sm:$0xff] %v8014
      %8918 = vst [vmem:[#allocation4 + $0x660] sm:$0xff] %v8015
      %8919 = vst [vmem:[#allocation4 + $0x668] sm:$0xff] %v8016
      %8920 = vst [vmem:[#allocation4 + $0x670] sm:$0xff] %v8017
      %8921 = vst [vmem:[#allocation4 + $0x678] sm:$0xff] %v8018
      %8922 = vst [vmem:[#allocation4 + $0x680] sm:$0xff] %v8019
      %8923 = vst [vmem:[#allocation4 + $0x688] sm:$0xff] %v8020
      %8924 = vst [vmem:[#allocation4 + $0x690] sm:$0xff] %v8021
      %8925 = vst [vmem:[#allocation4 + $0x698] sm:$0xff] %v8022
      %8926 = vst [vmem:[#allocation4 + $0x6a0] sm:$0xff] %v8023
      %8927 = vst [vmem:[#allocation4 + $0x6a8] sm:$0xff] %v8024
      %8928 = vst [vmem:[#allocation4 + $0x6b0] sm:$0xff] %v8025
      %8929 = vst [vmem:[#allocation4 + $0x6b8] sm:$0xff] %v8026
      %8930 = vst [vmem:[#allocation4 + $0x6c0] sm:$0xff] %v8027
      %8931 = vst [vmem:[#allocation4 + $0x6c8] sm:$0xff] %v8028
      %8932 = vst [vmem:[#allocation4 + $0x6d0] sm:$0xff] %v8029
      %8933 = vst [vmem:[#allocation4 + $0x6d8] sm:$0xff] %v8030
      %8934 = vst [vmem:[#allocation4 + $0x6e0] sm:$0xff] %v8031
      %8935 = vst [vmem:[#allocation4 + $0x6e8] sm:$0xff] %v8032
      %8936 = vst [vmem:[#allocation4 + $0x6f0] sm:$0xff] %v8033
      %8937 = vst.msk [vmem:[#allocation4 + $0x6f8] sm:$0xff] %vm8066, %v8034
      %8939 = vrot.lane.b32.xlu0 %v8032, 126
      %v8940 = vpop.permute.xlu0 %8939
      %8941 = vrot.lane.b32.xlu0 %v8033, 126
      %v8942 = vpop.permute.xlu0 %8941
      %8943 = vrot.lane.b32.xlu0 %v8034, 126
      %v8944 = vpop.permute.xlu0 %8943
      %v8945 = vsel %vm366, %v8163, %v8940
      %v8946 = vsel %vm366, %v8940, %v8942
      %v8947 = vsel %vm366, %v8942, %v8944
      %8952 = vst [vmem:[#allocation4 + $0x700] sm:$0xff] %v8167
      %8953 = vst [vmem:[#allocation4 + $0x708] sm:$0xff] %v8168
      %8954 = vst [vmem:[#allocation4 + $0x710] sm:$0xff] %v8169
      %8955 = vst [vmem:[#allocation4 + $0x718] sm:$0xff] %v8170
      %8956 = vst [vmem:[#allocation4 + $0x720] sm:$0xff] %v8171
      %8957 = vst [vmem:[#allocation4 + $0x728] sm:$0xff] %v8172
      %8958 = vst [vmem:[#allocation4 + $0x730] sm:$0xff] %v8173
      %8959 = vst [vmem:[#allocation4 + $0x738] sm:$0xff] %v8174
      %8960 = vst [vmem:[#allocation4 + $0x740] sm:$0xff] %v8175
      %8961 = vst [vmem:[#allocation4 + $0x748] sm:$0xff] %v8176
      %8962 = vst [vmem:[#allocation4 + $0x750] sm:$0xff] %v8177
      %8963 = vst [vmem:[#allocation4 + $0x758] sm:$0xff] %v8178
      %8964 = vst [vmem:[#allocation4 + $0x760] sm:$0xff] %v8179
      %8965 = vst [vmem:[#allocation4 + $0x768] sm:$0xff] %v8180
      %8966 = vst [vmem:[#allocation4 + $0x770] sm:$0xff] %v8181
      %8967 = vst [vmem:[#allocation4 + $0x778] sm:$0xff] %v8182
      %8968 = vst [vmem:[#allocation4 + $0x780] sm:$0xff] %v8183
      %8969 = vst [vmem:[#allocation4 + $0x788] sm:$0xff] %v8184
      %8970 = vst [vmem:[#allocation4 + $0x790] sm:$0xff] %v8185
      %8971 = vst [vmem:[#allocation4 + $0x798] sm:$0xff] %v8186
      %8972 = vst [vmem:[#allocation4 + $0x7a0] sm:$0xff] %v8187
      %8973 = vst [vmem:[#allocation4 + $0x7a8] sm:$0xff] %v8188
      %8974 = vst [vmem:[#allocation4 + $0x7b0] sm:$0xff] %v8189
      %8975 = vst [vmem:[#allocation4 + $0x7b8] sm:$0xff] %v8190
      %8976 = vst [vmem:[#allocation4 + $0x7c0] sm:$0xff] %v8191
      %8977 = vst [vmem:[#allocation4 + $0x7c8] sm:$0xff] %v8192
      %8978 = vst [vmem:[#allocation4 + $0x7d0] sm:$0xff] %v8193
      %8979 = vst [vmem:[#allocation4 + $0x7d8] sm:$0xff] %v8194
      %8980 = vst [vmem:[#allocation4 + $0x7e0] sm:$0xff] %v8945
      %8981 = vst [vmem:[#allocation4 + $0x7e8] sm:$0xff] %v8946
      %8982 = vst [vmem:[#allocation4 + $0x7f0] sm:$0xff] %v8947
      %8983 = vst.msk [vmem:[#allocation4 + $0x7f8] sm:$0xff] %vm8066, %v8944
      %8984 = vrot.lane.b32.xlu0 %v8032, 124
      %v8985 = vpop.permute.xlu0 %8984
      %8986 = vrot.lane.b32.xlu0 %v8033, 124
      %v8987 = vpop.permute.xlu0 %8986
      %8988 = vrot.lane.b32.xlu0 %v8034, 124
      %v8989 = vpop.permute.xlu0 %8988
      %v8990 = vsel %vm456, %v8322, %v8985
      %v8991 = vsel %vm456, %v8985, %v8987
      %v8992 = vsel %vm456, %v8987, %v8989
      %8997 = vst [vmem:[#allocation4 + $0x800] sm:$0xff] %v8326
      %8998 = vst [vmem:[#allocation4 + $0x808] sm:$0xff] %v8327
      %8999 = vst [vmem:[#allocation4 + $0x810] sm:$0xff] %v8328
      %9000 = vst [vmem:[#allocation4 + $0x818] sm:$0xff] %v8329
      %9001 = vst [vmem:[#allocation4 + $0x820] sm:$0xff] %v8330
      %9002 = vst [vmem:[#allocation4 + $0x828] sm:$0xff] %v8331
      %9003 = vst [vmem:[#allocation4 + $0x830] sm:$0xff] %v8332
      %9004 = vst [vmem:[#allocation4 + $0x838] sm:$0xff] %v8333
      %9005 = vst [vmem:[#allocation4 + $0x840] sm:$0xff] %v8334
      %9006 = vst [vmem:[#allocation4 + $0x848] sm:$0xff] %v8335
      %9007 = vst [vmem:[#allocation4 + $0x850] sm:$0xff] %v8336
      %9008 = vst [vmem:[#allocation4 + $0x858] sm:$0xff] %v8337
      %9009 = vst [vmem:[#allocation4 + $0x860] sm:$0xff] %v8338
      %9010 = vst [vmem:[#allocation4 + $0x868] sm:$0xff] %v8339
      %9011 = vst [vmem:[#allocation4 + $0x870] sm:$0xff] %v8340
      %9012 = vst [vmem:[#allocation4 + $0x878] sm:$0xff] %v8341
      %9013 = vst [vmem:[#allocation4 + $0x880] sm:$0xff] %v8342
      %9014 = vst [vmem:[#allocation4 + $0x888] sm:$0xff] %v8343
      %9015 = vst [vmem:[#allocation4 + $0x890] sm:$0xff] %v8344
      %9016 = vst [vmem:[#allocation4 + $0x898] sm:$0xff] %v8345
      %9017 = vst [vmem:[#allocation4 + $0x8a0] sm:$0xff] %v8346
      %9018 = vst [vmem:[#allocation4 + $0x8a8] sm:$0xff] %v8347
      %9019 = vst [vmem:[#allocation4 + $0x8b0] sm:$0xff] %v8348
      %9020 = vst [vmem:[#allocation4 + $0x8b8] sm:$0xff] %v8349
      %9021 = vst [vmem:[#allocation4 + $0x8c0] sm:$0xff] %v8350
      %9022 = vst [vmem:[#allocation4 + $0x8c8] sm:$0xff] %v8351
      %9023 = vst [vmem:[#allocation4 + $0x8d0] sm:$0xff] %v8352
      %9024 = vst [vmem:[#allocation4 + $0x8d8] sm:$0xff] %v8353
      %9025 = vst [vmem:[#allocation4 + $0x8e0] sm:$0xff] %v8990
      %9026 = vst [vmem:[#allocation4 + $0x8e8] sm:$0xff] %v8991
      %9027 = vst [vmem:[#allocation4 + $0x8f0] sm:$0xff] %v8992
      %9028 = vst.msk [vmem:[#allocation4 + $0x8f8] sm:$0xff] %vm8066, %v8989
      %v9029 = vld [vmem:[%s5] sm:$0xff]
      %v9030 = vld [vmem:[%s5 + $0x8] sm:$0xff]
      %v9031 = vld [vmem:[#allocation4] sm:$0xff]
      %v9032 = vld [vmem:[#allocation4 + $0x8] sm:$0xff]
      %v9033 = vld [vmem:[#allocation4 + $0x20] sm:$0xff]
      %v9034 = vld [vmem:[#allocation4 + $0x28] sm:$0xff]
      %v9035 = vld [vmem:[#allocation4 + $0x30] sm:$0xff]
      %v9036 = vld [vmem:[#allocation4 + $0x38] sm:$0xff]
      %v9037 = vld [vmem:[#allocation4 + $0x40] sm:$0xff]
      %v9038 = vld [vmem:[#allocation4 + $0x48] sm:$0xff]
      %v9039 = vld [vmem:[#allocation4 + $0x50] sm:$0xff]
      %v9040 = vld [vmem:[#allocation4 + $0x58] sm:$0xff]
      %v9041 = vld [vmem:[#allocation4 + $0xb0] sm:$0xff]
      %v9042 = vld [vmem:[#allocation4 + $0xb8] sm:$0xff]
      %v9043 = vld [vmem:[#allocation4 + $0xd0] sm:$0xff]
      %v9044 = vld [vmem:[#allocation4 + $0xd8] sm:$0xff]
      %v9045 = vld [vmem:[#allocation4 + $0xf0] sm:$0xff]
      %v9046 = vld [vmem:[#allocation4 + $0xf8] sm:$0xff]
      %v9047 = vld [vmem:[#allocation4 + $0x100] sm:$0xff]
      %v9048 = vld [vmem:[#allocation4 + $0x108] sm:$0xff]
      %v9049 = vld [vmem:[#allocation4 + $0x120] sm:$0xff]
      %v9050 = vld [vmem:[#allocation4 + $0x128] sm:$0xff]
      %v9051 = vld [vmem:[#allocation4 + $0x130] sm:$0xff]
      %v9052 = vld [vmem:[#allocation4 + $0x138] sm:$0xff]
      %v9053 = vld [vmem:[#allocation4 + $0x140] sm:$0xff]
      %v9054 = vld [vmem:[#allocation4 + $0x148] sm:$0xff]
      %v9055 = vld [vmem:[#allocation4 + $0x150] sm:$0xff]
      %v9056 = vld [vmem:[#allocation4 + $0x158] sm:$0xff]
      %v9057 = vld [vmem:[#allocation4 + $0x1b0] sm:$0xff]
      %v9058 = vld [vmem:[#allocation4 + $0x1b8] sm:$0xff]
      %v9059 = vld [vmem:[#allocation4 + $0x1d0] sm:$0xff]
      %v9060 = vld [vmem:[#allocation4 + $0x1d8] sm:$0xff]
      %v9061 = vld [vmem:[#allocation4 + $0x1f0] sm:$0xff]
      %v9062 = vld [vmem:[#allocation4 + $0x1f8] sm:$0xff]
      %v9063 = vld [vmem:[#allocation4 + $0x200] sm:$0xff]
      %v9064 = vld [vmem:[#allocation4 + $0x208] sm:$0xff]
      %v9065 = vld [vmem:[#allocation4 + $0x220] sm:$0xff]
      %v9066 = vld [vmem:[#allocation4 + $0x228] sm:$0xff]
      %v9067 = vld [vmem:[#allocation4 + $0x230] sm:$0xff]
      %v9068 = vld [vmem:[#allocation4 + $0x238] sm:$0xff]
      %v9069 = vld [vmem:[#allocation4 + $0x240] sm:$0xff]
      %v9070 = vld [vmem:[#allocation4 + $0x248] sm:$0xff]
      %v9071 = vld [vmem:[#allocation4 + $0x250] sm:$0xff]
      %v9072 = vld [vmem:[#allocation4 + $0x258] sm:$0xff]
      %v9073 = vld [vmem:[#allocation4 + $0x2b0] sm:$0xff]
      %v9074 = vld [vmem:[#allocation4 + $0x2b8] sm:$0xff]
      %v9075 = vld [vmem:[#allocation4 + $0x2d0] sm:$0xff]
      %v9076 = vld [vmem:[#allocation4 + $0x2d8] sm:$0xff]
      %v9077 = vld [vmem:[#allocation4 + $0x2f0] sm:$0xff]
      %v9078 = vld [vmem:[#allocation4 + $0x2f8] sm:$0xff]
      %v9079 = vld [vmem:[#allocation4 + $0x300] sm:$0xff]
      %v9080 = vld [vmem:[#allocation4 + $0x308] sm:$0xff]
      %v9081 = vld [vmem:[#allocation4 + $0x320] sm:$0xff]
      %v9082 = vld [vmem:[#allocation4 + $0x328] sm:$0xff]
      %v9083 = vld [vmem:[#allocation4 + $0x330] sm:$0xff]
      %v9084 = vld [vmem:[#allocation4 + $0x338] sm:$0xff]
      %v9085 = vld [vmem:[#allocation4 + $0x340] sm:$0xff]
      %v9086 = vld [vmem:[#allocation4 + $0x348] sm:$0xff]
      %v9087 = vld [vmem:[#allocation4 + $0x350] sm:$0xff]
      %v9088 = vld [vmem:[#allocation4 + $0x358] sm:$0xff]
      %v9089 = vld [vmem:[#allocation4 + $0x3b0] sm:$0xff]
      %v9090 = vld [vmem:[#allocation4 + $0x3b8] sm:$0xff]
      %v9091 = vld [vmem:[#allocation4 + $0x3d0] sm:$0xff]
      %v9092 = vld [vmem:[#allocation4 + $0x3d8] sm:$0xff]
      %v9093 = vld [vmem:[#allocation4 + $0x3f0] sm:$0xff]
      %v9094 = vld [vmem:[#allocation4 + $0x3f8] sm:$0xff]
      %v9095 = vld [vmem:[#allocation4 + $0x400] sm:$0xff]
      %v9096 = vld [vmem:[#allocation4 + $0x408] sm:$0xff]
      %v9097 = vld [vmem:[#allocation4 + $0x420] sm:$0xff]
      %v9098 = vld [vmem:[#allocation4 + $0x428] sm:$0xff]
      %v9099 = vld [vmem:[#allocation4 + $0x430] sm:$0xff]
      %v9100 = vld [vmem:[#allocation4 + $0x438] sm:$0xff]
      %v9101 = vld [vmem:[#allocation4 + $0x440] sm:$0xff]
      %v9102 = vld [vmem:[#allocation4 + $0x448] sm:$0xff]
      %v9103 = vld [vmem:[#allocation4 + $0x450] sm:$0xff]
      %v9104 = vld [vmem:[#allocation4 + $0x458] sm:$0xff]
      %v9105 = vld [vmem:[#allocation4 + $0x4b0] sm:$0xff]
      %v9106 = vld [vmem:[#allocation4 + $0x4b8] sm:$0xff]
      %v9107 = vld [vmem:[#allocation4 + $0x4d0] sm:$0xff]
      %v9108 = vld [vmem:[#allocation4 + $0x4d8] sm:$0xff]
      %v9109 = vld [vmem:[#allocation4 + $0x4f0] sm:$0xff]
      %v9110 = vld [vmem:[#allocation4 + $0x4f8] sm:$0xff]
      %v9111 = vld [vmem:[#allocation4 + $0x500] sm:$0xff]
      %v9112 = vld [vmem:[#allocation4 + $0x508] sm:$0xff]
      %v9113 = vld [vmem:[#allocation4 + $0x520] sm:$0xff]
      %v9114 = vld [vmem:[#allocation4 + $0x528] sm:$0xff]
      %v9115 = vld [vmem:[#allocation4 + $0x530] sm:$0xff]
      %v9116 = vld [vmem:[#allocation4 + $0x538] sm:$0xff]
      %v9117 = vld [vmem:[#allocation4 + $0x540] sm:$0xff]
      %v9118 = vld [vmem:[#allocation4 + $0x548] sm:$0xff]
      %v9119 = vld [vmem:[#allocation4 + $0x550] sm:$0xff]
      %v9120 = vld [vmem:[#allocation4 + $0x558] sm:$0xff]
      %v9121 = vld [vmem:[#allocation4 + $0x5b0] sm:$0xff]
      %v9122 = vld [vmem:[#allocation4 + $0x5b8] sm:$0xff]
      %v9123 = vld [vmem:[#allocation4 + $0x5d0] sm:$0xff]
      %v9124 = vld [vmem:[#allocation4 + $0x5d8] sm:$0xff]
      %v9125 = vld [vmem:[#allocation4 + $0x5f0] sm:$0xff]
      %v9126 = vld [vmem:[#allocation4 + $0x5f8] sm:$0xff]
      %v9127 = vld [vmem:[#allocation4 + $0x600] sm:$0xff]
      %v9128 = vld [vmem:[#allocation4 + $0x608] sm:$0xff]
      %v9129 = vld [vmem:[#allocation4 + $0x620] sm:$0xff]
      %v9130 = vld [vmem:[#allocation4 + $0x628] sm:$0xff]
      %v9131 = vld [vmem:[#allocation4 + $0x630] sm:$0xff]
      %v9132 = vld [vmem:[#allocation4 + $0x638] sm:$0xff]
      %v9133 = vld [vmem:[#allocation4 + $0x640] sm:$0xff]
      %v9134 = vld [vmem:[#allocation4 + $0x648] sm:$0xff]
      %v9135 = vld [vmem:[#allocation4 + $0x650] sm:$0xff]
      %v9136 = vld [vmem:[#allocation4 + $0x658] sm:$0xff]
      %v9137 = vld [vmem:[#allocation4 + $0x6b0] sm:$0xff]
      %v9138 = vld [vmem:[#allocation4 + $0x6b8] sm:$0xff]
      %v9139 = vld [vmem:[#allocation4 + $0x6d0] sm:$0xff]
      %v9140 = vld [vmem:[#allocation4 + $0x6d8] sm:$0xff]
      %v9141 = vld [vmem:[#allocation4 + $0x6f0] sm:$0xff]
      %v9142 = vld [vmem:[#allocation4 + $0x6f8] sm:$0xff]
      %v9143 = vld [vmem:[#allocation4 + $0x700] sm:$0xff]
      %v9144 = vld [vmem:[#allocation4 + $0x708] sm:$0xff]
      %v9145 = vld [vmem:[#allocation4 + $0x720] sm:$0xff]
      %v9146 = vld [vmem:[#allocation4 + $0x728] sm:$0xff]
      %v9147 = vld [vmem:[#allocation4 + $0x730] sm:$0xff]
      %v9148 = vld [vmem:[#allocation4 + $0x738] sm:$0xff]
      %v9149 = vld [vmem:[#allocation4 + $0x740] sm:$0xff]
      %v9150 = vld [vmem:[#allocation4 + $0x748] sm:$0xff]
      %v9151 = vld [vmem:[#allocation4 + $0x750] sm:$0xff]
      %v9152 = vld [vmem:[#allocation4 + $0x758] sm:$0xff]
      %v9153 = vld [vmem:[#allocation4 + $0x7b0] sm:$0xff]
      %v9154 = vld [vmem:[#allocation4 + $0x7b8] sm:$0xff]
      %v9155 = vld [vmem:[#allocation4 + $0x7d0] sm:$0xff]
      %v9156 = vld [vmem:[#allocation4 + $0x7d8] sm:$0xff]
      %v9157 = vld [vmem:[#allocation4 + $0x7f0] sm:$0xff]
      %v9158 = vld [vmem:[#allocation4 + $0x7f8] sm:$0xff]
      %v9159 = vld [vmem:[#allocation4 + $0x800] sm:$0xff]
      %v9160 = vld [vmem:[#allocation4 + $0x808] sm:$0xff]
      %v9161 = vld [vmem:[#allocation4 + $0x820] sm:$0xff]
      %v9162 = vld [vmem:[#allocation4 + $0x828] sm:$0xff]
      %v9163 = vld [vmem:[#allocation4 + $0x830] sm:$0xff]
      %v9164 = vld [vmem:[#allocation4 + $0x838] sm:$0xff]
      %v9165 = vld [vmem:[#allocation4 + $0x840] sm:$0xff]
      %v9166 = vld [vmem:[#allocation4 + $0x848] sm:$0xff]
      %v9167 = vld [vmem:[#allocation4 + $0x850] sm:$0xff]
      %v9168 = vld [vmem:[#allocation4 + $0x858] sm:$0xff]
      %v9169 = vld [vmem:[#allocation4 + $0x8b0] sm:$0xff]
      %v9170 = vld [vmem:[#allocation4 + $0x8b8] sm:$0xff]
      %v9171 = vld [vmem:[#allocation4 + $0x8d0] sm:$0xff]
      %v9172 = vld [vmem:[#allocation4 + $0x8d8] sm:$0xff]
      %v9173 = vld [vmem:[#allocation4 + $0x8f0] sm:$0xff]
      %v9174 = vld [vmem:[#allocation4 + $0x8f8] sm:$0xff]
      %v9175 = vld [vmem:[%s6] sm:$0xff]
      %v9176 = vld [vmem:[%s6 + $0x8] sm:$0xff]
      %9178 = vset.pattern.permute.xlu0 0
      %9179 = vperm.xlu0 %9178, %v9175
      %v9180 = vpop.permute.xlu0 %9179
      %9183 = vset.pattern.permute.xlu0 0
      %9184 = vperm.xlu0 %9183, %v9176
      %v9185 = vpop.permute.xlu0 %9184
      %v9188 = vsel %vm6086, %v9029, 0
      %v9191 = vsel %vm6086, %v9030, 0
      %9193 = vmatprep.subr.mxu0 0.0
      %9194 = vmatpush1.msra.mxu0 0.0
      %9195 = vmatprep.subr.mxu0 0.0
      %9196 = vmatpush1.msra.mxu0 0.0
      %9197 = vmatprep.subr.mxu0 0.0
      %9198 = vmatpush1.msra.mxu0 0.0
      %9199 = vmatprep.subr.mxu0 0.0
      %9200 = vmatpush1.msra.mxu0 0.0
      %9201 = vmatprep.subr.mxu0 0.0
      %9202 = vmatpush1.msra.mxu0 0.0
      %9203 = vmatprep.subr.mxu0 0.0
      %9204 = vmatpush1.msra.mxu0 0.0
      %9205 = vmatprep.subr.mxu0 0.0
      %9206 = vmatpush1.msra.mxu0 0.0
      %9207 = vmatprep.subr.mxu0 %v9160
      %9208 = vmatpush1.msra.mxu0 %v9159
      %9209 = vmatprep.subr.mxu0 %v9144
      %9210 = vmatpush1.msra.mxu0 %v9143
      %9211 = vmatprep.subr.mxu0 %v9128
      %9212 = vmatpush1.msra.mxu0 %v9127
      %9213 = vmatprep.subr.mxu0 %v9112
      %9214 = vmatpush1.msra.mxu0 %v9111
      %9215 = vmatprep.subr.mxu0 %v9096
      %9216 = vmatpush1.msra.mxu0 %v9095
      %9217 = vmatprep.subr.mxu0 %v9080
      %9218 = vmatpush1.msra.mxu0 %v9079
      %9219 = vmatprep.subr.mxu0 %v9064
      %9220 = vmatpush1.msra.mxu0 %v9063
      %9221 = vmatprep.subr.mxu0 %v9048
      %9222 = vmatpush1.msra.mxu0 %v9047
      %9223 = vmatprep.subr.mxu0 %v9032
      %9224 = vmatpush1.msra.mxu0 %v9031
      %9225 = vmatprep.subr.mxu0 0.0
      %9226 = vmatpush2.msra.mxu0 0.0
      %9227 = vmatprep.subr.mxu0 0.0
      %9228 = vmatpush2.msra.mxu0 0.0
      %9229 = vmatprep.subr.mxu0 0.0
      %9230 = vmatpush2.msra.mxu0 0.0
      %9231 = vmatprep.subr.mxu0 0.0
      %9232 = vmatpush2.msra.mxu0 0.0
      %9233 = vmatprep.subr.mxu0 0.0
      %9234 = vmatpush2.msra.mxu0 0.0
      %9235 = vmatprep.subr.mxu0 0.0
      %9236 = vmatpush2.msra.mxu0 0.0
      %9237 = vmatprep.subr.mxu0 0.0
      %9238 = vmatpush2.msra.mxu0 0.0
      %9239 = vmatprep.subr.mxu0 0.0
      %9240 = vmatpush2.msra.mxu0 0.0
      %9241 = vmatprep.subr.mxu0 0.0
      %9242 = vmatpush2.msra.mxu0 0.0
      %9243 = vmatprep.subr.mxu0 0.0
      %9244 = vmatpush2.msra.mxu0 0.0
      %9245 = vmatprep.subr.mxu0 0.0
      %9246 = vmatpush2.msra.mxu0 0.0
      %9247 = vmatprep.subr.mxu0 0.0
      %9248 = vmatpush2.msra.mxu0 0.0
      %9249 = vmatprep.subr.mxu0 0.0
      %9250 = vmatpush2.msra.mxu0 0.0
      %9251 = vmatprep.subr.mxu0 0.0
      %9252 = vmatpush2.msra.mxu0 0.0
      %9253 = vmatprep.subr.mxu0 0.0
      %9254 = vmatpush2.msra.mxu0 0.0
      %9255 = vmatprep.subr.mxu0 0.0
      %9256 = vmatpush2.msra.mxu0 0.0
      %9257 = vmatprep.mubr.f32.mxu0 0.0
      %9258 = vmatmul.mubr.f32.gmra.mxu0 %v9188
      %v9259 = vpop.f32.mrf.mxu0
      %v9260 = vadd.f32 %v9180, %v9259
      %v9261 = vpop.f32.mrf.mxu0
      %v9262 = vadd.f32 %v9180, %v9261
      %9263 = vmatprep.mubr.f32.mxu0 0.0
      %9264 = vmatmul.mubr.f32.gmra.mxu0 %v9191
      %v9265 = vpop.f32.mrf.mxu0
      %v9266 = vadd.f32 %v9185, %v9265
      %v9267 = vpop.f32.mrf.mxu0
      %v9268 = vadd.f32 %v9185, %v9267
      %9269 = vdwg.mxu0
      %9270 = vmatprep.subr.mxu0 0.0
      %9271 = vmatpush1.msra.mxu0 0.0
      %9272 = vmatprep.subr.mxu0 0.0
      %9273 = vmatpush1.msra.mxu0 0.0
      %9274 = vmatprep.subr.mxu0 0.0
      %9275 = vmatpush1.msra.mxu0 0.0
      %9276 = vmatprep.subr.mxu0 0.0
      %9277 = vmatpush1.msra.mxu0 0.0
      %9278 = vmatprep.subr.mxu0 0.0
      %9279 = vmatpush1.msra.mxu0 0.0
      %9280 = vmatprep.subr.mxu0 0.0
      %9281 = vmatpush1.msra.mxu0 0.0
      %9282 = vmatprep.subr.mxu0 0.0
      %9283 = vmatpush1.msra.mxu0 0.0
      %9284 = vmatprep.subr.mxu0 %v9162
      %9285 = vmatpush1.msra.mxu0 %v9161
      %9286 = vmatprep.subr.mxu0 %v9146
      %9287 = vmatpush1.msra.mxu0 %v9145
      %9288 = vmatprep.subr.mxu0 %v9130
      %9289 = vmatpush1.msra.mxu0 %v9129
      %9290 = vmatprep.subr.mxu0 %v9114
      %9291 = vmatpush1.msra.mxu0 %v9113
      %9292 = vmatprep.subr.mxu0 %v9098
      %9293 = vmatpush1.msra.mxu0 %v9097
      %9294 = vmatprep.subr.mxu0 %v9082
      %9295 = vmatpush1.msra.mxu0 %v9081
      %9296 = vmatprep.subr.mxu0 %v9066
      %9297 = vmatpush1.msra.mxu0 %v9065
      %9298 = vmatprep.subr.mxu0 %v9050
      %9299 = vmatpush1.msra.mxu0 %v9049
      %9300 = vmatprep.subr.mxu0 %v9034
      %9301 = vmatpush1.msra.mxu0 %v9033
      %9302 = vmatprep.subr.mxu0 0.0
      %9303 = vmatpush2.msra.mxu0 0.0
      %9304 = vmatprep.subr.mxu0 0.0
      %9305 = vmatpush2.msra.mxu0 0.0
      %9306 = vmatprep.subr.mxu0 0.0
      %9307 = vmatpush2.msra.mxu0 0.0
      %9308 = vmatprep.subr.mxu0 0.0
      %9309 = vmatpush2.msra.mxu0 0.0
      %9310 = vmatprep.subr.mxu0 0.0
      %9311 = vmatpush2.msra.mxu0 0.0
      %9312 = vmatprep.subr.mxu0 0.0
      %9313 = vmatpush2.msra.mxu0 0.0
      %9314 = vmatprep.subr.mxu0 0.0
      %9315 = vmatpush2.msra.mxu0 0.0
      %9316 = vmatprep.subr.mxu0 0.0
      %9317 = vmatpush2.msra.mxu0 0.0
      %9318 = vmatprep.subr.mxu0 0.0
      %9319 = vmatpush2.msra.mxu0 0.0
      %9320 = vmatprep.subr.mxu0 0.0
      %9321 = vmatpush2.msra.mxu0 0.0
      %9322 = vmatprep.subr.mxu0 0.0
      %9323 = vmatpush2.msra.mxu0 0.0
      %9324 = vmatprep.subr.mxu0 0.0
      %9325 = vmatpush2.msra.mxu0 0.0
      %9326 = vmatprep.subr.mxu0 0.0
      %9327 = vmatpush2.msra.mxu0 0.0
      %9328 = vmatprep.subr.mxu0 0.0
      %9329 = vmatpush2.msra.mxu0 0.0
      %9330 = vmatprep.subr.mxu0 0.0
      %9331 = vmatpush2.msra.mxu0 0.0
      %9332 = vmatprep.subr.mxu0 0.0
      %9333 = vmatpush2.msra.mxu0 0.0
      %9334 = vmatprep.mubr.f32.mxu0 0.0
      %9335 = vmatmul.mubr.f32.gmra.mxu0 %v9188
      %v9336 = vpop.f32.mrf.mxu0
      %v9337 = vadd.f32 %v9180, %v9336
      %v9338 = vpop.f32.mrf.mxu0
      %v9339 = vadd.f32 %v9180, %v9338
      %9340 = vmatprep.mubr.f32.mxu0 0.0
      %9341 = vmatmul.mubr.f32.gmra.mxu0 %v9191
      %v9342 = vpop.f32.mrf.mxu0
      %v9343 = vadd.f32 %v9185, %v9342
      %v9344 = vpop.f32.mrf.mxu0
      %v9345 = vadd.f32 %v9185, %v9344
      %9346 = vdwg.mxu0
      %9347 = vmatprep.subr.mxu0 0.0
      %9348 = vmatpush1.msra.mxu0 0.0
      %9349 = vmatprep.subr.mxu0 0.0
      %9350 = vmatpush1.msra.mxu0 0.0
      %9351 = vmatprep.subr.mxu0 0.0
      %9352 = vmatpush1.msra.mxu0 0.0
      %9353 = vmatprep.subr.mxu0 0.0
      %9354 = vmatpush1.msra.mxu0 0.0
      %9355 = vmatprep.subr.mxu0 0.0
      %9356 = vmatpush1.msra.mxu0 0.0
      %9357 = vmatprep.subr.mxu0 0.0
      %9358 = vmatpush1.msra.mxu0 0.0
      %9359 = vmatprep.subr.mxu0 0.0
      %9360 = vmatpush1.msra.mxu0 0.0
      %9361 = vmatprep.subr.mxu0 %v9164
      %9362 = vmatpush1.msra.mxu0 %v9163
      %9363 = vmatprep.subr.mxu0 %v9148
      %9364 = vmatpush1.msra.mxu0 %v9147
      %9365 = vmatprep.subr.mxu0 %v9132
      %9366 = vmatpush1.msra.mxu0 %v9131
      %9367 = vmatprep.subr.mxu0 %v9116
      %9368 = vmatpush1.msra.mxu0 %v9115
      %9369 = vmatprep.subr.mxu0 %v9100
      %9370 = vmatpush1.msra.mxu0 %v9099
      %9371 = vmatprep.subr.mxu0 %v9084
      %9372 = vmatpush1.msra.mxu0 %v9083
      %9373 = vmatprep.subr.mxu0 %v9068
      %9374 = vmatpush1.msra.mxu0 %v9067
      %9375 = vmatprep.subr.mxu0 %v9052
      %9376 = vmatpush1.msra.mxu0 %v9051
      %9377 = vmatprep.subr.mxu0 %v9036
      %9378 = vmatpush1.msra.mxu0 %v9035
      %9379 = vmatprep.subr.mxu0 0.0
      %9380 = vmatpush2.msra.mxu0 0.0
      %9381 = vmatprep.subr.mxu0 0.0
      %9382 = vmatpush2.msra.mxu0 0.0
      %9383 = vmatprep.subr.mxu0 0.0
      %9384 = vmatpush2.msra.mxu0 0.0
      %9385 = vmatprep.subr.mxu0 0.0
      %9386 = vmatpush2.msra.mxu0 0.0
      %9387 = vmatprep.subr.mxu0 0.0
      %9388 = vmatpush2.msra.mxu0 0.0
      %9389 = vmatprep.subr.mxu0 0.0
      %9390 = vmatpush2.msra.mxu0 0.0
      %9391 = vmatprep.subr.mxu0 0.0
      %9392 = vmatpush2.msra.mxu0 0.0
      %9393 = vmatprep.subr.mxu0 0.0
      %9394 = vmatpush2.msra.mxu0 0.0
      %9395 = vmatprep.subr.mxu0 0.0
      %9396 = vmatpush2.msra.mxu0 0.0
      %9397 = vmatprep.subr.mxu0 0.0
      %9398 = vmatpush2.msra.mxu0 0.0
      %9399 = vmatprep.subr.mxu0 0.0
      %9400 = vmatpush2.msra.mxu0 0.0
      %9401 = vmatprep.subr.mxu0 0.0
      %9402 = vmatpush2.msra.mxu0 0.0
      %9403 = vmatprep.subr.mxu0 0.0
      %9404 = vmatpush2.msra.mxu0 0.0
      %9405 = vmatprep.subr.mxu0 0.0
      %9406 = vmatpush2.msra.mxu0 0.0
      %9407 = vmatprep.subr.mxu0 0.0
      %9408 = vmatpush2.msra.mxu0 0.0
      %9409 = vmatprep.subr.mxu0 0.0
      %9410 = vmatpush2.msra.mxu0 0.0
      %9411 = vmatprep.mubr.f32.mxu0 0.0
      %9412 = vmatmul.mubr.f32.gmra.mxu0 %v9188
      %v9413 = vpop.f32.mrf.mxu0
      %v9414 = vadd.f32 %v9180, %v9413
      %v9415 = vpop.f32.mrf.mxu0
      %9416 = vmatprep.mubr.f32.mxu0 0.0
      %9417 = vmatmul.mubr.f32.gmra.mxu0 %v9191
      %v9418 = vpop.f32.mrf.mxu0
      %v9419 = vadd.f32 %v9185, %v9418
      %v9420 = vpop.f32.mrf.mxu0
      %9421 = vdwg.mxu0
      %9422 = vmatprep.subr.mxu0 0.0
      %9423 = vmatpush1.msra.mxu0 0.0
      %9424 = vmatprep.subr.mxu0 0.0
      %9425 = vmatpush1.msra.mxu0 0.0
      %9426 = vmatprep.subr.mxu0 0.0
      %9427 = vmatpush1.msra.mxu0 0.0
      %9428 = vmatprep.subr.mxu0 0.0
      %9429 = vmatpush1.msra.mxu0 0.0
      %9430 = vmatprep.subr.mxu0 0.0
      %9431 = vmatpush1.msra.mxu0 0.0
      %9432 = vmatprep.subr.mxu0 0.0
      %9433 = vmatpush1.msra.mxu0 0.0
      %9434 = vmatprep.subr.mxu0 0.0
      %9435 = vmatpush1.msra.mxu0 0.0
      %9436 = vmatprep.subr.mxu0 %v9166
      %9437 = vmatpush1.msra.mxu0 %v9165
      %9438 = vmatprep.subr.mxu0 %v9150
      %9439 = vmatpush1.msra.mxu0 %v9149
      %9440 = vmatprep.subr.mxu0 %v9134
      %9441 = vmatpush1.msra.mxu0 %v9133
      %9442 = vmatprep.subr.mxu0 %v9118
      %9443 = vmatpush1.msra.mxu0 %v9117
      %9444 = vmatprep.subr.mxu0 %v9102
      %9445 = vmatpush1.msra.mxu0 %v9101
      %9446 = vmatprep.subr.mxu0 %v9086
      %9447 = vmatpush1.msra.mxu0 %v9085
      %9448 = vmatprep.subr.mxu0 %v9070
      %9449 = vmatpush1.msra.mxu0 %v9069
      %9450 = vmatprep.subr.mxu0 %v9054
      %9451 = vmatpush1.msra.mxu0 %v9053
      %9452 = vmatprep.subr.mxu0 %v9038
      %9453 = vmatpush1.msra.mxu0 %v9037
      %9454 = vmatprep.subr.mxu0 0.0
      %9455 = vmatpush2.msra.mxu0 0.0
      %9456 = vmatprep.subr.mxu0 0.0
      %9457 = vmatpush2.msra.mxu0 0.0
      %9458 = vmatprep.subr.mxu0 0.0
      %9459 = vmatpush2.msra.mxu0 0.0
      %9460 = vmatprep.subr.mxu0 0.0
      %9461 = vmatpush2.msra.mxu0 0.0
      %9462 = vmatprep.subr.mxu0 0.0
      %9463 = vmatpush2.msra.mxu0 0.0
      %9464 = vmatprep.subr.mxu0 0.0
      %9465 = vmatpush2.msra.mxu0 0.0
      %9466 = vmatprep.subr.mxu0 0.0
      %9467 = vmatpush2.msra.mxu0 0.0
      %9468 = vmatprep.subr.mxu0 0.0
      %9469 = vmatpush2.msra.mxu0 0.0
      %9470 = vmatprep.subr.mxu0 0.0
      %9471 = vmatpush2.msra.mxu0 0.0
      %9472 = vmatprep.subr.mxu0 0.0
      %9473 = vmatpush2.msra.mxu0 0.0
      %9474 = vmatprep.subr.mxu0 0.0
      %9475 = vmatpush2.msra.mxu0 0.0
      %9476 = vmatprep.subr.mxu0 0.0
      %9477 = vmatpush2.msra.mxu0 0.0
      %9478 = vmatprep.subr.mxu0 0.0
      %9479 = vmatpush2.msra.mxu0 0.0
      %9480 = vmatprep.subr.mxu0 0.0
      %9481 = vmatpush2.msra.mxu0 0.0
      %9482 = vmatprep.subr.mxu0 0.0
      %9483 = vmatpush2.msra.mxu0 0.0
      %9484 = vmatprep.subr.mxu0 0.0
      %9485 = vmatpush2.msra.mxu0 0.0
      %9486 = vmatprep.mubr.f32.mxu0 0.0
      %9487 = vmatmul.mubr.f32.gmra.mxu0 %v9188
      %v9488 = vpop.f32.mrf.mxu0
      %v9489 = vpop.f32.mrf.mxu0
      %v9490 = vadd.f32 %v9180, %v9489
      %9491 = vmatprep.mubr.f32.mxu0 0.0
      %9492 = vmatmul.mubr.f32.gmra.mxu0 %v9191
      %v9493 = vpop.f32.mrf.mxu0
      %v9494 = vpop.f32.mrf.mxu0
      %v9495 = vadd.f32 %v9185, %v9494
      %9496 = vdwg.mxu0
      %9497 = vmatprep.subr.mxu0 0.0
      %9498 = vmatpush1.msra.mxu0 0.0
      %9499 = vmatprep.subr.mxu0 0.0
      %9500 = vmatpush1.msra.mxu0 0.0
      %9501 = vmatprep.subr.mxu0 0.0
      %9502 = vmatpush1.msra.mxu0 0.0
      %9503 = vmatprep.subr.mxu0 0.0
      %9504 = vmatpush1.msra.mxu0 0.0
      %9505 = vmatprep.subr.mxu0 0.0
      %9506 = vmatpush1.msra.mxu0 0.0
      %9507 = vmatprep.subr.mxu0 0.0
      %9508 = vmatpush1.msra.mxu0 0.0
      %9509 = vmatprep.subr.mxu0 0.0
      %9510 = vmatpush1.msra.mxu0 0.0
      %9511 = vmatprep.subr.mxu0 %v9168
      %9512 = vmatpush1.msra.mxu0 %v9167
      %9513 = vmatprep.subr.mxu0 %v9152
      %9514 = vmatpush1.msra.mxu0 %v9151
      %9515 = vmatprep.subr.mxu0 %v9136
      %9516 = vmatpush1.msra.mxu0 %v9135
      %9517 = vmatprep.subr.mxu0 %v9120
      %9518 = vmatpush1.msra.mxu0 %v9119
      %9519 = vmatprep.subr.mxu0 %v9104
      %9520 = vmatpush1.msra.mxu0 %v9103
      %9521 = vmatprep.subr.mxu0 %v9088
      %9522 = vmatpush1.msra.mxu0 %v9087
      %9523 = vmatprep.subr.mxu0 %v9072
      %9524 = vmatpush1.msra.mxu0 %v9071
      %9525 = vmatprep.subr.mxu0 %v9056
      %9526 = vmatpush1.msra.mxu0 %v9055
      %9527 = vmatprep.subr.mxu0 %v9040
      %9528 = vmatpush1.msra.mxu0 %v9039
      %9529 = vmatprep.subr.mxu0 0.0
      %9530 = vmatpush2.msra.mxu0 0.0
      %9531 = vmatprep.subr.mxu0 0.0
      %9532 = vmatpush2.msra.mxu0 0.0
      %9533 = vmatprep.subr.mxu0 0.0
      %9534 = vmatpush2.msra.mxu0 0.0
      %9535 = vmatprep.subr.mxu0 0.0
      %9536 = vmatpush2.msra.mxu0 0.0
      %9537 = vmatprep.subr.mxu0 0.0
      %9538 = vmatpush2.msra.mxu0 0.0
      %9539 = vmatprep.subr.mxu0 0.0
      %9540 = vmatpush2.msra.mxu0 0.0
      %9541 = vmatprep.subr.mxu0 0.0
      %9542 = vmatpush2.msra.mxu0 0.0
      %9543 = vmatprep.subr.mxu0 0.0
      %9544 = vmatpush2.msra.mxu0 0.0
      %9545 = vmatprep.subr.mxu0 0.0
      %9546 = vmatpush2.msra.mxu0 0.0
      %9547 = vmatprep.subr.mxu0 0.0
      %9548 = vmatpush2.msra.mxu0 0.0
      %9549 = vmatprep.subr.mxu0 0.0
      %9550 = vmatpush2.msra.mxu0 0.0
      %9551 = vmatprep.subr.mxu0 0.0
      %9552 = vmatpush2.msra.mxu0 0.0
      %9553 = vmatprep.subr.mxu0 0.0
      %9554 = vmatpush2.msra.mxu0 0.0
      %9555 = vmatprep.subr.mxu0 0.0
      %9556 = vmatpush2.msra.mxu0 0.0
      %9557 = vmatprep.subr.mxu0 0.0
      %9558 = vmatpush2.msra.mxu0 0.0
      %9559 = vmatprep.subr.mxu0 0.0
      %9560 = vmatpush2.msra.mxu0 0.0
      %9561 = vmatprep.mubr.f32.mxu0 0.0
      %9562 = vmatmul.mubr.f32.gmra.mxu0 %v9188
      %v9563 = vpop.f32.mrf.mxu0
      %v9564 = vadd.f32 %v9180, %v9563
      %v9565 = vpop.f32.mrf.mxu0
      %9566 = vmatprep.mubr.f32.mxu0 0.0
      %9567 = vmatmul.mubr.f32.gmra.mxu0 %v9191
      %v9568 = vpop.f32.mrf.mxu0
      %v9569 = vadd.f32 %v9185, %v9568
      %v9570 = vpop.f32.mrf.mxu0
      %9571 = vdwg.mxu0
      %9572 = vmatprep.subr.mxu0 0.0
      %9573 = vmatpush1.msra.mxu0 0.0
      %9574 = vmatprep.subr.mxu0 0.0
      %9575 = vmatpush1.msra.mxu0 0.0
      %9576 = vmatprep.subr.mxu0 0.0
      %9577 = vmatpush1.msra.mxu0 0.0
      %9578 = vmatprep.subr.mxu0 0.0
      %9579 = vmatpush1.msra.mxu0 0.0
      %9580 = vmatprep.subr.mxu0 0.0
      %9581 = vmatpush1.msra.mxu0 0.0
      %9582 = vmatprep.subr.mxu0 0.0
      %9583 = vmatpush1.msra.mxu0 0.0
      %9584 = vmatprep.subr.mxu0 0.0
      %9585 = vmatpush1.msra.mxu0 0.0
      %9586 = vmatprep.subr.mxu0 %v9170
      %9587 = vmatpush1.msra.mxu0 %v9169
      %9588 = vmatprep.subr.mxu0 %v9154
      %9589 = vmatpush1.msra.mxu0 %v9153
      %9590 = vmatprep.subr.mxu0 %v9138
      %9591 = vmatpush1.msra.mxu0 %v9137
      %9592 = vmatprep.subr.mxu0 %v9122
      %9593 = vmatpush1.msra.mxu0 %v9121
      %9594 = vmatprep.subr.mxu0 %v9106
      %9595 = vmatpush1.msra.mxu0 %v9105
      %9596 = vmatprep.subr.mxu0 %v9090
      %9597 = vmatpush1.msra.mxu0 %v9089
      %9598 = vmatprep.subr.mxu0 %v9074
      %9599 = vmatpush1.msra.mxu0 %v9073
      %9600 = vmatprep.subr.mxu0 %v9058
      %9601 = vmatpush1.msra.mxu0 %v9057
      %9602 = vmatprep.subr.mxu0 %v9042
      %9603 = vmatpush1.msra.mxu0 %v9041
      %9604 = vmatprep.subr.mxu0 0.0
      %9605 = vmatpush2.msra.mxu0 0.0
      %9606 = vmatprep.subr.mxu0 0.0
      %9607 = vmatpush2.msra.mxu0 0.0
      %9608 = vmatprep.subr.mxu0 0.0
      %9609 = vmatpush2.msra.mxu0 0.0
      %9610 = vmatprep.subr.mxu0 0.0
      %9611 = vmatpush2.msra.mxu0 0.0
      %9612 = vmatprep.subr.mxu0 0.0
      %9613 = vmatpush2.msra.mxu0 0.0
      %9614 = vmatprep.subr.mxu0 0.0
      %9615 = vmatpush2.msra.mxu0 0.0
      %9616 = vmatprep.subr.mxu0 0.0
      %9617 = vmatpush2.msra.mxu0 0.0
      %9618 = vmatprep.subr.mxu0 0.0
      %9619 = vmatpush2.msra.mxu0 0.0
      %9620 = vmatprep.subr.mxu0 0.0
      %9621 = vmatpush2.msra.mxu0 0.0
      %9622 = vmatprep.subr.mxu0 0.0
      %9623 = vmatpush2.msra.mxu0 0.0
      %9624 = vmatprep.subr.mxu0 0.0
      %9625 = vmatpush2.msra.mxu0 0.0
      %9626 = vmatprep.subr.mxu0 0.0
      %9627 = vmatpush2.msra.mxu0 0.0
      %9628 = vmatprep.subr.mxu0 0.0
      %9629 = vmatpush2.msra.mxu0 0.0
      %9630 = vmatprep.subr.mxu0 0.0
      %9631 = vmatpush2.msra.mxu0 0.0
      %9632 = vmatprep.subr.mxu0 0.0
      %9633 = vmatpush2.msra.mxu0 0.0
      %9634 = vmatprep.subr.mxu0 0.0
      %9635 = vmatpush2.msra.mxu0 0.0
      %9636 = vmatprep.mubr.f32.mxu0 0.0
      %9637 = vmatmul.mubr.f32.gmra.mxu0 %v9188
      %v9638 = vpop.f32.mrf.mxu0
      %v9639 = vadd.f32 %v9180, %v9638
      %v9640 = vpop.f32.mrf.mxu0
      %9641 = vmatprep.mubr.f32.mxu0 0.0
      %9642 = vmatmul.mubr.f32.gmra.mxu0 %v9191
      %v9643 = vpop.f32.mrf.mxu0
      %v9644 = vadd.f32 %v9185, %v9643
      %v9645 = vpop.f32.mrf.mxu0
      %9646 = vdwg.mxu0
      %9647 = vmatprep.subr.mxu0 0.0
      %9648 = vmatpush1.msra.mxu0 0.0
      %9649 = vmatprep.subr.mxu0 0.0
      %9650 = vmatpush1.msra.mxu0 0.0
      %9651 = vmatprep.subr.mxu0 0.0
      %9652 = vmatpush1.msra.mxu0 0.0
      %9653 = vmatprep.subr.mxu0 0.0
      %9654 = vmatpush1.msra.mxu0 0.0
      %9655 = vmatprep.subr.mxu0 0.0
      %9656 = vmatpush1.msra.mxu0 0.0
      %9657 = vmatprep.subr.mxu0 0.0
      %9658 = vmatpush1.msra.mxu0 0.0
      %9659 = vmatprep.subr.mxu0 0.0
      %9660 = vmatpush1.msra.mxu0 0.0
      %9661 = vmatprep.subr.mxu0 %v9172
      %9662 = vmatpush1.msra.mxu0 %v9171
      %9663 = vmatprep.subr.mxu0 %v9156
      %9664 = vmatpush1.msra.mxu0 %v9155
      %9665 = vmatprep.subr.mxu0 %v9140
      %9666 = vmatpush1.msra.mxu0 %v9139
      %9667 = vmatprep.subr.mxu0 %v9124
      %9668 = vmatpush1.msra.mxu0 %v9123
      %9669 = vmatprep.subr.mxu0 %v9108
      %9670 = vmatpush1.msra.mxu0 %v9107
      %9671 = vmatprep.subr.mxu0 %v9092
      %9672 = vmatpush1.msra.mxu0 %v9091
      %9673 = vmatprep.subr.mxu0 %v9076
      %9674 = vmatpush1.msra.mxu0 %v9075
      %9675 = vmatprep.subr.mxu0 %v9060
      %9676 = vmatpush1.msra.mxu0 %v9059
      %9677 = vmatprep.subr.mxu0 %v9044
      %9678 = vmatpush1.msra.mxu0 %v9043
      %9679 = vmatprep.subr.mxu0 0.0
      %9680 = vmatpush2.msra.mxu0 0.0
      %9681 = vmatprep.subr.mxu0 0.0
      %9682 = vmatpush2.msra.mxu0 0.0
      %9683 = vmatprep.subr.mxu0 0.0
      %9684 = vmatpush2.msra.mxu0 0.0
      %9685 = vmatprep.subr.mxu0 0.0
      %9686 = vmatpush2.msra.mxu0 0.0
      %9687 = vmatprep.subr.mxu0 0.0
      %9688 = vmatpush2.msra.mxu0 0.0
      %9689 = vmatprep.subr.mxu0 0.0
      %9690 = vmatpush2.msra.mxu0 0.0
      %9691 = vmatprep.subr.mxu0 0.0
      %9692 = vmatpush2.msra.mxu0 0.0
      %9693 = vmatprep.subr.mxu0 0.0
      %9694 = vmatpush2.msra.mxu0 0.0
      %9695 = vmatprep.subr.mxu0 0.0
      %9696 = vmatpush2.msra.mxu0 0.0
      %9697 = vmatprep.subr.mxu0 0.0
      %9698 = vmatpush2.msra.mxu0 0.0
      %9699 = vmatprep.subr.mxu0 0.0
      %9700 = vmatpush2.msra.mxu0 0.0
      %9701 = vmatprep.subr.mxu0 0.0
      %9702 = vmatpush2.msra.mxu0 0.0
      %9703 = vmatprep.subr.mxu0 0.0
      %9704 = vmatpush2.msra.mxu0 0.0
      %9705 = vmatprep.subr.mxu0 0.0
      %9706 = vmatpush2.msra.mxu0 0.0
      %9707 = vmatprep.subr.mxu0 0.0
      %9708 = vmatpush2.msra.mxu0 0.0
      %9709 = vmatprep.subr.mxu0 0.0
      %9710 = vmatpush2.msra.mxu0 0.0
      %9711 = vmatprep.mubr.f32.mxu0 0.0
      %9712 = vmatmul.mubr.f32.gmra.mxu0 %v9188
      %v9713 = vpop.f32.mrf.mxu0
      %v9714 = vadd.f32 %v9180, %v9713
      %v9715 = vpop.f32.mrf.mxu0
      %v9716 = vadd.f32 %v9180, %v9715
      %9717 = vmatprep.mubr.f32.mxu0 0.0
      %9718 = vmatmul.mubr.f32.gmra.mxu0 %v9191
      %v9719 = vpop.f32.mrf.mxu0
      %v9720 = vadd.f32 %v9185, %v9719
      %v9721 = vpop.f32.mrf.mxu0
      %v9722 = vadd.f32 %v9185, %v9721
      %9723 = vdwg.mxu0
      %9724 = vmatprep.subr.mxu0 0.0
      %9725 = vmatpush1.msra.mxu0 0.0
      %9726 = vmatprep.subr.mxu0 0.0
      %9727 = vmatpush1.msra.mxu0 0.0
      %9728 = vmatprep.subr.mxu0 0.0
      %9729 = vmatpush1.msra.mxu0 0.0
      %9730 = vmatprep.subr.mxu0 0.0
      %9731 = vmatpush1.msra.mxu0 0.0
      %9732 = vmatprep.subr.mxu0 0.0
      %9733 = vmatpush1.msra.mxu0 0.0
      %9734 = vmatprep.subr.mxu0 0.0
      %9735 = vmatpush1.msra.mxu0 0.0
      %9736 = vmatprep.subr.mxu0 0.0
      %9737 = vmatpush1.msra.mxu0 0.0
      %9738 = vmatprep.subr.mxu0 %v9174
      %9739 = vmatpush1.msra.mxu0 %v9173
      %9740 = vmatprep.subr.mxu0 %v9158
      %9741 = vmatpush1.msra.mxu0 %v9157
      %9742 = vmatprep.subr.mxu0 %v9142
      %9743 = vmatpush1.msra.mxu0 %v9141
      %9744 = vmatprep.subr.mxu0 %v9126
      %9745 = vmatpush1.msra.mxu0 %v9125
      %9746 = vmatprep.subr.mxu0 %v9110
      %9747 = vmatpush1.msra.mxu0 %v9109
      %9748 = vmatprep.subr.mxu0 %v9094
      %9749 = vmatpush1.msra.mxu0 %v9093
      %9750 = vmatprep.subr.mxu0 %v9078
      %9751 = vmatpush1.msra.mxu0 %v9077
      %9752 = vmatprep.subr.mxu0 %v9062
      %9753 = vmatpush1.msra.mxu0 %v9061
      %9754 = vmatprep.subr.mxu0 %v9046
      %9755 = vmatpush1.msra.mxu0 %v9045
      %9756 = vmatprep.subr.mxu0 0.0
      %9757 = vmatpush2.msra.mxu0 0.0
      %9758 = vmatprep.subr.mxu0 0.0
      %9759 = vmatpush2.msra.mxu0 0.0
      %9760 = vmatprep.subr.mxu0 0.0
      %9761 = vmatpush2.msra.mxu0 0.0
      %9762 = vmatprep.subr.mxu0 0.0
      %9763 = vmatpush2.msra.mxu0 0.0
      %9764 = vmatprep.subr.mxu0 0.0
      %9765 = vmatpush2.msra.mxu0 0.0
      %9766 = vmatprep.subr.mxu0 0.0
      %9767 = vmatpush2.msra.mxu0 0.0
      %9768 = vmatprep.subr.mxu0 0.0
      %9769 = vmatpush2.msra.mxu0 0.0
      %9770 = vmatprep.subr.mxu0 0.0
      %9771 = vmatpush2.msra.mxu0 0.0
      %9772 = vmatprep.subr.mxu0 0.0
      %9773 = vmatpush2.msra.mxu0 0.0
      %9774 = vmatprep.subr.mxu0 0.0
      %9775 = vmatpush2.msra.mxu0 0.0
      %9776 = vmatprep.subr.mxu0 0.0
      %9777 = vmatpush2.msra.mxu0 0.0
      %9778 = vmatprep.subr.mxu0 0.0
      %9779 = vmatpush2.msra.mxu0 0.0
      %9780 = vmatprep.subr.mxu0 0.0
      %9781 = vmatpush2.msra.mxu0 0.0
      %9782 = vmatprep.subr.mxu0 0.0
      %9783 = vmatpush2.msra.mxu0 0.0
      %9784 = vmatprep.subr.mxu0 0.0
      %9785 = vmatpush2.msra.mxu0 0.0
      %9786 = vmatprep.subr.mxu0 0.0
      %9787 = vmatpush2.msra.mxu0 0.0
      %9788 = vmatprep.mubr.f32.mxu0 0.0
      %9789 = vmatmul.mubr.f32.gmra.mxu0 %v9188
      %v9790 = vpop.f32.mrf.mxu0
      %v9791 = vpop.f32.mrf.mxu0
      %v9792 = vadd.f32 %v9180, %v9791
      %9793 = vmatprep.mubr.f32.mxu0 0.0
      %9794 = vmatmul.mubr.f32.gmra.mxu0 %v9191
      %v9795 = vpop.f32.mrf.mxu0
      %v9796 = vpop.f32.mrf.mxu0
      %v9797 = vadd.f32 %v9185, %v9796
      %9798 = vdwg.mxu0
      %v9799 = vmax.f32 %v9260, 0.0
      %v9800 = vmax.f32 %v9262, 0.0
      %v9801 = vmax.f32 %v9337, 0.0
      %v9802 = vmax.f32 %v9339, 0.0
      %v9803 = vmax.f32 %v9414, 0.0
      %v9804 = vmax.f32 %v9490, 0.0
      %v9805 = vmax.f32 %v9564, 0.0
      %v9806 = vmax.f32 %v9639, 0.0
      %v9807 = vmax.f32 %v9714, 0.0
      %v9808 = vmax.f32 %v9716, 0.0
      %v9809 = vmax.f32 %v9792, 0.0
      %v9810 = vmax.f32 %v9266, 0.0
      %v9811 = vmax.f32 %v9268, 0.0
      %v9812 = vmax.f32 %v9343, 0.0
      %v9813 = vmax.f32 %v9345, 0.0
      %v9814 = vmax.f32 %v9419, 0.0
      %v9815 = vmax.f32 %v9495, 0.0
      %v9816 = vmax.f32 %v9569, 0.0
      %v9817 = vmax.f32 %v9644, 0.0
      %v9818 = vmax.f32 %v9720, 0.0
      %v9819 = vmax.f32 %v9722, 0.0
      %v9820 = vmax.f32 %v9797, 0.0
      %9831 = vrot.lane.b32.xlu0 %v9801, 64
      %v9832 = vpop.permute.xlu0 %9831
      %9833 = vrot.lane.b32.xlu0 %v9802, 64
      %v9834 = vpop.permute.xlu0 %9833
      %9835 = vrot.lane.b32.xlu0 %v9803, 64
      %v9836 = vpop.permute.xlu0 %9835
      %9837 = vrot.lane.b32.xlu0 %v9807, 64
      %v9838 = vpop.permute.xlu0 %9837
      %9839 = vrot.lane.b32.xlu0 %v9808, 64
      %v9840 = vpop.permute.xlu0 %9839
      %9841 = vrot.lane.b32.xlu0 %v9812, 64
      %v9842 = vpop.permute.xlu0 %9841
      %9843 = vrot.lane.b32.xlu0 %v9813, 64
      %v9844 = vpop.permute.xlu0 %9843
      %9845 = vrot.lane.b32.xlu0 %v9814, 64
      %v9846 = vpop.permute.xlu0 %9845
      %9847 = vrot.lane.b32.xlu0 %v9818, 64
      %v9848 = vpop.permute.xlu0 %9847
      %9849 = vrot.lane.b32.xlu0 %v9819, 64
      %v9850 = vpop.permute.xlu0 %9849
      %v9851 = vsel %vm501, %v9832, %v9834
      %v9852 = vsel %vm501, %v9834, %v9836
      %v9853 = vsel %vm501, %v9838, %v9840
      %v9854 = vsel %vm501, %v9842, %v9844
      %v9855 = vsel %vm501, %v9844, %v9846
      %v9856 = vsel %vm501, %v9848, %v9850
      %v9863 = vmax.f32 %v9799, %v9851
      %v9864 = vmax.f32 %v9800, %v9852
      %v9865 = vmax.f32 %v9806, %v9853
      %v9866 = vmax.f32 %v9810, %v9854
      %v9867 = vmax.f32 %v9811, %v9855
      %v9868 = vmax.f32 %v9817, %v9856
      %v9869 = vmax.f32 %v9863, %v9804
      %v9870 = vmax.f32 %v9864, %v9805
      %v9871 = vmax.f32 %v9865, %v9809
      %v9872 = vmax.f32 %v9866, %v9815
      %v9873 = vmax.f32 %v9867, %v9816
      %v9874 = vmax.f32 %v9868, %v9820
      %9881 = vrot.lane.b32.xlu0 %v9869, 124
      %v9882 = vpop.permute.xlu0 %9881
      %9883 = vrot.lane.b32.xlu0 %v9870, 124
      %v9884 = vpop.permute.xlu0 %9883
      %9885 = vrot.lane.b32.xlu0 %v9871, 124
      %v9886 = vpop.permute.xlu0 %9885
      %9887 = vrot.lane.b32.xlu0 %v9872, 124
      %v9888 = vpop.permute.xlu0 %9887
      %9889 = vrot.lane.b32.xlu0 %v9873, 124
      %v9890 = vpop.permute.xlu0 %9889
      %9891 = vrot.lane.b32.xlu0 %v9874, 124
      %v9892 = vpop.permute.xlu0 %9891
      %v9893 = vsel %vm456, %v9882, %v9884
      %v9894 = vsel %vm456, %v9888, %v9890
      %v9899 = vmax.f32 %v9869, %v9893
      %v9900 = vmax.f32 %v9871, %v9886
      %v9901 = vmax.f32 %v9872, %v9894
      %v9902 = vmax.f32 %v9874, %v9892
      %9903 = vrot.lane.b32.xlu0 %v9869, 120
      %v9904 = vpop.permute.xlu0 %9903
      %9905 = vrot.lane.b32.xlu0 %v9870, 120
      %v9906 = vpop.permute.xlu0 %9905
      %9907 = vrot.lane.b32.xlu0 %v9871, 120
      %v9908 = vpop.permute.xlu0 %9907
      %9909 = vrot.lane.b32.xlu0 %v9872, 120
      %v9910 = vpop.permute.xlu0 %9909
      %9911 = vrot.lane.b32.xlu0 %v9873, 120
      %v9912 = vpop.permute.xlu0 %9911
      %9913 = vrot.lane.b32.xlu0 %v9874, 120
      %v9914 = vpop.permute.xlu0 %9913
      %v9915 = vsel %vm2912, %v9904, %v9906
      %v9916 = vsel %vm2912, %v9910, %v9912
      %v9921 = vmax.f32 %v9899, %v9915
      %v9922 = vmax.f32 %v9900, %v9908
      %v9923 = vmax.f32 %v9901, %v9916
      %v9924 = vmax.f32 %v9902, %v9914
      %vm9925 = vcmask 7168
      %9926 = vst.msk [vmem:[%s275] sm:$0xff] %vm9925, %v9921
      %9927 = vst.msk [vmem:[%s275 + $0x8] sm:$0xff] %vm9925, %v9923
      %9930 = vrot.lane.b32.xlu0 %v9921, 121
      %v9931 = vpop.permute.xlu0 %9930
      %9932 = vrot.lane.b32.xlu0 %v9923, 121
      %v9933 = vpop.permute.xlu0 %9932
      %vm9936 = vcmask 15368
      %9937 = vst.msk [vmem:[%s275] sm:$0xff] %vm9936, %v9931
      %9938 = vst.msk [vmem:[%s275 + $0x8] sm:$0xff] %vm9936, %v9933
      %9939 = vrot.lane.b32.xlu0 %v9921, 114
      %v9940 = vpop.permute.xlu0 %9939
      %9941 = vrot.lane.b32.xlu0 %v9923, 114
      %v9942 = vpop.permute.xlu0 %9941
      %vm9945 = vcmask 23568
      %9946 = vst.msk [vmem:[%s275] sm:$0xff] %vm9945, %v9940
      %9947 = vst.msk [vmem:[%s275 + $0x8] sm:$0xff] %vm9945, %v9942
      %9948 = vrot.lane.b32.xlu0 %v9921, 107
      %v9949 = vpop.permute.xlu0 %9948
      %9950 = vrot.lane.b32.xlu0 %v9923, 107
      %v9951 = vpop.permute.xlu0 %9950
      %vm9954 = vcmask 31768
      %9955 = vst.msk [vmem:[%s275] sm:$0xff] %vm9954, %v9949
      %9956 = vst.msk [vmem:[%s275 + $0x8] sm:$0xff] %vm9954, %v9951
      %9957 = vrot.lane.b32.xlu0 %v9921, 100
      %v9958 = vpop.permute.xlu0 %9957
      %9959 = vrot.lane.b32.xlu0 %v9923, 100
      %v9960 = vpop.permute.xlu0 %9959
      %vm9963 = vcmask 39968
      %9964 = vst.msk [vmem:[%s275] sm:$0xff] %vm9963, %v9958
      %9965 = vst.msk [vmem:[%s275 + $0x8] sm:$0xff] %vm9963, %v9960
      %9966 = vrot.lane.b32.xlu0 %v9921, 93
      %v9967 = vpop.permute.xlu0 %9966
      %9968 = vrot.lane.b32.xlu0 %v9923, 93
      %v9969 = vpop.permute.xlu0 %9968
      %vm9972 = vcmask 48168
      %9973 = vst.msk [vmem:[%s275] sm:$0xff] %vm9972, %v9967
      %9974 = vst.msk [vmem:[%s275 + $0x8] sm:$0xff] %vm9972, %v9969
      %9977 = vrot.lane.b32.xlu0 %v9922, 70
      %v9978 = vpop.permute.xlu0 %9977
      %9979 = vrot.lane.b32.xlu0 %v9924, 70
      %v9980 = vpop.permute.xlu0 %9979
      %vm9983 = vcmask 56368
      %9984 = vst.msk [vmem:[%s275] sm:$0xff] %vm9983, %v9978
      %9985 = vst.msk [vmem:[%s275 + $0x8] sm:$0xff] %vm9983, %v9980
      %9986 = vrot.lane.b32.xlu0 %v9922, 63
      %v9987 = vpop.permute.xlu0 %9986
      %9988 = vrot.lane.b32.xlu0 %v9924, 63
      %v9989 = vpop.permute.xlu0 %9988
      %vm9992 = vcmask 64568
      %9993 = vst.msk [vmem:[%s275] sm:$0xff] %vm9992, %v9987
      %9994 = vst.msk [vmem:[%s275 + $0x8] sm:$0xff] %vm9992, %v9989
      %9995 = vrot.lane.b32.xlu0 %v9922, 56
      %v9996 = vpop.permute.xlu0 %9995
      %9997 = vrot.lane.b32.xlu0 %v9924, 56
      %v9998 = vpop.permute.xlu0 %9997
      %vm10001 = vcmask 72768
      %10002 = vst.msk [vmem:[%s275] sm:$0xff] %vm10001, %v9996
      %10003 = vst.msk [vmem:[%s275 + $0x8] sm:$0xff] %vm10001, %v9998
      %10004 = vrot.lane.b32.xlu0 %v9922, 49
      %v10005 = vpop.permute.xlu0 %10004
      %10006 = vrot.lane.b32.xlu0 %v9924, 49
      %v10007 = vpop.permute.xlu0 %10006
      %vm10010 = vcmask 80968
      %10011 = vst.msk [vmem:[%s275] sm:$0xff] %vm10010, %v10005
      %10012 = vst.msk [vmem:[%s275 + $0x8] sm:$0xff] %vm10010, %v10007
      %10013 = vrot.lane.b32.xlu0 %v9922, 42
      %v10014 = vpop.permute.xlu0 %10013
      %10015 = vrot.lane.b32.xlu0 %v9924, 42
      %v10016 = vpop.permute.xlu0 %10015
      %vm10019 = vcmask 89168
      %10020 = vst.msk [vmem:[%s275] sm:$0xff] %vm10019, %v10014
      %10021 = vst.msk [vmem:[%s275 + $0x8] sm:$0xff] %vm10019, %v10016
      %10022 = vrot.lane.b32.xlu0 %v9922, 35
      %v10023 = vpop.permute.xlu0 %10022
      %10024 = vrot.lane.b32.xlu0 %v9924, 35
      %v10025 = vpop.permute.xlu0 %10024
      %vm10028 = vcmask 97368
      %10029 = vst.msk [vmem:[%s275] sm:$0xff] %vm10028, %v10023
      %10030 = vst.msk [vmem:[%s275 + $0x8] sm:$0xff] %vm10028, %v10025
      %p10031 = scmp.lt.s32.totalorder %s18, 1
      %s10032 = scalar_select %p10031, %s18, 1
      %s10033 = smul.addr %s10032, 2
      %s10034 = smul.addr %s10033, 8
      %s10035 = scalar_lea.vmem %s7, %s10034
      // Predicated region
      $region49: #{emotion_encoder_forward.1} parent=47 // pred_check
        %p10036 = pneg %p188
      $region50: #{emotion_encoder_forward.1} parent=47 // pred_check_branch
        %10038 = sbr.rel (%p10036) target = $region52
      $region51: #{emotion_encoder_forward.1} parent=47 // pred_region
        _
      $region52: #{emotion_encoder_forward.1} parent=47 // pred_fallthru
        _
    $region48: #{emotion_encoder_forward.1} parent=5 // pred_fallthru
      _
    %p10039 = scmp.le.s32.totalorder 2, %s13
    // Predicated region
    $region53: #{emotion_encoder_forward.1} parent=5 // pred_check
      %p10040 = pneg %p10039
    $region54: #{emotion_encoder_forward.1} parent=5 // pred_check_branch
      %10042 = sbr.rel (%p10040) target = $region56
    $region55: #{emotion_encoder_forward.1} parent=5 // pred_region
      %s10043 = ssub.s32 %s13, 2
      // Predicated region
      $region57: #{emotion_encoder_forward.1} parent=55 // pred_check
        %p10044 = pneg %p194
      $region58: #{emotion_encoder_forward.1} parent=55 // pred_check_branch
        %10046 = sbr.rel (%p10044) target = $region60
      $region59: #{emotion_encoder_forward.1} parent=55 // pred_region
        %p10047 = scmp.lt.s32.totalorder %s19, 1
        %s10048 = scalar_select %p10047, %s19, 1
        %s10049 = smul.addr %s10048, 2
        %s10050 = smul.addr %s10049, 8
        %s10051 = scalar_lea.vmem %s7, %s10050
      $region60: #{emotion_encoder_forward.1} parent=55 // pred_fallthru
        _
    $region56: #{emotion_encoder_forward.1} parent=5 // pred_fallthru
      _
  $region6: #{emotion_encoder_forward.1} parent=0 // loop_footer
    %s17 = sadd.s32 1, %s13
  $region7: #{emotion_encoder_forward.1} parent=0 // loop_footer_branch
    %12 = sbr.rel target = $region3
  $region8: #{emotion_encoder_forward.1} parent=0 // loop_exit
    _

</llo_original>
